<compile_context>
chip_gen: v6e
topology: v6e:2x2x1
jax: 0.10.0
libtpu: 0.0.40
codegen_flags: <defaults>
</compile_context>

<pallas_src>
from functools import partial

import jax
import jax.numpy as jnp
from jax.experimental import pallas as pl
from jax.experimental.pallas import tpu as pltpu

_LANE = 128


def _round_up(x, m):
    return (x + m - 1) // m * m


# ----------------------------------------------------------------------------
# Fused ResidualBlock kernel (conv1+BN+ReLU -> conv2+BN -> +bypass -> ReLU)
# ----------------------------------------------------------------------------
def _make_residual_kernel(*, stride, use_bypass, Ho, Wo, Cin_p, Cout_p):
    S = stride
    M = Ho * Wo

    def tap(ph_ref, kh, kw):
        # x_pad[S*i + kh, S*j + kw]  ==  phase[kh%S, kw%S][i + kh//S, j + kw//S]
        a, b = kh % S, kw % S
        di, dj = kh // S, kw // S
        v = ph_ref[a * S + b, di:di + Ho, dj:dj + Wo, :]
        return v.reshape(M, Cin_p).astype(jnp.bfloat16)

    def kernel(*refs):
        if use_bypass:
            ph_ref, w1_ref, b1_ref, w2_ref, b2_ref, wb_ref, bb_ref, o_ref, hpad_ref = refs
        else:
            ph_ref, w1_ref, b1_ref, w2_ref, b2_ref, o_ref, hpad_ref = refs

        # ---- conv1 (3x3, stride S) + folded BN1 + ReLU ----
        acc = jnp.zeros((M, Cout_p), jnp.float32)
        for kh in range(3):
            for kw in range(3):
                r = (kh * 3 + kw) * Cin_p
                acc = acc + jnp.dot(tap(ph_ref, kh, kw), w1_ref[r:r + Cin_p, :],
                                    preferred_element_type=jnp.float32)
        h = jnp.maximum(acc + b1_ref[...], 0.0)

        # stash h with a zero halo (padding=1) for conv2, in VMEM scratch
        hpad_ref[...] = jnp.zeros(hpad_ref.shape, hpad_ref.dtype)
        hpad_ref[1:Ho + 1, 1:Wo + 1, :] = h.reshape(Ho, Wo, Cout_p)

        # ---- conv2 (3x3, stride 1) + folded BN2 ----
        acc2 = jnp.zeros((M, Cout_p), jnp.float32)
        for kh in range(3):
            for kw in range(3):
                r = (kh * 3 + kw) * Cout_p
                lhs = hpad_ref[kh:kh + Ho, kw:kw + Wo, :].reshape(M, Cout_p)
                acc2 = acc2 + jnp.dot(lhs.astype(jnp.bfloat16), w2_ref[r:r + Cout_p, :],
                                      preferred_element_type=jnp.float32)
        acc2 = acc2 + b2_ref[...]

        # ---- bypass branch ----
        if use_bypass:
            if S == 1:
                xb = ph_ref[0, 1:1 + Ho, 1:1 + Wo, :]
            else:
                xb = ph_ref[S + 1, 0:Ho, 0:Wo, :]      # stride phase (1, 1)
            xb = xb.reshape(M, Cin_p).astype(jnp.bfloat16)
            byp = jnp.dot(xb, wb_ref[...], preferred_element_type=jnp.float32) + bb_ref[...]
        else:
            # identity bypass (stride == 1, Cin_p == Cout_p)
            byp = ph_ref[0, 1:1 + Ho, 1:1 + Wo, :].reshape(M, Cout_p)

        out = jnp.maximum(acc2 + byp, 0.0)
        o_ref[...] = out.reshape(1, Ho, Wo, Cout_p).astype(o_ref.dtype)

    return kernel


# ----------------------------------------------------------------------------
# Wrapper glue: parameter folding, stride-phase decomposition, pallas_call
# ----------------------------------------------------------------------------
def _fold_bn(w_oihw, conv_b, bn, cin_p, cout_p):
    """OIHW conv weight + conv bias + inference BN -> (k*k*cin_p, cout_p) bf16 weight
    with the BN scale folded in, and a (1, cout_p) f32 bias."""
    cout, cin, kh, kw = w_oihw.shape
    scale = bn["gamma"] / jnp.sqrt(bn["var"] + 1e-5)
    bias = bn["beta"] - bn["mean"] * scale + scale * conv_b
    w = jnp.transpose(w_oihw, (2, 3, 1, 0)) * scale            # (kh, kw, cin, cout)
    w = jnp.pad(w, ((0, 0), (0, 0), (0, cin_p - cin), (0, cout_p - cout)))
    w_mat = w.reshape(kh * kw * cin_p, cout_p).astype(jnp.bfloat16)
    b = jnp.pad(bias, (0, cout_p - cout)).reshape(1, cout_p).astype(jnp.float32)
    return w_mat, b


def _phases(x_p, stride):
    """Spatially pad (padding=1) and decompose into stride^2 phases so every 3x3 tap in
    the kernel is an unstrided shifted window.  Returns (N*S*S, Hph, Wph, Cp) f32."""
    N, H, W, Cp = x_p.shape
    Ho = (H - 1) // stride + 1
    Wo = (W - 1) // stride + 1
    halo = -(-2 // stride)                                     # ceil(2 / stride)
    Hph, Wph = Ho + halo, Wo + halo
    xp = jnp.pad(x_p.astype(jnp.float32), ((0, 0), (1, 1), (1, 1), (0, 0)))
    phs = []
    for a in range(stride):
        for b in range(stride):
            phs.append(xp[:, a:a + stride * Hph:stride, b:b + stride * Wph:stride, :])
    ph = jnp.stack(phs, axis=1).reshape(N * stride * stride, Hph, Wph, Cp)
    return ph, Ho, Wo, Hph, Wph


def residual_block_pallas(x_p, p, *, stride, use_bypass):
    """x_p: (N, H, W, Cin_p) channel-padded NHWC activations -> (N, Ho, Wo, Cout_p) bf16."""
    N, H, W, Cin_p = x_p.shape
    c_out = p["w1"].shape[0]
    Cout_p = _round_up(c_out, _LANE)

    ph, Ho, Wo, Hph, Wph = _phases(x_p, stride)
    w1, b1 = _fold_bn(p["w1"], p["b1"], p["bn1"], Cin_p, Cout_p)
    w2, b2 = _fold_bn(p["w2"], p["b2"], p["bn2"], Cout_p, Cout_p)

    args = [ph, w1, b1, w2, b2]
    in_specs = [
        pl.BlockSpec((stride * stride, Hph, Wph, Cin_p), lambda n: (n, 0, 0, 0)),
        pl.BlockSpec(w1.shape, lambda n: (0, 0)),
        pl.BlockSpec(b1.shape, lambda n: (0, 0)),
        pl.BlockSpec(w2.shape, lambda n: (0, 0)),
        pl.BlockSpec(b2.shape, lambda n: (0, 0)),
    ]
    if use_bypass:
        wb, bb = _fold_bn(p["wb"], p["bb"], p["bnb"], Cin_p, Cout_p)
        args += [wb, bb]
        in_specs += [pl.BlockSpec(wb.shape, lambda n: (0, 0)),
                     pl.BlockSpec(bb.shape, lambda n: (0, 0))]
    else:
        assert stride == 1 and Cin_p == Cout_p, "identity bypass needs matching shapes"

    kernel = _make_residual_kernel(stride=stride, use_bypass=use_bypass,
                                   Ho=Ho, Wo=Wo, Cin_p=Cin_p, Cout_p=Cout_p)
    return pl.pallas_call(
        kernel,
        out_shape=jax.ShapeDtypeStruct((N, Ho, Wo, Cout_p), jnp.bfloat16),
        grid_spec=pltpu.PrefetchScalarGridSpec(
            num_scalar_prefetch=0,
            grid=(N,),
            in_specs=in_specs,
            out_specs=pl.BlockSpec((1, Ho, Wo, Cout_p), lambda n: (n, 0, 0, 0)),
            scratch_shapes=[pltpu.VMEM((Ho + 2, Wo + 2, Cout_p), jnp.float32)],
        ),
        compiler_params=pltpu.CompilerParams(
            dimension_semantics=("parallel",),
            vmem_limit_bytes=32 * 1024 * 1024,
        ),
    )(*args)


def resnet_block_forward(x_nchw, params, configs):
    """PyTorch-convention NCHW in / NCHW out; configs is a static tuple of
    (stride, use_bypass) per residual block."""
    x = jnp.transpose(x_nchw, (0, 2, 3, 1))                    # NCHW -> NHWC
    c_in = x.shape[-1]
    x_p = jnp.pad(x, ((0, 0), (0, 0), (0, 0), (0, _round_up(c_in, _LANE) - c_in)))
    c_cur = c_in
    for p, (stride, use_bypass) in zip(params, configs):
        x_p = residual_block_pallas(x_p, p, stride=stride, use_bypass=use_bypass)
        c_cur = p["w1"].shape[0]
    out = x_p[..., :c_cur].astype(jnp.float32)                 # drop channel padding
    return jnp.transpose(out, (0, 3, 1, 2))                    # NHWC -> NCHW


# ----------------------------------------------------------------------------
# Deterministic parameter init (shapes per the PyTorch module __init__)
# ----------------------------------------------------------------------------
def _init_conv(key, c_out, c_in, k):
    kw, kb = jax.random.split(key)
    w = jax.random.normal(kw, (c_out, c_in, k, k), jnp.float32) * 0.1
    b = jax.random.normal(kb, (c_out,), jnp.float32) * 0.05
    return w, b


def _init_bn(key, c):
    k1, k2, k3, k4 = jax.random.split(key, 4)
    return dict(
        gamma=jax.random.uniform(k1, (c,), jnp.float32, 0.5, 1.5),
        beta=jax.random.normal(k2, (c,), jnp.float32) * 0.1,
        mean=jax.random.normal(k3, (c,), jnp.float32) * 0.1,
        var=jax.random.uniform(k4, (c,), jnp.float32, 0.5, 1.5),
    )


def init_resnet_block(key, num_residuals, out_channels, in_channels, is_first_block):
    params, configs = [], []
    for i in range(num_residuals):
        if i == 0 and not is_first_block:
            stride, use_bypass = 2, True
        else:
            stride, use_bypass = 1, False
        c_in = in_channels if i == 0 else out_channels
        key, k1, k2, k3, k4, k5, k6 = jax.random.split(key, 7)
        p = {}
        p["w1"], p["b1"] = _init_conv(k1, out_channels, c_in, 3)
        p["bn1"] = _init_bn(k2, out_channels)
        p["w2"], p["b2"] = _init_conv(k3, out_channels, out_channels, 3)
        p["bn2"] = _init_bn(k4, out_channels)
        if use_bypass:
            p["wb"], p["bb"] = _init_conv(k5, out_channels, c_in, 1)
            p["bnb"] = _init_bn(k6, out_channels)
        params.append(p)
        configs.append((stride, use_bypass))
    return params, tuple(configs)


# ----------------------------------------------------------------------------
# Pure-JAX f32 reference (XLA conv) for correctness check
# ----------------------------------------------------------------------------
def _ref_conv_bn(x, w, b, bn, stride, padding, relu, bypass=None):
    out = jax.lax.conv_general_dilated(
        x, jnp.transpose(w, (2, 3, 1, 0)),
        window_strides=(stride, stride),
        padding=((padding, padding), (padding, padding)),
        dimension_numbers=("NHWC", "HWIO", "NHWC"))
    scale = bn["gamma"] / jnp.sqrt(bn["var"] + 1e-5)
    bias = bn["beta"] - bn["mean"] * scale + scale * b
    out = out * scale + bias
    if bypass is not None:
        out = out + bypass
    if relu:
        out = jnp.maximum(out, 0.0)
    return out


def _ref_forward(x_nchw, params, configs):
    x = jnp.transpose(x_nchw, (0, 2, 3, 1))
    for p, (stride, use_bypass) in zip(params, configs):
        h = _ref_conv_bn(x, p["w1"], p["b1"], p["bn1"], stride, 1, True)
        byp = (_ref_conv_bn(x, p["wb"], p["bb"], p["bnb"], stride, 0, False)
               if use_bypass else x)
        x = _ref_conv_bn(h, p["w2"], p["b2"], p["bn2"], 1, 1, True, bypass=byp)
    return jnp.transpose(x, (0, 3, 1, 2))


# ----------------------------------------------------------------------------
if __name__ == "__main__":
    key = jax.random.PRNGKey(0)
    kx, kp = jax.random.split(key)

    # ResNetBlock(num_residuals=2, out_channels=8, is_first_block=False)
    num_residuals, out_channels, is_first_block = 2, 8, False
    N, C_in, H, W = 2, 4, 16, 16

    x = jax.random.normal(kx, (N, C_in, H, W), jnp.float32)   # NCHW (PyTorch convention)
    params, configs = init_resnet_block(kp, num_residuals, out_channels, C_in,
                                        is_first_block)

    fwd = jax.jit(resnet_block_forward, static_argnums=(2,))
    out = jax.block_until_ready(fwd(x, params, configs))

    ref = jax.block_until_ready(_ref_forward(x, params, configs))
    assert out.shape == (N, out_channels, H // 2, W // 2), out.shape
    max_err = float(jnp.max(jnp.abs(out - ref)))
    # bf16 MXU inputs / bf16 inter-block activations => compare at bf16-level tolerance.
    assert jnp.allclose(out, ref, atol=5e-2, rtol=5e-2), max_err

    print("KERNEL_OK")
</pallas_src>

<mosaic_0001>
module attributes {stable_mosaic.version = 11 : i64} {
  func.func @kernel(%arg0: i32, %arg1: memref<1x10x10x128xf32, #tpu.memory_space<vmem>>, %arg2: memref<1152x128xbf16, #tpu.memory_space<vmem>>, %arg3: memref<1x128xf32, #tpu.memory_space<vmem>>, %arg4: memref<1152x128xbf16, #tpu.memory_space<vmem>>, %arg5: memref<1x128xf32, #tpu.memory_space<vmem>>, %arg6: memref<1x8x8x128xbf16, #tpu.memory_space<vmem>>, %arg7: memref<10x10x128xf32, #tpu.memory_space<vmem>>) attributes {dimension_semantics = [#tpu.dimension_semantics<parallel>], iteration_bounds = array<i64: 2>, scalar_prefetch = 0 : i64, scratch_operands = 1 : i64, tpu.core_type = #tpu.core_type<tc>, window_params = [{transform_indices = @transform_0, window_bounds = array<i64: 1, 10, 10, 128>}, {pipeline_mode = #tpu.pipeline_mode<synchronous>, transform_indices = @transform_1, window_bounds = array<i64: 1152, 128>}, {pipeline_mode = #tpu.pipeline_mode<synchronous>, transform_indices = @transform_2, window_bounds = array<i64: 1, 128>}, {pipeline_mode = #tpu.pipeline_mode<synchronous>, transform_indices = @transform_3, window_bounds = array<i64: 1152, 128>}, {pipeline_mode = #tpu.pipeline_mode<synchronous>, transform_indices = @transform_4, window_bounds = array<i64: 1, 128>}, {transform_indices = @transform_5, window_bounds = array<i64: 1, 8, 8, 128>}]} {
    %cst = arith.constant 0.000000e+00 : f32
    %0 = vector.broadcast %cst : f32 to vector<64x128xf32>
    %c0 = arith.constant 0 : index
    %c0_0 = arith.constant 0 : index
    %c0_1 = arith.constant 0 : index
    %c0_2 = arith.constant 0 : index
    %1 = vector.load %arg1[%c0, %c0_0, %c0_1, %c0_2] : memref<1x10x10x128xf32, #tpu.memory_space<vmem>>, vector<1x8x8x128xf32>
    %2 = vector.shape_cast %1 : vector<1x8x8x128xf32> to vector<8x8x128xf32>
    %3 = vector.shape_cast %2 : vector<8x8x128xf32> to vector<64x128xf32>
    %4 = arith.truncf %3 : vector<64x128xf32> to vector<64x128xbf16>
    %c0_3 = arith.constant 0 : index
    %c0_4 = arith.constant 0 : index
    %5 = vector.load %arg2[%c0_3, %c0_4] : memref<1152x128xbf16, #tpu.memory_space<vmem>>, vector<128x128xbf16>
    %cst_5 = arith.constant dense<0.000000e+00> : vector<64x128xf32>
    %6 = tpu.matmul %4, %5, %cst_5 {dimension_numbers = #tpu.dot_dimension_numbers<[1], [0], [0], [1], [0, 0, 1, 1], [], []>} : vector<64x128xbf16>, vector<128x128xbf16>, vector<64x128xf32> -> vector<64x128xf32>
    %7 = arith.addf %0, %6 : vector<64x128xf32>
    %c0_6 = arith.constant 0 : index
    %c0_7 = arith.constant 0 : index
    %c1 = arith.constant 1 : index
    %c0_8 = arith.constant 0 : index
    %8 = vector.load %arg1[%c0_6, %c0_7, %c1, %c0_8] : memref<1x10x10x128xf32, #tpu.memory_space<vmem>>, vector<1x8x8x128xf32>
    %9 = vector.shape_cast %8 : vector<1x8x8x128xf32> to vector<8x8x128xf32>
    %10 = vector.shape_cast %9 : vector<8x8x128xf32> to vector<64x128xf32>
    %11 = arith.truncf %10 : vector<64x128xf32> to vector<64x128xbf16>
    %c128 = arith.constant 128 : index
    %c0_9 = arith.constant 0 : index
    %12 = vector.load %arg2[%c128, %c0_9] : memref<1152x128xbf16, #tpu.memory_space<vmem>>, vector<128x128xbf16>
    %cst_10 = arith.constant dense<0.000000e+00> : vector<64x128xf32>
    %13 = tpu.matmul %11, %12, %cst_10 {dimension_numbers = #tpu.dot_dimension_numbers<[1], [0], [0], [1], [0, 0, 1, 1], [], []>} : vector<64x128xbf16>, vector<128x128xbf16>, vector<64x128xf32> -> vector<64x128xf32>
    %14 = arith.addf %7, %13 : vector<64x128xf32>
    %c0_11 = arith.constant 0 : index
    %c0_12 = arith.constant 0 : index
    %c2 = arith.constant 2 : index
    %c0_13 = arith.constant 0 : index
    %15 = vector.load %arg1[%c0_11, %c0_12, %c2, %c0_13] : memref<1x10x10x128xf32, #tpu.memory_space<vmem>>, vector<1x8x8x128xf32>
    %16 = vector.shape_cast %15 : vector<1x8x8x128xf32> to vector<8x8x128xf32>
    %17 = vector.shape_cast %16 : vector<8x8x128xf32> to vector<64x128xf32>
    %18 = arith.truncf %17 : vector<64x128xf32> to vector<64x128xbf16>
    %c256 = arith.constant 256 : index
    %c0_14 = arith.constant 0 : index
    %19 = vector.load %arg2[%c256, %c0_14] : memref<1152x128xbf16, #tpu.memory_space<vmem>>, vector<128x128xbf16>
    %cst_15 = arith.constant dense<0.000000e+00> : vector<64x128xf32>
    %20 = tpu.matmul %18, %19, %cst_15 {dimension_numbers = #tpu.dot_dimension_numbers<[1], [0], [0], [1], [0, 0, 1, 1], [], []>} : vector<64x128xbf16>, vector<128x128xbf16>, vector<64x128xf32> -> vector<64x128xf32>
    %21 = arith.addf %14, %20 : vector<64x128xf32>
    %c0_16 = arith.constant 0 : index
    %c1_17 = arith.constant 1 : index
    %c0_18 = arith.constant 0 : index
    %c0_19 = arith.constant 0 : index
    %22 = vector.load %arg1[%c0_16, %c1_17, %c0_18, %c0_19] : memref<1x10x10x128xf32, #tpu.memory_space<vmem>>, vector<1x8x8x128xf32>
    %23 = vector.shape_cast %22 : vector<1x8x8x128xf32> to vector<8x8x128xf32>
    %24 = vector.shape_cast %23 : vector<8x8x128xf32> to vector<64x128xf32>
    %25 = arith.truncf %24 : vector<64x128xf32> to vector<64x128xbf16>
    %c384 = arith.constant 384 : index
    %c0_20 = arith.constant 0 : index
    %26 = vector.load %arg2[%c384, %c0_20] : memref<1152x128xbf16, #tpu.memory_space<vmem>>, vector<128x128xbf16>
    %cst_21 = arith.constant dense<0.000000e+00> : vector<64x128xf32>
    %27 = tpu.matmul %25, %26, %cst_21 {dimension_numbers = #tpu.dot_dimension_numbers<[1], [0], [0], [1], [0, 0, 1, 1], [], []>} : vector<64x128xbf16>, vector<128x128xbf16>, vector<64x128xf32> -> vector<64x128xf32>
    %28 = arith.addf %21, %27 : vector<64x128xf32>
    %c0_22 = arith.constant 0 : index
    %c1_23 = arith.constant 1 : index
    %c1_24 = arith.constant 1 : index
    %c0_25 = arith.constant 0 : index
    %29 = vector.load %arg1[%c0_22, %c1_23, %c1_24, %c0_25] : memref<1x10x10x128xf32, #tpu.memory_space<vmem>>, vector<1x8x8x128xf32>
    %30 = vector.shape_cast %29 : vector<1x8x8x128xf32> to vector<8x8x128xf32>
    %31 = vector.shape_cast %30 : vector<8x8x128xf32> to vector<64x128xf32>
    %32 = arith.truncf %31 : vector<64x128xf32> to vector<64x128xbf16>
    %c512 = arith.constant 512 : index
    %c0_26 = arith.constant 0 : index
    %33 = vector.load %arg2[%c512, %c0_26] : memref<1152x128xbf16, #tpu.memory_space<vmem>>, vector<128x128xbf16>
    %cst_27 = arith.constant dense<0.000000e+00> : vector<64x128xf32>
    %34 = tpu.matmul %32, %33, %cst_27 {dimension_numbers = #tpu.dot_dimension_numbers<[1], [0], [0], [1], [0, 0, 1, 1], [], []>} : vector<64x128xbf16>, vector<128x128xbf16>, vector<64x128xf32> -> vector<64x128xf32>
    %35 = arith.addf %28, %34 : vector<64x128xf32>
    %c0_28 = arith.constant 0 : index
    %c1_29 = arith.constant 1 : index
    %c2_30 = arith.constant 2 : index
    %c0_31 = arith.constant 0 : index
    %36 = vector.load %arg1[%c0_28, %c1_29, %c2_30, %c0_31] : memref<1x10x10x128xf32, #tpu.memory_space<vmem>>, vector<1x8x8x128xf32>
    %37 = vector.shape_cast %36 : vector<1x8x8x128xf32> to vector<8x8x128xf32>
    %38 = vector.shape_cast %37 : vector<8x8x128xf32> to vector<64x128xf32>
    %39 = arith.truncf %38 : vector<64x128xf32> to vector<64x128xbf16>
    %c640 = arith.constant 640 : index
    %c0_32 = arith.constant 0 : index
    %40 = vector.load %arg2[%c640, %c0_32] : memref<1152x128xbf16, #tpu.memory_space<vmem>>, vector<128x128xbf16>
    %cst_33 = arith.constant dense<0.000000e+00> : vector<64x128xf32>
    %41 = tpu.matmul %39, %40, %cst_33 {dimension_numbers = #tpu.dot_dimension_numbers<[1], [0], [0], [1], [0, 0, 1, 1], [], []>} : vector<64x128xbf16>, vector<128x128xbf16>, vector<64x128xf32> -> vector<64x128xf32>
    %42 = arith.addf %35, %41 : vector<64x128xf32>
    %c0_34 = arith.constant 0 : index
    %c2_35 = arith.constant 2 : index
    %c0_36 = arith.constant 0 : index
    %c0_37 = arith.constant 0 : index
    %43 = vector.load %arg1[%c0_34, %c2_35, %c0_36, %c0_37] : memref<1x10x10x128xf32, #tpu.memory_space<vmem>>, vector<1x8x8x128xf32>
    %44 = vector.shape_cast %43 : vector<1x8x8x128xf32> to vector<8x8x128xf32>
    %45 = vector.shape_cast %44 : vector<8x8x128xf32> to vector<64x128xf32>
    %46 = arith.truncf %45 : vector<64x128xf32> to vector<64x128xbf16>
    %c768 = arith.constant 768 : index
    %c0_38 = arith.constant 0 : index
    %47 = vector.load %arg2[%c768, %c0_38] : memref<1152x128xbf16, #tpu.memory_space<vmem>>, vector<128x128xbf16>
    %cst_39 = arith.constant dense<0.000000e+00> : vector<64x128xf32>
    %48 = tpu.matmul %46, %47, %cst_39 {dimension_numbers = #tpu.dot_dimension_numbers<[1], [0], [0], [1], [0, 0, 1, 1], [], []>} : vector<64x128xbf16>, vector<128x128xbf16>, vector<64x128xf32> -> vector<64x128xf32>
    %49 = arith.addf %42, %48 : vector<64x128xf32>
    %c0_40 = arith.constant 0 : index
    %c2_41 = arith.constant 2 : index
    %c1_42 = arith.constant 1 : index
    %c0_43 = arith.constant 0 : index
    %50 = vector.load %arg1[%c0_40, %c2_41, %c1_42, %c0_43] : memref<1x10x10x128xf32, #tpu.memory_space<vmem>>, vector<1x8x8x128xf32>
    %51 = vector.shape_cast %50 : vector<1x8x8x128xf32> to vector<8x8x128xf32>
    %52 = vector.shape_cast %51 : vector<8x8x128xf32> to vector<64x128xf32>
    %53 = arith.truncf %52 : vector<64x128xf32> to vector<64x128xbf16>
    %c896 = arith.constant 896 : index
    %c0_44 = arith.constant 0 : index
    %54 = vector.load %arg2[%c896, %c0_44] : memref<1152x128xbf16, #tpu.memory_space<vmem>>, vector<128x128xbf16>
    %cst_45 = arith.constant dense<0.000000e+00> : vector<64x128xf32>
    %55 = tpu.matmul %53, %54, %cst_45 {dimension_numbers = #tpu.dot_dimension_numbers<[1], [0], [0], [1], [0, 0, 1, 1], [], []>} : vector<64x128xbf16>, vector<128x128xbf16>, vector<64x128xf32> -> vector<64x128xf32>
    %56 = arith.addf %49, %55 : vector<64x128xf32>
    %c0_46 = arith.constant 0 : index
    %c2_47 = arith.constant 2 : index
    %c2_48 = arith.constant 2 : index
    %c0_49 = arith.constant 0 : index
    %57 = vector.load %arg1[%c0_46, %c2_47, %c2_48, %c0_49] : memref<1x10x10x128xf32, #tpu.memory_space<vmem>>, vector<1x8x8x128xf32>
    %58 = vector.shape_cast %57 : vector<1x8x8x128xf32> to vector<8x8x128xf32>
    %59 = vector.shape_cast %58 : vector<8x8x128xf32> to vector<64x128xf32>
    %60 = arith.truncf %59 : vector<64x128xf32> to vector<64x128xbf16>
    %c1024 = arith.constant 1024 : index
    %c0_50 = arith.constant 0 : index
    %61 = vector.load %arg2[%c1024, %c0_50] : memref<1152x128xbf16, #tpu.memory_space<vmem>>, vector<128x128xbf16>
    %cst_51 = arith.constant dense<0.000000e+00> : vector<64x128xf32>
    %62 = tpu.matmul %60, %61, %cst_51 {dimension_numbers = #tpu.dot_dimension_numbers<[1], [0], [0], [1], [0, 0, 1, 1], [], []>} : vector<64x128xbf16>, vector<128x128xbf16>, vector<64x128xf32> -> vector<64x128xf32>
    %63 = arith.addf %56, %62 : vector<64x128xf32>
    %c0_52 = arith.constant 0 : index
    %c0_53 = arith.constant 0 : index
    %64 = vector.load %arg3[%c0_52, %c0_53] : memref<1x128xf32, #tpu.memory_space<vmem>>, vector<1x128xf32>
    %65 = vector.broadcast %64 : vector<1x128xf32> to vector<64x128xf32>
    %66 = arith.addf %63, %65 : vector<64x128xf32>
    %cst_54 = arith.constant 0.000000e+00 : f32
    %67 = vector.broadcast %cst_54 : f32 to vector<64x128xf32>
    %68 = arith.maximumf %66, %67 : vector<64x128xf32>
    %cst_55 = arith.constant 0.000000e+00 : f32
    %69 = vector.broadcast %cst_55 : f32 to vector<10x10x128xf32>
    %c0_56 = arith.constant 0 : index
    %c0_57 = arith.constant 0 : index
    %c0_58 = arith.constant 0 : index
    %70 = vector.load %arg7[%c0_56, %c0_57, %c0_58] : memref<10x10x128xf32, #tpu.memory_space<vmem>>, vector<10x10x128xf32>
    tpu.vector_store %arg7[%c0_56, %c0_57, %c0_58], %69 {strides = array<i32>} : memref<10x10x128xf32, #tpu.memory_space<vmem>>, vector<10x10x128xf32>,
    %71 = vector.shape_cast %68 : vector<64x128xf32> to vector<8x8x128xf32>
    %c1_59 = arith.constant 1 : index
    %c1_60 = arith.constant 1 : index
    %c0_61 = arith.constant 0 : index
    %72 = vector.load %arg7[%c1_59, %c1_60, %c0_61] : memref<10x10x128xf32, #tpu.memory_space<vmem>>, vector<8x8x128xf32>
    tpu.vector_store %arg7[%c1_59, %c1_60, %c0_61], %71 {strides = array<i32>} : memref<10x10x128xf32, #tpu.memory_space<vmem>>, vector<8x8x128xf32>,
    %cst_62 = arith.constant 0.000000e+00 : f32
    %73 = vector.broadcast %cst_62 : f32 to vector<64x128xf32>
    %c0_63 = arith.constant 0 : index
    %c0_64 = arith.constant 0 : index
    %c0_65 = arith.constant 0 : index
    %74 = vector.load %arg7[%c0_63, %c0_64, %c0_65] : memref<10x10x128xf32, #tpu.memory_space<vmem>>, vector<8x8x128xf32>
    %75 = vector.shape_cast %74 : vector<8x8x128xf32> to vector<64x128xf32>
    %76 = arith.truncf %75 : vector<64x128xf32> to vector<64x128xbf16>
    %c0_66 = arith.constant 0 : index
    %c0_67 = arith.constant 0 : index
    %77 = vector.load %arg4[%c0_66, %c0_67] : memref<1152x128xbf16, #tpu.memory_space<vmem>>, vector<128x128xbf16>
    %cst_68 = arith.constant dense<0.000000e+00> : vector<64x128xf32>
    %78 = tpu.matmul %76, %77, %cst_68 {dimension_numbers = #tpu.dot_dimension_numbers<[1], [0], [0], [1], [0, 0, 1, 1], [], []>} : vector<64x128xbf16>, vector<128x128xbf16>, vector<64x128xf32> -> vector<64x128xf32>
    %79 = arith.addf %73, %78 : vector<64x128xf32>
    %c0_69 = arith.constant 0 : index
    %c1_70 = arith.constant 1 : index
    %c0_71 = arith.constant 0 : index
    %80 = vector.load %arg7[%c0_69, %c1_70, %c0_71] : memref<10x10x128xf32, #tpu.memory_space<vmem>>, vector<8x8x128xf32>
    %81 = vector.shape_cast %80 : vector<8x8x128xf32> to vector<64x128xf32>
    %82 = arith.truncf %81 : vector<64x128xf32> to vector<64x128xbf16>
    %c128_72 = arith.constant 128 : index
    %c0_73 = arith.constant 0 : index
    %83 = vector.load %arg4[%c128_72, %c0_73] : memref<1152x128xbf16, #tpu.memory_space<vmem>>, vector<128x128xbf16>
    %cst_74 = arith.constant dense<0.000000e+00> : vector<64x128xf32>
    %84 = tpu.matmul %82, %83, %cst_74 {dimension_numbers = #tpu.dot_dimension_numbers<[1], [0], [0], [1], [0, 0, 1, 1], [], []>} : vector<64x128xbf16>, vector<128x128xbf16>, vector<64x128xf32> -> vector<64x128xf32>
    %85 = arith.addf %79, %84 : vector<64x128xf32>
    %c0_75 = arith.constant 0 : index
    %c2_76 = arith.constant 2 : index
    %c0_77 = arith.constant 0 : index
    %86 = vector.load %arg7[%c0_75, %c2_76, %c0_77] : memref<10x10x128xf32, #tpu.memory_space<vmem>>, vector<8x8x128xf32>
    %87 = vector.shape_cast %86 : vector<8x8x128xf32> to vector<64x128xf32>
    %88 = arith.truncf %87 : vector<64x128xf32> to vector<64x128xbf16>
    %c256_78 = arith.constant 256 : index
    %c0_79 = arith.constant 0 : index
    %89 = vector.load %arg4[%c256_78, %c0_79] : memref<1152x128xbf16, #tpu.memory_space<vmem>>, vector<128x128xbf16>
    %cst_80 = arith.constant dense<0.000000e+00> : vector<64x128xf32>
    %90 = tpu.matmul %88, %89, %cst_80 {dimension_numbers = #tpu.dot_dimension_numbers<[1], [0], [0], [1], [0, 0, 1, 1], [], []>} : vector<64x128xbf16>, vector<128x128xbf16>, vector<64x128xf32> -> vector<64x128xf32>
    %91 = arith.addf %85, %90 : vector<64x128xf32>
    %c1_81 = arith.constant 1 : index
    %c0_82 = arith.constant 0 : index
    %c0_83 = arith.constant 0 : index
    %92 = vector.load %arg7[%c1_81, %c0_82, %c0_83] : memref<10x10x128xf32, #tpu.memory_space<vmem>>, vector<8x8x128xf32>
    %93 = vector.shape_cast %92 : vector<8x8x128xf32> to vector<64x128xf32>
    %94 = arith.truncf %93 : vector<64x128xf32> to vector<64x128xbf16>
    %c384_84 = arith.constant 384 : index
    %c0_85 = arith.constant 0 : index
    %95 = vector.load %arg4[%c384_84, %c0_85] : memref<1152x128xbf16, #tpu.memory_space<vmem>>, vector<128x128xbf16>
    %cst_86 = arith.constant dense<0.000000e+00> : vector<64x128xf32>
    %96 = tpu.matmul %94, %95, %cst_86 {dimension_numbers = #tpu.dot_dimension_numbers<[1], [0], [0], [1], [0, 0, 1, 1], [], []>} : vector<64x128xbf16>, vector<128x128xbf16>, vector<64x128xf32> -> vector<64x128xf32>
    %97 = arith.addf %91, %96 : vector<64x128xf32>
    %c1_87 = arith.constant 1 : index
    %c1_88 = arith.constant 1 : index
    %c0_89 = arith.constant 0 : index
    %98 = vector.load %arg7[%c1_87, %c1_88, %c0_89] : memref<10x10x128xf32, #tpu.memory_space<vmem>>, vector<8x8x128xf32>
    %99 = vector.shape_cast %98 : vector<8x8x128xf32> to vector<64x128xf32>
    %100 = arith.truncf %99 : vector<64x128xf32> to vector<64x128xbf16>
    %c512_90 = arith.constant 512 : index
    %c0_91 = arith.constant 0 : index
    %101 = vector.load %arg4[%c512_90, %c0_91] : memref<1152x128xbf16, #tpu.memory_space<vmem>>, vector<128x128xbf16>
    %cst_92 = arith.constant dense<0.000000e+00> : vector<64x128xf32>
    %102 = tpu.matmul %100, %101, %cst_92 {dimension_numbers = #tpu.dot_dimension_numbers<[1], [0], [0], [1], [0, 0, 1, 1], [], []>} : vector<64x128xbf16>, vector<128x128xbf16>, vector<64x128xf32> -> vector<64x128xf32>
    %103 = arith.addf %97, %102 : vector<64x128xf32>
    %c1_93 = arith.constant 1 : index
    %c2_94 = arith.constant 2 : index
    %c0_95 = arith.constant 0 : index
    %104 = vector.load %arg7[%c1_93, %c2_94, %c0_95] : memref<10x10x128xf32, #tpu.memory_space<vmem>>, vector<8x8x128xf32>
    %105 = vector.shape_cast %104 : vector<8x8x128xf32> to vector<64x128xf32>
    %106 = arith.truncf %105 : vector<64x128xf32> to vector<64x128xbf16>
    %c640_96 = arith.constant 640 : index
    %c0_97 = arith.constant 0 : index
    %107 = vector.load %arg4[%c640_96, %c0_97] : memref<1152x128xbf16, #tpu.memory_space<vmem>>, vector<128x128xbf16>
    %cst_98 = arith.constant dense<0.000000e+00> : vector<64x128xf32>
    %108 = tpu.matmul %106, %107, %cst_98 {dimension_numbers = #tpu.dot_dimension_numbers<[1], [0], [0], [1], [0, 0, 1, 1], [], []>} : vector<64x128xbf16>, vector<128x128xbf16>, vector<64x128xf32> -> vector<64x128xf32>
    %109 = arith.addf %103, %108 : vector<64x128xf32>
    %c2_99 = arith.constant 2 : index
    %c0_100 = arith.constant 0 : index
    %c0_101 = arith.constant 0 : index
    %110 = vector.load %arg7[%c2_99, %c0_100, %c0_101] : memref<10x10x128xf32, #tpu.memory_space<vmem>>, vector<8x8x128xf32>
    %111 = vector.shape_cast %110 : vector<8x8x128xf32> to vector<64x128xf32>
    %112 = arith.truncf %111 : vector<64x128xf32> to vector<64x128xbf16>
    %c768_102 = arith.constant 768 : index
    %c0_103 = arith.constant 0 : index
    %113 = vector.load %arg4[%c768_102, %c0_103] : memref<1152x128xbf16, #tpu.memory_space<vmem>>, vector<128x128xbf16>
    %cst_104 = arith.constant dense<0.000000e+00> : vector<64x128xf32>
    %114 = tpu.matmul %112, %113, %cst_104 {dimension_numbers = #tpu.dot_dimension_numbers<[1], [0], [0], [1], [0, 0, 1, 1], [], []>} : vector<64x128xbf16>, vector<128x128xbf16>, vector<64x128xf32> -> vector<64x128xf32>
    %115 = arith.addf %109, %114 : vector<64x128xf32>
    %c2_105 = arith.constant 2 : index
    %c1_106 = arith.constant 1 : index
    %c0_107 = arith.constant 0 : index
    %116 = vector.load %arg7[%c2_105, %c1_106, %c0_107] : memref<10x10x128xf32, #tpu.memory_space<vmem>>, vector<8x8x128xf32>
    %117 = vector.shape_cast %116 : vector<8x8x128xf32> to vector<64x128xf32>
    %118 = arith.truncf %117 : vector<64x128xf32> to vector<64x128xbf16>
    %c896_108 = arith.constant 896 : index
    %c0_109 = arith.constant 0 : index
    %119 = vector.load %arg4[%c896_108, %c0_109] : memref<1152x128xbf16, #tpu.memory_space<vmem>>, vector<128x128xbf16>
    %cst_110 = arith.constant dense<0.000000e+00> : vector<64x128xf32>
    %120 = tpu.matmul %118, %119, %cst_110 {dimension_numbers = #tpu.dot_dimension_numbers<[1], [0], [0], [1], [0, 0, 1, 1], [], []>} : vector<64x128xbf16>, vector<128x128xbf16>, vector<64x128xf32> -> vector<64x128xf32>
    %121 = arith.addf %115, %120 : vector<64x128xf32>
    %c2_111 = arith.constant 2 : index
    %c2_112 = arith.constant 2 : index
    %c0_113 = arith.constant 0 : index
    %122 = vector.load %arg7[%c2_111, %c2_112, %c0_113] : memref<10x10x128xf32, #tpu.memory_space<vmem>>, vector<8x8x128xf32>
    %123 = vector.shape_cast %122 : vector<8x8x128xf32> to vector<64x128xf32>
    %124 = arith.truncf %123 : vector<64x128xf32> to vector<64x128xbf16>
    %c1024_114 = arith.constant 1024 : index
    %c0_115 = arith.constant 0 : index
    %125 = vector.load %arg4[%c1024_114, %c0_115] : memref<1152x128xbf16, #tpu.memory_space<vmem>>, vector<128x128xbf16>
    %cst_116 = arith.constant dense<0.000000e+00> : vector<64x128xf32>
    %126 = tpu.matmul %124, %125, %cst_116 {dimension_numbers = #tpu.dot_dimension_numbers<[1], [0], [0], [1], [0, 0, 1, 1], [], []>} : vector<64x128xbf16>, vector<128x128xbf16>, vector<64x128xf32> -> vector<64x128xf32>
    %127 = arith.addf %121, %126 : vector<64x128xf32>
    %c0_117 = arith.constant 0 : index
    %c0_118 = arith.constant 0 : index
    %128 = vector.load %arg5[%c0_117, %c0_118] : memref<1x128xf32, #tpu.memory_space<vmem>>, vector<1x128xf32>
    %129 = vector.broadcast %128 : vector<1x128xf32> to vector<64x128xf32>
    %130 = arith.addf %127, %129 : vector<64x128xf32>
    %c0_119 = arith.constant 0 : index
    %c1_120 = arith.constant 1 : index
    %c1_121 = arith.constant 1 : index
    %c0_122 = arith.constant 0 : index
    %131 = vector.load %arg1[%c0_119, %c1_120, %c1_121, %c0_122] : memref<1x10x10x128xf32, #tpu.memory_space<vmem>>, vector<1x8x8x128xf32>
    %132 = vector.shape_cast %131 : vector<1x8x8x128xf32> to vector<8x8x128xf32>
    %133 = vector.shape_cast %132 : vector<8x8x128xf32> to vector<64x128xf32>
    %134 = arith.addf %130, %133 : vector<64x128xf32>
    %cst_123 = arith.constant 0.000000e+00 : f32
    %135 = vector.broadcast %cst_123 : f32 to vector<64x128xf32>
    %136 = arith.maximumf %134, %135 : vector<64x128xf32>
    %137 = vector.shape_cast %136 : vector<64x128xf32> to vector<1x8x8x128xf32>
    %138 = arith.truncf %137 : vector<1x8x8x128xf32> to vector<1x8x8x128xbf16>
    %c0_124 = arith.constant 0 : index
    %c0_125 = arith.constant 0 : index
    %c0_126 = arith.constant 0 : index
    %c0_127 = arith.constant 0 : index
    %139 = vector.load %arg6[%c0_124, %c0_125, %c0_126, %c0_127] : memref<1x8x8x128xbf16, #tpu.memory_space<vmem>>, vector<1x8x8x128xbf16>
    tpu.vector_store %arg6[%c0_124, %c0_125, %c0_126, %c0_127], %138 {strides = array<i32>} : memref<1x8x8x128xbf16, #tpu.memory_space<vmem>>, vector<1x8x8x128xbf16>,
    return
  }
  func.func @transform_0(%arg0: i32) -> (i32, i32, i32, i32) {
    %c0_i32 = arith.constant 0 : i32
    %c0_i32_0 = arith.constant 0 : i32
    %c0_i32_1 = arith.constant 0 : i32
    %c0_i32_2 = arith.constant 0 : i32
    return %arg0, %c0_i32, %c0_i32_0, %c0_i32_1 : i32, i32, i32, i32
  }
  func.func @transform_1(%arg0: i32) -> (i32, i32) {
    %c0_i32 = arith.constant 0 : i32
    %c0_i32_0 = arith.constant 0 : i32
    %c0_i32_1 = arith.constant 0 : i32
    return %c0_i32, %c0_i32_0 : i32, i32
  }
  func.func @transform_2(%arg0: i32) -> (i32, i32) {
    %c0_i32 = arith.constant 0 : i32
    %c0_i32_0 = arith.constant 0 : i32
    %c0_i32_1 = arith.constant 0 : i32
    return %c0_i32, %c0_i32_0 : i32, i32
  }
  func.func @transform_3(%arg0: i32) -> (i32, i32) {
    %c0_i32 = arith.constant 0 : i32
    %c0_i32_0 = arith.constant 0 : i32
    %c0_i32_1 = arith.constant 0 : i32
    return %c0_i32, %c0_i32_0 : i32, i32
  }
  func.func @transform_4(%arg0: i32) -> (i32, i32) {
    %c0_i32 = arith.constant 0 : i32
    %c0_i32_0 = arith.constant 0 : i32
    %c0_i32_1 = arith.constant 0 : i32
    return %c0_i32, %c0_i32_0 : i32, i32
  }
  func.func @transform_5(%arg0: i32) -> (i32, i32, i32, i32) {
    %c0_i32 = arith.constant 0 : i32
    %c0_i32_0 = arith.constant 0 : i32
    %c0_i32_1 = arith.constant 0 : i32
    %c0_i32_2 = arith.constant 0 : i32
    return %arg0, %c0_i32, %c0_i32_0, %c0_i32_1 : i32, i32, i32, i32
  }
}

module attributes {stable_mosaic.version = 11 : i64} {
  func.func @kernel(%arg0: i32, %arg1: memref<4x9x9x128xf32, #tpu.memory_space<vmem>>, %arg2: memref<1152x128xbf16, #tpu.memory_space<vmem>>, %arg3: memref<1x128xf32, #tpu.memory_space<vmem>>, %arg4: memref<1152x128xbf16, #tpu.memory_space<vmem>>, %arg5: memref<1x128xf32, #tpu.memory_space<vmem>>, %arg6: memref<128x128xbf16, #tpu.memory_space<vmem>>, %arg7: memref<1x128xf32, #tpu.memory_space<vmem>>, %arg8: memref<1x8x8x128xbf16, #tpu.memory_space<vmem>>, %arg9: memref<10x10x128xf32, #tpu.memory_space<vmem>>) attributes {dimension_semantics = [#tpu.dimension_semantics<parallel>], iteration_bounds = array<i64: 2>, scalar_prefetch = 0 : i64, scratch_operands = 1 : i64, tpu.core_type = #tpu.core_type<tc>, window_params = [{transform_indices = @transform_0, window_bounds = array<i64: 4, 9, 9, 128>}, {pipeline_mode = #tpu.pipeline_mode<synchronous>, transform_indices = @transform_1, window_bounds = array<i64: 1152, 128>}, {pipeline_mode = #tpu.pipeline_mode<synchronous>, transform_indices = @transform_2, window_bounds = array<i64: 1, 128>}, {pipeline_mode = #tpu.pipeline_mode<synchronous>, transform_indices = @transform_3, window_bounds = array<i64: 1152, 128>}, {pipeline_mode = #tpu.pipeline_mode<synchronous>, transform_indices = @transform_4, window_bounds = array<i64: 1, 128>}, {pipeline_mode = #tpu.pipeline_mode<synchronous>, transform_indices = @transform_5, window_bounds = array<i64: 128, 128>}, {pipeline_mode = #tpu.pipeline_mode<synchronous>, transform_indices = @transform_6, window_bounds = array<i64: 1, 128>}, {transform_indices = @transform_7, window_bounds = array<i64: 1, 8, 8, 128>}]} {
    %cst = arith.constant 0.000000e+00 : f32
    %0 = vector.broadcast %cst : f32 to vector<64x128xf32>
    %c0 = arith.constant 0 : index
    %c0_0 = arith.constant 0 : index
    %c0_1 = arith.constant 0 : index
    %c0_2 = arith.constant 0 : index
    %1 = vector.load %arg1[%c0, %c0_0, %c0_1, %c0_2] : memref<4x9x9x128xf32, #tpu.memory_space<vmem>>, vector<1x8x8x128xf32>
    %2 = vector.shape_cast %1 : vector<1x8x8x128xf32> to vector<8x8x128xf32>
    %3 = vector.shape_cast %2 : vector<8x8x128xf32> to vector<64x128xf32>
    %4 = arith.truncf %3 : vector<64x128xf32> to vector<64x128xbf16>
    %c0_3 = arith.constant 0 : index
    %c0_4 = arith.constant 0 : index
    %5 = vector.load %arg2[%c0_3, %c0_4] : memref<1152x128xbf16, #tpu.memory_space<vmem>>, vector<128x128xbf16>
    %cst_5 = arith.constant dense<0.000000e+00> : vector<64x128xf32>
    %6 = tpu.matmul %4, %5, %cst_5 {dimension_numbers = #tpu.dot_dimension_numbers<[1], [0], [0], [1], [0, 0, 1, 1], [], []>} : vector<64x128xbf16>, vector<128x128xbf16>, vector<64x128xf32> -> vector<64x128xf32>
    %7 = arith.addf %0, %6 : vector<64x128xf32>
    %c1 = arith.constant 1 : index
    %c0_6 = arith.constant 0 : index
    %c0_7 = arith.constant 0 : index
    %c0_8 = arith.constant 0 : index
    %8 = vector.load %arg1[%c1, %c0_6, %c0_7, %c0_8] : memref<4x9x9x128xf32, #tpu.memory_space<vmem>>, vector<1x8x8x128xf32>
    %9 = vector.shape_cast %8 : vector<1x8x8x128xf32> to vector<8x8x128xf32>
    %10 = vector.shape_cast %9 : vector<8x8x128xf32> to vector<64x128xf32>
    %11 = arith.truncf %10 : vector<64x128xf32> to vector<64x128xbf16>
    %c128 = arith.constant 128 : index
    %c0_9 = arith.constant 0 : index
    %12 = vector.load %arg2[%c128, %c0_9] : memref<1152x128xbf16, #tpu.memory_space<vmem>>, vector<128x128xbf16>
    %cst_10 = arith.constant dense<0.000000e+00> : vector<64x128xf32>
    %13 = tpu.matmul %11, %12, %cst_10 {dimension_numbers = #tpu.dot_dimension_numbers<[1], [0], [0], [1], [0, 0, 1, 1], [], []>} : vector<64x128xbf16>, vector<128x128xbf16>, vector<64x128xf32> -> vector<64x128xf32>
    %14 = arith.addf %7, %13 : vector<64x128xf32>
    %c0_11 = arith.constant 0 : index
    %c0_12 = arith.constant 0 : index
    %c1_13 = arith.constant 1 : index
    %c0_14 = arith.constant 0 : index
    %15 = vector.load %arg1[%c0_11, %c0_12, %c1_13, %c0_14] : memref<4x9x9x128xf32, #tpu.memory_space<vmem>>, vector<1x8x8x128xf32>
    %16 = vector.shape_cast %15 : vector<1x8x8x128xf32> to vector<8x8x128xf32>
    %17 = vector.shape_cast %16 : vector<8x8x128xf32> to vector<64x128xf32>
    %18 = arith.truncf %17 : vector<64x128xf32> to vector<64x128xbf16>
    %c256 = arith.constant 256 : index
    %c0_15 = arith.constant 0 : index
    %19 = vector.load %arg2[%c256, %c0_15] : memref<1152x128xbf16, #tpu.memory_space<vmem>>, vector<128x128xbf16>
    %cst_16 = arith.constant dense<0.000000e+00> : vector<64x128xf32>
    %20 = tpu.matmul %18, %19, %cst_16 {dimension_numbers = #tpu.dot_dimension_numbers<[1], [0], [0], [1], [0, 0, 1, 1], [], []>} : vector<64x128xbf16>, vector<128x128xbf16>, vector<64x128xf32> -> vector<64x128xf32>
    %21 = arith.addf %14, %20 : vector<64x128xf32>
    %c2 = arith.constant 2 : index
    %c0_17 = arith.constant 0 : index
    %c0_18 = arith.constant 0 : index
    %c0_19 = arith.constant 0 : index
    %22 = vector.load %arg1[%c2, %c0_17, %c0_18, %c0_19] : memref<4x9x9x128xf32, #tpu.memory_space<vmem>>, vector<1x8x8x128xf32>
    %23 = vector.shape_cast %22 : vector<1x8x8x128xf32> to vector<8x8x128xf32>
    %24 = vector.shape_cast %23 : vector<8x8x128xf32> to vector<64x128xf32>
    %25 = arith.truncf %24 : vector<64x128xf32> to vector<64x128xbf16>
    %c384 = arith.constant 384 : index
    %c0_20 = arith.constant 0 : index
    %26 = vector.load %arg2[%c384, %c0_20] : memref<1152x128xbf16, #tpu.memory_space<vmem>>, vector<128x128xbf16>
    %cst_21 = arith.constant dense<0.000000e+00> : vector<64x128xf32>
    %27 = tpu.matmul %25, %26, %cst_21 {dimension_numbers = #tpu.dot_dimension_numbers<[1], [0], [0], [1], [0, 0, 1, 1], [], []>} : vector<64x128xbf16>, vector<128x128xbf16>, vector<64x128xf32> -> vector<64x128xf32>
    %28 = arith.addf %21, %27 : vector<64x128xf32>
    %c3 = arith.constant 3 : index
    %c0_22 = arith.constant 0 : index
    %c0_23 = arith.constant 0 : index
    %c0_24 = arith.constant 0 : index
    %29 = vector.load %arg1[%c3, %c0_22, %c0_23, %c0_24] : memref<4x9x9x128xf32, #tpu.memory_space<vmem>>, vector<1x8x8x128xf32>
    %30 = vector.shape_cast %29 : vector<1x8x8x128xf32> to vector<8x8x128xf32>
    %31 = vector.shape_cast %30 : vector<8x8x128xf32> to vector<64x128xf32>
    %32 = arith.truncf %31 : vector<64x128xf32> to vector<64x128xbf16>
    %c512 = arith.constant 512 : index
    %c0_25 = arith.constant 0 : index
    %33 = vector.load %arg2[%c512, %c0_25] : memref<1152x128xbf16, #tpu.memory_space<vmem>>, vector<128x128xbf16>
    %cst_26 = arith.constant dense<0.000000e+00> : vector<64x128xf32>
    %34 = tpu.matmul %32, %33, %cst_26 {dimension_numbers = #tpu.dot_dimension_numbers<[1], [0], [0], [1], [0, 0, 1, 1], [], []>} : vector<64x128xbf16>, vector<128x128xbf16>, vector<64x128xf32> -> vector<64x128xf32>
    %35 = arith.addf %28, %34 : vector<64x128xf32>
    %c2_27 = arith.constant 2 : index
    %c0_28 = arith.constant 0 : index
    %c1_29 = arith.constant 1 : index
    %c0_30 = arith.constant 0 : index
    %36 = vector.load %arg1[%c2_27, %c0_28, %c1_29, %c0_30] : memref<4x9x9x128xf32, #tpu.memory_space<vmem>>, vector<1x8x8x128xf32>
    %37 = vector.shape_cast %36 : vector<1x8x8x128xf32> to vector<8x8x128xf32>
    %38 = vector.shape_cast %37 : vector<8x8x128xf32> to vector<64x128xf32>
    %39 = arith.truncf %38 : vector<64x128xf32> to vector<64x128xbf16>
    %c640 = arith.constant 640 : index
    %c0_31 = arith.constant 0 : index
    %40 = vector.load %arg2[%c640, %c0_31] : memref<1152x128xbf16, #tpu.memory_space<vmem>>, vector<128x128xbf16>
    %cst_32 = arith.constant dense<0.000000e+00> : vector<64x128xf32>
    %41 = tpu.matmul %39, %40, %cst_32 {dimension_numbers = #tpu.dot_dimension_numbers<[1], [0], [0], [1], [0, 0, 1, 1], [], []>} : vector<64x128xbf16>, vector<128x128xbf16>, vector<64x128xf32> -> vector<64x128xf32>
    %42 = arith.addf %35, %41 : vector<64x128xf32>
    %c0_33 = arith.constant 0 : index
    %c1_34 = arith.constant 1 : index
    %c0_35 = arith.constant 0 : index
    %c0_36 = arith.constant 0 : index
    %43 = vector.load %arg1[%c0_33, %c1_34, %c0_35, %c0_36] : memref<4x9x9x128xf32, #tpu.memory_space<vmem>>, vector<1x8x8x128xf32>
    %44 = vector.shape_cast %43 : vector<1x8x8x128xf32> to vector<8x8x128xf32>
    %45 = vector.shape_cast %44 : vector<8x8x128xf32> to vector<64x128xf32>
    %46 = arith.truncf %45 : vector<64x128xf32> to vector<64x128xbf16>
    %c768 = arith.constant 768 : index
    %c0_37 = arith.constant 0 : index
    %47 = vector.load %arg2[%c768, %c0_37] : memref<1152x128xbf16, #tpu.memory_space<vmem>>, vector<128x128xbf16>
    %cst_38 = arith.constant dense<0.000000e+00> : vector<64x128xf32>
    %48 = tpu.matmul %46, %47, %cst_38 {dimension_numbers = #tpu.dot_dimension_numbers<[1], [0], [0], [1], [0, 0, 1, 1], [], []>} : vector<64x128xbf16>, vector<128x128xbf16>, vector<64x128xf32> -> vector<64x128xf32>
    %49 = arith.addf %42, %48 : vector<64x128xf32>
    %c1_39 = arith.constant 1 : index
    %c1_40 = arith.constant 1 : index
    %c0_41 = arith.constant 0 : index
    %c0_42 = arith.constant 0 : index
    %50 = vector.load %arg1[%c1_39, %c1_40, %c0_41, %c0_42] : memref<4x9x9x128xf32, #tpu.memory_space<vmem>>, vector<1x8x8x128xf32>
    %51 = vector.shape_cast %50 : vector<1x8x8x128xf32> to vector<8x8x128xf32>
    %52 = vector.shape_cast %51 : vector<8x8x128xf32> to vector<64x128xf32>
    %53 = arith.truncf %52 : vector<64x128xf32> to vector<64x128xbf16>
    %c896 = arith.constant 896 : index
    %c0_43 = arith.constant 0 : index
    %54 = vector.load %arg2[%c896, %c0_43] : memref<1152x128xbf16, #tpu.memory_space<vmem>>, vector<128x128xbf16>
    %cst_44 = arith.constant dense<0.000000e+00> : vector<64x128xf32>
    %55 = tpu.matmul %53, %54, %cst_44 {dimension_numbers = #tpu.dot_dimension_numbers<[1], [0], [0], [1], [0, 0, 1, 1], [], []>} : vector<64x128xbf16>, vector<128x128xbf16>, vector<64x128xf32> -> vector<64x128xf32>
    %56 = arith.addf %49, %55 : vector<64x128xf32>
    %c0_45 = arith.constant 0 : index
    %c1_46 = arith.constant 1 : index
    %c1_47 = arith.constant 1 : index
    %c0_48 = arith.constant 0 : index
    %57 = vector.load %arg1[%c0_45, %c1_46, %c1_47, %c0_48] : memref<4x9x9x128xf32, #tpu.memory_space<vmem>>, vector<1x8x8x128xf32>
    %58 = vector.shape_cast %57 : vector<1x8x8x128xf32> to vector<8x8x128xf32>
    %59 = vector.shape_cast %58 : vector<8x8x128xf32> to vector<64x128xf32>
    %60 = arith.truncf %59 : vector<64x128xf32> to vector<64x128xbf16>
    %c1024 = arith.constant 1024 : index
    %c0_49 = arith.constant 0 : index
    %61 = vector.load %arg2[%c1024, %c0_49] : memref<1152x128xbf16, #tpu.memory_space<vmem>>, vector<128x128xbf16>
    %cst_50 = arith.constant dense<0.000000e+00> : vector<64x128xf32>
    %62 = tpu.matmul %60, %61, %cst_50 {dimension_numbers = #tpu.dot_dimension_numbers<[1], [0], [0], [1], [0, 0, 1, 1], [], []>} : vector<64x128xbf16>, vector<128x128xbf16>, vector<64x128xf32> -> vector<64x128xf32>
    %63 = arith.addf %56, %62 : vector<64x128xf32>
    %c0_51 = arith.constant 0 : index
    %c0_52 = arith.constant 0 : index
    %64 = vector.load %arg3[%c0_51, %c0_52] : memref<1x128xf32, #tpu.memory_space<vmem>>, vector<1x128xf32>
    %65 = vector.broadcast %64 : vector<1x128xf32> to vector<64x128xf32>
    %66 = arith.addf %63, %65 : vector<64x128xf32>
    %cst_53 = arith.constant 0.000000e+00 : f32
    %67 = vector.broadcast %cst_53 : f32 to vector<64x128xf32>
    %68 = arith.maximumf %66, %67 : vector<64x128xf32>
    %cst_54 = arith.constant 0.000000e+00 : f32
    %69 = vector.broadcast %cst_54 : f32 to vector<10x10x128xf32>
    %c0_55 = arith.constant 0 : index
    %c0_56 = arith.constant 0 : index
    %c0_57 = arith.constant 0 : index
    %70 = vector.load %arg9[%c0_55, %c0_56, %c0_57] : memref<10x10x128xf32, #tpu.memory_space<vmem>>, vector<10x10x128xf32>
    tpu.vector_store %arg9[%c0_55, %c0_56, %c0_57], %69 {strides = array<i32>} : memref<10x10x128xf32, #tpu.memory_space<vmem>>, vector<10x10x128xf32>,
    %71 = vector.shape_cast %68 : vector<64x128xf32> to vector<8x8x128xf32>
    %c1_58 = arith.constant 1 : index
    %c1_59 = arith.constant 1 : index
    %c0_60 = arith.constant 0 : index
    %72 = vector.load %arg9[%c1_58, %c1_59, %c0_60] : memref<10x10x128xf32, #tpu.memory_space<vmem>>, vector<8x8x128xf32>
    tpu.vector_store %arg9[%c1_58, %c1_59, %c0_60], %71 {strides = array<i32>} : memref<10x10x128xf32, #tpu.memory_space<vmem>>, vector<8x8x128xf32>,
    %cst_61 = arith.constant 0.000000e+00 : f32
    %73 = vector.broadcast %cst_61 : f32 to vector<64x128xf32>
    %c0_62 = arith.constant 0 : index
    %c0_63 = arith.constant 0 : index
    %c0_64 = arith.constant 0 : index
    %74 = vector.load %arg9[%c0_62, %c0_63, %c0_64] : memref<10x10x128xf32, #tpu.memory_space<vmem>>, vector<8x8x128xf32>
    %75 = vector.shape_cast %74 : vector<8x8x128xf32> to vector<64x128xf32>
    %76 = arith.truncf %75 : vector<64x128xf32> to vector<64x128xbf16>
    %c0_65 = arith.constant 0 : index
    %c0_66 = arith.constant 0 : index
    %77 = vector.load %arg4[%c0_65, %c0_66] : memref<1152x128xbf16, #tpu.memory_space<vmem>>, vector<128x128xbf16>
    %cst_67 = arith.constant dense<0.000000e+00> : vector<64x128xf32>
    %78 = tpu.matmul %76, %77, %cst_67 {dimension_numbers = #tpu.dot_dimension_numbers<[1], [0], [0], [1], [0, 0, 1, 1], [], []>} : vector<64x128xbf16>, vector<128x128xbf16>, vector<64x128xf32> -> vector<64x128xf32>
    %79 = arith.addf %73, %78 : vector<64x128xf32>
    %c0_68 = arith.constant 0 : index
    %c1_69 = arith.constant 1 : index
    %c0_70 = arith.constant 0 : index
    %80 = vector.load %arg9[%c0_68, %c1_69, %c0_70] : memref<10x10x128xf32, #tpu.memory_space<vmem>>, vector<8x8x128xf32>
    %81 = vector.shape_cast %80 : vector<8x8x128xf32> to vector<64x128xf32>
    %82 = arith.truncf %81 : vector<64x128xf32> to vector<64x128xbf16>
    %c128_71 = arith.constant 128 : index
    %c0_72 = arith.constant 0 : index
    %83 = vector.load %arg4[%c128_71, %c0_72] : memref<1152x128xbf16, #tpu.memory_space<vmem>>, vector<128x128xbf16>
    %cst_73 = arith.constant dense<0.000000e+00> : vector<64x128xf32>
    %84 = tpu.matmul %82, %83, %cst_73 {dimension_numbers = #tpu.dot_dimension_numbers<[1], [0], [0], [1], [0, 0, 1, 1], [], []>} : vector<64x128xbf16>, vector<128x128xbf16>, vector<64x128xf32> -> vector<64x128xf32>
    %85 = arith.addf %79, %84 : vector<64x128xf32>
    %c0_74 = arith.constant 0 : index
    %c2_75 = arith.constant 2 : index
    %c0_76 = arith.constant 0 : index
    %86 = vector.load %arg9[%c0_74, %c2_75, %c0_76] : memref<10x10x128xf32, #tpu.memory_space<vmem>>, vector<8x8x128xf32>
    %87 = vector.shape_cast %86 : vector<8x8x128xf32> to vector<64x128xf32>
    %88 = arith.truncf %87 : vector<64x128xf32> to vector<64x128xbf16>
    %c256_77 = arith.constant 256 : index
    %c0_78 = arith.constant 0 : index
    %89 = vector.load %arg4[%c256_77, %c0_78] : memref<1152x128xbf16, #tpu.memory_space<vmem>>, vector<128x128xbf16>
    %cst_79 = arith.constant dense<0.000000e+00> : vector<64x128xf32>
    %90 = tpu.matmul %88, %89, %cst_79 {dimension_numbers = #tpu.dot_dimension_numbers<[1], [0], [0], [1], [0, 0, 1, 1], [], []>} : vector<64x128xbf16>, vector<128x128xbf16>, vector<64x128xf32> -> vector<64x128xf32>
    %91 = arith.addf %85, %90 : vector<64x128xf32>
    %c1_80 = arith.constant 1 : index
    %c0_81 = arith.constant 0 : index
    %c0_82 = arith.constant 0 : index
    %92 = vector.load %arg9[%c1_80, %c0_81, %c0_82] : memref<10x10x128xf32, #tpu.memory_space<vmem>>, vector<8x8x128xf32>
    %93 = vector.shape_cast %92 : vector<8x8x128xf32> to vector<64x128xf32>
    %94 = arith.truncf %93 : vector<64x128xf32> to vector<64x128xbf16>
    %c384_83 = arith.constant 384 : index
    %c0_84 = arith.constant 0 : index
    %95 = vector.load %arg4[%c384_83, %c0_84] : memref<1152x128xbf16, #tpu.memory_space<vmem>>, vector<128x128xbf16>
    %cst_85 = arith.constant dense<0.000000e+00> : vector<64x128xf32>
    %96 = tpu.matmul %94, %95, %cst_85 {dimension_numbers = #tpu.dot_dimension_numbers<[1], [0], [0], [1], [0, 0, 1, 1], [], []>} : vector<64x128xbf16>, vector<128x128xbf16>, vector<64x128xf32> -> vector<64x128xf32>
    %97 = arith.addf %91, %96 : vector<64x128xf32>
    %c1_86 = arith.constant 1 : index
    %c1_87 = arith.constant 1 : index
    %c0_88 = arith.constant 0 : index
    %98 = vector.load %arg9[%c1_86, %c1_87, %c0_88] : memref<10x10x128xf32, #tpu.memory_space<vmem>>, vector<8x8x128xf32>
    %99 = vector.shape_cast %98 : vector<8x8x128xf32> to vector<64x128xf32>
    %100 = arith.truncf %99 : vector<64x128xf32> to vector<64x128xbf16>
    %c512_89 = arith.constant 512 : index
    %c0_90 = arith.constant 0 : index
    %101 = vector.load %arg4[%c512_89, %c0_90] : memref<1152x128xbf16, #tpu.memory_space<vmem>>, vector<128x128xbf16>
    %cst_91 = arith.constant dense<0.000000e+00> : vector<64x128xf32>
    %102 = tpu.matmul %100, %101, %cst_91 {dimension_numbers = #tpu.dot_dimension_numbers<[1], [0], [0], [1], [0, 0, 1, 1], [], []>} : vector<64x128xbf16>, vector<128x128xbf16>, vector<64x128xf32> -> vector<64x128xf32>
    %103 = arith.addf %97, %102 : vector<64x128xf32>
    %c1_92 = arith.constant 1 : index
    %c2_93 = arith.constant 2 : index
    %c0_94 = arith.constant 0 : index
    %104 = vector.load %arg9[%c1_92, %c2_93, %c0_94] : memref<10x10x128xf32, #tpu.memory_space<vmem>>, vector<8x8x128xf32>
    %105 = vector.shape_cast %104 : vector<8x8x128xf32> to vector<64x128xf32>
    %106 = arith.truncf %105 : vector<64x128xf32> to vector<64x128xbf16>
    %c640_95 = arith.constant 640 : index
    %c0_96 = arith.constant 0 : index
    %107 = vector.load %arg4[%c640_95, %c0_96] : memref<1152x128xbf16, #tpu.memory_space<vmem>>, vector<128x128xbf16>
    %cst_97 = arith.constant dense<0.000000e+00> : vector<64x128xf32>
    %108 = tpu.matmul %106, %107, %cst_97 {dimension_numbers = #tpu.dot_dimension_numbers<[1], [0], [0], [1], [0, 0, 1, 1], [], []>} : vector<64x128xbf16>, vector<128x128xbf16>, vector<64x128xf32> -> vector<64x128xf32>
    %109 = arith.addf %103, %108 : vector<64x128xf32>
    %c2_98 = arith.constant 2 : index
    %c0_99 = arith.constant 0 : index
    %c0_100 = arith.constant 0 : index
    %110 = vector.load %arg9[%c2_98, %c0_99, %c0_100] : memref<10x10x128xf32, #tpu.memory_space<vmem>>, vector<8x8x128xf32>
    %111 = vector.shape_cast %110 : vector<8x8x128xf32> to vector<64x128xf32>
    %112 = arith.truncf %111 : vector<64x128xf32> to vector<64x128xbf16>
    %c768_101 = arith.constant 768 : index
    %c0_102 = arith.constant 0 : index
    %113 = vector.load %arg4[%c768_101, %c0_102] : memref<1152x128xbf16, #tpu.memory_space<vmem>>, vector<128x128xbf16>
    %cst_103 = arith.constant dense<0.000000e+00> : vector<64x128xf32>
    %114 = tpu.matmul %112, %113, %cst_103 {dimension_numbers = #tpu.dot_dimension_numbers<[1], [0], [0], [1], [0, 0, 1, 1], [], []>} : vector<64x128xbf16>, vector<128x128xbf16>, vector<64x128xf32> -> vector<64x128xf32>
    %115 = arith.addf %109, %114 : vector<64x128xf32>
    %c2_104 = arith.constant 2 : index
    %c1_105 = arith.constant 1 : index
    %c0_106 = arith.constant 0 : index
    %116 = vector.load %arg9[%c2_104, %c1_105, %c0_106] : memref<10x10x128xf32, #tpu.memory_space<vmem>>, vector<8x8x128xf32>
    %117 = vector.shape_cast %116 : vector<8x8x128xf32> to vector<64x128xf32>
    %118 = arith.truncf %117 : vector<64x128xf32> to vector<64x128xbf16>
    %c896_107 = arith.constant 896 : index
    %c0_108 = arith.constant 0 : index
    %119 = vector.load %arg4[%c896_107, %c0_108] : memref<1152x128xbf16, #tpu.memory_space<vmem>>, vector<128x128xbf16>
    %cst_109 = arith.constant dense<0.000000e+00> : vector<64x128xf32>
    %120 = tpu.matmul %118, %119, %cst_109 {dimension_numbers = #tpu.dot_dimension_numbers<[1], [0], [0], [1], [0, 0, 1, 1], [], []>} : vector<64x128xbf16>, vector<128x128xbf16>, vector<64x128xf32> -> vector<64x128xf32>
    %121 = arith.addf %115, %120 : vector<64x128xf32>
    %c2_110 = arith.constant 2 : index
    %c2_111 = arith.constant 2 : index
    %c0_112 = arith.constant 0 : index
    %122 = vector.load %arg9[%c2_110, %c2_111, %c0_112] : memref<10x10x128xf32, #tpu.memory_space<vmem>>, vector<8x8x128xf32>
    %123 = vector.shape_cast %122 : vector<8x8x128xf32> to vector<64x128xf32>
    %124 = arith.truncf %123 : vector<64x128xf32> to vector<64x128xbf16>
    %c1024_113 = arith.constant 1024 : index
    %c0_114 = arith.constant 0 : index
    %125 = vector.load %arg4[%c1024_113, %c0_114] : memref<1152x128xbf16, #tpu.memory_space<vmem>>, vector<128x128xbf16>
    %cst_115 = arith.constant dense<0.000000e+00> : vector<64x128xf32>
    %126 = tpu.matmul %124, %125, %cst_115 {dimension_numbers = #tpu.dot_dimension_numbers<[1], [0], [0], [1], [0, 0, 1, 1], [], []>} : vector<64x128xbf16>, vector<128x128xbf16>, vector<64x128xf32> -> vector<64x128xf32>
    %127 = arith.addf %121, %126 : vector<64x128xf32>
    %c0_116 = arith.constant 0 : index
    %c0_117 = arith.constant 0 : index
    %128 = vector.load %arg5[%c0_116, %c0_117] : memref<1x128xf32, #tpu.memory_space<vmem>>, vector<1x128xf32>
    %129 = vector.broadcast %128 : vector<1x128xf32> to vector<64x128xf32>
    %130 = arith.addf %127, %129 : vector<64x128xf32>
    %c3_118 = arith.constant 3 : index
    %c0_119 = arith.constant 0 : index
    %c0_120 = arith.constant 0 : index
    %c0_121 = arith.constant 0 : index
    %131 = vector.load %arg1[%c3_118, %c0_119, %c0_120, %c0_121] : memref<4x9x9x128xf32, #tpu.memory_space<vmem>>, vector<1x8x8x128xf32>
    %132 = vector.shape_cast %131 : vector<1x8x8x128xf32> to vector<8x8x128xf32>
    %133 = vector.shape_cast %132 : vector<8x8x128xf32> to vector<64x128xf32>
    %134 = arith.truncf %133 : vector<64x128xf32> to vector<64x128xbf16>
    %c0_122 = arith.constant 0 : index
    %c0_123 = arith.constant 0 : index
    %135 = vector.load %arg6[%c0_122, %c0_123] : memref<128x128xbf16, #tpu.memory_space<vmem>>, vector<128x128xbf16>
    %cst_124 = arith.constant dense<0.000000e+00> : vector<64x128xf32>
    %136 = tpu.matmul %134, %135, %cst_124 {dimension_numbers = #tpu.dot_dimension_numbers<[1], [0], [0], [1], [0, 0, 1, 1], [], []>} : vector<64x128xbf16>, vector<128x128xbf16>, vector<64x128xf32> -> vector<64x128xf32>
    %c0_125 = arith.constant 0 : index
    %c0_126 = arith.constant 0 : index
    %137 = vector.load %arg7[%c0_125, %c0_126] : memref<1x128xf32, #tpu.memory_space<vmem>>, vector<1x128xf32>
    %138 = vector.broadcast %137 : vector<1x128xf32> to vector<64x128xf32>
    %139 = arith.addf %136, %138 : vector<64x128xf32>
    %140 = arith.addf %130, %139 : vector<64x128xf32>
    %cst_127 = arith.constant 0.000000e+00 : f32
    %141 = vector.broadcast %cst_127 : f32 to vector<64x128xf32>
    %142 = arith.maximumf %140, %141 : vector<64x128xf32>
    %143 = vector.shape_cast %142 : vector<64x128xf32> to vector<1x8x8x128xf32>
    %144 = arith.truncf %143 : vector<1x8x8x128xf32> to vector<1x8x8x128xbf16>
    %c0_128 = arith.constant 0 : index
    %c0_129 = arith.constant 0 : index
    %c0_130 = arith.constant 0 : index
    %c0_131 = arith.constant 0 : index
    %145 = vector.load %arg8[%c0_128, %c0_129, %c0_130, %c0_131] : memref<1x8x8x128xbf16, #tpu.memory_space<vmem>>, vector<1x8x8x128xbf16>
    tpu.vector_store %arg8[%c0_128, %c0_129, %c0_130, %c0_131], %144 {strides = array<i32>} : memref<1x8x8x128xbf16, #tpu.memory_space<vmem>>, vector<1x8x8x128xbf16>,
    return
  }
  func.func @transform_0(%arg0: i32) -> (i32, i32, i32, i32) {
    %c0_i32 = arith.constant 0 : i32
    %c0_i32_0 = arith.constant 0 : i32
    %c0_i32_1 = arith.constant 0 : i32
    %c0_i32_2 = arith.constant 0 : i32
    return %arg0, %c0_i32, %c0_i32_0, %c0_i32_1 : i32, i32, i32, i32
  }
  func.func @transform_1(%arg0: i32) -> (i32, i32) {
    %c0_i32 = arith.constant 0 : i32
    %c0_i32_0 = arith.constant 0 : i32
    %c0_i32_1 = arith.constant 0 : i32
    return %c0_i32, %c0_i32_0 : i32, i32
  }
  func.func @transform_2(%arg0: i32) -> (i32, i32) {
    %c0_i32 = arith.constant 0 : i32
    %c0_i32_0 = arith.constant 0 : i32
    %c0_i32_1 = arith.constant 0 : i32
    return %c0_i32, %c0_i32_0 : i32, i32
  }
  func.func @transform_3(%arg0: i32) -> (i32, i32) {
    %c0_i32 = arith.constant 0 : i32
    %c0_i32_0 = arith.constant 0 : i32
    %c0_i32_1 = arith.constant 0 : i32
    return %c0_i32, %c0_i32_0 : i32, i32
  }
  func.func @transform_4(%arg0: i32) -> (i32, i32) {
    %c0_i32 = arith.constant 0 : i32
    %c0_i32_0 = arith.constant 0 : i32
    %c0_i32_1 = arith.constant 0 : i32
    return %c0_i32, %c0_i32_0 : i32, i32
  }
  func.func @transform_5(%arg0: i32) -> (i32, i32) {
    %c0_i32 = arith.constant 0 : i32
    %c0_i32_0 = arith.constant 0 : i32
    %c0_i32_1 = arith.constant 0 : i32
    return %c0_i32, %c0_i32_0 : i32, i32
  }
  func.func @transform_6(%arg0: i32) -> (i32, i32) {
    %c0_i32 = arith.constant 0 : i32
    %c0_i32_0 = arith.constant 0 : i32
    %c0_i32_1 = arith.constant 0 : i32
    return %c0_i32, %c0_i32_0 : i32, i32
  }
  func.func @transform_7(%arg0: i32) -> (i32, i32, i32, i32) {
    %c0_i32 = arith.constant 0 : i32
    %c0_i32_0 = arith.constant 0 : i32
    %c0_i32_1 = arith.constant 0 : i32
    %c0_i32_2 = arith.constant 0 : i32
    return %arg0, %c0_i32, %c0_i32_0, %c0_i32_1 : i32, i32, i32, i32
  }
}

</mosaic_0001>

<llo_original>
// kernel: resnet_block_forward.3
$region0: #{resnet_block_forward.3}
  #allocation0 [shape = 'u32[]', space=smem, size = 0x4, offset = 0x4, fixed_abs, tag = 'smem constant byte address 0x4 - core index']
  #allocation1 [shape = 'u32[144,128]{1,0:T(1,128)}', space=vmem, size = 0x12000, scoped, tag = 'internal scratch']
  #allocation2 [shape = 'f32[10,10,128]{2,1,0:T(8,128)}', space=vmem, size = 0x14000, scoped, tag = 'scratch operand']
  %s0 = inlined_call_operand.vmem [shape: f32[2,10,10,128], index: 0, kind: input, shape index: {}]
  %s1 = inlined_call_operand.vmem [shape: bf16[1152,128], index: 1, kind: input, shape index: {}]
  %s2 = inlined_call_operand.vmem [shape: f32[1,128], index: 2, kind: input, shape index: {}]
  %s3 = inlined_call_operand.vmem [shape: bf16[1152,128], index: 3, kind: input, shape index: {}]
  %s4 = inlined_call_operand.vmem [shape: f32[1,128], index: 4, kind: input, shape index: {}]
  %s5 = inlined_call_operand.vmem [shape: bf16[2,8,8,128], index: 5, kind: output, shape index: {}]
  %s6 = sld [smem:[#allocation0]]
  $region53: #{resnet_block_forward.3} parent=0
    _
  %s8 = ssub.s32 1, %s6
  %s9 = scalar_select 0, %s8, %s6
  loop: start=0, step=1, limit=4
  $region2: #{resnet_block_forward.3} parent=0 // loop_pre_header
    _
  $region3: #{resnet_block_forward.3} parent=0 // loop_header
    %s11 = sphi 0, %s15
    %p12 = scmp.ge.s32.totalorder %s11, 4
    %s21 = sphi 0, %s23
    %s24 = sphi 0, %s21
    %s25 = sphi 0, %s24
    %s41 = sphi 0, %s25
    %s45 = sphi 0, %s45
    %s47 = sphi 0, %s45
    %s48 = sphi 0, %s47
    %s62 = sphi 0, %s48
    %s66 = sphi 0, %s66
    %s68 = sphi 0, %s66
    %s69 = sphi 0, %s68
    %s83 = sphi 0, %s69
    %s87 = sphi 0, %s87
    %s89 = sphi 0, %s87
    %s90 = sphi 0, %s89
    %s104 = sphi 0, %s90
    %s108 = sphi 0, %s108
    %s110 = sphi 0, %s108
    %s111 = sphi 0, %s110
    %s125 = sphi 0, %s111
    %s131 = sphi 0, %s133
    %s134 = sphi 0, %s131
    %s135 = sphi 0, %s134
    %s151 = sphi 0, %s135
  $region4: #{resnet_block_forward.3} parent=0 // loop_header_branch
    %14 = sbr.rel (%p12) target = $region8
  $region5: #{resnet_block_forward.3} parent=0 // loop_body
    %s16 = ssub.s32 %s11, 1
    %s17 = ssub.s32 %s11, 2
    %s18 = sadd.s32 %s11, 1
    %s19 = ssub.s32 %s11, %s18
    %p20 = scmp.eq.s32.totalorder %s19, 0
    %s22 = sadd.s32 %s21, 1
    %s23 = scalar_select %p20, %s21, %s22
    %p26 = pneg %p20
    %p27 = scmp.eq.s32.totalorder %s11, 1
    %p28 = por %p26, %p27
    %p29 = scmp.ne.s32.totalorder %s21, %s24
    %p30 = scmp.eq.s32.totalorder %s11, 0
    %p31 = por %p29, %p30
    %p32 = scmp.ne.s32.totalorder %s21, %s24
    %p33 = scmp.eq.s32.totalorder %s16, 1
    %p34 = por %p32, %p33
    %p35 = scmp.ne.s32.totalorder %s24, %s25
    %p36 = scmp.eq.s32.totalorder %s16, 0
    %p37 = por %p35, %p36
    %p38 = scmp.ne.s32.totalorder %s24, %s25
    %p39 = scmp.eq.s32.totalorder %s17, 1
    %p40 = por %p38, %p39
    %p42 = scmp.ne.s32.totalorder %s25, %s41
    %p43 = scmp.eq.s32.totalorder %s17, 0
    %p44 = por %p42, %p43
    %s46 = sadd.s32 %s45, 1
    %p49 = scmp.eq.s32.totalorder %s11, 1
    %p50 = scmp.ne.s32.totalorder %s45, %s47
    %p51 = scmp.eq.s32.totalorder %s11, 0
    %p52 = por %p50, %p51
    %p53 = scmp.ne.s32.totalorder %s45, %s47
    %p54 = scmp.eq.s32.totalorder %s16, 1
    %p55 = por %p53, %p54
    %p56 = scmp.ne.s32.totalorder %s47, %s48
    %p57 = scmp.eq.s32.totalorder %s16, 0
    %p58 = por %p56, %p57
    %p59 = scmp.ne.s32.totalorder %s47, %s48
    %p60 = scmp.eq.s32.totalorder %s17, 1
    %p61 = por %p59, %p60
    %p63 = scmp.ne.s32.totalorder %s48, %s62
    %p64 = scmp.eq.s32.totalorder %s17, 0
    %p65 = por %p63, %p64
    %s67 = sadd.s32 %s66, 1
    %p70 = scmp.eq.s32.totalorder %s11, 1
    %p71 = scmp.ne.s32.totalorder %s66, %s68
    %p72 = scmp.eq.s32.totalorder %s11, 0
    %p73 = por %p71, %p72
    %p74 = scmp.ne.s32.totalorder %s66, %s68
    %p75 = scmp.eq.s32.totalorder %s16, 1
    %p76 = por %p74, %p75
    %p77 = scmp.ne.s32.totalorder %s68, %s69
    %p78 = scmp.eq.s32.totalorder %s16, 0
    %p79 = por %p77, %p78
    %p80 = scmp.ne.s32.totalorder %s68, %s69
    %p81 = scmp.eq.s32.totalorder %s17, 1
    %p82 = por %p80, %p81
    %p84 = scmp.ne.s32.totalorder %s69, %s83
    %p85 = scmp.eq.s32.totalorder %s17, 0
    %p86 = por %p84, %p85
    %s88 = sadd.s32 %s87, 1
    %p91 = scmp.eq.s32.totalorder %s11, 1
    %p92 = scmp.ne.s32.totalorder %s87, %s89
    %p93 = scmp.eq.s32.totalorder %s11, 0
    %p94 = por %p92, %p93
    %p95 = scmp.ne.s32.totalorder %s87, %s89
    %p96 = scmp.eq.s32.totalorder %s16, 1
    %p97 = por %p95, %p96
    %p98 = scmp.ne.s32.totalorder %s89, %s90
    %p99 = scmp.eq.s32.totalorder %s16, 0
    %p100 = por %p98, %p99
    %p101 = scmp.ne.s32.totalorder %s89, %s90
    %p102 = scmp.eq.s32.totalorder %s17, 1
    %p103 = por %p101, %p102
    %p105 = scmp.ne.s32.totalorder %s90, %s104
    %p106 = scmp.eq.s32.totalorder %s17, 0
    %p107 = por %p105, %p106
    %s109 = sadd.s32 %s108, 1
    %p112 = scmp.eq.s32.totalorder %s11, 1
    %p113 = scmp.ne.s32.totalorder %s108, %s110
    %p114 = scmp.eq.s32.totalorder %s11, 0
    %p115 = por %p113, %p114
    %p116 = scmp.ne.s32.totalorder %s108, %s110
    %p117 = scmp.eq.s32.totalorder %s16, 1
    %p118 = por %p116, %p117
    %p119 = scmp.ne.s32.totalorder %s110, %s111
    %p120 = scmp.eq.s32.totalorder %s16, 0
    %p121 = por %p119, %p120
    %p122 = scmp.ne.s32.totalorder %s110, %s111
    %p123 = scmp.eq.s32.totalorder %s17, 1
    %p124 = por %p122, %p123
    %p126 = scmp.ne.s32.totalorder %s111, %s125
    %p127 = scmp.eq.s32.totalorder %s17, 0
    %p128 = por %p126, %p127
    %s129 = ssub.s32 %s11, %s18
    %p130 = scmp.eq.s32.totalorder %s129, 0
    %s132 = sadd.s32 %s131, 1
    %s133 = scalar_select %p130, %s131, %s132
    %p136 = pneg %p130
    %p137 = scmp.eq.s32.totalorder %s11, 1
    %p138 = por %p136, %p137
    %p139 = scmp.ne.s32.totalorder %s131, %s134
    %p140 = scmp.eq.s32.totalorder %s11, 0
    %p141 = por %p139, %p140
    %p142 = scmp.ne.s32.totalorder %s131, %s134
    %p143 = scmp.eq.s32.totalorder %s16, 1
    %p144 = por %p142, %p143
    %p145 = scmp.ne.s32.totalorder %s134, %s135
    %p146 = scmp.eq.s32.totalorder %s16, 0
    %p147 = por %p145, %p146
    %p148 = scmp.ne.s32.totalorder %s134, %s135
    %p149 = scmp.eq.s32.totalorder %s17, 1
    %p150 = por %p148, %p149
    %p152 = scmp.ne.s32.totalorder %s135, %s151
    %p153 = scmp.eq.s32.totalorder %s17, 0
    %p154 = por %p152, %p153
    %p155 = scmp.le.s32.totalorder 1, %s11
    %p156 = scmp.lt.s32.totalorder %s11, 3
    %p157 = pnand %p155, %p156
    %p158 = pneg %p157
    // Predicated region
    $region9: #{resnet_block_forward.3} parent=5 // pred_check
      _
    $region10: #{resnet_block_forward.3} parent=5 // pred_check_branch
      %160 = sbr.rel (%p157) target = $region12
    $region11: #{resnet_block_forward.3} parent=5 // pred_region
      %s161 = ssub.s32 %s11, 1
      // Predicated region
      $region13: #{resnet_block_forward.3} parent=11 // pred_check
        %p162 = pneg %p58
      $region14: #{resnet_block_forward.3} parent=11 // pred_check_branch
        %164 = sbr.rel (%p162) target = $region16
      $region15: #{resnet_block_forward.3} parent=11 // pred_region
        _
      $region16: #{resnet_block_forward.3} parent=11 // pred_fallthru
        _
      // Predicated region
      $region17: #{resnet_block_forward.3} parent=11 // pred_check
        %p165 = pneg %p79
      $region18: #{resnet_block_forward.3} parent=11 // pred_check_branch
        %167 = sbr.rel (%p165) target = $region20
      $region19: #{resnet_block_forward.3} parent=11 // pred_region
        _
      $region20: #{resnet_block_forward.3} parent=11 // pred_fallthru
        _
      // Predicated region
      $region21: #{resnet_block_forward.3} parent=11 // pred_check
        %p168 = pneg %p100
      $region22: #{resnet_block_forward.3} parent=11 // pred_check_branch
        %170 = sbr.rel (%p168) target = $region24
      $region23: #{resnet_block_forward.3} parent=11 // pred_region
        _
      $region24: #{resnet_block_forward.3} parent=11 // pred_fallthru
        _
      // Predicated region
      $region25: #{resnet_block_forward.3} parent=11 // pred_check
        %p171 = pneg %p121
      $region26: #{resnet_block_forward.3} parent=11 // pred_check_branch
        %173 = sbr.rel (%p171) target = $region28
      $region27: #{resnet_block_forward.3} parent=11 // pred_region
        _
      $region28: #{resnet_block_forward.3} parent=11 // pred_fallthru
        _
    $region12: #{resnet_block_forward.3} parent=5 // pred_fallthru
      _
    %p174 = scmp.lt.s32.totalorder %s11, 2
    // Predicated region
    $region29: #{resnet_block_forward.3} parent=5 // pred_check
      %p175 = pneg %p174
    $region30: #{resnet_block_forward.3} parent=5 // pred_check_branch
      %177 = sbr.rel (%p175) target = $region32
    $region31: #{resnet_block_forward.3} parent=5 // pred_region
      // Predicated region
      $region33: #{resnet_block_forward.3} parent=31 // pred_check
        %p178 = pneg %p31
      $region34: #{resnet_block_forward.3} parent=31 // pred_check_branch
        %180 = sbr.rel (%p178) target = $region36
      $region35: #{resnet_block_forward.3} parent=31 // pred_region
        %p181 = scmp.lt.s32.totalorder %s11, 1
        %s182 = scalar_select %p181, %s11, 1
        %s183 = smul.addr %s182, 20
        %s184 = smul.addr %s183, 8
        %s185 = scalar_lea.vmem %s0, %s184
      $region36: #{resnet_block_forward.3} parent=31 // pred_fallthru
        _
    $region32: #{resnet_block_forward.3} parent=5 // pred_fallthru
      _
    %p186 = scmp.le.s32.totalorder 1, %s11
    %p187 = scmp.lt.s32.totalorder %s11, 3
    %p188 = pnand %p186, %p187
    %p189 = pneg %p188
    // Predicated region
    $region37: #{resnet_block_forward.3} parent=5 // pred_check
      _
    $region38: #{resnet_block_forward.3} parent=5 // pred_check_branch
      %191 = sbr.rel (%p188) target = $region40
    $region39: #{resnet_block_forward.3} parent=5 // pred_region
      %s192 = ssub.s32 %s11, 1
      %p193 = scmp.lt.s32.totalorder %s16, 1
      %s194 = scalar_select %p193, %s16, 1
      %s195 = smul.addr %s194, 20
      %s196 = smul.addr %s195, 8
      %s197 = scalar_lea.vmem %s0, %s196
      %p198 = pneg %p37
      %p199 = pneg %p34
      %p200 = pneg %p58
      %p201 = pneg %p55
      %p202 = pneg %p79
      %p203 = pneg %p76
      %p204 = pneg %p100
      %p205 = pneg %p97
      %p206 = pneg %p121
      %p207 = pneg %p118
      %p208 = pneg %p147
      %p209 = pneg %p144
      %p210 = scmp.lt.s32.totalorder %s16, 1
      %s211 = scalar_select %p210, %s16, 1
      %s212 = smul.addr %s211, 8
      %s213 = smul.addr %s212, 4
      %s214 = scalar_lea.vmem %s5, %s213
      %p215 = scmp.lt.s32.totalorder %s16, 1
      %s216 = scalar_select %p215, %s16, 1
      %s217 = smul.addr %s216, 20
      %s218 = smul.addr %s217, 8
      %s219 = scalar_lea.vmem %s0, %s218
      %p220 = scmp.lt.s32.totalorder %s16, 1
      %s221 = scalar_select %p220, %s16, 1
      %s222 = smul.addr %s221, 8
      %s223 = smul.addr %s222, 4
      %s224 = scalar_lea.vmem %s5, %s223
      %v226 = vld [vmem:[%s219] sm:$0xff]
      %v227 = vld [vmem:[%s219 + $0x10] sm:$0xff]
      %v228 = vld [vmem:[%s219 + $0x20] sm:$0xff]
      %v229 = vld [vmem:[%s219 + $0x30] sm:$0xff]
      %v230 = vld [vmem:[%s219 + $0x40] sm:$0xff]
      %v231 = vld [vmem:[%s219 + $0x50] sm:$0xff]
      %v232 = vld [vmem:[%s219 + $0x60] sm:$0xff]
      %v233 = vld [vmem:[%s219 + $0x70] sm:$0xff]
      %v234 = vpack.c.bf16 %v227, %v226
      %v235 = vpack.c.bf16 %v229, %v228
      %v236 = vpack.c.bf16 %v231, %v230
      %v237 = vpack.c.bf16 %v233, %v232
      %v238 = vld [vmem:[%s1] sm:$0xf]
      %v239 = vld [vmem:[%s1 + $0x4] sm:$0xf]
      %v240 = vld [vmem:[%s1 + $0x8] sm:$0xf]
      %v241 = vld [vmem:[%s1 + $0xc] sm:$0xf]
      %v242 = vld [vmem:[%s1 + $0x10] sm:$0xf]
      %v243 = vld [vmem:[%s1 + $0x14] sm:$0xf]
      %v244 = vld [vmem:[%s1 + $0x18] sm:$0xf]
      %v245 = vld [vmem:[%s1 + $0x1c] sm:$0xf]
      %v246 = vld [vmem:[%s1 + $0x20] sm:$0xf]
      %v247 = vld [vmem:[%s1 + $0x24] sm:$0xf]
      %v248 = vld [vmem:[%s1 + $0x28] sm:$0xf]
      %v249 = vld [vmem:[%s1 + $0x2c] sm:$0xf]
      %v250 = vld [vmem:[%s1 + $0x30] sm:$0xf]
      %v251 = vld [vmem:[%s1 + $0x34] sm:$0xf]
      %v252 = vld [vmem:[%s1 + $0x38] sm:$0xf]
      %v253 = vld [vmem:[%s1 + $0x3c] sm:$0xf]
      %v254 = vld [vmem:[%s219 + $0x1] sm:$0xff]
      %v255 = vld [vmem:[%s219 + $0x11] sm:$0xff]
      %v256 = vld [vmem:[%s219 + $0x21] sm:$0xff]
      %v257 = vld [vmem:[%s219 + $0x31] sm:$0xff]
      %v258 = vld [vmem:[%s219 + $0x41] sm:$0xff]
      %v259 = vld [vmem:[%s219 + $0x51] sm:$0xff]
      %v260 = vld [vmem:[%s219 + $0x61] sm:$0xff]
      %v261 = vld [vmem:[%s219 + $0x71] sm:$0xff]
      %v262 = vpack.c.bf16 %v255, %v254
      %v263 = vpack.c.bf16 %v257, %v256
      %v264 = vpack.c.bf16 %v259, %v258
      %v265 = vpack.c.bf16 %v261, %v260
      %v266 = vld [vmem:[%s1 + $0x40] sm:$0xf]
      %v267 = vld [vmem:[%s1 + $0x44] sm:$0xf]
      %v268 = vld [vmem:[%s1 + $0x48] sm:$0xf]
      %v269 = vld [vmem:[%s1 + $0x4c] sm:$0xf]
      %v270 = vld [vmem:[%s1 + $0x50] sm:$0xf]
      %v271 = vld [vmem:[%s1 + $0x54] sm:$0xf]
      %v272 = vld [vmem:[%s1 + $0x58] sm:$0xf]
      %v273 = vld [vmem:[%s1 + $0x5c] sm:$0xf]
      %v274 = vld [vmem:[%s1 + $0x60] sm:$0xf]
      %v275 = vld [vmem:[%s1 + $0x64] sm:$0xf]
      %v276 = vld [vmem:[%s1 + $0x68] sm:$0xf]
      %v277 = vld [vmem:[%s1 + $0x6c] sm:$0xf]
      %v278 = vld [vmem:[%s1 + $0x70] sm:$0xf]
      %v279 = vld [vmem:[%s1 + $0x74] sm:$0xf]
      %v280 = vld [vmem:[%s1 + $0x78] sm:$0xf]
      %v281 = vld [vmem:[%s1 + $0x7c] sm:$0xf]
      %v298 = vunpack.c.l.b16 %v266
      %v299 = vunpack.c.l.b16 %v267
      %v300 = vunpack.c.l.b16 %v268
      %v301 = vunpack.c.l.b16 %v269
      %v302 = vunpack.c.l.b16 %v270
      %v303 = vunpack.c.l.b16 %v271
      %v304 = vunpack.c.l.b16 %v272
      %v305 = vunpack.c.l.b16 %v273
      %v306 = vunpack.c.l.b16 %v274
      %v307 = vunpack.c.l.b16 %v275
      %v308 = vunpack.c.l.b16 %v276
      %v309 = vunpack.c.l.b16 %v277
      %v310 = vunpack.c.l.b16 %v278
      %v311 = vunpack.c.l.b16 %v279
      %v312 = vunpack.c.l.b16 %v280
      %v313 = vunpack.c.l.b16 %v281
      %v314 = vpack.c.b16 %v299, %v298
      %v315 = vpack.c.b16 %v301, %v300
      %v316 = vpack.c.b16 %v303, %v302
      %v317 = vpack.c.b16 %v305, %v304
      %v318 = vpack.c.b16 %v307, %v306
      %v319 = vpack.c.b16 %v309, %v308
      %v320 = vpack.c.b16 %v311, %v310
      %v321 = vpack.c.b16 %v313, %v312
      %330 = vmatprep.subr.bf16.mxu0 0
      %331 = vmatpush1.bf16.msra.mxu0 %v321
      %332 = vmatprep.subr.bf16.mxu0 0
      %333 = vmatpush1.bf16.msra.mxu0 %v320
      %334 = vmatprep.subr.bf16.mxu0 0
      %335 = vmatpush1.bf16.msra.mxu0 %v319
      %336 = vmatprep.subr.bf16.mxu0 0
      %337 = vmatpush1.bf16.msra.mxu0 %v318
      %338 = vmatprep.subr.bf16.mxu0 0
      %339 = vmatpush1.bf16.msra.mxu0 %v317
      %340 = vmatprep.subr.bf16.mxu0 0
      %341 = vmatpush1.bf16.msra.mxu0 %v316
      %342 = vmatprep.subr.bf16.mxu0 0
      %343 = vmatpush1.bf16.msra.mxu0 %v315
      %344 = vmatprep.subr.bf16.mxu0 0
      %345 = vmatpush1.bf16.msra.mxu0 %v314
      %346 = vmatprep.subr.bf16.mxu0 0
      %347 = vmatpush2.bf16.msra.mxu0 0
      %348 = vmatprep.subr.bf16.mxu0 0
      %349 = vmatpush2.bf16.msra.mxu0 0
      %350 = vmatprep.subr.bf16.mxu0 0
      %351 = vmatpush2.bf16.msra.mxu0 0
      %352 = vmatprep.subr.bf16.mxu0 0
      %353 = vmatpush2.bf16.msra.mxu0 0
      %354 = vmatprep.subr.bf16.mxu0 0
      %355 = vmatpush2.bf16.msra.mxu0 0
      %356 = vmatprep.subr.bf16.mxu0 0
      %357 = vmatpush2.bf16.msra.mxu0 0
      %358 = vmatprep.subr.bf16.mxu0 0
      %359 = vmatpush2.bf16.msra.mxu0 0
      %360 = vmatprep.subr.bf16.mxu0 0
      %361 = vmatpush2.bf16.msra.mxu0 0
      %362 = vmatprep.mubr.bf16.mxu0 0
      %363 = vmatmul.mubr.bf16.gmra.mxu0 %v262
      %v364 = vpop.f32.mrf.mxu0
      %v365 = vadd.f32 0.0, %v364
      %v366 = vpop.f32.mrf.mxu0
      %v367 = vpop.f32.mrf.mxu0
      %v368 = vadd.f32 0.0, %v367
      %v369 = vpop.f32.mrf.mxu0
      %370 = vmatprep.mubr.bf16.mxu0 0
      %371 = vmatmul.mubr.bf16.gmra.mxu0 %v263
      %v372 = vpop.f32.mrf.mxu0
      %v373 = vadd.f32 0.0, %v372
      %v374 = vpop.f32.mrf.mxu0
      %v375 = vpop.f32.mrf.mxu0
      %v376 = vadd.f32 0.0, %v375
      %v377 = vpop.f32.mrf.mxu0
      %378 = vmatprep.mubr.bf16.mxu0 0
      %379 = vmatmul.mubr.bf16.gmra.mxu0 %v264
      %v380 = vpop.f32.mrf.mxu0
      %v381 = vadd.f32 0.0, %v380
      %v382 = vpop.f32.mrf.mxu0
      %v383 = vpop.f32.mrf.mxu0
      %v384 = vadd.f32 0.0, %v383
      %v385 = vpop.f32.mrf.mxu0
      %386 = vmatprep.mubr.bf16.mxu0 0
      %387 = vmatmul.mubr.bf16.gmra.mxu0 %v265
      %v388 = vpop.f32.mrf.mxu0
      %v389 = vadd.f32 0.0, %v388
      %v390 = vpop.f32.mrf.mxu0
      %v391 = vpop.f32.mrf.mxu0
      %v392 = vadd.f32 0.0, %v391
      %v393 = vpop.f32.mrf.mxu0
      %394 = vdwg.mxu0
      %v411 = vunpack.c.l.b16 %v238
      %v412 = vunpack.c.l.b16 %v239
      %v413 = vunpack.c.l.b16 %v240
      %v414 = vunpack.c.l.b16 %v241
      %v415 = vunpack.c.l.b16 %v242
      %v416 = vunpack.c.l.b16 %v243
      %v417 = vunpack.c.l.b16 %v244
      %v418 = vunpack.c.l.b16 %v245
      %v419 = vunpack.c.l.b16 %v246
      %v420 = vunpack.c.l.b16 %v247
      %v421 = vunpack.c.l.b16 %v248
      %v422 = vunpack.c.l.b16 %v249
      %v423 = vunpack.c.l.b16 %v250
      %v424 = vunpack.c.l.b16 %v251
      %v425 = vunpack.c.l.b16 %v252
      %v426 = vunpack.c.l.b16 %v253
      %v427 = vpack.c.b16 %v412, %v411
      %v428 = vpack.c.b16 %v414, %v413
      %v429 = vpack.c.b16 %v416, %v415
      %v430 = vpack.c.b16 %v418, %v417
      %v431 = vpack.c.b16 %v420, %v419
      %v432 = vpack.c.b16 %v422, %v421
      %v433 = vpack.c.b16 %v424, %v423
      %v434 = vpack.c.b16 %v426, %v425
      %443 = vmatprep.subr.bf16.mxu0 0
      %444 = vmatpush1.bf16.msra.mxu0 %v434
      %445 = vmatprep.subr.bf16.mxu0 0
      %446 = vmatpush1.bf16.msra.mxu0 %v433
      %447 = vmatprep.subr.bf16.mxu0 0
      %448 = vmatpush1.bf16.msra.mxu0 %v432
      %449 = vmatprep.subr.bf16.mxu0 0
      %450 = vmatpush1.bf16.msra.mxu0 %v431
      %451 = vmatprep.subr.bf16.mxu0 0
      %452 = vmatpush1.bf16.msra.mxu0 %v430
      %453 = vmatprep.subr.bf16.mxu0 0
      %454 = vmatpush1.bf16.msra.mxu0 %v429
      %455 = vmatprep.subr.bf16.mxu0 0
      %456 = vmatpush1.bf16.msra.mxu0 %v428
      %457 = vmatprep.subr.bf16.mxu0 0
      %458 = vmatpush1.bf16.msra.mxu0 %v427
      %459 = vmatprep.subr.bf16.mxu0 0
      %460 = vmatpush2.bf16.msra.mxu0 0
      %461 = vmatprep.subr.bf16.mxu0 0
      %462 = vmatpush2.bf16.msra.mxu0 0
      %463 = vmatprep.subr.bf16.mxu0 0
      %464 = vmatpush2.bf16.msra.mxu0 0
      %465 = vmatprep.subr.bf16.mxu0 0
      %466 = vmatpush2.bf16.msra.mxu0 0
      %467 = vmatprep.subr.bf16.mxu0 0
      %468 = vmatpush2.bf16.msra.mxu0 0
      %469 = vmatprep.subr.bf16.mxu0 0
      %470 = vmatpush2.bf16.msra.mxu0 0
      %471 = vmatprep.subr.bf16.mxu0 0
      %472 = vmatpush2.bf16.msra.mxu0 0
      %473 = vmatprep.subr.bf16.mxu0 0
      %474 = vmatpush2.bf16.msra.mxu0 0
      %475 = vmatprep.mubr.bf16.mxu0 0
      %476 = vmatmul.mubr.bf16.gmra.mxu0 %v234
      %v477 = vpop.f32.mrf.mxu0
      %v478 = vadd.f32 %v365, %v477
      %v479 = vpop.f32.mrf.mxu0
      %v480 = vpop.f32.mrf.mxu0
      %v481 = vadd.f32 %v368, %v480
      %v482 = vpop.f32.mrf.mxu0
      %483 = vmatprep.mubr.bf16.mxu0 0
      %484 = vmatmul.mubr.bf16.gmra.mxu0 %v235
      %v485 = vpop.f32.mrf.mxu0
      %v486 = vadd.f32 %v373, %v485
      %v487 = vpop.f32.mrf.mxu0
      %v488 = vpop.f32.mrf.mxu0
      %v489 = vadd.f32 %v376, %v488
      %v490 = vpop.f32.mrf.mxu0
      %491 = vmatprep.mubr.bf16.mxu0 0
      %492 = vmatmul.mubr.bf16.gmra.mxu0 %v236
      %v493 = vpop.f32.mrf.mxu0
      %v494 = vadd.f32 %v381, %v493
      %v495 = vpop.f32.mrf.mxu0
      %v496 = vpop.f32.mrf.mxu0
      %v497 = vadd.f32 %v384, %v496
      %v498 = vpop.f32.mrf.mxu0
      %499 = vmatprep.mubr.bf16.mxu0 0
      %500 = vmatmul.mubr.bf16.gmra.mxu0 %v237
      %v501 = vpop.f32.mrf.mxu0
      %v502 = vadd.f32 %v389, %v501
      %v503 = vpop.f32.mrf.mxu0
      %v504 = vpop.f32.mrf.mxu0
      %v505 = vadd.f32 %v392, %v504
      %v506 = vpop.f32.mrf.mxu0
      %507 = vdwg.mxu0
      %v508 = vld [vmem:[%s219 + $0x2] sm:$0xff]
      %v509 = vld [vmem:[%s219 + $0x12] sm:$0xff]
      %v510 = vld [vmem:[%s219 + $0x22] sm:$0xff]
      %v511 = vld [vmem:[%s219 + $0x32] sm:$0xff]
      %v512 = vld [vmem:[%s219 + $0x42] sm:$0xff]
      %v513 = vld [vmem:[%s219 + $0x52] sm:$0xff]
      %v514 = vld [vmem:[%s219 + $0x62] sm:$0xff]
      %v515 = vld [vmem:[%s219 + $0x72] sm:$0xff]
      %v516 = vpack.c.bf16 %v509, %v508
      %v517 = vpack.c.bf16 %v511, %v510
      %v518 = vpack.c.bf16 %v513, %v512
      %v519 = vpack.c.bf16 %v515, %v514
      %v520 = vld [vmem:[%s1 + $0x80] sm:$0xf]
      %v521 = vld [vmem:[%s1 + $0x84] sm:$0xf]
      %v522 = vld [vmem:[%s1 + $0x88] sm:$0xf]
      %v523 = vld [vmem:[%s1 + $0x8c] sm:$0xf]
      %v524 = vld [vmem:[%s1 + $0x90] sm:$0xf]
      %v525 = vld [vmem:[%s1 + $0x94] sm:$0xf]
      %v526 = vld [vmem:[%s1 + $0x98] sm:$0xf]
      %v527 = vld [vmem:[%s1 + $0x9c] sm:$0xf]
      %v528 = vld [vmem:[%s1 + $0xa0] sm:$0xf]
      %v529 = vld [vmem:[%s1 + $0xa4] sm:$0xf]
      %v530 = vld [vmem:[%s1 + $0xa8] sm:$0xf]
      %v531 = vld [vmem:[%s1 + $0xac] sm:$0xf]
      %v532 = vld [vmem:[%s1 + $0xb0] sm:$0xf]
      %v533 = vld [vmem:[%s1 + $0xb4] sm:$0xf]
      %v534 = vld [vmem:[%s1 + $0xb8] sm:$0xf]
      %v535 = vld [vmem:[%s1 + $0xbc] sm:$0xf]
      %v552 = vunpack.c.l.b16 %v520
      %v553 = vunpack.c.l.b16 %v521
      %v554 = vunpack.c.l.b16 %v522
      %v555 = vunpack.c.l.b16 %v523
      %v556 = vunpack.c.l.b16 %v524
      %v557 = vunpack.c.l.b16 %v525
      %v558 = vunpack.c.l.b16 %v526
      %v559 = vunpack.c.l.b16 %v527
      %v560 = vunpack.c.l.b16 %v528
      %v561 = vunpack.c.l.b16 %v529
      %v562 = vunpack.c.l.b16 %v530
      %v563 = vunpack.c.l.b16 %v531
      %v564 = vunpack.c.l.b16 %v532
      %v565 = vunpack.c.l.b16 %v533
      %v566 = vunpack.c.l.b16 %v534
      %v567 = vunpack.c.l.b16 %v535
      %v568 = vpack.c.b16 %v553, %v552
      %v569 = vpack.c.b16 %v555, %v554
      %v570 = vpack.c.b16 %v557, %v556
      %v571 = vpack.c.b16 %v559, %v558
      %v572 = vpack.c.b16 %v561, %v560
      %v573 = vpack.c.b16 %v563, %v562
      %v574 = vpack.c.b16 %v565, %v564
      %v575 = vpack.c.b16 %v567, %v566
      %584 = vmatprep.subr.bf16.mxu0 0
      %585 = vmatpush1.bf16.msra.mxu0 %v575
      %586 = vmatprep.subr.bf16.mxu0 0
      %587 = vmatpush1.bf16.msra.mxu0 %v574
      %588 = vmatprep.subr.bf16.mxu0 0
      %589 = vmatpush1.bf16.msra.mxu0 %v573
      %590 = vmatprep.subr.bf16.mxu0 0
      %591 = vmatpush1.bf16.msra.mxu0 %v572
      %592 = vmatprep.subr.bf16.mxu0 0
      %593 = vmatpush1.bf16.msra.mxu0 %v571
      %594 = vmatprep.subr.bf16.mxu0 0
      %595 = vmatpush1.bf16.msra.mxu0 %v570
      %596 = vmatprep.subr.bf16.mxu0 0
      %597 = vmatpush1.bf16.msra.mxu0 %v569
      %598 = vmatprep.subr.bf16.mxu0 0
      %599 = vmatpush1.bf16.msra.mxu0 %v568
      %600 = vmatprep.subr.bf16.mxu0 0
      %601 = vmatpush2.bf16.msra.mxu0 0
      %602 = vmatprep.subr.bf16.mxu0 0
      %603 = vmatpush2.bf16.msra.mxu0 0
      %604 = vmatprep.subr.bf16.mxu0 0
      %605 = vmatpush2.bf16.msra.mxu0 0
      %606 = vmatprep.subr.bf16.mxu0 0
      %607 = vmatpush2.bf16.msra.mxu0 0
      %608 = vmatprep.subr.bf16.mxu0 0
      %609 = vmatpush2.bf16.msra.mxu0 0
      %610 = vmatprep.subr.bf16.mxu0 0
      %611 = vmatpush2.bf16.msra.mxu0 0
      %612 = vmatprep.subr.bf16.mxu0 0
      %613 = vmatpush2.bf16.msra.mxu0 0
      %614 = vmatprep.subr.bf16.mxu0 0
      %615 = vmatpush2.bf16.msra.mxu0 0
      %616 = vmatprep.mubr.bf16.mxu0 0
      %617 = vmatmul.mubr.bf16.gmra.mxu0 %v516
      %v618 = vpop.f32.mrf.mxu0
      %v619 = vadd.f32 0.0, %v618
      %v620 = vpop.f32.mrf.mxu0
      %v621 = vpop.f32.mrf.mxu0
      %v622 = vadd.f32 0.0, %v621
      %v623 = vpop.f32.mrf.mxu0
      %624 = vmatprep.mubr.bf16.mxu0 0
      %625 = vmatmul.mubr.bf16.gmra.mxu0 %v517
      %v626 = vpop.f32.mrf.mxu0
      %v627 = vadd.f32 0.0, %v626
      %v628 = vpop.f32.mrf.mxu0
      %v629 = vpop.f32.mrf.mxu0
      %v630 = vadd.f32 0.0, %v629
      %v631 = vpop.f32.mrf.mxu0
      %632 = vmatprep.mubr.bf16.mxu0 0
      %633 = vmatmul.mubr.bf16.gmra.mxu0 %v518
      %v634 = vpop.f32.mrf.mxu0
      %v635 = vadd.f32 0.0, %v634
      %v636 = vpop.f32.mrf.mxu0
      %v637 = vpop.f32.mrf.mxu0
      %v638 = vadd.f32 0.0, %v637
      %v639 = vpop.f32.mrf.mxu0
      %640 = vmatprep.mubr.bf16.mxu0 0
      %641 = vmatmul.mubr.bf16.gmra.mxu0 %v519
      %v642 = vpop.f32.mrf.mxu0
      %v643 = vadd.f32 0.0, %v642
      %v644 = vpop.f32.mrf.mxu0
      %v645 = vpop.f32.mrf.mxu0
      %v646 = vadd.f32 0.0, %v645
      %v647 = vpop.f32.mrf.mxu0
      %648 = vdwg.mxu0
      %v649 = vadd.f32 %v478, %v619
      %v650 = vadd.f32 %v481, %v622
      %v651 = vadd.f32 %v486, %v627
      %v652 = vadd.f32 %v489, %v630
      %v653 = vadd.f32 %v494, %v635
      %v654 = vadd.f32 %v497, %v638
      %v655 = vadd.f32 %v502, %v643
      %v656 = vadd.f32 %v505, %v646
      %s657 = scalar_lea.vmem %s219, 16
      %v658 = vld [vmem:[%s657] sm:$0xff]
      %v659 = vld [vmem:[%s657 + $0x10] sm:$0xff]
      %v660 = vld [vmem:[%s657 + $0x20] sm:$0xff]
      %v661 = vld [vmem:[%s657 + $0x30] sm:$0xff]
      %v662 = vld [vmem:[%s657 + $0x40] sm:$0xff]
      %v663 = vld [vmem:[%s657 + $0x50] sm:$0xff]
      %v664 = vld [vmem:[%s657 + $0x60] sm:$0xff]
      %v665 = vld [vmem:[%s657 + $0x70] sm:$0xff]
      %v666 = vpack.c.bf16 %v659, %v658
      %v667 = vpack.c.bf16 %v661, %v660
      %v668 = vpack.c.bf16 %v663, %v662
      %v669 = vpack.c.bf16 %v665, %v664
      %v670 = vld [vmem:[%s1 + $0xc0] sm:$0xf]
      %v671 = vld [vmem:[%s1 + $0xc4] sm:$0xf]
      %v672 = vld [vmem:[%s1 + $0xc8] sm:$0xf]
      %v673 = vld [vmem:[%s1 + $0xcc] sm:$0xf]
      %v674 = vld [vmem:[%s1 + $0xd0] sm:$0xf]
      %v675 = vld [vmem:[%s1 + $0xd4] sm:$0xf]
      %v676 = vld [vmem:[%s1 + $0xd8] sm:$0xf]
      %v677 = vld [vmem:[%s1 + $0xdc] sm:$0xf]
      %v678 = vld [vmem:[%s1 + $0xe0] sm:$0xf]
      %v679 = vld [vmem:[%s1 + $0xe4] sm:$0xf]
      %v680 = vld [vmem:[%s1 + $0xe8] sm:$0xf]
      %v681 = vld [vmem:[%s1 + $0xec] sm:$0xf]
      %v682 = vld [vmem:[%s1 + $0xf0] sm:$0xf]
      %v683 = vld [vmem:[%s1 + $0xf4] sm:$0xf]
      %v684 = vld [vmem:[%s1 + $0xf8] sm:$0xf]
      %v685 = vld [vmem:[%s1 + $0xfc] sm:$0xf]
      %v702 = vunpack.c.l.b16 %v670
      %v703 = vunpack.c.l.b16 %v671
      %v704 = vunpack.c.l.b16 %v672
      %v705 = vunpack.c.l.b16 %v673
      %v706 = vunpack.c.l.b16 %v674
      %v707 = vunpack.c.l.b16 %v675
      %v708 = vunpack.c.l.b16 %v676
      %v709 = vunpack.c.l.b16 %v677
      %v710 = vunpack.c.l.b16 %v678
      %v711 = vunpack.c.l.b16 %v679
      %v712 = vunpack.c.l.b16 %v680
      %v713 = vunpack.c.l.b16 %v681
      %v714 = vunpack.c.l.b16 %v682
      %v715 = vunpack.c.l.b16 %v683
      %v716 = vunpack.c.l.b16 %v684
      %v717 = vunpack.c.l.b16 %v685
      %v718 = vpack.c.b16 %v703, %v702
      %v719 = vpack.c.b16 %v705, %v704
      %v720 = vpack.c.b16 %v707, %v706
      %v721 = vpack.c.b16 %v709, %v708
      %v722 = vpack.c.b16 %v711, %v710
      %v723 = vpack.c.b16 %v713, %v712
      %v724 = vpack.c.b16 %v715, %v714
      %v725 = vpack.c.b16 %v717, %v716
      %734 = vmatprep.subr.bf16.mxu0 0
      %735 = vmatpush1.bf16.msra.mxu0 %v725
      %736 = vmatprep.subr.bf16.mxu0 0
      %737 = vmatpush1.bf16.msra.mxu0 %v724
      %738 = vmatprep.subr.bf16.mxu0 0
      %739 = vmatpush1.bf16.msra.mxu0 %v723
      %740 = vmatprep.subr.bf16.mxu0 0
      %741 = vmatpush1.bf16.msra.mxu0 %v722
      %742 = vmatprep.subr.bf16.mxu0 0
      %743 = vmatpush1.bf16.msra.mxu0 %v721
      %744 = vmatprep.subr.bf16.mxu0 0
      %745 = vmatpush1.bf16.msra.mxu0 %v720
      %746 = vmatprep.subr.bf16.mxu0 0
      %747 = vmatpush1.bf16.msra.mxu0 %v719
      %748 = vmatprep.subr.bf16.mxu0 0
      %749 = vmatpush1.bf16.msra.mxu0 %v718
      %750 = vmatprep.subr.bf16.mxu0 0
      %751 = vmatpush2.bf16.msra.mxu0 0
      %752 = vmatprep.subr.bf16.mxu0 0
      %753 = vmatpush2.bf16.msra.mxu0 0
      %754 = vmatprep.subr.bf16.mxu0 0
      %755 = vmatpush2.bf16.msra.mxu0 0
      %756 = vmatprep.subr.bf16.mxu0 0
      %757 = vmatpush2.bf16.msra.mxu0 0
      %758 = vmatprep.subr.bf16.mxu0 0
      %759 = vmatpush2.bf16.msra.mxu0 0
      %760 = vmatprep.subr.bf16.mxu0 0
      %761 = vmatpush2.bf16.msra.mxu0 0
      %762 = vmatprep.subr.bf16.mxu0 0
      %763 = vmatpush2.bf16.msra.mxu0 0
      %764 = vmatprep.subr.bf16.mxu0 0
      %765 = vmatpush2.bf16.msra.mxu0 0
      %766 = vmatprep.mubr.bf16.mxu0 0
      %767 = vmatmul.mubr.bf16.gmra.mxu0 %v666
      %v768 = vpop.f32.mrf.mxu0
      %v769 = vadd.f32 0.0, %v768
      %v770 = vpop.f32.mrf.mxu0
      %v771 = vpop.f32.mrf.mxu0
      %v772 = vadd.f32 0.0, %v771
      %v773 = vpop.f32.mrf.mxu0
      %774 = vmatprep.mubr.bf16.mxu0 0
      %775 = vmatmul.mubr.bf16.gmra.mxu0 %v667
      %v776 = vpop.f32.mrf.mxu0
      %v777 = vadd.f32 0.0, %v776
      %v778 = vpop.f32.mrf.mxu0
      %v779 = vpop.f32.mrf.mxu0
      %v780 = vadd.f32 0.0, %v779
      %v781 = vpop.f32.mrf.mxu0
      %782 = vmatprep.mubr.bf16.mxu0 0
      %783 = vmatmul.mubr.bf16.gmra.mxu0 %v668
      %v784 = vpop.f32.mrf.mxu0
      %v785 = vadd.f32 0.0, %v784
      %v786 = vpop.f32.mrf.mxu0
      %v787 = vpop.f32.mrf.mxu0
      %v788 = vadd.f32 0.0, %v787
      %v789 = vpop.f32.mrf.mxu0
      %790 = vmatprep.mubr.bf16.mxu0 0
      %791 = vmatmul.mubr.bf16.gmra.mxu0 %v669
      %v792 = vpop.f32.mrf.mxu0
      %v793 = vadd.f32 0.0, %v792
      %v794 = vpop.f32.mrf.mxu0
      %v795 = vpop.f32.mrf.mxu0
      %v796 = vadd.f32 0.0, %v795
      %v797 = vpop.f32.mrf.mxu0
      %798 = vdwg.mxu0
      %v799 = vadd.f32 %v649, %v769
      %v800 = vadd.f32 %v650, %v772
      %v801 = vadd.f32 %v651, %v777
      %v802 = vadd.f32 %v652, %v780
      %v803 = vadd.f32 %v653, %v785
      %v804 = vadd.f32 %v654, %v788
      %v805 = vadd.f32 %v655, %v793
      %v806 = vadd.f32 %v656, %v796
      %v807 = vld [vmem:[%s657 + $0x1] sm:$0xff]
      %v808 = vld [vmem:[%s657 + $0x11] sm:$0xff]
      %v809 = vld [vmem:[%s657 + $0x21] sm:$0xff]
      %v810 = vld [vmem:[%s657 + $0x31] sm:$0xff]
      %v811 = vld [vmem:[%s657 + $0x41] sm:$0xff]
      %v812 = vld [vmem:[%s657 + $0x51] sm:$0xff]
      %v813 = vld [vmem:[%s657 + $0x61] sm:$0xff]
      %v814 = vld [vmem:[%s657 + $0x71] sm:$0xff]
      %v815 = vpack.c.bf16 %v808, %v807
      %v816 = vpack.c.bf16 %v810, %v809
      %v817 = vpack.c.bf16 %v812, %v811
      %v818 = vpack.c.bf16 %v814, %v813
      %v819 = vld [vmem:[%s1 + $0x100] sm:$0xf]
      %v820 = vld [vmem:[%s1 + $0x104] sm:$0xf]
      %v821 = vld [vmem:[%s1 + $0x108] sm:$0xf]
      %v822 = vld [vmem:[%s1 + $0x10c] sm:$0xf]
      %v823 = vld [vmem:[%s1 + $0x110] sm:$0xf]
      %v824 = vld [vmem:[%s1 + $0x114] sm:$0xf]
      %v825 = vld [vmem:[%s1 + $0x118] sm:$0xf]
      %v826 = vld [vmem:[%s1 + $0x11c] sm:$0xf]
      %v827 = vld [vmem:[%s1 + $0x120] sm:$0xf]
      %v828 = vld [vmem:[%s1 + $0x124] sm:$0xf]
      %v829 = vld [vmem:[%s1 + $0x128] sm:$0xf]
      %v830 = vld [vmem:[%s1 + $0x12c] sm:$0xf]
      %v831 = vld [vmem:[%s1 + $0x130] sm:$0xf]
      %v832 = vld [vmem:[%s1 + $0x134] sm:$0xf]
      %v833 = vld [vmem:[%s1 + $0x138] sm:$0xf]
      %v834 = vld [vmem:[%s1 + $0x13c] sm:$0xf]
      %v851 = vunpack.c.l.b16 %v819
      %v852 = vunpack.c.l.b16 %v820
      %v853 = vunpack.c.l.b16 %v821
      %v854 = vunpack.c.l.b16 %v822
      %v855 = vunpack.c.l.b16 %v823
      %v856 = vunpack.c.l.b16 %v824
      %v857 = vunpack.c.l.b16 %v825
      %v858 = vunpack.c.l.b16 %v826
      %v859 = vunpack.c.l.b16 %v827
      %v860 = vunpack.c.l.b16 %v828
      %v861 = vunpack.c.l.b16 %v829
      %v862 = vunpack.c.l.b16 %v830
      %v863 = vunpack.c.l.b16 %v831
      %v864 = vunpack.c.l.b16 %v832
      %v865 = vunpack.c.l.b16 %v833
      %v866 = vunpack.c.l.b16 %v834
      %v867 = vpack.c.b16 %v852, %v851
      %v868 = vpack.c.b16 %v854, %v853
      %v869 = vpack.c.b16 %v856, %v855
      %v870 = vpack.c.b16 %v858, %v857
      %v871 = vpack.c.b16 %v860, %v859
      %v872 = vpack.c.b16 %v862, %v861
      %v873 = vpack.c.b16 %v864, %v863
      %v874 = vpack.c.b16 %v866, %v865
      %883 = vmatprep.subr.bf16.mxu0 0
      %884 = vmatpush1.bf16.msra.mxu0 %v874
      %885 = vmatprep.subr.bf16.mxu0 0
      %886 = vmatpush1.bf16.msra.mxu0 %v873
      %887 = vmatprep.subr.bf16.mxu0 0
      %888 = vmatpush1.bf16.msra.mxu0 %v872
      %889 = vmatprep.subr.bf16.mxu0 0
      %890 = vmatpush1.bf16.msra.mxu0 %v871
      %891 = vmatprep.subr.bf16.mxu0 0
      %892 = vmatpush1.bf16.msra.mxu0 %v870
      %893 = vmatprep.subr.bf16.mxu0 0
      %894 = vmatpush1.bf16.msra.mxu0 %v869
      %895 = vmatprep.subr.bf16.mxu0 0
      %896 = vmatpush1.bf16.msra.mxu0 %v868
      %897 = vmatprep.subr.bf16.mxu0 0
      %898 = vmatpush1.bf16.msra.mxu0 %v867
      %899 = vmatprep.subr.bf16.mxu0 0
      %900 = vmatpush2.bf16.msra.mxu0 0
      %901 = vmatprep.subr.bf16.mxu0 0
      %902 = vmatpush2.bf16.msra.mxu0 0
      %903 = vmatprep.subr.bf16.mxu0 0
      %904 = vmatpush2.bf16.msra.mxu0 0
      %905 = vmatprep.subr.bf16.mxu0 0
      %906 = vmatpush2.bf16.msra.mxu0 0
      %907 = vmatprep.subr.bf16.mxu0 0
      %908 = vmatpush2.bf16.msra.mxu0 0
      %909 = vmatprep.subr.bf16.mxu0 0
      %910 = vmatpush2.bf16.msra.mxu0 0
      %911 = vmatprep.subr.bf16.mxu0 0
      %912 = vmatpush2.bf16.msra.mxu0 0
      %913 = vmatprep.subr.bf16.mxu0 0
      %914 = vmatpush2.bf16.msra.mxu0 0
      %915 = vmatprep.mubr.bf16.mxu0 0
      %916 = vmatmul.mubr.bf16.gmra.mxu0 %v815
      %v917 = vpop.f32.mrf.mxu0
      %v918 = vadd.f32 0.0, %v917
      %v919 = vpop.f32.mrf.mxu0
      %v920 = vpop.f32.mrf.mxu0
      %v921 = vadd.f32 0.0, %v920
      %v922 = vpop.f32.mrf.mxu0
      %923 = vmatprep.mubr.bf16.mxu0 0
      %924 = vmatmul.mubr.bf16.gmra.mxu0 %v816
      %v925 = vpop.f32.mrf.mxu0
      %v926 = vadd.f32 0.0, %v925
      %v927 = vpop.f32.mrf.mxu0
      %v928 = vpop.f32.mrf.mxu0
      %v929 = vadd.f32 0.0, %v928
      %v930 = vpop.f32.mrf.mxu0
      %931 = vmatprep.mubr.bf16.mxu0 0
      %932 = vmatmul.mubr.bf16.gmra.mxu0 %v817
      %v933 = vpop.f32.mrf.mxu0
      %v934 = vadd.f32 0.0, %v933
      %v935 = vpop.f32.mrf.mxu0
      %v936 = vpop.f32.mrf.mxu0
      %v937 = vadd.f32 0.0, %v936
      %v938 = vpop.f32.mrf.mxu0
      %939 = vmatprep.mubr.bf16.mxu0 0
      %940 = vmatmul.mubr.bf16.gmra.mxu0 %v818
      %v941 = vpop.f32.mrf.mxu0
      %v942 = vadd.f32 0.0, %v941
      %v943 = vpop.f32.mrf.mxu0
      %v944 = vpop.f32.mrf.mxu0
      %v945 = vadd.f32 0.0, %v944
      %v946 = vpop.f32.mrf.mxu0
      %947 = vdwg.mxu0
      %v948 = vadd.f32 %v799, %v918
      %v949 = vadd.f32 %v800, %v921
      %v950 = vadd.f32 %v801, %v926
      %v951 = vadd.f32 %v802, %v929
      %v952 = vadd.f32 %v803, %v934
      %v953 = vadd.f32 %v804, %v937
      %v954 = vadd.f32 %v805, %v942
      %v955 = vadd.f32 %v806, %v945
      %v956 = vld [vmem:[%s657 + $0x2] sm:$0xff]
      %v957 = vld [vmem:[%s657 + $0x12] sm:$0xff]
      %v958 = vld [vmem:[%s657 + $0x22] sm:$0xff]
      %v959 = vld [vmem:[%s657 + $0x32] sm:$0xff]
      %v960 = vld [vmem:[%s657 + $0x42] sm:$0xff]
      %v961 = vld [vmem:[%s657 + $0x52] sm:$0xff]
      %v962 = vld [vmem:[%s657 + $0x62] sm:$0xff]
      %v963 = vld [vmem:[%s657 + $0x72] sm:$0xff]
      %v964 = vpack.c.bf16 %v957, %v956
      %v965 = vpack.c.bf16 %v959, %v958
      %v966 = vpack.c.bf16 %v961, %v960
      %v967 = vpack.c.bf16 %v963, %v962
      %v968 = vld [vmem:[%s1 + $0x140] sm:$0xf]
      %v969 = vld [vmem:[%s1 + $0x144] sm:$0xf]
      %v970 = vld [vmem:[%s1 + $0x148] sm:$0xf]
      %v971 = vld [vmem:[%s1 + $0x14c] sm:$0xf]
      %v972 = vld [vmem:[%s1 + $0x150] sm:$0xf]
      %v973 = vld [vmem:[%s1 + $0x154] sm:$0xf]
      %v974 = vld [vmem:[%s1 + $0x158] sm:$0xf]
      %v975 = vld [vmem:[%s1 + $0x15c] sm:$0xf]
      %v976 = vld [vmem:[%s1 + $0x160] sm:$0xf]
      %v977 = vld [vmem:[%s1 + $0x164] sm:$0xf]
      %v978 = vld [vmem:[%s1 + $0x168] sm:$0xf]
      %v979 = vld [vmem:[%s1 + $0x16c] sm:$0xf]
      %v980 = vld [vmem:[%s1 + $0x170] sm:$0xf]
      %v981 = vld [vmem:[%s1 + $0x174] sm:$0xf]
      %v982 = vld [vmem:[%s1 + $0x178] sm:$0xf]
      %v983 = vld [vmem:[%s1 + $0x17c] sm:$0xf]
      %v1000 = vunpack.c.l.b16 %v968
      %v1001 = vunpack.c.l.b16 %v969
      %v1002 = vunpack.c.l.b16 %v970
      %v1003 = vunpack.c.l.b16 %v971
      %v1004 = vunpack.c.l.b16 %v972
      %v1005 = vunpack.c.l.b16 %v973
      %v1006 = vunpack.c.l.b16 %v974
      %v1007 = vunpack.c.l.b16 %v975
      %v1008 = vunpack.c.l.b16 %v976
      %v1009 = vunpack.c.l.b16 %v977
      %v1010 = vunpack.c.l.b16 %v978
      %v1011 = vunpack.c.l.b16 %v979
      %v1012 = vunpack.c.l.b16 %v980
      %v1013 = vunpack.c.l.b16 %v981
      %v1014 = vunpack.c.l.b16 %v982
      %v1015 = vunpack.c.l.b16 %v983
      %v1016 = vpack.c.b16 %v1001, %v1000
      %v1017 = vpack.c.b16 %v1003, %v1002
      %v1018 = vpack.c.b16 %v1005, %v1004
      %v1019 = vpack.c.b16 %v1007, %v1006
      %v1020 = vpack.c.b16 %v1009, %v1008
      %v1021 = vpack.c.b16 %v1011, %v1010
      %v1022 = vpack.c.b16 %v1013, %v1012
      %v1023 = vpack.c.b16 %v1015, %v1014
      %1032 = vmatprep.subr.bf16.mxu0 0
      %1033 = vmatpush1.bf16.msra.mxu0 %v1023
      %1034 = vmatprep.subr.bf16.mxu0 0
      %1035 = vmatpush1.bf16.msra.mxu0 %v1022
      %1036 = vmatprep.subr.bf16.mxu0 0
      %1037 = vmatpush1.bf16.msra.mxu0 %v1021
      %1038 = vmatprep.subr.bf16.mxu0 0
      %1039 = vmatpush1.bf16.msra.mxu0 %v1020
      %1040 = vmatprep.subr.bf16.mxu0 0
      %1041 = vmatpush1.bf16.msra.mxu0 %v1019
      %1042 = vmatprep.subr.bf16.mxu0 0
      %1043 = vmatpush1.bf16.msra.mxu0 %v1018
      %1044 = vmatprep.subr.bf16.mxu0 0
      %1045 = vmatpush1.bf16.msra.mxu0 %v1017
      %1046 = vmatprep.subr.bf16.mxu0 0
      %1047 = vmatpush1.bf16.msra.mxu0 %v1016
      %1048 = vmatprep.subr.bf16.mxu0 0
      %1049 = vmatpush2.bf16.msra.mxu0 0
      %1050 = vmatprep.subr.bf16.mxu0 0
      %1051 = vmatpush2.bf16.msra.mxu0 0
      %1052 = vmatprep.subr.bf16.mxu0 0
      %1053 = vmatpush2.bf16.msra.mxu0 0
      %1054 = vmatprep.subr.bf16.mxu0 0
      %1055 = vmatpush2.bf16.msra.mxu0 0
      %1056 = vmatprep.subr.bf16.mxu0 0
      %1057 = vmatpush2.bf16.msra.mxu0 0
      %1058 = vmatprep.subr.bf16.mxu0 0
      %1059 = vmatpush2.bf16.msra.mxu0 0
      %1060 = vmatprep.subr.bf16.mxu0 0
      %1061 = vmatpush2.bf16.msra.mxu0 0
      %1062 = vmatprep.subr.bf16.mxu0 0
      %1063 = vmatpush2.bf16.msra.mxu0 0
      %1064 = vmatprep.mubr.bf16.mxu0 0
      %1065 = vmatmul.mubr.bf16.gmra.mxu0 %v964
      %v1066 = vpop.f32.mrf.mxu0
      %v1067 = vadd.f32 0.0, %v1066
      %v1068 = vpop.f32.mrf.mxu0
      %v1069 = vpop.f32.mrf.mxu0
      %v1070 = vadd.f32 0.0, %v1069
      %v1071 = vpop.f32.mrf.mxu0
      %1072 = vmatprep.mubr.bf16.mxu0 0
      %1073 = vmatmul.mubr.bf16.gmra.mxu0 %v965
      %v1074 = vpop.f32.mrf.mxu0
      %v1075 = vadd.f32 0.0, %v1074
      %v1076 = vpop.f32.mrf.mxu0
      %v1077 = vpop.f32.mrf.mxu0
      %v1078 = vadd.f32 0.0, %v1077
      %v1079 = vpop.f32.mrf.mxu0
      %1080 = vmatprep.mubr.bf16.mxu0 0
      %1081 = vmatmul.mubr.bf16.gmra.mxu0 %v966
      %v1082 = vpop.f32.mrf.mxu0
      %v1083 = vadd.f32 0.0, %v1082
      %v1084 = vpop.f32.mrf.mxu0
      %v1085 = vpop.f32.mrf.mxu0
      %v1086 = vadd.f32 0.0, %v1085
      %v1087 = vpop.f32.mrf.mxu0
      %1088 = vmatprep.mubr.bf16.mxu0 0
      %1089 = vmatmul.mubr.bf16.gmra.mxu0 %v967
      %v1090 = vpop.f32.mrf.mxu0
      %v1091 = vadd.f32 0.0, %v1090
      %v1092 = vpop.f32.mrf.mxu0
      %v1093 = vpop.f32.mrf.mxu0
      %v1094 = vadd.f32 0.0, %v1093
      %v1095 = vpop.f32.mrf.mxu0
      %1096 = vdwg.mxu0
      %v1097 = vadd.f32 %v948, %v1067
      %v1098 = vadd.f32 %v949, %v1070
      %v1099 = vadd.f32 %v950, %v1075
      %v1100 = vadd.f32 %v951, %v1078
      %v1101 = vadd.f32 %v952, %v1083
      %v1102 = vadd.f32 %v953, %v1086
      %v1103 = vadd.f32 %v954, %v1091
      %v1104 = vadd.f32 %v955, %v1094
      %s1105 = scalar_lea.vmem %s219, 32
      %v1106 = vld [vmem:[%s1105] sm:$0xff]
      %v1107 = vld [vmem:[%s1105 + $0x10] sm:$0xff]
      %v1108 = vld [vmem:[%s1105 + $0x20] sm:$0xff]
      %v1109 = vld [vmem:[%s1105 + $0x30] sm:$0xff]
      %v1110 = vld [vmem:[%s1105 + $0x40] sm:$0xff]
      %v1111 = vld [vmem:[%s1105 + $0x50] sm:$0xff]
      %v1112 = vld [vmem:[%s1105 + $0x60] sm:$0xff]
      %v1113 = vld [vmem:[%s1105 + $0x70] sm:$0xff]
      %v1114 = vpack.c.bf16 %v1107, %v1106
      %v1115 = vpack.c.bf16 %v1109, %v1108
      %v1116 = vpack.c.bf16 %v1111, %v1110
      %v1117 = vpack.c.bf16 %v1113, %v1112
      %v1118 = vld [vmem:[%s1 + $0x180] sm:$0xf]
      %v1119 = vld [vmem:[%s1 + $0x184] sm:$0xf]
      %v1120 = vld [vmem:[%s1 + $0x188] sm:$0xf]
      %v1121 = vld [vmem:[%s1 + $0x18c] sm:$0xf]
      %v1122 = vld [vmem:[%s1 + $0x190] sm:$0xf]
      %v1123 = vld [vmem:[%s1 + $0x194] sm:$0xf]
      %v1124 = vld [vmem:[%s1 + $0x198] sm:$0xf]
      %v1125 = vld [vmem:[%s1 + $0x19c] sm:$0xf]
      %v1126 = vld [vmem:[%s1 + $0x1a0] sm:$0xf]
      %v1127 = vld [vmem:[%s1 + $0x1a4] sm:$0xf]
      %v1128 = vld [vmem:[%s1 + $0x1a8] sm:$0xf]
      %v1129 = vld [vmem:[%s1 + $0x1ac] sm:$0xf]
      %v1130 = vld [vmem:[%s1 + $0x1b0] sm:$0xf]
      %v1131 = vld [vmem:[%s1 + $0x1b4] sm:$0xf]
      %v1132 = vld [vmem:[%s1 + $0x1b8] sm:$0xf]
      %v1133 = vld [vmem:[%s1 + $0x1bc] sm:$0xf]
      %v1150 = vunpack.c.l.b16 %v1118
      %v1151 = vunpack.c.l.b16 %v1119
      %v1152 = vunpack.c.l.b16 %v1120
      %v1153 = vunpack.c.l.b16 %v1121
      %v1154 = vunpack.c.l.b16 %v1122
      %v1155 = vunpack.c.l.b16 %v1123
      %v1156 = vunpack.c.l.b16 %v1124
      %v1157 = vunpack.c.l.b16 %v1125
      %v1158 = vunpack.c.l.b16 %v1126
      %v1159 = vunpack.c.l.b16 %v1127
      %v1160 = vunpack.c.l.b16 %v1128
      %v1161 = vunpack.c.l.b16 %v1129
      %v1162 = vunpack.c.l.b16 %v1130
      %v1163 = vunpack.c.l.b16 %v1131
      %v1164 = vunpack.c.l.b16 %v1132
      %v1165 = vunpack.c.l.b16 %v1133
      %v1166 = vpack.c.b16 %v1151, %v1150
      %v1167 = vpack.c.b16 %v1153, %v1152
      %v1168 = vpack.c.b16 %v1155, %v1154
      %v1169 = vpack.c.b16 %v1157, %v1156
      %v1170 = vpack.c.b16 %v1159, %v1158
      %v1171 = vpack.c.b16 %v1161, %v1160
      %v1172 = vpack.c.b16 %v1163, %v1162
      %v1173 = vpack.c.b16 %v1165, %v1164
      %1182 = vmatprep.subr.bf16.mxu0 0
      %1183 = vmatpush1.bf16.msra.mxu0 %v1173
      %1184 = vmatprep.subr.bf16.mxu0 0
      %1185 = vmatpush1.bf16.msra.mxu0 %v1172
      %1186 = vmatprep.subr.bf16.mxu0 0
      %1187 = vmatpush1.bf16.msra.mxu0 %v1171
      %1188 = vmatprep.subr.bf16.mxu0 0
      %1189 = vmatpush1.bf16.msra.mxu0 %v1170
      %1190 = vmatprep.subr.bf16.mxu0 0
      %1191 = vmatpush1.bf16.msra.mxu0 %v1169
      %1192 = vmatprep.subr.bf16.mxu0 0
      %1193 = vmatpush1.bf16.msra.mxu0 %v1168
      %1194 = vmatprep.subr.bf16.mxu0 0
      %1195 = vmatpush1.bf16.msra.mxu0 %v1167
      %1196 = vmatprep.subr.bf16.mxu0 0
      %1197 = vmatpush1.bf16.msra.mxu0 %v1166
      %1198 = vmatprep.subr.bf16.mxu0 0
      %1199 = vmatpush2.bf16.msra.mxu0 0
      %1200 = vmatprep.subr.bf16.mxu0 0
      %1201 = vmatpush2.bf16.msra.mxu0 0
      %1202 = vmatprep.subr.bf16.mxu0 0
      %1203 = vmatpush2.bf16.msra.mxu0 0
      %1204 = vmatprep.subr.bf16.mxu0 0
      %1205 = vmatpush2.bf16.msra.mxu0 0
      %1206 = vmatprep.subr.bf16.mxu0 0
      %1207 = vmatpush2.bf16.msra.mxu0 0
      %1208 = vmatprep.subr.bf16.mxu0 0
      %1209 = vmatpush2.bf16.msra.mxu0 0
      %1210 = vmatprep.subr.bf16.mxu0 0
      %1211 = vmatpush2.bf16.msra.mxu0 0
      %1212 = vmatprep.subr.bf16.mxu0 0
      %1213 = vmatpush2.bf16.msra.mxu0 0
      %1214 = vmatprep.mubr.bf16.mxu0 0
      %1215 = vmatmul.mubr.bf16.gmra.mxu0 %v1114
      %v1216 = vpop.f32.mrf.mxu0
      %v1217 = vadd.f32 0.0, %v1216
      %v1218 = vpop.f32.mrf.mxu0
      %v1219 = vpop.f32.mrf.mxu0
      %v1220 = vadd.f32 0.0, %v1219
      %v1221 = vpop.f32.mrf.mxu0
      %1222 = vmatprep.mubr.bf16.mxu0 0
      %1223 = vmatmul.mubr.bf16.gmra.mxu0 %v1115
      %v1224 = vpop.f32.mrf.mxu0
      %v1225 = vadd.f32 0.0, %v1224
      %v1226 = vpop.f32.mrf.mxu0
      %v1227 = vpop.f32.mrf.mxu0
      %v1228 = vadd.f32 0.0, %v1227
      %v1229 = vpop.f32.mrf.mxu0
      %1230 = vmatprep.mubr.bf16.mxu0 0
      %1231 = vmatmul.mubr.bf16.gmra.mxu0 %v1116
      %v1232 = vpop.f32.mrf.mxu0
      %v1233 = vadd.f32 0.0, %v1232
      %v1234 = vpop.f32.mrf.mxu0
      %v1235 = vpop.f32.mrf.mxu0
      %v1236 = vadd.f32 0.0, %v1235
      %v1237 = vpop.f32.mrf.mxu0
      %1238 = vmatprep.mubr.bf16.mxu0 0
      %1239 = vmatmul.mubr.bf16.gmra.mxu0 %v1117
      %v1240 = vpop.f32.mrf.mxu0
      %v1241 = vadd.f32 0.0, %v1240
      %v1242 = vpop.f32.mrf.mxu0
      %v1243 = vpop.f32.mrf.mxu0
      %v1244 = vadd.f32 0.0, %v1243
      %v1245 = vpop.f32.mrf.mxu0
      %1246 = vdwg.mxu0
      %v1247 = vadd.f32 %v1097, %v1217
      %v1248 = vadd.f32 %v1098, %v1220
      %v1249 = vadd.f32 %v1099, %v1225
      %v1250 = vadd.f32 %v1100, %v1228
      %v1251 = vadd.f32 %v1101, %v1233
      %v1252 = vadd.f32 %v1102, %v1236
      %v1253 = vadd.f32 %v1103, %v1241
      %v1254 = vadd.f32 %v1104, %v1244
      %v1255 = vld [vmem:[%s1105 + $0x1] sm:$0xff]
      %v1256 = vld [vmem:[%s1105 + $0x11] sm:$0xff]
      %v1257 = vld [vmem:[%s1105 + $0x21] sm:$0xff]
      %v1258 = vld [vmem:[%s1105 + $0x31] sm:$0xff]
      %v1259 = vld [vmem:[%s1105 + $0x41] sm:$0xff]
      %v1260 = vld [vmem:[%s1105 + $0x51] sm:$0xff]
      %v1261 = vld [vmem:[%s1105 + $0x61] sm:$0xff]
      %v1262 = vld [vmem:[%s1105 + $0x71] sm:$0xff]
      %v1263 = vpack.c.bf16 %v1256, %v1255
      %v1264 = vpack.c.bf16 %v1258, %v1257
      %v1265 = vpack.c.bf16 %v1260, %v1259
      %v1266 = vpack.c.bf16 %v1262, %v1261
      %v1267 = vld [vmem:[%s1 + $0x1c0] sm:$0xf]
      %v1268 = vld [vmem:[%s1 + $0x1c4] sm:$0xf]
      %v1269 = vld [vmem:[%s1 + $0x1c8] sm:$0xf]
      %v1270 = vld [vmem:[%s1 + $0x1cc] sm:$0xf]
      %v1271 = vld [vmem:[%s1 + $0x1d0] sm:$0xf]
      %v1272 = vld [vmem:[%s1 + $0x1d4] sm:$0xf]
      %v1273 = vld [vmem:[%s1 + $0x1d8] sm:$0xf]
      %v1274 = vld [vmem:[%s1 + $0x1dc] sm:$0xf]
      %v1275 = vld [vmem:[%s1 + $0x1e0] sm:$0xf]
      %v1276 = vld [vmem:[%s1 + $0x1e4] sm:$0xf]
      %v1277 = vld [vmem:[%s1 + $0x1e8] sm:$0xf]
      %v1278 = vld [vmem:[%s1 + $0x1ec] sm:$0xf]
      %v1279 = vld [vmem:[%s1 + $0x1f0] sm:$0xf]
      %v1280 = vld [vmem:[%s1 + $0x1f4] sm:$0xf]
      %v1281 = vld [vmem:[%s1 + $0x1f8] sm:$0xf]
      %v1282 = vld [vmem:[%s1 + $0x1fc] sm:$0xf]
      %v1299 = vunpack.c.l.b16 %v1267
      %v1300 = vunpack.c.l.b16 %v1268
      %v1301 = vunpack.c.l.b16 %v1269
      %v1302 = vunpack.c.l.b16 %v1270
      %v1303 = vunpack.c.l.b16 %v1271
      %v1304 = vunpack.c.l.b16 %v1272
      %v1305 = vunpack.c.l.b16 %v1273
      %v1306 = vunpack.c.l.b16 %v1274
      %v1307 = vunpack.c.l.b16 %v1275
      %v1308 = vunpack.c.l.b16 %v1276
      %v1309 = vunpack.c.l.b16 %v1277
      %v1310 = vunpack.c.l.b16 %v1278
      %v1311 = vunpack.c.l.b16 %v1279
      %v1312 = vunpack.c.l.b16 %v1280
      %v1313 = vunpack.c.l.b16 %v1281
      %v1314 = vunpack.c.l.b16 %v1282
      %v1315 = vpack.c.b16 %v1300, %v1299
      %v1316 = vpack.c.b16 %v1302, %v1301
      %v1317 = vpack.c.b16 %v1304, %v1303
      %v1318 = vpack.c.b16 %v1306, %v1305
      %v1319 = vpack.c.b16 %v1308, %v1307
      %v1320 = vpack.c.b16 %v1310, %v1309
      %v1321 = vpack.c.b16 %v1312, %v1311
      %v1322 = vpack.c.b16 %v1314, %v1313
      %1331 = vmatprep.subr.bf16.mxu0 0
      %1332 = vmatpush1.bf16.msra.mxu0 %v1322
      %1333 = vmatprep.subr.bf16.mxu0 0
      %1334 = vmatpush1.bf16.msra.mxu0 %v1321
      %1335 = vmatprep.subr.bf16.mxu0 0
      %1336 = vmatpush1.bf16.msra.mxu0 %v1320
      %1337 = vmatprep.subr.bf16.mxu0 0
      %1338 = vmatpush1.bf16.msra.mxu0 %v1319
      %1339 = vmatprep.subr.bf16.mxu0 0
      %1340 = vmatpush1.bf16.msra.mxu0 %v1318
      %1341 = vmatprep.subr.bf16.mxu0 0
      %1342 = vmatpush1.bf16.msra.mxu0 %v1317
      %1343 = vmatprep.subr.bf16.mxu0 0
      %1344 = vmatpush1.bf16.msra.mxu0 %v1316
      %1345 = vmatprep.subr.bf16.mxu0 0
      %1346 = vmatpush1.bf16.msra.mxu0 %v1315
      %1347 = vmatprep.subr.bf16.mxu0 0
      %1348 = vmatpush2.bf16.msra.mxu0 0
      %1349 = vmatprep.subr.bf16.mxu0 0
      %1350 = vmatpush2.bf16.msra.mxu0 0
      %1351 = vmatprep.subr.bf16.mxu0 0
      %1352 = vmatpush2.bf16.msra.mxu0 0
      %1353 = vmatprep.subr.bf16.mxu0 0
      %1354 = vmatpush2.bf16.msra.mxu0 0
      %1355 = vmatprep.subr.bf16.mxu0 0
      %1356 = vmatpush2.bf16.msra.mxu0 0
      %1357 = vmatprep.subr.bf16.mxu0 0
      %1358 = vmatpush2.bf16.msra.mxu0 0
      %1359 = vmatprep.subr.bf16.mxu0 0
      %1360 = vmatpush2.bf16.msra.mxu0 0
      %1361 = vmatprep.subr.bf16.mxu0 0
      %1362 = vmatpush2.bf16.msra.mxu0 0
      %1363 = vmatprep.mubr.bf16.mxu0 0
      %1364 = vmatmul.mubr.bf16.gmra.mxu0 %v1263
      %v1365 = vpop.f32.mrf.mxu0
      %v1366 = vadd.f32 0.0, %v1365
      %v1367 = vpop.f32.mrf.mxu0
      %v1368 = vpop.f32.mrf.mxu0
      %v1369 = vadd.f32 0.0, %v1368
      %v1370 = vpop.f32.mrf.mxu0
      %1371 = vmatprep.mubr.bf16.mxu0 0
      %1372 = vmatmul.mubr.bf16.gmra.mxu0 %v1264
      %v1373 = vpop.f32.mrf.mxu0
      %v1374 = vadd.f32 0.0, %v1373
      %v1375 = vpop.f32.mrf.mxu0
      %v1376 = vpop.f32.mrf.mxu0
      %v1377 = vadd.f32 0.0, %v1376
      %v1378 = vpop.f32.mrf.mxu0
      %1379 = vmatprep.mubr.bf16.mxu0 0
      %1380 = vmatmul.mubr.bf16.gmra.mxu0 %v1265
      %v1381 = vpop.f32.mrf.mxu0
      %v1382 = vadd.f32 0.0, %v1381
      %v1383 = vpop.f32.mrf.mxu0
      %v1384 = vpop.f32.mrf.mxu0
      %v1385 = vadd.f32 0.0, %v1384
      %v1386 = vpop.f32.mrf.mxu0
      %1387 = vmatprep.mubr.bf16.mxu0 0
      %1388 = vmatmul.mubr.bf16.gmra.mxu0 %v1266
      %v1389 = vpop.f32.mrf.mxu0
      %v1390 = vadd.f32 0.0, %v1389
      %v1391 = vpop.f32.mrf.mxu0
      %v1392 = vpop.f32.mrf.mxu0
      %v1393 = vadd.f32 0.0, %v1392
      %v1394 = vpop.f32.mrf.mxu0
      %1395 = vdwg.mxu0
      %v1396 = vadd.f32 %v1247, %v1366
      %v1397 = vadd.f32 %v1248, %v1369
      %v1398 = vadd.f32 %v1249, %v1374
      %v1399 = vadd.f32 %v1250, %v1377
      %v1400 = vadd.f32 %v1251, %v1382
      %v1401 = vadd.f32 %v1252, %v1385
      %v1402 = vadd.f32 %v1253, %v1390
      %v1403 = vadd.f32 %v1254, %v1393
      %v1404 = vld [vmem:[%s1105 + $0x2] sm:$0xff]
      %v1405 = vld [vmem:[%s1105 + $0x12] sm:$0xff]
      %v1406 = vld [vmem:[%s1105 + $0x22] sm:$0xff]
      %v1407 = vld [vmem:[%s1105 + $0x32] sm:$0xff]
      %v1408 = vld [vmem:[%s1105 + $0x42] sm:$0xff]
      %v1409 = vld [vmem:[%s1105 + $0x52] sm:$0xff]
      %v1410 = vld [vmem:[%s1105 + $0x62] sm:$0xff]
      %v1411 = vld [vmem:[%s1105 + $0x72] sm:$0xff]
      %v1412 = vpack.c.bf16 %v1405, %v1404
      %v1413 = vpack.c.bf16 %v1407, %v1406
      %v1414 = vpack.c.bf16 %v1409, %v1408
      %v1415 = vpack.c.bf16 %v1411, %v1410
      %v1416 = vld [vmem:[%s1 + $0x200] sm:$0xf]
      %v1417 = vld [vmem:[%s1 + $0x204] sm:$0xf]
      %v1418 = vld [vmem:[%s1 + $0x208] sm:$0xf]
      %v1419 = vld [vmem:[%s1 + $0x20c] sm:$0xf]
      %v1420 = vld [vmem:[%s1 + $0x210] sm:$0xf]
      %v1421 = vld [vmem:[%s1 + $0x214] sm:$0xf]
      %v1422 = vld [vmem:[%s1 + $0x218] sm:$0xf]
      %v1423 = vld [vmem:[%s1 + $0x21c] sm:$0xf]
      %v1424 = vld [vmem:[%s1 + $0x220] sm:$0xf]
      %v1425 = vld [vmem:[%s1 + $0x224] sm:$0xf]
      %v1426 = vld [vmem:[%s1 + $0x228] sm:$0xf]
      %v1427 = vld [vmem:[%s1 + $0x22c] sm:$0xf]
      %v1428 = vld [vmem:[%s1 + $0x230] sm:$0xf]
      %v1429 = vld [vmem:[%s1 + $0x234] sm:$0xf]
      %v1430 = vld [vmem:[%s1 + $0x238] sm:$0xf]
      %v1431 = vld [vmem:[%s1 + $0x23c] sm:$0xf]
      %v1448 = vunpack.c.l.b16 %v1416
      %v1449 = vunpack.c.l.b16 %v1417
      %v1450 = vunpack.c.l.b16 %v1418
      %v1451 = vunpack.c.l.b16 %v1419
      %v1452 = vunpack.c.l.b16 %v1420
      %v1453 = vunpack.c.l.b16 %v1421
      %v1454 = vunpack.c.l.b16 %v1422
      %v1455 = vunpack.c.l.b16 %v1423
      %v1456 = vunpack.c.l.b16 %v1424
      %v1457 = vunpack.c.l.b16 %v1425
      %v1458 = vunpack.c.l.b16 %v1426
      %v1459 = vunpack.c.l.b16 %v1427
      %v1460 = vunpack.c.l.b16 %v1428
      %v1461 = vunpack.c.l.b16 %v1429
      %v1462 = vunpack.c.l.b16 %v1430
      %v1463 = vunpack.c.l.b16 %v1431
      %v1464 = vpack.c.b16 %v1449, %v1448
      %v1465 = vpack.c.b16 %v1451, %v1450
      %v1466 = vpack.c.b16 %v1453, %v1452
      %v1467 = vpack.c.b16 %v1455, %v1454
      %v1468 = vpack.c.b16 %v1457, %v1456
      %v1469 = vpack.c.b16 %v1459, %v1458
      %v1470 = vpack.c.b16 %v1461, %v1460
      %v1471 = vpack.c.b16 %v1463, %v1462
      %1480 = vmatprep.subr.bf16.mxu0 0
      %1481 = vmatpush1.bf16.msra.mxu0 %v1471
      %1482 = vmatprep.subr.bf16.mxu0 0
      %1483 = vmatpush1.bf16.msra.mxu0 %v1470
      %1484 = vmatprep.subr.bf16.mxu0 0
      %1485 = vmatpush1.bf16.msra.mxu0 %v1469
      %1486 = vmatprep.subr.bf16.mxu0 0
      %1487 = vmatpush1.bf16.msra.mxu0 %v1468
      %1488 = vmatprep.subr.bf16.mxu0 0
      %1489 = vmatpush1.bf16.msra.mxu0 %v1467
      %1490 = vmatprep.subr.bf16.mxu0 0
      %1491 = vmatpush1.bf16.msra.mxu0 %v1466
      %1492 = vmatprep.subr.bf16.mxu0 0
      %1493 = vmatpush1.bf16.msra.mxu0 %v1465
      %1494 = vmatprep.subr.bf16.mxu0 0
      %1495 = vmatpush1.bf16.msra.mxu0 %v1464
      %1496 = vmatprep.subr.bf16.mxu0 0
      %1497 = vmatpush2.bf16.msra.mxu0 0
      %1498 = vmatprep.subr.bf16.mxu0 0
      %1499 = vmatpush2.bf16.msra.mxu0 0
      %1500 = vmatprep.subr.bf16.mxu0 0
      %1501 = vmatpush2.bf16.msra.mxu0 0
      %1502 = vmatprep.subr.bf16.mxu0 0
      %1503 = vmatpush2.bf16.msra.mxu0 0
      %1504 = vmatprep.subr.bf16.mxu0 0
      %1505 = vmatpush2.bf16.msra.mxu0 0
      %1506 = vmatprep.subr.bf16.mxu0 0
      %1507 = vmatpush2.bf16.msra.mxu0 0
      %1508 = vmatprep.subr.bf16.mxu0 0
      %1509 = vmatpush2.bf16.msra.mxu0 0
      %1510 = vmatprep.subr.bf16.mxu0 0
      %1511 = vmatpush2.bf16.msra.mxu0 0
      %1512 = vmatprep.mubr.bf16.mxu0 0
      %1513 = vmatmul.mubr.bf16.gmra.mxu0 %v1412
      %v1514 = vpop.f32.mrf.mxu0
      %v1515 = vadd.f32 0.0, %v1514
      %v1516 = vpop.f32.mrf.mxu0
      %v1517 = vpop.f32.mrf.mxu0
      %v1518 = vadd.f32 0.0, %v1517
      %v1519 = vpop.f32.mrf.mxu0
      %1520 = vmatprep.mubr.bf16.mxu0 0
      %1521 = vmatmul.mubr.bf16.gmra.mxu0 %v1413
      %v1522 = vpop.f32.mrf.mxu0
      %v1523 = vadd.f32 0.0, %v1522
      %v1524 = vpop.f32.mrf.mxu0
      %v1525 = vpop.f32.mrf.mxu0
      %v1526 = vadd.f32 0.0, %v1525
      %v1527 = vpop.f32.mrf.mxu0
      %1528 = vmatprep.mubr.bf16.mxu0 0
      %1529 = vmatmul.mubr.bf16.gmra.mxu0 %v1414
      %v1530 = vpop.f32.mrf.mxu0
      %v1531 = vadd.f32 0.0, %v1530
      %v1532 = vpop.f32.mrf.mxu0
      %v1533 = vpop.f32.mrf.mxu0
      %v1534 = vadd.f32 0.0, %v1533
      %v1535 = vpop.f32.mrf.mxu0
      %1536 = vmatprep.mubr.bf16.mxu0 0
      %1537 = vmatmul.mubr.bf16.gmra.mxu0 %v1415
      %v1538 = vpop.f32.mrf.mxu0
      %v1539 = vadd.f32 0.0, %v1538
      %v1540 = vpop.f32.mrf.mxu0
      %v1541 = vpop.f32.mrf.mxu0
      %v1542 = vadd.f32 0.0, %v1541
      %v1543 = vpop.f32.mrf.mxu0
      %1544 = vdwg.mxu0
      %v1545 = vadd.f32 %v1396, %v1515
      %v1546 = vadd.f32 %v1397, %v1518
      %v1547 = vadd.f32 %v1398, %v1523
      %v1548 = vadd.f32 %v1399, %v1526
      %v1549 = vadd.f32 %v1400, %v1531
      %v1550 = vadd.f32 %v1401, %v1534
      %v1551 = vadd.f32 %v1402, %v1539
      %v1552 = vadd.f32 %v1403, %v1542
      %v1553 = vld [vmem:[%s2] sm:$0x1]
      %v1555 = vlaneseq
      %v1556 = vshrl.u32 %v1555, 7
      %v1557 = vsub.s32 0, %v1556
      %v1558 = vrot.slane %v1553, %v1557
      %v1560 = vadd.f32 %v1545, %v1558
      %v1561 = vadd.f32 %v1546, %v1558
      %v1562 = vadd.f32 %v1547, %v1558
      %v1563 = vadd.f32 %v1548, %v1558
      %v1564 = vadd.f32 %v1549, %v1558
      %v1565 = vadd.f32 %v1550, %v1558
      %v1566 = vadd.f32 %v1551, %v1558
      %v1567 = vadd.f32 %v1552, %v1558
      %v1568 = vmax.f32 %v1560, 0.0
      %v1569 = vmax.f32 %v1561, 0.0
      %v1570 = vmax.f32 %v1562, 0.0
      %v1571 = vmax.f32 %v1563, 0.0
      %v1572 = vmax.f32 %v1564, 0.0
      %v1573 = vmax.f32 %v1565, 0.0
      %v1574 = vmax.f32 %v1566, 0.0
      %v1575 = vmax.f32 %v1567, 0.0
      %1576 = vst [vmem:[#allocation2] sm:$0xff] 0.0
      %1577 = vst [vmem:[#allocation2 + $0x8] sm:$0x3] 0.0
      %1578 = vst [vmem:[#allocation2 + $0x10] sm:$0xff] 0.0
      %1579 = vst [vmem:[#allocation2 + $0x18] sm:$0x3] 0.0
      %1580 = vst [vmem:[#allocation2 + $0x20] sm:$0xff] 0.0
      %1581 = vst [vmem:[#allocation2 + $0x28] sm:$0x3] 0.0
      %1582 = vst [vmem:[#allocation2 + $0x30] sm:$0xff] 0.0
      %1583 = vst [vmem:[#allocation2 + $0x38] sm:$0x3] 0.0
      %1584 = vst [vmem:[#allocation2 + $0x40] sm:$0xff] 0.0
      %1585 = vst [vmem:[#allocation2 + $0x48] sm:$0x3] 0.0
      %1586 = vst [vmem:[#allocation2 + $0x50] sm:$0xff] 0.0
      %1587 = vst [vmem:[#allocation2 + $0x58] sm:$0x3] 0.0
      %1588 = vst [vmem:[#allocation2 + $0x60] sm:$0xff] 0.0
      %1589 = vst [vmem:[#allocation2 + $0x68] sm:$0x3] 0.0
      %1590 = vst [vmem:[#allocation2 + $0x70] sm:$0xff] 0.0
      %1591 = vst [vmem:[#allocation2 + $0x78] sm:$0x3] 0.0
      %1592 = vst [vmem:[#allocation2 + $0x80] sm:$0xff] 0.0
      %1593 = vst [vmem:[#allocation2 + $0x88] sm:$0x3] 0.0
      %1594 = vst [vmem:[#allocation2 + $0x90] sm:$0xff] 0.0
      %1595 = vst [vmem:[#allocation2 + $0x98] sm:$0x3] 0.0
      %s1596 = scalar_lea.vmem [#allocation2], 16
      %1597 = vst [vmem:[%s1596 + $0x1] sm:$0xff] %v1568
      %1598 = vst [vmem:[%s1596 + $0x11] sm:$0xff] %v1569
      %1599 = vst [vmem:[%s1596 + $0x21] sm:$0xff] %v1570
      %1600 = vst [vmem:[%s1596 + $0x31] sm:$0xff] %v1571
      %1601 = vst [vmem:[%s1596 + $0x41] sm:$0xff] %v1572
      %1602 = vst [vmem:[%s1596 + $0x51] sm:$0xff] %v1573
      %1603 = vst [vmem:[%s1596 + $0x61] sm:$0xff] %v1574
      %1604 = vst [vmem:[%s1596 + $0x71] sm:$0xff] %v1575
      %v1605 = vld [vmem:[#allocation2] sm:$0xff]
      %v1606 = vld [vmem:[#allocation2 + $0x10] sm:$0xff]
      %v1607 = vld [vmem:[#allocation2 + $0x20] sm:$0xff]
      %v1608 = vld [vmem:[#allocation2 + $0x30] sm:$0xff]
      %v1609 = vld [vmem:[#allocation2 + $0x40] sm:$0xff]
      %v1610 = vld [vmem:[#allocation2 + $0x50] sm:$0xff]
      %v1611 = vld [vmem:[#allocation2 + $0x60] sm:$0xff]
      %v1612 = vld [vmem:[#allocation2 + $0x70] sm:$0xff]
      %v1613 = vpack.c.bf16 %v1606, %v1605
      %v1614 = vpack.c.bf16 %v1608, %v1607
      %v1615 = vpack.c.bf16 %v1610, %v1609
      %v1616 = vpack.c.bf16 %v1612, %v1611
      %v1617 = vld [vmem:[%s3] sm:$0xf]
      %v1618 = vld [vmem:[%s3 + $0x4] sm:$0xf]
      %v1619 = vld [vmem:[%s3 + $0x8] sm:$0xf]
      %v1620 = vld [vmem:[%s3 + $0xc] sm:$0xf]
      %v1621 = vld [vmem:[%s3 + $0x10] sm:$0xf]
      %v1622 = vld [vmem:[%s3 + $0x14] sm:$0xf]
      %v1623 = vld [vmem:[%s3 + $0x18] sm:$0xf]
      %v1624 = vld [vmem:[%s3 + $0x1c] sm:$0xf]
      %v1625 = vld [vmem:[%s3 + $0x20] sm:$0xf]
      %v1626 = vld [vmem:[%s3 + $0x24] sm:$0xf]
      %v1627 = vld [vmem:[%s3 + $0x28] sm:$0xf]
      %v1628 = vld [vmem:[%s3 + $0x2c] sm:$0xf]
      %v1629 = vld [vmem:[%s3 + $0x30] sm:$0xf]
      %v1630 = vld [vmem:[%s3 + $0x34] sm:$0xf]
      %v1631 = vld [vmem:[%s3 + $0x38] sm:$0xf]
      %v1632 = vld [vmem:[%s3 + $0x3c] sm:$0xf]
      %v1633 = vld [vmem:[#allocation2 + $0x1] sm:$0xff]
      %v1634 = vld [vmem:[#allocation2 + $0x11] sm:$0xff]
      %v1635 = vld [vmem:[#allocation2 + $0x21] sm:$0xff]
      %v1636 = vld [vmem:[#allocation2 + $0x31] sm:$0xff]
      %v1637 = vld [vmem:[#allocation2 + $0x41] sm:$0xff]
      %v1638 = vld [vmem:[#allocation2 + $0x51] sm:$0xff]
      %v1639 = vld [vmem:[#allocation2 + $0x61] sm:$0xff]
      %v1640 = vld [vmem:[#allocation2 + $0x71] sm:$0xff]
      %v1641 = vpack.c.bf16 %v1634, %v1633
      %v1642 = vpack.c.bf16 %v1636, %v1635
      %v1643 = vpack.c.bf16 %v1638, %v1637
      %v1644 = vpack.c.bf16 %v1640, %v1639
      %v1645 = vld [vmem:[%s3 + $0x40] sm:$0xf]
      %v1646 = vld [vmem:[%s3 + $0x44] sm:$0xf]
      %v1647 = vld [vmem:[%s3 + $0x48] sm:$0xf]
      %v1648 = vld [vmem:[%s3 + $0x4c] sm:$0xf]
      %v1649 = vld [vmem:[%s3 + $0x50] sm:$0xf]
      %v1650 = vld [vmem:[%s3 + $0x54] sm:$0xf]
      %v1651 = vld [vmem:[%s3 + $0x58] sm:$0xf]
      %v1652 = vld [vmem:[%s3 + $0x5c] sm:$0xf]
      %v1653 = vld [vmem:[%s3 + $0x60] sm:$0xf]
      %v1654 = vld [vmem:[%s3 + $0x64] sm:$0xf]
      %v1655 = vld [vmem:[%s3 + $0x68] sm:$0xf]
      %v1656 = vld [vmem:[%s3 + $0x6c] sm:$0xf]
      %v1657 = vld [vmem:[%s3 + $0x70] sm:$0xf]
      %v1658 = vld [vmem:[%s3 + $0x74] sm:$0xf]
      %v1659 = vld [vmem:[%s3 + $0x78] sm:$0xf]
      %v1660 = vld [vmem:[%s3 + $0x7c] sm:$0xf]
      %v1677 = vunpack.c.l.b16 %v1645
      %v1678 = vunpack.c.l.b16 %v1646
      %v1679 = vunpack.c.l.b16 %v1647
      %v1680 = vunpack.c.l.b16 %v1648
      %v1681 = vunpack.c.l.b16 %v1649
      %v1682 = vunpack.c.l.b16 %v1650
      %v1683 = vunpack.c.l.b16 %v1651
      %v1684 = vunpack.c.l.b16 %v1652
      %v1685 = vunpack.c.l.b16 %v1653
      %v1686 = vunpack.c.l.b16 %v1654
      %v1687 = vunpack.c.l.b16 %v1655
      %v1688 = vunpack.c.l.b16 %v1656
      %v1689 = vunpack.c.l.b16 %v1657
      %v1690 = vunpack.c.l.b16 %v1658
      %v1691 = vunpack.c.l.b16 %v1659
      %v1692 = vunpack.c.l.b16 %v1660
      %v1693 = vpack.c.b16 %v1678, %v1677
      %v1694 = vpack.c.b16 %v1680, %v1679
      %v1695 = vpack.c.b16 %v1682, %v1681
      %v1696 = vpack.c.b16 %v1684, %v1683
      %v1697 = vpack.c.b16 %v1686, %v1685
      %v1698 = vpack.c.b16 %v1688, %v1687
      %v1699 = vpack.c.b16 %v1690, %v1689
      %v1700 = vpack.c.b16 %v1692, %v1691
      %1709 = vmatprep.subr.bf16.mxu0 0
      %1710 = vmatpush1.bf16.msra.mxu0 %v1700
      %1711 = vmatprep.subr.bf16.mxu0 0
      %1712 = vmatpush1.bf16.msra.mxu0 %v1699
      %1713 = vmatprep.subr.bf16.mxu0 0
      %1714 = vmatpush1.bf16.msra.mxu0 %v1698
      %1715 = vmatprep.subr.bf16.mxu0 0
      %1716 = vmatpush1.bf16.msra.mxu0 %v1697
      %1717 = vmatprep.subr.bf16.mxu0 0
      %1718 = vmatpush1.bf16.msra.mxu0 %v1696
      %1719 = vmatprep.subr.bf16.mxu0 0
      %1720 = vmatpush1.bf16.msra.mxu0 %v1695
      %1721 = vmatprep.subr.bf16.mxu0 0
      %1722 = vmatpush1.bf16.msra.mxu0 %v1694
      %1723 = vmatprep.subr.bf16.mxu0 0
      %1724 = vmatpush1.bf16.msra.mxu0 %v1693
      %1725 = vmatprep.subr.bf16.mxu0 0
      %1726 = vmatpush2.bf16.msra.mxu0 0
      %1727 = vmatprep.subr.bf16.mxu0 0
      %1728 = vmatpush2.bf16.msra.mxu0 0
      %1729 = vmatprep.subr.bf16.mxu0 0
      %1730 = vmatpush2.bf16.msra.mxu0 0
      %1731 = vmatprep.subr.bf16.mxu0 0
      %1732 = vmatpush2.bf16.msra.mxu0 0
      %1733 = vmatprep.subr.bf16.mxu0 0
      %1734 = vmatpush2.bf16.msra.mxu0 0
      %1735 = vmatprep.subr.bf16.mxu0 0
      %1736 = vmatpush2.bf16.msra.mxu0 0
      %1737 = vmatprep.subr.bf16.mxu0 0
      %1738 = vmatpush2.bf16.msra.mxu0 0
      %1739 = vmatprep.subr.bf16.mxu0 0
      %1740 = vmatpush2.bf16.msra.mxu0 0
      %1741 = vmatprep.mubr.bf16.mxu0 0
      %1742 = vmatmul.mubr.bf16.gmra.mxu0 %v1641
      %v1743 = vpop.f32.mrf.mxu0
      %v1744 = vadd.f32 0.0, %v1743
      %v1745 = vpop.f32.mrf.mxu0
      %v1746 = vpop.f32.mrf.mxu0
      %v1747 = vadd.f32 0.0, %v1746
      %v1748 = vpop.f32.mrf.mxu0
      %1749 = vmatprep.mubr.bf16.mxu0 0
      %1750 = vmatmul.mubr.bf16.gmra.mxu0 %v1642
      %v1751 = vpop.f32.mrf.mxu0
      %v1752 = vadd.f32 0.0, %v1751
      %v1753 = vpop.f32.mrf.mxu0
      %v1754 = vpop.f32.mrf.mxu0
      %v1755 = vadd.f32 0.0, %v1754
      %v1756 = vpop.f32.mrf.mxu0
      %1757 = vmatprep.mubr.bf16.mxu0 0
      %1758 = vmatmul.mubr.bf16.gmra.mxu0 %v1643
      %v1759 = vpop.f32.mrf.mxu0
      %v1760 = vadd.f32 0.0, %v1759
      %v1761 = vpop.f32.mrf.mxu0
      %v1762 = vpop.f32.mrf.mxu0
      %v1763 = vadd.f32 0.0, %v1762
      %v1764 = vpop.f32.mrf.mxu0
      %1765 = vmatprep.mubr.bf16.mxu0 0
      %1766 = vmatmul.mubr.bf16.gmra.mxu0 %v1644
      %v1767 = vpop.f32.mrf.mxu0
      %v1768 = vadd.f32 0.0, %v1767
      %v1769 = vpop.f32.mrf.mxu0
      %v1770 = vpop.f32.mrf.mxu0
      %v1771 = vadd.f32 0.0, %v1770
      %v1772 = vpop.f32.mrf.mxu0
      %1773 = vdwg.mxu0
      %v1790 = vunpack.c.l.b16 %v1617
      %v1791 = vunpack.c.l.b16 %v1618
      %v1792 = vunpack.c.l.b16 %v1619
      %v1793 = vunpack.c.l.b16 %v1620
      %v1794 = vunpack.c.l.b16 %v1621
      %v1795 = vunpack.c.l.b16 %v1622
      %v1796 = vunpack.c.l.b16 %v1623
      %v1797 = vunpack.c.l.b16 %v1624
      %v1798 = vunpack.c.l.b16 %v1625
      %v1799 = vunpack.c.l.b16 %v1626
      %v1800 = vunpack.c.l.b16 %v1627
      %v1801 = vunpack.c.l.b16 %v1628
      %v1802 = vunpack.c.l.b16 %v1629
      %v1803 = vunpack.c.l.b16 %v1630
      %v1804 = vunpack.c.l.b16 %v1631
      %v1805 = vunpack.c.l.b16 %v1632
      %v1806 = vpack.c.b16 %v1791, %v1790
      %v1807 = vpack.c.b16 %v1793, %v1792
      %v1808 = vpack.c.b16 %v1795, %v1794
      %v1809 = vpack.c.b16 %v1797, %v1796
      %v1810 = vpack.c.b16 %v1799, %v1798
      %v1811 = vpack.c.b16 %v1801, %v1800
      %v1812 = vpack.c.b16 %v1803, %v1802
      %v1813 = vpack.c.b16 %v1805, %v1804
      %1822 = vmatprep.subr.bf16.mxu0 0
      %1823 = vmatpush1.bf16.msra.mxu0 %v1813
      %1824 = vmatprep.subr.bf16.mxu0 0
      %1825 = vmatpush1.bf16.msra.mxu0 %v1812
      %1826 = vmatprep.subr.bf16.mxu0 0
      %1827 = vmatpush1.bf16.msra.mxu0 %v1811
      %1828 = vmatprep.subr.bf16.mxu0 0
      %1829 = vmatpush1.bf16.msra.mxu0 %v1810
      %1830 = vmatprep.subr.bf16.mxu0 0
      %1831 = vmatpush1.bf16.msra.mxu0 %v1809
      %1832 = vmatprep.subr.bf16.mxu0 0
      %1833 = vmatpush1.bf16.msra.mxu0 %v1808
      %1834 = vmatprep.subr.bf16.mxu0 0
      %1835 = vmatpush1.bf16.msra.mxu0 %v1807
      %1836 = vmatprep.subr.bf16.mxu0 0
      %1837 = vmatpush1.bf16.msra.mxu0 %v1806
      %1838 = vmatprep.subr.bf16.mxu0 0
      %1839 = vmatpush2.bf16.msra.mxu0 0
      %1840 = vmatprep.subr.bf16.mxu0 0
      %1841 = vmatpush2.bf16.msra.mxu0 0
      %1842 = vmatprep.subr.bf16.mxu0 0
      %1843 = vmatpush2.bf16.msra.mxu0 0
      %1844 = vmatprep.subr.bf16.mxu0 0
      %1845 = vmatpush2.bf16.msra.mxu0 0
      %1846 = vmatprep.subr.bf16.mxu0 0
      %1847 = vmatpush2.bf16.msra.mxu0 0
      %1848 = vmatprep.subr.bf16.mxu0 0
      %1849 = vmatpush2.bf16.msra.mxu0 0
      %1850 = vmatprep.subr.bf16.mxu0 0
      %1851 = vmatpush2.bf16.msra.mxu0 0
      %1852 = vmatprep.subr.bf16.mxu0 0
      %1853 = vmatpush2.bf16.msra.mxu0 0
      %1854 = vmatprep.mubr.bf16.mxu0 0
      %1855 = vmatmul.mubr.bf16.gmra.mxu0 %v1613
      %v1856 = vpop.f32.mrf.mxu0
      %v1857 = vadd.f32 %v1744, %v1856
      %v1858 = vpop.f32.mrf.mxu0
      %v1859 = vpop.f32.mrf.mxu0
      %v1860 = vadd.f32 %v1747, %v1859
      %v1861 = vpop.f32.mrf.mxu0
      %1862 = vmatprep.mubr.bf16.mxu0 0
      %1863 = vmatmul.mubr.bf16.gmra.mxu0 %v1614
      %v1864 = vpop.f32.mrf.mxu0
      %v1865 = vadd.f32 %v1752, %v1864
      %v1866 = vpop.f32.mrf.mxu0
      %v1867 = vpop.f32.mrf.mxu0
      %v1868 = vadd.f32 %v1755, %v1867
      %v1869 = vpop.f32.mrf.mxu0
      %1870 = vmatprep.mubr.bf16.mxu0 0
      %1871 = vmatmul.mubr.bf16.gmra.mxu0 %v1615
      %v1872 = vpop.f32.mrf.mxu0
      %v1873 = vadd.f32 %v1760, %v1872
      %v1874 = vpop.f32.mrf.mxu0
      %v1875 = vpop.f32.mrf.mxu0
      %v1876 = vadd.f32 %v1763, %v1875
      %v1877 = vpop.f32.mrf.mxu0
      %1878 = vmatprep.mubr.bf16.mxu0 0
      %1879 = vmatmul.mubr.bf16.gmra.mxu0 %v1616
      %v1880 = vpop.f32.mrf.mxu0
      %v1881 = vadd.f32 %v1768, %v1880
      %v1882 = vpop.f32.mrf.mxu0
      %v1883 = vpop.f32.mrf.mxu0
      %v1884 = vadd.f32 %v1771, %v1883
      %v1885 = vpop.f32.mrf.mxu0
      %1886 = vdwg.mxu0
      %v1887 = vld [vmem:[#allocation2 + $0x2] sm:$0xff]
      %v1888 = vld [vmem:[#allocation2 + $0x12] sm:$0xff]
      %v1889 = vld [vmem:[#allocation2 + $0x22] sm:$0xff]
      %v1890 = vld [vmem:[#allocation2 + $0x32] sm:$0xff]
      %v1891 = vld [vmem:[#allocation2 + $0x42] sm:$0xff]
      %v1892 = vld [vmem:[#allocation2 + $0x52] sm:$0xff]
      %v1893 = vld [vmem:[#allocation2 + $0x62] sm:$0xff]
      %v1894 = vld [vmem:[#allocation2 + $0x72] sm:$0xff]
      %v1895 = vpack.c.bf16 %v1888, %v1887
      %v1896 = vpack.c.bf16 %v1890, %v1889
      %v1897 = vpack.c.bf16 %v1892, %v1891
      %v1898 = vpack.c.bf16 %v1894, %v1893
      %v1899 = vld [vmem:[%s3 + $0x80] sm:$0xf]
      %v1900 = vld [vmem:[%s3 + $0x84] sm:$0xf]
      %v1901 = vld [vmem:[%s3 + $0x88] sm:$0xf]
      %v1902 = vld [vmem:[%s3 + $0x8c] sm:$0xf]
      %v1903 = vld [vmem:[%s3 + $0x90] sm:$0xf]
      %v1904 = vld [vmem:[%s3 + $0x94] sm:$0xf]
      %v1905 = vld [vmem:[%s3 + $0x98] sm:$0xf]
      %v1906 = vld [vmem:[%s3 + $0x9c] sm:$0xf]
      %v1907 = vld [vmem:[%s3 + $0xa0] sm:$0xf]
      %v1908 = vld [vmem:[%s3 + $0xa4] sm:$0xf]
      %v1909 = vld [vmem:[%s3 + $0xa8] sm:$0xf]
      %v1910 = vld [vmem:[%s3 + $0xac] sm:$0xf]
      %v1911 = vld [vmem:[%s3 + $0xb0] sm:$0xf]
      %v1912 = vld [vmem:[%s3 + $0xb4] sm:$0xf]
      %v1913 = vld [vmem:[%s3 + $0xb8] sm:$0xf]
      %v1914 = vld [vmem:[%s3 + $0xbc] sm:$0xf]
      %v1931 = vunpack.c.l.b16 %v1899
      %v1932 = vunpack.c.l.b16 %v1900
      %v1933 = vunpack.c.l.b16 %v1901
      %v1934 = vunpack.c.l.b16 %v1902
      %v1935 = vunpack.c.l.b16 %v1903
      %v1936 = vunpack.c.l.b16 %v1904
      %v1937 = vunpack.c.l.b16 %v1905
      %v1938 = vunpack.c.l.b16 %v1906
      %v1939 = vunpack.c.l.b16 %v1907
      %v1940 = vunpack.c.l.b16 %v1908
      %v1941 = vunpack.c.l.b16 %v1909
      %v1942 = vunpack.c.l.b16 %v1910
      %v1943 = vunpack.c.l.b16 %v1911
      %v1944 = vunpack.c.l.b16 %v1912
      %v1945 = vunpack.c.l.b16 %v1913
      %v1946 = vunpack.c.l.b16 %v1914
      %v1947 = vpack.c.b16 %v1932, %v1931
      %v1948 = vpack.c.b16 %v1934, %v1933
      %v1949 = vpack.c.b16 %v1936, %v1935
      %v1950 = vpack.c.b16 %v1938, %v1937
      %v1951 = vpack.c.b16 %v1940, %v1939
      %v1952 = vpack.c.b16 %v1942, %v1941
      %v1953 = vpack.c.b16 %v1944, %v1943
      %v1954 = vpack.c.b16 %v1946, %v1945
      %1963 = vmatprep.subr.bf16.mxu0 0
      %1964 = vmatpush1.bf16.msra.mxu0 %v1954
      %1965 = vmatprep.subr.bf16.mxu0 0
      %1966 = vmatpush1.bf16.msra.mxu0 %v1953
      %1967 = vmatprep.subr.bf16.mxu0 0
      %1968 = vmatpush1.bf16.msra.mxu0 %v1952
      %1969 = vmatprep.subr.bf16.mxu0 0
      %1970 = vmatpush1.bf16.msra.mxu0 %v1951
      %1971 = vmatprep.subr.bf16.mxu0 0
      %1972 = vmatpush1.bf16.msra.mxu0 %v1950
      %1973 = vmatprep.subr.bf16.mxu0 0
      %1974 = vmatpush1.bf16.msra.mxu0 %v1949
      %1975 = vmatprep.subr.bf16.mxu0 0
      %1976 = vmatpush1.bf16.msra.mxu0 %v1948
      %1977 = vmatprep.subr.bf16.mxu0 0
      %1978 = vmatpush1.bf16.msra.mxu0 %v1947
      %1979 = vmatprep.subr.bf16.mxu0 0
      %1980 = vmatpush2.bf16.msra.mxu0 0
      %1981 = vmatprep.subr.bf16.mxu0 0
      %1982 = vmatpush2.bf16.msra.mxu0 0
      %1983 = vmatprep.subr.bf16.mxu0 0
      %1984 = vmatpush2.bf16.msra.mxu0 0
      %1985 = vmatprep.subr.bf16.mxu0 0
      %1986 = vmatpush2.bf16.msra.mxu0 0
      %1987 = vmatprep.subr.bf16.mxu0 0
      %1988 = vmatpush2.bf16.msra.mxu0 0
      %1989 = vmatprep.subr.bf16.mxu0 0
      %1990 = vmatpush2.bf16.msra.mxu0 0
      %1991 = vmatprep.subr.bf16.mxu0 0
      %1992 = vmatpush2.bf16.msra.mxu0 0
      %1993 = vmatprep.subr.bf16.mxu0 0
      %1994 = vmatpush2.bf16.msra.mxu0 0
      %1995 = vmatprep.mubr.bf16.mxu0 0
      %1996 = vmatmul.mubr.bf16.gmra.mxu0 %v1895
      %v1997 = vpop.f32.mrf.mxu0
      %v1998 = vadd.f32 0.0, %v1997
      %v1999 = vpop.f32.mrf.mxu0
      %v2000 = vpop.f32.mrf.mxu0
      %v2001 = vadd.f32 0.0, %v2000
      %v2002 = vpop.f32.mrf.mxu0
      %2003 = vmatprep.mubr.bf16.mxu0 0
      %2004 = vmatmul.mubr.bf16.gmra.mxu0 %v1896
      %v2005 = vpop.f32.mrf.mxu0
      %v2006 = vadd.f32 0.0, %v2005
      %v2007 = vpop.f32.mrf.mxu0
      %v2008 = vpop.f32.mrf.mxu0
      %v2009 = vadd.f32 0.0, %v2008
      %v2010 = vpop.f32.mrf.mxu0
      %2011 = vmatprep.mubr.bf16.mxu0 0
      %2012 = vmatmul.mubr.bf16.gmra.mxu0 %v1897
      %v2013 = vpop.f32.mrf.mxu0
      %v2014 = vadd.f32 0.0, %v2013
      %v2015 = vpop.f32.mrf.mxu0
      %v2016 = vpop.f32.mrf.mxu0
      %v2017 = vadd.f32 0.0, %v2016
      %v2018 = vpop.f32.mrf.mxu0
      %2019 = vmatprep.mubr.bf16.mxu0 0
      %2020 = vmatmul.mubr.bf16.gmra.mxu0 %v1898
      %v2021 = vpop.f32.mrf.mxu0
      %v2022 = vadd.f32 0.0, %v2021
      %v2023 = vpop.f32.mrf.mxu0
      %v2024 = vpop.f32.mrf.mxu0
      %v2025 = vadd.f32 0.0, %v2024
      %v2026 = vpop.f32.mrf.mxu0
      %2027 = vdwg.mxu0
      %v2028 = vadd.f32 %v1857, %v1998
      %v2029 = vadd.f32 %v1860, %v2001
      %v2030 = vadd.f32 %v1865, %v2006
      %v2031 = vadd.f32 %v1868, %v2009
      %v2032 = vadd.f32 %v1873, %v2014
      %v2033 = vadd.f32 %v1876, %v2017
      %v2034 = vadd.f32 %v1881, %v2022
      %v2035 = vadd.f32 %v1884, %v2025
      %v2036 = vld [vmem:[%s1596] sm:$0xff]
      %v2037 = vld [vmem:[%s1596 + $0x10] sm:$0xff]
      %v2038 = vld [vmem:[%s1596 + $0x20] sm:$0xff]
      %v2039 = vld [vmem:[%s1596 + $0x30] sm:$0xff]
      %v2040 = vld [vmem:[%s1596 + $0x40] sm:$0xff]
      %v2041 = vld [vmem:[%s1596 + $0x50] sm:$0xff]
      %v2042 = vld [vmem:[%s1596 + $0x60] sm:$0xff]
      %v2043 = vld [vmem:[%s1596 + $0x70] sm:$0xff]
      %v2044 = vpack.c.bf16 %v2037, %v2036
      %v2045 = vpack.c.bf16 %v2039, %v2038
      %v2046 = vpack.c.bf16 %v2041, %v2040
      %v2047 = vpack.c.bf16 %v2043, %v2042
      %v2048 = vld [vmem:[%s3 + $0xc0] sm:$0xf]
      %v2049 = vld [vmem:[%s3 + $0xc4] sm:$0xf]
      %v2050 = vld [vmem:[%s3 + $0xc8] sm:$0xf]
      %v2051 = vld [vmem:[%s3 + $0xcc] sm:$0xf]
      %v2052 = vld [vmem:[%s3 + $0xd0] sm:$0xf]
      %v2053 = vld [vmem:[%s3 + $0xd4] sm:$0xf]
      %v2054 = vld [vmem:[%s3 + $0xd8] sm:$0xf]
      %v2055 = vld [vmem:[%s3 + $0xdc] sm:$0xf]
      %v2056 = vld [vmem:[%s3 + $0xe0] sm:$0xf]
      %v2057 = vld [vmem:[%s3 + $0xe4] sm:$0xf]
      %v2058 = vld [vmem:[%s3 + $0xe8] sm:$0xf]
      %v2059 = vld [vmem:[%s3 + $0xec] sm:$0xf]
      %v2060 = vld [vmem:[%s3 + $0xf0] sm:$0xf]
      %v2061 = vld [vmem:[%s3 + $0xf4] sm:$0xf]
      %v2062 = vld [vmem:[%s3 + $0xf8] sm:$0xf]
      %v2063 = vld [vmem:[%s3 + $0xfc] sm:$0xf]
      %v2080 = vunpack.c.l.b16 %v2048
      %v2081 = vunpack.c.l.b16 %v2049
      %v2082 = vunpack.c.l.b16 %v2050
      %v2083 = vunpack.c.l.b16 %v2051
      %v2084 = vunpack.c.l.b16 %v2052
      %v2085 = vunpack.c.l.b16 %v2053
      %v2086 = vunpack.c.l.b16 %v2054
      %v2087 = vunpack.c.l.b16 %v2055
      %v2088 = vunpack.c.l.b16 %v2056
      %v2089 = vunpack.c.l.b16 %v2057
      %v2090 = vunpack.c.l.b16 %v2058
      %v2091 = vunpack.c.l.b16 %v2059
      %v2092 = vunpack.c.l.b16 %v2060
      %v2093 = vunpack.c.l.b16 %v2061
      %v2094 = vunpack.c.l.b16 %v2062
      %v2095 = vunpack.c.l.b16 %v2063
      %v2096 = vpack.c.b16 %v2081, %v2080
      %v2097 = vpack.c.b16 %v2083, %v2082
      %v2098 = vpack.c.b16 %v2085, %v2084
      %v2099 = vpack.c.b16 %v2087, %v2086
      %v2100 = vpack.c.b16 %v2089, %v2088
      %v2101 = vpack.c.b16 %v2091, %v2090
      %v2102 = vpack.c.b16 %v2093, %v2092
      %v2103 = vpack.c.b16 %v2095, %v2094
      %2112 = vmatprep.subr.bf16.mxu0 0
      %2113 = vmatpush1.bf16.msra.mxu0 %v2103
      %2114 = vmatprep.subr.bf16.mxu0 0
      %2115 = vmatpush1.bf16.msra.mxu0 %v2102
      %2116 = vmatprep.subr.bf16.mxu0 0
      %2117 = vmatpush1.bf16.msra.mxu0 %v2101
      %2118 = vmatprep.subr.bf16.mxu0 0
      %2119 = vmatpush1.bf16.msra.mxu0 %v2100
      %2120 = vmatprep.subr.bf16.mxu0 0
      %2121 = vmatpush1.bf16.msra.mxu0 %v2099
      %2122 = vmatprep.subr.bf16.mxu0 0
      %2123 = vmatpush1.bf16.msra.mxu0 %v2098
      %2124 = vmatprep.subr.bf16.mxu0 0
      %2125 = vmatpush1.bf16.msra.mxu0 %v2097
      %2126 = vmatprep.subr.bf16.mxu0 0
      %2127 = vmatpush1.bf16.msra.mxu0 %v2096
      %2128 = vmatprep.subr.bf16.mxu0 0
      %2129 = vmatpush2.bf16.msra.mxu0 0
      %2130 = vmatprep.subr.bf16.mxu0 0
      %2131 = vmatpush2.bf16.msra.mxu0 0
      %2132 = vmatprep.subr.bf16.mxu0 0
      %2133 = vmatpush2.bf16.msra.mxu0 0
      %2134 = vmatprep.subr.bf16.mxu0 0
      %2135 = vmatpush2.bf16.msra.mxu0 0
      %2136 = vmatprep.subr.bf16.mxu0 0
      %2137 = vmatpush2.bf16.msra.mxu0 0
      %2138 = vmatprep.subr.bf16.mxu0 0
      %2139 = vmatpush2.bf16.msra.mxu0 0
      %2140 = vmatprep.subr.bf16.mxu0 0
      %2141 = vmatpush2.bf16.msra.mxu0 0
      %2142 = vmatprep.subr.bf16.mxu0 0
      %2143 = vmatpush2.bf16.msra.mxu0 0
      %2144 = vmatprep.mubr.bf16.mxu0 0
      %2145 = vmatmul.mubr.bf16.gmra.mxu0 %v2044
      %v2146 = vpop.f32.mrf.mxu0
      %v2147 = vadd.f32 0.0, %v2146
      %v2148 = vpop.f32.mrf.mxu0
      %v2149 = vpop.f32.mrf.mxu0
      %v2150 = vadd.f32 0.0, %v2149
      %v2151 = vpop.f32.mrf.mxu0
      %2152 = vmatprep.mubr.bf16.mxu0 0
      %2153 = vmatmul.mubr.bf16.gmra.mxu0 %v2045
      %v2154 = vpop.f32.mrf.mxu0
      %v2155 = vadd.f32 0.0, %v2154
      %v2156 = vpop.f32.mrf.mxu0
      %v2157 = vpop.f32.mrf.mxu0
      %v2158 = vadd.f32 0.0, %v2157
      %v2159 = vpop.f32.mrf.mxu0
      %2160 = vmatprep.mubr.bf16.mxu0 0
      %2161 = vmatmul.mubr.bf16.gmra.mxu0 %v2046
      %v2162 = vpop.f32.mrf.mxu0
      %v2163 = vadd.f32 0.0, %v2162
      %v2164 = vpop.f32.mrf.mxu0
      %v2165 = vpop.f32.mrf.mxu0
      %v2166 = vadd.f32 0.0, %v2165
      %v2167 = vpop.f32.mrf.mxu0
      %2168 = vmatprep.mubr.bf16.mxu0 0
      %2169 = vmatmul.mubr.bf16.gmra.mxu0 %v2047
      %v2170 = vpop.f32.mrf.mxu0
      %v2171 = vadd.f32 0.0, %v2170
      %v2172 = vpop.f32.mrf.mxu0
      %v2173 = vpop.f32.mrf.mxu0
      %v2174 = vadd.f32 0.0, %v2173
      %v2175 = vpop.f32.mrf.mxu0
      %2176 = vdwg.mxu0
      %v2177 = vadd.f32 %v2028, %v2147
      %v2178 = vadd.f32 %v2029, %v2150
      %v2179 = vadd.f32 %v2030, %v2155
      %v2180 = vadd.f32 %v2031, %v2158
      %v2181 = vadd.f32 %v2032, %v2163
      %v2182 = vadd.f32 %v2033, %v2166
      %v2183 = vadd.f32 %v2034, %v2171
      %v2184 = vadd.f32 %v2035, %v2174
      %v2185 = vld [vmem:[%s1596 + $0x1] sm:$0xff]
      %v2186 = vld [vmem:[%s1596 + $0x11] sm:$0xff]
      %v2187 = vld [vmem:[%s1596 + $0x21] sm:$0xff]
      %v2188 = vld [vmem:[%s1596 + $0x31] sm:$0xff]
      %v2189 = vld [vmem:[%s1596 + $0x41] sm:$0xff]
      %v2190 = vld [vmem:[%s1596 + $0x51] sm:$0xff]
      %v2191 = vld [vmem:[%s1596 + $0x61] sm:$0xff]
      %v2192 = vld [vmem:[%s1596 + $0x71] sm:$0xff]
      %v2193 = vpack.c.bf16 %v2186, %v2185
      %v2194 = vpack.c.bf16 %v2188, %v2187
      %v2195 = vpack.c.bf16 %v2190, %v2189
      %v2196 = vpack.c.bf16 %v2192, %v2191
      %v2197 = vld [vmem:[%s3 + $0x100] sm:$0xf]
      %v2198 = vld [vmem:[%s3 + $0x104] sm:$0xf]
      %v2199 = vld [vmem:[%s3 + $0x108] sm:$0xf]
      %v2200 = vld [vmem:[%s3 + $0x10c] sm:$0xf]
      %v2201 = vld [vmem:[%s3 + $0x110] sm:$0xf]
      %v2202 = vld [vmem:[%s3 + $0x114] sm:$0xf]
      %v2203 = vld [vmem:[%s3 + $0x118] sm:$0xf]
      %v2204 = vld [vmem:[%s3 + $0x11c] sm:$0xf]
      %v2205 = vld [vmem:[%s3 + $0x120] sm:$0xf]
      %v2206 = vld [vmem:[%s3 + $0x124] sm:$0xf]
      %v2207 = vld [vmem:[%s3 + $0x128] sm:$0xf]
      %v2208 = vld [vmem:[%s3 + $0x12c] sm:$0xf]
      %v2209 = vld [vmem:[%s3 + $0x130] sm:$0xf]
      %v2210 = vld [vmem:[%s3 + $0x134] sm:$0xf]
      %v2211 = vld [vmem:[%s3 + $0x138] sm:$0xf]
      %v2212 = vld [vmem:[%s3 + $0x13c] sm:$0xf]
      %v2229 = vunpack.c.l.b16 %v2197
      %v2230 = vunpack.c.l.b16 %v2198
      %v2231 = vunpack.c.l.b16 %v2199
      %v2232 = vunpack.c.l.b16 %v2200
      %v2233 = vunpack.c.l.b16 %v2201
      %v2234 = vunpack.c.l.b16 %v2202
      %v2235 = vunpack.c.l.b16 %v2203
      %v2236 = vunpack.c.l.b16 %v2204
      %v2237 = vunpack.c.l.b16 %v2205
      %v2238 = vunpack.c.l.b16 %v2206
      %v2239 = vunpack.c.l.b16 %v2207
      %v2240 = vunpack.c.l.b16 %v2208
      %v2241 = vunpack.c.l.b16 %v2209
      %v2242 = vunpack.c.l.b16 %v2210
      %v2243 = vunpack.c.l.b16 %v2211
      %v2244 = vunpack.c.l.b16 %v2212
      %v2245 = vpack.c.b16 %v2230, %v2229
      %v2246 = vpack.c.b16 %v2232, %v2231
      %v2247 = vpack.c.b16 %v2234, %v2233
      %v2248 = vpack.c.b16 %v2236, %v2235
      %v2249 = vpack.c.b16 %v2238, %v2237
      %v2250 = vpack.c.b16 %v2240, %v2239
      %v2251 = vpack.c.b16 %v2242, %v2241
      %v2252 = vpack.c.b16 %v2244, %v2243
      %2261 = vmatprep.subr.bf16.mxu0 0
      %2262 = vmatpush1.bf16.msra.mxu0 %v2252
      %2263 = vmatprep.subr.bf16.mxu0 0
      %2264 = vmatpush1.bf16.msra.mxu0 %v2251
      %2265 = vmatprep.subr.bf16.mxu0 0
      %2266 = vmatpush1.bf16.msra.mxu0 %v2250
      %2267 = vmatprep.subr.bf16.mxu0 0
      %2268 = vmatpush1.bf16.msra.mxu0 %v2249
      %2269 = vmatprep.subr.bf16.mxu0 0
      %2270 = vmatpush1.bf16.msra.mxu0 %v2248
      %2271 = vmatprep.subr.bf16.mxu0 0
      %2272 = vmatpush1.bf16.msra.mxu0 %v2247
      %2273 = vmatprep.subr.bf16.mxu0 0
      %2274 = vmatpush1.bf16.msra.mxu0 %v2246
      %2275 = vmatprep.subr.bf16.mxu0 0
      %2276 = vmatpush1.bf16.msra.mxu0 %v2245
      %2277 = vmatprep.subr.bf16.mxu0 0
      %2278 = vmatpush2.bf16.msra.mxu0 0
      %2279 = vmatprep.subr.bf16.mxu0 0
      %2280 = vmatpush2.bf16.msra.mxu0 0
      %2281 = vmatprep.subr.bf16.mxu0 0
      %2282 = vmatpush2.bf16.msra.mxu0 0
      %2283 = vmatprep.subr.bf16.mxu0 0
      %2284 = vmatpush2.bf16.msra.mxu0 0
      %2285 = vmatprep.subr.bf16.mxu0 0
      %2286 = vmatpush2.bf16.msra.mxu0 0
      %2287 = vmatprep.subr.bf16.mxu0 0
      %2288 = vmatpush2.bf16.msra.mxu0 0
      %2289 = vmatprep.subr.bf16.mxu0 0
      %2290 = vmatpush2.bf16.msra.mxu0 0
      %2291 = vmatprep.subr.bf16.mxu0 0
      %2292 = vmatpush2.bf16.msra.mxu0 0
      %2293 = vmatprep.mubr.bf16.mxu0 0
      %2294 = vmatmul.mubr.bf16.gmra.mxu0 %v2193
      %v2295 = vpop.f32.mrf.mxu0
      %v2296 = vadd.f32 0.0, %v2295
      %v2297 = vpop.f32.mrf.mxu0
      %v2298 = vpop.f32.mrf.mxu0
      %v2299 = vadd.f32 0.0, %v2298
      %v2300 = vpop.f32.mrf.mxu0
      %2301 = vmatprep.mubr.bf16.mxu0 0
      %2302 = vmatmul.mubr.bf16.gmra.mxu0 %v2194
      %v2303 = vpop.f32.mrf.mxu0
      %v2304 = vadd.f32 0.0, %v2303
      %v2305 = vpop.f32.mrf.mxu0
      %v2306 = vpop.f32.mrf.mxu0
      %v2307 = vadd.f32 0.0, %v2306
      %v2308 = vpop.f32.mrf.mxu0
      %2309 = vmatprep.mubr.bf16.mxu0 0
      %2310 = vmatmul.mubr.bf16.gmra.mxu0 %v2195
      %v2311 = vpop.f32.mrf.mxu0
      %v2312 = vadd.f32 0.0, %v2311
      %v2313 = vpop.f32.mrf.mxu0
      %v2314 = vpop.f32.mrf.mxu0
      %v2315 = vadd.f32 0.0, %v2314
      %v2316 = vpop.f32.mrf.mxu0
      %2317 = vmatprep.mubr.bf16.mxu0 0
      %2318 = vmatmul.mubr.bf16.gmra.mxu0 %v2196
      %v2319 = vpop.f32.mrf.mxu0
      %v2320 = vadd.f32 0.0, %v2319
      %v2321 = vpop.f32.mrf.mxu0
      %v2322 = vpop.f32.mrf.mxu0
      %v2323 = vadd.f32 0.0, %v2322
      %v2324 = vpop.f32.mrf.mxu0
      %2325 = vdwg.mxu0
      %v2326 = vadd.f32 %v2177, %v2296
      %v2327 = vadd.f32 %v2178, %v2299
      %v2328 = vadd.f32 %v2179, %v2304
      %v2329 = vadd.f32 %v2180, %v2307
      %v2330 = vadd.f32 %v2181, %v2312
      %v2331 = vadd.f32 %v2182, %v2315
      %v2332 = vadd.f32 %v2183, %v2320
      %v2333 = vadd.f32 %v2184, %v2323
      %v2334 = vld [vmem:[%s1596 + $0x2] sm:$0xff]
      %v2335 = vld [vmem:[%s1596 + $0x12] sm:$0xff]
      %v2336 = vld [vmem:[%s1596 + $0x22] sm:$0xff]
      %v2337 = vld [vmem:[%s1596 + $0x32] sm:$0xff]
      %v2338 = vld [vmem:[%s1596 + $0x42] sm:$0xff]
      %v2339 = vld [vmem:[%s1596 + $0x52] sm:$0xff]
      %v2340 = vld [vmem:[%s1596 + $0x62] sm:$0xff]
      %v2341 = vld [vmem:[%s1596 + $0x72] sm:$0xff]
      %v2342 = vpack.c.bf16 %v2335, %v2334
      %v2343 = vpack.c.bf16 %v2337, %v2336
      %v2344 = vpack.c.bf16 %v2339, %v2338
      %v2345 = vpack.c.bf16 %v2341, %v2340
      %v2346 = vld [vmem:[%s3 + $0x140] sm:$0xf]
      %v2347 = vld [vmem:[%s3 + $0x144] sm:$0xf]
      %v2348 = vld [vmem:[%s3 + $0x148] sm:$0xf]
      %v2349 = vld [vmem:[%s3 + $0x14c] sm:$0xf]
      %v2350 = vld [vmem:[%s3 + $0x150] sm:$0xf]
      %v2351 = vld [vmem:[%s3 + $0x154] sm:$0xf]
      %v2352 = vld [vmem:[%s3 + $0x158] sm:$0xf]
      %v2353 = vld [vmem:[%s3 + $0x15c] sm:$0xf]
      %v2354 = vld [vmem:[%s3 + $0x160] sm:$0xf]
      %v2355 = vld [vmem:[%s3 + $0x164] sm:$0xf]
      %v2356 = vld [vmem:[%s3 + $0x168] sm:$0xf]
      %v2357 = vld [vmem:[%s3 + $0x16c] sm:$0xf]
      %v2358 = vld [vmem:[%s3 + $0x170] sm:$0xf]
      %v2359 = vld [vmem:[%s3 + $0x174] sm:$0xf]
      %v2360 = vld [vmem:[%s3 + $0x178] sm:$0xf]
      %v2361 = vld [vmem:[%s3 + $0x17c] sm:$0xf]
      %v2378 = vunpack.c.l.b16 %v2346
      %v2379 = vunpack.c.l.b16 %v2347
      %v2380 = vunpack.c.l.b16 %v2348
      %v2381 = vunpack.c.l.b16 %v2349
      %v2382 = vunpack.c.l.b16 %v2350
      %v2383 = vunpack.c.l.b16 %v2351
      %v2384 = vunpack.c.l.b16 %v2352
      %v2385 = vunpack.c.l.b16 %v2353
      %v2386 = vunpack.c.l.b16 %v2354
      %v2387 = vunpack.c.l.b16 %v2355
      %v2388 = vunpack.c.l.b16 %v2356
      %v2389 = vunpack.c.l.b16 %v2357
      %v2390 = vunpack.c.l.b16 %v2358
      %v2391 = vunpack.c.l.b16 %v2359
      %v2392 = vunpack.c.l.b16 %v2360
      %v2393 = vunpack.c.l.b16 %v2361
      %v2394 = vpack.c.b16 %v2379, %v2378
      %v2395 = vpack.c.b16 %v2381, %v2380
      %v2396 = vpack.c.b16 %v2383, %v2382
      %v2397 = vpack.c.b16 %v2385, %v2384
      %v2398 = vpack.c.b16 %v2387, %v2386
      %v2399 = vpack.c.b16 %v2389, %v2388
      %v2400 = vpack.c.b16 %v2391, %v2390
      %v2401 = vpack.c.b16 %v2393, %v2392
      %2410 = vmatprep.subr.bf16.mxu0 0
      %2411 = vmatpush1.bf16.msra.mxu0 %v2401
      %2412 = vmatprep.subr.bf16.mxu0 0
      %2413 = vmatpush1.bf16.msra.mxu0 %v2400
      %2414 = vmatprep.subr.bf16.mxu0 0
      %2415 = vmatpush1.bf16.msra.mxu0 %v2399
      %2416 = vmatprep.subr.bf16.mxu0 0
      %2417 = vmatpush1.bf16.msra.mxu0 %v2398
      %2418 = vmatprep.subr.bf16.mxu0 0
      %2419 = vmatpush1.bf16.msra.mxu0 %v2397
      %2420 = vmatprep.subr.bf16.mxu0 0
      %2421 = vmatpush1.bf16.msra.mxu0 %v2396
      %2422 = vmatprep.subr.bf16.mxu0 0
      %2423 = vmatpush1.bf16.msra.mxu0 %v2395
      %2424 = vmatprep.subr.bf16.mxu0 0
      %2425 = vmatpush1.bf16.msra.mxu0 %v2394
      %2426 = vmatprep.subr.bf16.mxu0 0
      %2427 = vmatpush2.bf16.msra.mxu0 0
      %2428 = vmatprep.subr.bf16.mxu0 0
      %2429 = vmatpush2.bf16.msra.mxu0 0
      %2430 = vmatprep.subr.bf16.mxu0 0
      %2431 = vmatpush2.bf16.msra.mxu0 0
      %2432 = vmatprep.subr.bf16.mxu0 0
      %2433 = vmatpush2.bf16.msra.mxu0 0
      %2434 = vmatprep.subr.bf16.mxu0 0
      %2435 = vmatpush2.bf16.msra.mxu0 0
      %2436 = vmatprep.subr.bf16.mxu0 0
      %2437 = vmatpush2.bf16.msra.mxu0 0
      %2438 = vmatprep.subr.bf16.mxu0 0
      %2439 = vmatpush2.bf16.msra.mxu0 0
      %2440 = vmatprep.subr.bf16.mxu0 0
      %2441 = vmatpush2.bf16.msra.mxu0 0
      %2442 = vmatprep.mubr.bf16.mxu0 0
      %2443 = vmatmul.mubr.bf16.gmra.mxu0 %v2342
      %v2444 = vpop.f32.mrf.mxu0
      %v2445 = vadd.f32 0.0, %v2444
      %v2446 = vpop.f32.mrf.mxu0
      %v2447 = vpop.f32.mrf.mxu0
      %v2448 = vadd.f32 0.0, %v2447
      %v2449 = vpop.f32.mrf.mxu0
      %2450 = vmatprep.mubr.bf16.mxu0 0
      %2451 = vmatmul.mubr.bf16.gmra.mxu0 %v2343
      %v2452 = vpop.f32.mrf.mxu0
      %v2453 = vadd.f32 0.0, %v2452
      %v2454 = vpop.f32.mrf.mxu0
      %v2455 = vpop.f32.mrf.mxu0
      %v2456 = vadd.f32 0.0, %v2455
      %v2457 = vpop.f32.mrf.mxu0
      %2458 = vmatprep.mubr.bf16.mxu0 0
      %2459 = vmatmul.mubr.bf16.gmra.mxu0 %v2344
      %v2460 = vpop.f32.mrf.mxu0
      %v2461 = vadd.f32 0.0, %v2460
      %v2462 = vpop.f32.mrf.mxu0
      %v2463 = vpop.f32.mrf.mxu0
      %v2464 = vadd.f32 0.0, %v2463
      %v2465 = vpop.f32.mrf.mxu0
      %2466 = vmatprep.mubr.bf16.mxu0 0
      %2467 = vmatmul.mubr.bf16.gmra.mxu0 %v2345
      %v2468 = vpop.f32.mrf.mxu0
      %v2469 = vadd.f32 0.0, %v2468
      %v2470 = vpop.f32.mrf.mxu0
      %v2471 = vpop.f32.mrf.mxu0
      %v2472 = vadd.f32 0.0, %v2471
      %v2473 = vpop.f32.mrf.mxu0
      %2474 = vdwg.mxu0
      %v2475 = vadd.f32 %v2326, %v2445
      %v2476 = vadd.f32 %v2327, %v2448
      %v2477 = vadd.f32 %v2328, %v2453
      %v2478 = vadd.f32 %v2329, %v2456
      %v2479 = vadd.f32 %v2330, %v2461
      %v2480 = vadd.f32 %v2331, %v2464
      %v2481 = vadd.f32 %v2332, %v2469
      %v2482 = vadd.f32 %v2333, %v2472
      %s2483 = scalar_lea.vmem [#allocation2], 32
      %v2484 = vld [vmem:[%s2483] sm:$0xff]
      %v2485 = vld [vmem:[%s2483 + $0x10] sm:$0xff]
      %v2486 = vld [vmem:[%s2483 + $0x20] sm:$0xff]
      %v2487 = vld [vmem:[%s2483 + $0x30] sm:$0xff]
      %v2488 = vld [vmem:[%s2483 + $0x40] sm:$0xff]
      %v2489 = vld [vmem:[%s2483 + $0x50] sm:$0xff]
      %v2490 = vld [vmem:[%s2483 + $0x60] sm:$0xff]
      %v2491 = vld [vmem:[%s2483 + $0x70] sm:$0xff]
      %v2492 = vpack.c.bf16 %v2485, %v2484
      %v2493 = vpack.c.bf16 %v2487, %v2486
      %v2494 = vpack.c.bf16 %v2489, %v2488
      %v2495 = vpack.c.bf16 %v2491, %v2490
      %v2496 = vld [vmem:[%s3 + $0x180] sm:$0xf]
      %v2497 = vld [vmem:[%s3 + $0x184] sm:$0xf]
      %v2498 = vld [vmem:[%s3 + $0x188] sm:$0xf]
      %v2499 = vld [vmem:[%s3 + $0x18c] sm:$0xf]
      %v2500 = vld [vmem:[%s3 + $0x190] sm:$0xf]
      %v2501 = vld [vmem:[%s3 + $0x194] sm:$0xf]
      %v2502 = vld [vmem:[%s3 + $0x198] sm:$0xf]
      %v2503 = vld [vmem:[%s3 + $0x19c] sm:$0xf]
      %v2504 = vld [vmem:[%s3 + $0x1a0] sm:$0xf]
      %v2505 = vld [vmem:[%s3 + $0x1a4] sm:$0xf]
      %v2506 = vld [vmem:[%s3 + $0x1a8] sm:$0xf]
      %v2507 = vld [vmem:[%s3 + $0x1ac] sm:$0xf]
      %v2508 = vld [vmem:[%s3 + $0x1b0] sm:$0xf]
      %v2509 = vld [vmem:[%s3 + $0x1b4] sm:$0xf]
      %v2510 = vld [vmem:[%s3 + $0x1b8] sm:$0xf]
      %v2511 = vld [vmem:[%s3 + $0x1bc] sm:$0xf]
      %v2528 = vunpack.c.l.b16 %v2496
      %v2529 = vunpack.c.l.b16 %v2497
      %v2530 = vunpack.c.l.b16 %v2498
      %v2531 = vunpack.c.l.b16 %v2499
      %v2532 = vunpack.c.l.b16 %v2500
      %v2533 = vunpack.c.l.b16 %v2501
      %v2534 = vunpack.c.l.b16 %v2502
      %v2535 = vunpack.c.l.b16 %v2503
      %v2536 = vunpack.c.l.b16 %v2504
      %v2537 = vunpack.c.l.b16 %v2505
      %v2538 = vunpack.c.l.b16 %v2506
      %v2539 = vunpack.c.l.b16 %v2507
      %v2540 = vunpack.c.l.b16 %v2508
      %v2541 = vunpack.c.l.b16 %v2509
      %v2542 = vunpack.c.l.b16 %v2510
      %v2543 = vunpack.c.l.b16 %v2511
      %v2544 = vpack.c.b16 %v2529, %v2528
      %v2545 = vpack.c.b16 %v2531, %v2530
      %v2546 = vpack.c.b16 %v2533, %v2532
      %v2547 = vpack.c.b16 %v2535, %v2534
      %v2548 = vpack.c.b16 %v2537, %v2536
      %v2549 = vpack.c.b16 %v2539, %v2538
      %v2550 = vpack.c.b16 %v2541, %v2540
      %v2551 = vpack.c.b16 %v2543, %v2542
      %2560 = vmatprep.subr.bf16.mxu0 0
      %2561 = vmatpush1.bf16.msra.mxu0 %v2551
      %2562 = vmatprep.subr.bf16.mxu0 0
      %2563 = vmatpush1.bf16.msra.mxu0 %v2550
      %2564 = vmatprep.subr.bf16.mxu0 0
      %2565 = vmatpush1.bf16.msra.mxu0 %v2549
      %2566 = vmatprep.subr.bf16.mxu0 0
      %2567 = vmatpush1.bf16.msra.mxu0 %v2548
      %2568 = vmatprep.subr.bf16.mxu0 0
      %2569 = vmatpush1.bf16.msra.mxu0 %v2547
      %2570 = vmatprep.subr.bf16.mxu0 0
      %2571 = vmatpush1.bf16.msra.mxu0 %v2546
      %2572 = vmatprep.subr.bf16.mxu0 0
      %2573 = vmatpush1.bf16.msra.mxu0 %v2545
      %2574 = vmatprep.subr.bf16.mxu0 0
      %2575 = vmatpush1.bf16.msra.mxu0 %v2544
      %2576 = vmatprep.subr.bf16.mxu0 0
      %2577 = vmatpush2.bf16.msra.mxu0 0
      %2578 = vmatprep.subr.bf16.mxu0 0
      %2579 = vmatpush2.bf16.msra.mxu0 0
      %2580 = vmatprep.subr.bf16.mxu0 0
      %2581 = vmatpush2.bf16.msra.mxu0 0
      %2582 = vmatprep.subr.bf16.mxu0 0
      %2583 = vmatpush2.bf16.msra.mxu0 0
      %2584 = vmatprep.subr.bf16.mxu0 0
      %2585 = vmatpush2.bf16.msra.mxu0 0
      %2586 = vmatprep.subr.bf16.mxu0 0
      %2587 = vmatpush2.bf16.msra.mxu0 0
      %2588 = vmatprep.subr.bf16.mxu0 0
      %2589 = vmatpush2.bf16.msra.mxu0 0
      %2590 = vmatprep.subr.bf16.mxu0 0
      %2591 = vmatpush2.bf16.msra.mxu0 0
      %2592 = vmatprep.mubr.bf16.mxu0 0
      %2593 = vmatmul.mubr.bf16.gmra.mxu0 %v2492
      %v2594 = vpop.f32.mrf.mxu0
      %v2595 = vadd.f32 0.0, %v2594
      %v2596 = vpop.f32.mrf.mxu0
      %v2597 = vpop.f32.mrf.mxu0
      %v2598 = vadd.f32 0.0, %v2597
      %v2599 = vpop.f32.mrf.mxu0
      %2600 = vmatprep.mubr.bf16.mxu0 0
      %2601 = vmatmul.mubr.bf16.gmra.mxu0 %v2493
      %v2602 = vpop.f32.mrf.mxu0
      %v2603 = vadd.f32 0.0, %v2602
      %v2604 = vpop.f32.mrf.mxu0
      %v2605 = vpop.f32.mrf.mxu0
      %v2606 = vadd.f32 0.0, %v2605
      %v2607 = vpop.f32.mrf.mxu0
      %2608 = vmatprep.mubr.bf16.mxu0 0
      %2609 = vmatmul.mubr.bf16.gmra.mxu0 %v2494
      %v2610 = vpop.f32.mrf.mxu0
      %v2611 = vadd.f32 0.0, %v2610
      %v2612 = vpop.f32.mrf.mxu0
      %v2613 = vpop.f32.mrf.mxu0
      %v2614 = vadd.f32 0.0, %v2613
      %v2615 = vpop.f32.mrf.mxu0
      %2616 = vmatprep.mubr.bf16.mxu0 0
      %2617 = vmatmul.mubr.bf16.gmra.mxu0 %v2495
      %v2618 = vpop.f32.mrf.mxu0
      %v2619 = vadd.f32 0.0, %v2618
      %v2620 = vpop.f32.mrf.mxu0
      %v2621 = vpop.f32.mrf.mxu0
      %v2622 = vadd.f32 0.0, %v2621
      %v2623 = vpop.f32.mrf.mxu0
      %2624 = vdwg.mxu0
      %v2625 = vadd.f32 %v2475, %v2595
      %v2626 = vadd.f32 %v2476, %v2598
      %v2627 = vadd.f32 %v2477, %v2603
      %v2628 = vadd.f32 %v2478, %v2606
      %v2629 = vadd.f32 %v2479, %v2611
      %v2630 = vadd.f32 %v2480, %v2614
      %v2631 = vadd.f32 %v2481, %v2619
      %v2632 = vadd.f32 %v2482, %v2622
      %v2633 = vld [vmem:[%s2483 + $0x1] sm:$0xff]
      %v2634 = vld [vmem:[%s2483 + $0x11] sm:$0xff]
      %v2635 = vld [vmem:[%s2483 + $0x21] sm:$0xff]
      %v2636 = vld [vmem:[%s2483 + $0x31] sm:$0xff]
      %v2637 = vld [vmem:[%s2483 + $0x41] sm:$0xff]
      %v2638 = vld [vmem:[%s2483 + $0x51] sm:$0xff]
      %v2639 = vld [vmem:[%s2483 + $0x61] sm:$0xff]
      %v2640 = vld [vmem:[%s2483 + $0x71] sm:$0xff]
      %v2641 = vpack.c.bf16 %v2634, %v2633
      %v2642 = vpack.c.bf16 %v2636, %v2635
      %v2643 = vpack.c.bf16 %v2638, %v2637
      %v2644 = vpack.c.bf16 %v2640, %v2639
      %v2645 = vld [vmem:[%s3 + $0x1c0] sm:$0xf]
      %v2646 = vld [vmem:[%s3 + $0x1c4] sm:$0xf]
      %v2647 = vld [vmem:[%s3 + $0x1c8] sm:$0xf]
      %v2648 = vld [vmem:[%s3 + $0x1cc] sm:$0xf]
      %v2649 = vld [vmem:[%s3 + $0x1d0] sm:$0xf]
      %v2650 = vld [vmem:[%s3 + $0x1d4] sm:$0xf]
      %v2651 = vld [vmem:[%s3 + $0x1d8] sm:$0xf]
      %v2652 = vld [vmem:[%s3 + $0x1dc] sm:$0xf]
      %v2653 = vld [vmem:[%s3 + $0x1e0] sm:$0xf]
      %v2654 = vld [vmem:[%s3 + $0x1e4] sm:$0xf]
      %v2655 = vld [vmem:[%s3 + $0x1e8] sm:$0xf]
      %v2656 = vld [vmem:[%s3 + $0x1ec] sm:$0xf]
      %v2657 = vld [vmem:[%s3 + $0x1f0] sm:$0xf]
      %v2658 = vld [vmem:[%s3 + $0x1f4] sm:$0xf]
      %v2659 = vld [vmem:[%s3 + $0x1f8] sm:$0xf]
      %v2660 = vld [vmem:[%s3 + $0x1fc] sm:$0xf]
      %v2677 = vunpack.c.l.b16 %v2645
      %v2678 = vunpack.c.l.b16 %v2646
      %v2679 = vunpack.c.l.b16 %v2647
      %v2680 = vunpack.c.l.b16 %v2648
      %v2681 = vunpack.c.l.b16 %v2649
      %v2682 = vunpack.c.l.b16 %v2650
      %v2683 = vunpack.c.l.b16 %v2651
      %v2684 = vunpack.c.l.b16 %v2652
      %v2685 = vunpack.c.l.b16 %v2653
      %v2686 = vunpack.c.l.b16 %v2654
      %v2687 = vunpack.c.l.b16 %v2655
      %v2688 = vunpack.c.l.b16 %v2656
      %v2689 = vunpack.c.l.b16 %v2657
      %v2690 = vunpack.c.l.b16 %v2658
      %v2691 = vunpack.c.l.b16 %v2659
      %v2692 = vunpack.c.l.b16 %v2660
      %v2693 = vpack.c.b16 %v2678, %v2677
      %v2694 = vpack.c.b16 %v2680, %v2679
      %v2695 = vpack.c.b16 %v2682, %v2681
      %v2696 = vpack.c.b16 %v2684, %v2683
      %v2697 = vpack.c.b16 %v2686, %v2685
      %v2698 = vpack.c.b16 %v2688, %v2687
      %v2699 = vpack.c.b16 %v2690, %v2689
      %v2700 = vpack.c.b16 %v2692, %v2691
      %2709 = vmatprep.subr.bf16.mxu0 0
      %2710 = vmatpush1.bf16.msra.mxu0 %v2700
      %2711 = vmatprep.subr.bf16.mxu0 0
      %2712 = vmatpush1.bf16.msra.mxu0 %v2699
      %2713 = vmatprep.subr.bf16.mxu0 0
      %2714 = vmatpush1.bf16.msra.mxu0 %v2698
      %2715 = vmatprep.subr.bf16.mxu0 0
      %2716 = vmatpush1.bf16.msra.mxu0 %v2697
      %2717 = vmatprep.subr.bf16.mxu0 0
      %2718 = vmatpush1.bf16.msra.mxu0 %v2696
      %2719 = vmatprep.subr.bf16.mxu0 0
      %2720 = vmatpush1.bf16.msra.mxu0 %v2695
      %2721 = vmatprep.subr.bf16.mxu0 0
      %2722 = vmatpush1.bf16.msra.mxu0 %v2694
      %2723 = vmatprep.subr.bf16.mxu0 0
      %2724 = vmatpush1.bf16.msra.mxu0 %v2693
      %2725 = vmatprep.subr.bf16.mxu0 0
      %2726 = vmatpush2.bf16.msra.mxu0 0
      %2727 = vmatprep.subr.bf16.mxu0 0
      %2728 = vmatpush2.bf16.msra.mxu0 0
      %2729 = vmatprep.subr.bf16.mxu0 0
      %2730 = vmatpush2.bf16.msra.mxu0 0
      %2731 = vmatprep.subr.bf16.mxu0 0
      %2732 = vmatpush2.bf16.msra.mxu0 0
      %2733 = vmatprep.subr.bf16.mxu0 0
      %2734 = vmatpush2.bf16.msra.mxu0 0
      %2735 = vmatprep.subr.bf16.mxu0 0
      %2736 = vmatpush2.bf16.msra.mxu0 0
      %2737 = vmatprep.subr.bf16.mxu0 0
      %2738 = vmatpush2.bf16.msra.mxu0 0
      %2739 = vmatprep.subr.bf16.mxu0 0
      %2740 = vmatpush2.bf16.msra.mxu0 0
      %2741 = vmatprep.mubr.bf16.mxu0 0
      %2742 = vmatmul.mubr.bf16.gmra.mxu0 %v2641
      %v2743 = vpop.f32.mrf.mxu0
      %v2744 = vadd.f32 0.0, %v2743
      %v2745 = vpop.f32.mrf.mxu0
      %v2746 = vpop.f32.mrf.mxu0
      %v2747 = vadd.f32 0.0, %v2746
      %v2748 = vpop.f32.mrf.mxu0
      %2749 = vmatprep.mubr.bf16.mxu0 0
      %2750 = vmatmul.mubr.bf16.gmra.mxu0 %v2642
      %v2751 = vpop.f32.mrf.mxu0
      %v2752 = vadd.f32 0.0, %v2751
      %v2753 = vpop.f32.mrf.mxu0
      %v2754 = vpop.f32.mrf.mxu0
      %v2755 = vadd.f32 0.0, %v2754
      %v2756 = vpop.f32.mrf.mxu0
      %2757 = vmatprep.mubr.bf16.mxu0 0
      %2758 = vmatmul.mubr.bf16.gmra.mxu0 %v2643
      %v2759 = vpop.f32.mrf.mxu0
      %v2760 = vadd.f32 0.0, %v2759
      %v2761 = vpop.f32.mrf.mxu0
      %v2762 = vpop.f32.mrf.mxu0
      %v2763 = vadd.f32 0.0, %v2762
      %v2764 = vpop.f32.mrf.mxu0
      %2765 = vmatprep.mubr.bf16.mxu0 0
      %2766 = vmatmul.mubr.bf16.gmra.mxu0 %v2644
      %v2767 = vpop.f32.mrf.mxu0
      %v2768 = vadd.f32 0.0, %v2767
      %v2769 = vpop.f32.mrf.mxu0
      %v2770 = vpop.f32.mrf.mxu0
      %v2771 = vadd.f32 0.0, %v2770
      %v2772 = vpop.f32.mrf.mxu0
      %2773 = vdwg.mxu0
      %v2774 = vadd.f32 %v2625, %v2744
      %v2775 = vadd.f32 %v2626, %v2747
      %v2776 = vadd.f32 %v2627, %v2752
      %v2777 = vadd.f32 %v2628, %v2755
      %v2778 = vadd.f32 %v2629, %v2760
      %v2779 = vadd.f32 %v2630, %v2763
      %v2780 = vadd.f32 %v2631, %v2768
      %v2781 = vadd.f32 %v2632, %v2771
      %v2782 = vld [vmem:[%s2483 + $0x2] sm:$0xff]
      %v2783 = vld [vmem:[%s2483 + $0x12] sm:$0xff]
      %v2784 = vld [vmem:[%s2483 + $0x22] sm:$0xff]
      %v2785 = vld [vmem:[%s2483 + $0x32] sm:$0xff]
      %v2786 = vld [vmem:[%s2483 + $0x42] sm:$0xff]
      %v2787 = vld [vmem:[%s2483 + $0x52] sm:$0xff]
      %v2788 = vld [vmem:[%s2483 + $0x62] sm:$0xff]
      %v2789 = vld [vmem:[%s2483 + $0x72] sm:$0xff]
      %v2790 = vpack.c.bf16 %v2783, %v2782
      %v2791 = vpack.c.bf16 %v2785, %v2784
      %v2792 = vpack.c.bf16 %v2787, %v2786
      %v2793 = vpack.c.bf16 %v2789, %v2788
      %v2794 = vld [vmem:[%s3 + $0x200] sm:$0xf]
      %v2795 = vld [vmem:[%s3 + $0x204] sm:$0xf]
      %v2796 = vld [vmem:[%s3 + $0x208] sm:$0xf]
      %v2797 = vld [vmem:[%s3 + $0x20c] sm:$0xf]
      %v2798 = vld [vmem:[%s3 + $0x210] sm:$0xf]
      %v2799 = vld [vmem:[%s3 + $0x214] sm:$0xf]
      %v2800 = vld [vmem:[%s3 + $0x218] sm:$0xf]
      %v2801 = vld [vmem:[%s3 + $0x21c] sm:$0xf]
      %v2802 = vld [vmem:[%s3 + $0x220] sm:$0xf]
      %v2803 = vld [vmem:[%s3 + $0x224] sm:$0xf]
      %v2804 = vld [vmem:[%s3 + $0x228] sm:$0xf]
      %v2805 = vld [vmem:[%s3 + $0x22c] sm:$0xf]
      %v2806 = vld [vmem:[%s3 + $0x230] sm:$0xf]
      %v2807 = vld [vmem:[%s3 + $0x234] sm:$0xf]
      %v2808 = vld [vmem:[%s3 + $0x238] sm:$0xf]
      %v2809 = vld [vmem:[%s3 + $0x23c] sm:$0xf]
      %v2826 = vunpack.c.l.b16 %v2794
      %v2827 = vunpack.c.l.b16 %v2795
      %v2828 = vunpack.c.l.b16 %v2796
      %v2829 = vunpack.c.l.b16 %v2797
      %v2830 = vunpack.c.l.b16 %v2798
      %v2831 = vunpack.c.l.b16 %v2799
      %v2832 = vunpack.c.l.b16 %v2800
      %v2833 = vunpack.c.l.b16 %v2801
      %v2834 = vunpack.c.l.b16 %v2802
      %v2835 = vunpack.c.l.b16 %v2803
      %v2836 = vunpack.c.l.b16 %v2804
      %v2837 = vunpack.c.l.b16 %v2805
      %v2838 = vunpack.c.l.b16 %v2806
      %v2839 = vunpack.c.l.b16 %v2807
      %v2840 = vunpack.c.l.b16 %v2808
      %v2841 = vunpack.c.l.b16 %v2809
      %v2842 = vpack.c.b16 %v2827, %v2826
      %v2843 = vpack.c.b16 %v2829, %v2828
      %v2844 = vpack.c.b16 %v2831, %v2830
      %v2845 = vpack.c.b16 %v2833, %v2832
      %v2846 = vpack.c.b16 %v2835, %v2834
      %v2847 = vpack.c.b16 %v2837, %v2836
      %v2848 = vpack.c.b16 %v2839, %v2838
      %v2849 = vpack.c.b16 %v2841, %v2840
      %2858 = vmatprep.subr.bf16.mxu0 0
      %2859 = vmatpush1.bf16.msra.mxu0 %v2849
      %2860 = vmatprep.subr.bf16.mxu0 0
      %2861 = vmatpush1.bf16.msra.mxu0 %v2848
      %2862 = vmatprep.subr.bf16.mxu0 0
      %2863 = vmatpush1.bf16.msra.mxu0 %v2847
      %2864 = vmatprep.subr.bf16.mxu0 0
      %2865 = vmatpush1.bf16.msra.mxu0 %v2846
      %2866 = vmatprep.subr.bf16.mxu0 0
      %2867 = vmatpush1.bf16.msra.mxu0 %v2845
      %2868 = vmatprep.subr.bf16.mxu0 0
      %2869 = vmatpush1.bf16.msra.mxu0 %v2844
      %2870 = vmatprep.subr.bf16.mxu0 0
      %2871 = vmatpush1.bf16.msra.mxu0 %v2843
      %2872 = vmatprep.subr.bf16.mxu0 0
      %2873 = vmatpush1.bf16.msra.mxu0 %v2842
      %2874 = vmatprep.subr.bf16.mxu0 0
      %2875 = vmatpush2.bf16.msra.mxu0 0
      %2876 = vmatprep.subr.bf16.mxu0 0
      %2877 = vmatpush2.bf16.msra.mxu0 0
      %2878 = vmatprep.subr.bf16.mxu0 0
      %2879 = vmatpush2.bf16.msra.mxu0 0
      %2880 = vmatprep.subr.bf16.mxu0 0
      %2881 = vmatpush2.bf16.msra.mxu0 0
      %2882 = vmatprep.subr.bf16.mxu0 0
      %2883 = vmatpush2.bf16.msra.mxu0 0
      %2884 = vmatprep.subr.bf16.mxu0 0
      %2885 = vmatpush2.bf16.msra.mxu0 0
      %2886 = vmatprep.subr.bf16.mxu0 0
      %2887 = vmatpush2.bf16.msra.mxu0 0
      %2888 = vmatprep.subr.bf16.mxu0 0
      %2889 = vmatpush2.bf16.msra.mxu0 0
      %2890 = vmatprep.mubr.bf16.mxu0 0
      %2891 = vmatmul.mubr.bf16.gmra.mxu0 %v2790
      %v2892 = vpop.f32.mrf.mxu0
      %v2893 = vadd.f32 0.0, %v2892
      %v2894 = vpop.f32.mrf.mxu0
      %v2895 = vpop.f32.mrf.mxu0
      %v2896 = vadd.f32 0.0, %v2895
      %v2897 = vpop.f32.mrf.mxu0
      %2898 = vmatprep.mubr.bf16.mxu0 0
      %2899 = vmatmul.mubr.bf16.gmra.mxu0 %v2791
      %v2900 = vpop.f32.mrf.mxu0
      %v2901 = vadd.f32 0.0, %v2900
      %v2902 = vpop.f32.mrf.mxu0
      %v2903 = vpop.f32.mrf.mxu0
      %v2904 = vadd.f32 0.0, %v2903
      %v2905 = vpop.f32.mrf.mxu0
      %2906 = vmatprep.mubr.bf16.mxu0 0
      %2907 = vmatmul.mubr.bf16.gmra.mxu0 %v2792
      %v2908 = vpop.f32.mrf.mxu0
      %v2909 = vadd.f32 0.0, %v2908
      %v2910 = vpop.f32.mrf.mxu0
      %v2911 = vpop.f32.mrf.mxu0
      %v2912 = vadd.f32 0.0, %v2911
      %v2913 = vpop.f32.mrf.mxu0
      %2914 = vmatprep.mubr.bf16.mxu0 0
      %2915 = vmatmul.mubr.bf16.gmra.mxu0 %v2793
      %v2916 = vpop.f32.mrf.mxu0
      %v2917 = vadd.f32 0.0, %v2916
      %v2918 = vpop.f32.mrf.mxu0
      %v2919 = vpop.f32.mrf.mxu0
      %v2920 = vadd.f32 0.0, %v2919
      %v2921 = vpop.f32.mrf.mxu0
      %2922 = vdwg.mxu0
      %v2923 = vadd.f32 %v2774, %v2893
      %v2924 = vadd.f32 %v2775, %v2896
      %v2925 = vadd.f32 %v2776, %v2901
      %v2926 = vadd.f32 %v2777, %v2904
      %v2927 = vadd.f32 %v2778, %v2909
      %v2928 = vadd.f32 %v2779, %v2912
      %v2929 = vadd.f32 %v2780, %v2917
      %v2930 = vadd.f32 %v2781, %v2920
      %v2931 = vld [vmem:[%s4] sm:$0x1]
      %v2933 = vlaneseq
      %v2934 = vshrl.u32 %v2933, 7
      %v2935 = vsub.s32 0, %v2934
      %v2936 = vrot.slane %v2931, %v2935
      %v2938 = vadd.f32 %v2923, %v2936
      %v2939 = vadd.f32 %v2924, %v2936
      %v2940 = vadd.f32 %v2925, %v2936
      %v2941 = vadd.f32 %v2926, %v2936
      %v2942 = vadd.f32 %v2927, %v2936
      %v2943 = vadd.f32 %v2928, %v2936
      %v2944 = vadd.f32 %v2929, %v2936
      %v2945 = vadd.f32 %v2930, %v2936
      %v2946 = vld [vmem:[%s657 + $0x1] sm:$0xff]
      %v2947 = vld [vmem:[%s657 + $0x11] sm:$0xff]
      %v2948 = vld [vmem:[%s657 + $0x21] sm:$0xff]
      %v2949 = vld [vmem:[%s657 + $0x31] sm:$0xff]
      %v2950 = vld [vmem:[%s657 + $0x41] sm:$0xff]
      %v2951 = vld [vmem:[%s657 + $0x51] sm:$0xff]
      %v2952 = vld [vmem:[%s657 + $0x61] sm:$0xff]
      %v2953 = vld [vmem:[%s657 + $0x71] sm:$0xff]
      %v2954 = vadd.f32 %v2938, %v2946
      %v2955 = vadd.f32 %v2939, %v2947
      %v2956 = vadd.f32 %v2940, %v2948
      %v2957 = vadd.f32 %v2941, %v2949
      %v2958 = vadd.f32 %v2942, %v2950
      %v2959 = vadd.f32 %v2943, %v2951
      %v2960 = vadd.f32 %v2944, %v2952
      %v2961 = vadd.f32 %v2945, %v2953
      %v2962 = vmax.f32 %v2954, 0.0
      %v2963 = vmax.f32 %v2955, 0.0
      %v2964 = vmax.f32 %v2956, 0.0
      %v2965 = vmax.f32 %v2957, 0.0
      %v2966 = vmax.f32 %v2958, 0.0
      %v2967 = vmax.f32 %v2959, 0.0
      %v2968 = vmax.f32 %v2960, 0.0
      %v2969 = vmax.f32 %v2961, 0.0
      %v2970 = vpack.c.bf16 %v2962, %v2962
      %v2971 = vpack.c.bf16 %v2963, %v2963
      %v2972 = vpack.c.bf16 %v2964, %v2964
      %v2973 = vpack.c.bf16 %v2965, %v2965
      %v2974 = vpack.c.bf16 %v2966, %v2966
      %v2975 = vpack.c.bf16 %v2967, %v2967
      %v2976 = vpack.c.bf16 %v2968, %v2968
      %v2977 = vpack.c.bf16 %v2969, %v2969
      %2978 = vst [vmem:[%s224] sm:$0xf] %v2970
      %2979 = vst [vmem:[%s224 + $0x4] sm:$0xf] %v2971
      %2980 = vst [vmem:[%s224 + $0x8] sm:$0xf] %v2972
      %2981 = vst [vmem:[%s224 + $0xc] sm:$0xf] %v2973
      %2982 = vst [vmem:[%s224 + $0x10] sm:$0xf] %v2974
      %2983 = vst [vmem:[%s224 + $0x14] sm:$0xf] %v2975
      %2984 = vst [vmem:[%s224 + $0x18] sm:$0xf] %v2976
      %2985 = vst [vmem:[%s224 + $0x1c] sm:$0xf] %v2977
      %p2986 = scmp.lt.s32.totalorder %s16, 1
      %s2987 = scalar_select %p2986, %s16, 1
      %s2988 = smul.addr %s2987, 8
      %s2989 = smul.addr %s2988, 4
      %s2990 = scalar_lea.vmem %s5, %s2989
      // Predicated region
      $region41: #{resnet_block_forward.3} parent=39 // pred_check
        %p2991 = pneg %p144
      $region42: #{resnet_block_forward.3} parent=39 // pred_check_branch
        %2993 = sbr.rel (%p2991) target = $region44
      $region43: #{resnet_block_forward.3} parent=39 // pred_region
        _
      $region44: #{resnet_block_forward.3} parent=39 // pred_fallthru
        _
    $region40: #{resnet_block_forward.3} parent=5 // pred_fallthru
      _
    %p2994 = scmp.le.s32.totalorder 2, %s11
    // Predicated region
    $region45: #{resnet_block_forward.3} parent=5 // pred_check
      %p2995 = pneg %p2994
    $region46: #{resnet_block_forward.3} parent=5 // pred_check_branch
      %2997 = sbr.rel (%p2995) target = $region48
    $region47: #{resnet_block_forward.3} parent=5 // pred_region
      %s2998 = ssub.s32 %s11, 2
      // Predicated region
      $region49: #{resnet_block_forward.3} parent=47 // pred_check
        %p2999 = pneg %p150
      $region50: #{resnet_block_forward.3} parent=47 // pred_check_branch
        %3001 = sbr.rel (%p2999) target = $region52
      $region51: #{resnet_block_forward.3} parent=47 // pred_region
        %p3002 = scmp.lt.s32.totalorder %s17, 1
        %s3003 = scalar_select %p3002, %s17, 1
        %s3004 = smul.addr %s3003, 8
        %s3005 = smul.addr %s3004, 4
        %s3006 = scalar_lea.vmem %s5, %s3005
      $region52: #{resnet_block_forward.3} parent=47 // pred_fallthru
        _
    $region48: #{resnet_block_forward.3} parent=5 // pred_fallthru
      _
  $region6: #{resnet_block_forward.3} parent=0 // loop_footer
    %s15 = sadd.s32 1, %s11
  $region7: #{resnet_block_forward.3} parent=0 // loop_footer_branch
    %10 = sbr.rel target = $region3
  $region8: #{resnet_block_forward.3} parent=0 // loop_exit
    _

// kernel: resnet_block_forward.2
$region0: #{resnet_block_forward.2}
  #allocation0 [shape = 'u32[]', space=smem, size = 0x4, offset = 0x4, fixed_abs, tag = 'smem constant byte address 0x4 - core index']
  #allocation1 [shape = 'u32[144,128]{1,0:T(1,128)}', space=vmem, size = 0x12000, scoped, tag = 'internal scratch']
  #allocation2 [shape = 'f32[10,10,128]{2,1,0:T(8,128)}', space=vmem, size = 0x14000, scoped, tag = 'scratch operand']
  %s0 = inlined_call_operand.vmem [shape: f32[8,9,9,128], index: 0, kind: input, shape index: {}]
  %s1 = inlined_call_operand.vmem [shape: bf16[1152,128], index: 1, kind: input, shape index: {}]
  %s2 = inlined_call_operand.vmem [shape: f32[1,128], index: 2, kind: input, shape index: {}]
  %s3 = inlined_call_operand.vmem [shape: bf16[1152,128], index: 3, kind: input, shape index: {}]
  %s4 = inlined_call_operand.vmem [shape: f32[1,128], index: 4, kind: input, shape index: {}]
  %s5 = inlined_call_operand.vmem [shape: bf16[128,128], index: 5, kind: input, shape index: {}]
  %s6 = inlined_call_operand.vmem [shape: f32[1,128], index: 6, kind: input, shape index: {}]
  %s7 = inlined_call_operand.vmem [shape: bf16[2,8,8,128], index: 7, kind: output, shape index: {}]
  %s8 = sld [smem:[#allocation0]]
  $region61: #{resnet_block_forward.2} parent=0
    _
  %s10 = ssub.s32 1, %s8
  %s11 = scalar_select 0, %s10, %s8
  loop: start=0, step=1, limit=4
  $region2: #{resnet_block_forward.2} parent=0 // loop_pre_header
    _
  $region3: #{resnet_block_forward.2} parent=0 // loop_header
    %s13 = sphi 0, %s17
    %p14 = scmp.ge.s32.totalorder %s13, 4
    %s23 = sphi 0, %s25
    %s26 = sphi 0, %s23
    %s27 = sphi 0, %s26
    %s43 = sphi 0, %s27
    %s47 = sphi 0, %s47
    %s49 = sphi 0, %s47
    %s50 = sphi 0, %s49
    %s64 = sphi 0, %s50
    %s68 = sphi 0, %s68
    %s70 = sphi 0, %s68
    %s71 = sphi 0, %s70
    %s85 = sphi 0, %s71
    %s89 = sphi 0, %s89
    %s91 = sphi 0, %s89
    %s92 = sphi 0, %s91
    %s106 = sphi 0, %s92
    %s110 = sphi 0, %s110
    %s112 = sphi 0, %s110
    %s113 = sphi 0, %s112
    %s127 = sphi 0, %s113
    %s131 = sphi 0, %s131
    %s133 = sphi 0, %s131
    %s134 = sphi 0, %s133
    %s148 = sphi 0, %s134
    %s152 = sphi 0, %s152
    %s154 = sphi 0, %s152
    %s155 = sphi 0, %s154
    %s169 = sphi 0, %s155
    %s175 = sphi 0, %s177
    %s178 = sphi 0, %s175
    %s179 = sphi 0, %s178
    %s195 = sphi 0, %s179
  $region4: #{resnet_block_forward.2} parent=0 // loop_header_branch
    %16 = sbr.rel (%p14) target = $region8
  $region5: #{resnet_block_forward.2} parent=0 // loop_body
    %s18 = ssub.s32 %s13, 1
    %s19 = ssub.s32 %s13, 2
    %s20 = sadd.s32 %s13, 1
    %s21 = ssub.s32 %s13, %s20
    %p22 = scmp.eq.s32.totalorder %s21, 0
    %s24 = sadd.s32 %s23, 1
    %s25 = scalar_select %p22, %s23, %s24
    %p28 = pneg %p22
    %p29 = scmp.eq.s32.totalorder %s13, 1
    %p30 = por %p28, %p29
    %p31 = scmp.ne.s32.totalorder %s23, %s26
    %p32 = scmp.eq.s32.totalorder %s13, 0
    %p33 = por %p31, %p32
    %p34 = scmp.ne.s32.totalorder %s23, %s26
    %p35 = scmp.eq.s32.totalorder %s18, 1
    %p36 = por %p34, %p35
    %p37 = scmp.ne.s32.totalorder %s26, %s27
    %p38 = scmp.eq.s32.totalorder %s18, 0
    %p39 = por %p37, %p38
    %p40 = scmp.ne.s32.totalorder %s26, %s27
    %p41 = scmp.eq.s32.totalorder %s19, 1
    %p42 = por %p40, %p41
    %p44 = scmp.ne.s32.totalorder %s27, %s43
    %p45 = scmp.eq.s32.totalorder %s19, 0
    %p46 = por %p44, %p45
    %s48 = sadd.s32 %s47, 1
    %p51 = scmp.eq.s32.totalorder %s13, 1
    %p52 = scmp.ne.s32.totalorder %s47, %s49
    %p53 = scmp.eq.s32.totalorder %s13, 0
    %p54 = por %p52, %p53
    %p55 = scmp.ne.s32.totalorder %s47, %s49
    %p56 = scmp.eq.s32.totalorder %s18, 1
    %p57 = por %p55, %p56
    %p58 = scmp.ne.s32.totalorder %s49, %s50
    %p59 = scmp.eq.s32.totalorder %s18, 0
    %p60 = por %p58, %p59
    %p61 = scmp.ne.s32.totalorder %s49, %s50
    %p62 = scmp.eq.s32.totalorder %s19, 1
    %p63 = por %p61, %p62
    %p65 = scmp.ne.s32.totalorder %s50, %s64
    %p66 = scmp.eq.s32.totalorder %s19, 0
    %p67 = por %p65, %p66
    %s69 = sadd.s32 %s68, 1
    %p72 = scmp.eq.s32.totalorder %s13, 1
    %p73 = scmp.ne.s32.totalorder %s68, %s70
    %p74 = scmp.eq.s32.totalorder %s13, 0
    %p75 = por %p73, %p74
    %p76 = scmp.ne.s32.totalorder %s68, %s70
    %p77 = scmp.eq.s32.totalorder %s18, 1
    %p78 = por %p76, %p77
    %p79 = scmp.ne.s32.totalorder %s70, %s71
    %p80 = scmp.eq.s32.totalorder %s18, 0
    %p81 = por %p79, %p80
    %p82 = scmp.ne.s32.totalorder %s70, %s71
    %p83 = scmp.eq.s32.totalorder %s19, 1
    %p84 = por %p82, %p83
    %p86 = scmp.ne.s32.totalorder %s71, %s85
    %p87 = scmp.eq.s32.totalorder %s19, 0
    %p88 = por %p86, %p87
    %s90 = sadd.s32 %s89, 1
    %p93 = scmp.eq.s32.totalorder %s13, 1
    %p94 = scmp.ne.s32.totalorder %s89, %s91
    %p95 = scmp.eq.s32.totalorder %s13, 0
    %p96 = por %p94, %p95
    %p97 = scmp.ne.s32.totalorder %s89, %s91
    %p98 = scmp.eq.s32.totalorder %s18, 1
    %p99 = por %p97, %p98
    %p100 = scmp.ne.s32.totalorder %s91, %s92
    %p101 = scmp.eq.s32.totalorder %s18, 0
    %p102 = por %p100, %p101
    %p103 = scmp.ne.s32.totalorder %s91, %s92
    %p104 = scmp.eq.s32.totalorder %s19, 1
    %p105 = por %p103, %p104
    %p107 = scmp.ne.s32.totalorder %s92, %s106
    %p108 = scmp.eq.s32.totalorder %s19, 0
    %p109 = por %p107, %p108
    %s111 = sadd.s32 %s110, 1
    %p114 = scmp.eq.s32.totalorder %s13, 1
    %p115 = scmp.ne.s32.totalorder %s110, %s112
    %p116 = scmp.eq.s32.totalorder %s13, 0
    %p117 = por %p115, %p116
    %p118 = scmp.ne.s32.totalorder %s110, %s112
    %p119 = scmp.eq.s32.totalorder %s18, 1
    %p120 = por %p118, %p119
    %p121 = scmp.ne.s32.totalorder %s112, %s113
    %p122 = scmp.eq.s32.totalorder %s18, 0
    %p123 = por %p121, %p122
    %p124 = scmp.ne.s32.totalorder %s112, %s113
    %p125 = scmp.eq.s32.totalorder %s19, 1
    %p126 = por %p124, %p125
    %p128 = scmp.ne.s32.totalorder %s113, %s127
    %p129 = scmp.eq.s32.totalorder %s19, 0
    %p130 = por %p128, %p129
    %s132 = sadd.s32 %s131, 1
    %p135 = scmp.eq.s32.totalorder %s13, 1
    %p136 = scmp.ne.s32.totalorder %s131, %s133
    %p137 = scmp.eq.s32.totalorder %s13, 0
    %p138 = por %p136, %p137
    %p139 = scmp.ne.s32.totalorder %s131, %s133
    %p140 = scmp.eq.s32.totalorder %s18, 1
    %p141 = por %p139, %p140
    %p142 = scmp.ne.s32.totalorder %s133, %s134
    %p143 = scmp.eq.s32.totalorder %s18, 0
    %p144 = por %p142, %p143
    %p145 = scmp.ne.s32.totalorder %s133, %s134
    %p146 = scmp.eq.s32.totalorder %s19, 1
    %p147 = por %p145, %p146
    %p149 = scmp.ne.s32.totalorder %s134, %s148
    %p150 = scmp.eq.s32.totalorder %s19, 0
    %p151 = por %p149, %p150
    %s153 = sadd.s32 %s152, 1
    %p156 = scmp.eq.s32.totalorder %s13, 1
    %p157 = scmp.ne.s32.totalorder %s152, %s154
    %p158 = scmp.eq.s32.totalorder %s13, 0
    %p159 = por %p157, %p158
    %p160 = scmp.ne.s32.totalorder %s152, %s154
    %p161 = scmp.eq.s32.totalorder %s18, 1
    %p162 = por %p160, %p161
    %p163 = scmp.ne.s32.totalorder %s154, %s155
    %p164 = scmp.eq.s32.totalorder %s18, 0
    %p165 = por %p163, %p164
    %p166 = scmp.ne.s32.totalorder %s154, %s155
    %p167 = scmp.eq.s32.totalorder %s19, 1
    %p168 = por %p166, %p167
    %p170 = scmp.ne.s32.totalorder %s155, %s169
    %p171 = scmp.eq.s32.totalorder %s19, 0
    %p172 = por %p170, %p171
    %s173 = ssub.s32 %s13, %s20
    %p174 = scmp.eq.s32.totalorder %s173, 0
    %s176 = sadd.s32 %s175, 1
    %s177 = scalar_select %p174, %s175, %s176
    %p180 = pneg %p174
    %p181 = scmp.eq.s32.totalorder %s13, 1
    %p182 = por %p180, %p181
    %p183 = scmp.ne.s32.totalorder %s175, %s178
    %p184 = scmp.eq.s32.totalorder %s13, 0
    %p185 = por %p183, %p184
    %p186 = scmp.ne.s32.totalorder %s175, %s178
    %p187 = scmp.eq.s32.totalorder %s18, 1
    %p188 = por %p186, %p187
    %p189 = scmp.ne.s32.totalorder %s178, %s179
    %p190 = scmp.eq.s32.totalorder %s18, 0
    %p191 = por %p189, %p190
    %p192 = scmp.ne.s32.totalorder %s178, %s179
    %p193 = scmp.eq.s32.totalorder %s19, 1
    %p194 = por %p192, %p193
    %p196 = scmp.ne.s32.totalorder %s179, %s195
    %p197 = scmp.eq.s32.totalorder %s19, 0
    %p198 = por %p196, %p197
    %p199 = scmp.le.s32.totalorder 1, %s13
    %p200 = scmp.lt.s32.totalorder %s13, 3
    %p201 = pnand %p199, %p200
    %p202 = pneg %p201
    // Predicated region
    $region9: #{resnet_block_forward.2} parent=5 // pred_check
      _
    $region10: #{resnet_block_forward.2} parent=5 // pred_check_branch
      %204 = sbr.rel (%p201) target = $region12
    $region11: #{resnet_block_forward.2} parent=5 // pred_region
      %s205 = ssub.s32 %s13, 1
      // Predicated region
      $region13: #{resnet_block_forward.2} parent=11 // pred_check
        %p206 = pneg %p60
      $region14: #{resnet_block_forward.2} parent=11 // pred_check_branch
        %208 = sbr.rel (%p206) target = $region16
      $region15: #{resnet_block_forward.2} parent=11 // pred_region
        _
      $region16: #{resnet_block_forward.2} parent=11 // pred_fallthru
        _
      // Predicated region
      $region17: #{resnet_block_forward.2} parent=11 // pred_check
        %p209 = pneg %p81
      $region18: #{resnet_block_forward.2} parent=11 // pred_check_branch
        %211 = sbr.rel (%p209) target = $region20
      $region19: #{resnet_block_forward.2} parent=11 // pred_region
        _
      $region20: #{resnet_block_forward.2} parent=11 // pred_fallthru
        _
      // Predicated region
      $region21: #{resnet_block_forward.2} parent=11 // pred_check
        %p212 = pneg %p102
      $region22: #{resnet_block_forward.2} parent=11 // pred_check_branch
        %214 = sbr.rel (%p212) target = $region24
      $region23: #{resnet_block_forward.2} parent=11 // pred_region
        _
      $region24: #{resnet_block_forward.2} parent=11 // pred_fallthru
        _
      // Predicated region
      $region25: #{resnet_block_forward.2} parent=11 // pred_check
        %p215 = pneg %p123
      $region26: #{resnet_block_forward.2} parent=11 // pred_check_branch
        %217 = sbr.rel (%p215) target = $region28
      $region27: #{resnet_block_forward.2} parent=11 // pred_region
        _
      $region28: #{resnet_block_forward.2} parent=11 // pred_fallthru
        _
      // Predicated region
      $region29: #{resnet_block_forward.2} parent=11 // pred_check
        %p218 = pneg %p144
      $region30: #{resnet_block_forward.2} parent=11 // pred_check_branch
        %220 = sbr.rel (%p218) target = $region32
      $region31: #{resnet_block_forward.2} parent=11 // pred_region
        _
      $region32: #{resnet_block_forward.2} parent=11 // pred_fallthru
        _
      // Predicated region
      $region33: #{resnet_block_forward.2} parent=11 // pred_check
        %p221 = pneg %p165
      $region34: #{resnet_block_forward.2} parent=11 // pred_check_branch
        %223 = sbr.rel (%p221) target = $region36
      $region35: #{resnet_block_forward.2} parent=11 // pred_region
        _
      $region36: #{resnet_block_forward.2} parent=11 // pred_fallthru
        _
    $region12: #{resnet_block_forward.2} parent=5 // pred_fallthru
      _
    %p224 = scmp.lt.s32.totalorder %s13, 2
    // Predicated region
    $region37: #{resnet_block_forward.2} parent=5 // pred_check
      %p225 = pneg %p224
    $region38: #{resnet_block_forward.2} parent=5 // pred_check_branch
      %227 = sbr.rel (%p225) target = $region40
    $region39: #{resnet_block_forward.2} parent=5 // pred_region
      // Predicated region
      $region41: #{resnet_block_forward.2} parent=39 // pred_check
        %p228 = pneg %p33
      $region42: #{resnet_block_forward.2} parent=39 // pred_check_branch
        %230 = sbr.rel (%p228) target = $region44
      $region43: #{resnet_block_forward.2} parent=39 // pred_region
        %s231 = smul.u32 4, %s13
        %p232 = scmp.lt.s32.totalorder %s231, 7
        %s233 = scalar_select %p232, %s231, 7
        %s234 = smul.addr %s233, 18
        %s235 = smul.addr %s234, 8
        %s236 = scalar_lea.vmem %s0, %s235
        %s237 = smul.u32 4, %s13
      $region44: #{resnet_block_forward.2} parent=39 // pred_fallthru
        _
    $region40: #{resnet_block_forward.2} parent=5 // pred_fallthru
      _
    %p238 = scmp.le.s32.totalorder 1, %s13
    %p239 = scmp.lt.s32.totalorder %s13, 3
    %p240 = pnand %p238, %p239
    %p241 = pneg %p240
    // Predicated region
    $region45: #{resnet_block_forward.2} parent=5 // pred_check
      _
    $region46: #{resnet_block_forward.2} parent=5 // pred_check_branch
      %243 = sbr.rel (%p240) target = $region48
    $region47: #{resnet_block_forward.2} parent=5 // pred_region
      %s244 = ssub.s32 %s13, 1
      %s245 = smul.u32 4, %s18
      %p246 = scmp.lt.s32.totalorder %s245, 7
      %s247 = scalar_select %p246, %s245, 7
      %s248 = smul.addr %s247, 18
      %s249 = smul.addr %s248, 8
      %s250 = scalar_lea.vmem %s0, %s249
      %p251 = pneg %p39
      %p252 = pneg %p36
      %p253 = pneg %p60
      %p254 = pneg %p57
      %p255 = pneg %p81
      %p256 = pneg %p78
      %p257 = pneg %p102
      %p258 = pneg %p99
      %p259 = pneg %p123
      %p260 = pneg %p120
      %p261 = pneg %p144
      %p262 = pneg %p141
      %p263 = pneg %p165
      %p264 = pneg %p162
      %p265 = pneg %p191
      %p266 = pneg %p188
      %p267 = scmp.lt.s32.totalorder %s18, 1
      %s268 = scalar_select %p267, %s18, 1
      %s269 = smul.addr %s268, 8
      %s270 = smul.addr %s269, 4
      %s271 = scalar_lea.vmem %s7, %s270
      %s272 = smul.u32 4, %s18
      %p273 = scmp.lt.s32.totalorder %s272, 7
      %s274 = scalar_select %p273, %s272, 7
      %s275 = smul.addr %s274, 18
      %s276 = smul.addr %s275, 8
      %s277 = scalar_lea.vmem %s0, %s276
      %s278 = smul.u32 4, %s18
      %p279 = scmp.lt.s32.totalorder %s18, 1
      %s280 = scalar_select %p279, %s18, 1
      %s281 = smul.addr %s280, 8
      %s282 = smul.addr %s281, 4
      %s283 = scalar_lea.vmem %s7, %s282
      %v285 = vld [vmem:[%s277] sm:$0xff]
      %v286 = vld [vmem:[%s277 + $0x10] sm:$0xff]
      %v287 = vld [vmem:[%s277 + $0x20] sm:$0xff]
      %v288 = vld [vmem:[%s277 + $0x30] sm:$0xff]
      %v289 = vld [vmem:[%s277 + $0x40] sm:$0xff]
      %v290 = vld [vmem:[%s277 + $0x50] sm:$0xff]
      %v291 = vld [vmem:[%s277 + $0x60] sm:$0xff]
      %v292 = vld [vmem:[%s277 + $0x70] sm:$0xff]
      %v293 = vpack.c.bf16 %v286, %v285
      %v294 = vpack.c.bf16 %v288, %v287
      %v295 = vpack.c.bf16 %v290, %v289
      %v296 = vpack.c.bf16 %v292, %v291
      %v297 = vld [vmem:[%s1] sm:$0xf]
      %v298 = vld [vmem:[%s1 + $0x4] sm:$0xf]
      %v299 = vld [vmem:[%s1 + $0x8] sm:$0xf]
      %v300 = vld [vmem:[%s1 + $0xc] sm:$0xf]
      %v301 = vld [vmem:[%s1 + $0x10] sm:$0xf]
      %v302 = vld [vmem:[%s1 + $0x14] sm:$0xf]
      %v303 = vld [vmem:[%s1 + $0x18] sm:$0xf]
      %v304 = vld [vmem:[%s1 + $0x1c] sm:$0xf]
      %v305 = vld [vmem:[%s1 + $0x20] sm:$0xf]
      %v306 = vld [vmem:[%s1 + $0x24] sm:$0xf]
      %v307 = vld [vmem:[%s1 + $0x28] sm:$0xf]
      %v308 = vld [vmem:[%s1 + $0x2c] sm:$0xf]
      %v309 = vld [vmem:[%s1 + $0x30] sm:$0xf]
      %v310 = vld [vmem:[%s1 + $0x34] sm:$0xf]
      %v311 = vld [vmem:[%s1 + $0x38] sm:$0xf]
      %v312 = vld [vmem:[%s1 + $0x3c] sm:$0xf]
      %s313 = scalar_lea.vmem %s277, 144
      %v314 = vld [vmem:[%s313] sm:$0xff]
      %v315 = vld [vmem:[%s313 + $0x10] sm:$0xff]
      %v316 = vld [vmem:[%s313 + $0x20] sm:$0xff]
      %v317 = vld [vmem:[%s313 + $0x30] sm:$0xff]
      %v318 = vld [vmem:[%s313 + $0x40] sm:$0xff]
      %v319 = vld [vmem:[%s313 + $0x50] sm:$0xff]
      %v320 = vld [vmem:[%s313 + $0x60] sm:$0xff]
      %v321 = vld [vmem:[%s313 + $0x70] sm:$0xff]
      %v322 = vpack.c.bf16 %v315, %v314
      %v323 = vpack.c.bf16 %v317, %v316
      %v324 = vpack.c.bf16 %v319, %v318
      %v325 = vpack.c.bf16 %v321, %v320
      %v326 = vld [vmem:[%s1 + $0x40] sm:$0xf]
      %v327 = vld [vmem:[%s1 + $0x44] sm:$0xf]
      %v328 = vld [vmem:[%s1 + $0x48] sm:$0xf]
      %v329 = vld [vmem:[%s1 + $0x4c] sm:$0xf]
      %v330 = vld [vmem:[%s1 + $0x50] sm:$0xf]
      %v331 = vld [vmem:[%s1 + $0x54] sm:$0xf]
      %v332 = vld [vmem:[%s1 + $0x58] sm:$0xf]
      %v333 = vld [vmem:[%s1 + $0x5c] sm:$0xf]
      %v334 = vld [vmem:[%s1 + $0x60] sm:$0xf]
      %v335 = vld [vmem:[%s1 + $0x64] sm:$0xf]
      %v336 = vld [vmem:[%s1 + $0x68] sm:$0xf]
      %v337 = vld [vmem:[%s1 + $0x6c] sm:$0xf]
      %v338 = vld [vmem:[%s1 + $0x70] sm:$0xf]
      %v339 = vld [vmem:[%s1 + $0x74] sm:$0xf]
      %v340 = vld [vmem:[%s1 + $0x78] sm:$0xf]
      %v341 = vld [vmem:[%s1 + $0x7c] sm:$0xf]
      %v358 = vunpack.c.l.b16 %v326
      %v359 = vunpack.c.l.b16 %v327
      %v360 = vunpack.c.l.b16 %v328
      %v361 = vunpack.c.l.b16 %v329
      %v362 = vunpack.c.l.b16 %v330
      %v363 = vunpack.c.l.b16 %v331
      %v364 = vunpack.c.l.b16 %v332
      %v365 = vunpack.c.l.b16 %v333
      %v366 = vunpack.c.l.b16 %v334
      %v367 = vunpack.c.l.b16 %v335
      %v368 = vunpack.c.l.b16 %v336
      %v369 = vunpack.c.l.b16 %v337
      %v370 = vunpack.c.l.b16 %v338
      %v371 = vunpack.c.l.b16 %v339
      %v372 = vunpack.c.l.b16 %v340
      %v373 = vunpack.c.l.b16 %v341
      %v374 = vpack.c.b16 %v359, %v358
      %v375 = vpack.c.b16 %v361, %v360
      %v376 = vpack.c.b16 %v363, %v362
      %v377 = vpack.c.b16 %v365, %v364
      %v378 = vpack.c.b16 %v367, %v366
      %v379 = vpack.c.b16 %v369, %v368
      %v380 = vpack.c.b16 %v371, %v370
      %v381 = vpack.c.b16 %v373, %v372
      %390 = vmatprep.subr.bf16.mxu0 0
      %391 = vmatpush1.bf16.msra.mxu0 %v381
      %392 = vmatprep.subr.bf16.mxu0 0
      %393 = vmatpush1.bf16.msra.mxu0 %v380
      %394 = vmatprep.subr.bf16.mxu0 0
      %395 = vmatpush1.bf16.msra.mxu0 %v379
      %396 = vmatprep.subr.bf16.mxu0 0
      %397 = vmatpush1.bf16.msra.mxu0 %v378
      %398 = vmatprep.subr.bf16.mxu0 0
      %399 = vmatpush1.bf16.msra.mxu0 %v377
      %400 = vmatprep.subr.bf16.mxu0 0
      %401 = vmatpush1.bf16.msra.mxu0 %v376
      %402 = vmatprep.subr.bf16.mxu0 0
      %403 = vmatpush1.bf16.msra.mxu0 %v375
      %404 = vmatprep.subr.bf16.mxu0 0
      %405 = vmatpush1.bf16.msra.mxu0 %v374
      %406 = vmatprep.subr.bf16.mxu0 0
      %407 = vmatpush2.bf16.msra.mxu0 0
      %408 = vmatprep.subr.bf16.mxu0 0
      %409 = vmatpush2.bf16.msra.mxu0 0
      %410 = vmatprep.subr.bf16.mxu0 0
      %411 = vmatpush2.bf16.msra.mxu0 0
      %412 = vmatprep.subr.bf16.mxu0 0
      %413 = vmatpush2.bf16.msra.mxu0 0
      %414 = vmatprep.subr.bf16.mxu0 0
      %415 = vmatpush2.bf16.msra.mxu0 0
      %416 = vmatprep.subr.bf16.mxu0 0
      %417 = vmatpush2.bf16.msra.mxu0 0
      %418 = vmatprep.subr.bf16.mxu0 0
      %419 = vmatpush2.bf16.msra.mxu0 0
      %420 = vmatprep.subr.bf16.mxu0 0
      %421 = vmatpush2.bf16.msra.mxu0 0
      %422 = vmatprep.mubr.bf16.mxu0 0
      %423 = vmatmul.mubr.bf16.gmra.mxu0 %v322
      %v424 = vpop.f32.mrf.mxu0
      %v425 = vadd.f32 0.0, %v424
      %v426 = vpop.f32.mrf.mxu0
      %v427 = vpop.f32.mrf.mxu0
      %v428 = vadd.f32 0.0, %v427
      %v429 = vpop.f32.mrf.mxu0
      %430 = vmatprep.mubr.bf16.mxu0 0
      %431 = vmatmul.mubr.bf16.gmra.mxu0 %v323
      %v432 = vpop.f32.mrf.mxu0
      %v433 = vadd.f32 0.0, %v432
      %v434 = vpop.f32.mrf.mxu0
      %v435 = vpop.f32.mrf.mxu0
      %v436 = vadd.f32 0.0, %v435
      %v437 = vpop.f32.mrf.mxu0
      %438 = vmatprep.mubr.bf16.mxu0 0
      %439 = vmatmul.mubr.bf16.gmra.mxu0 %v324
      %v440 = vpop.f32.mrf.mxu0
      %v441 = vadd.f32 0.0, %v440
      %v442 = vpop.f32.mrf.mxu0
      %v443 = vpop.f32.mrf.mxu0
      %v444 = vadd.f32 0.0, %v443
      %v445 = vpop.f32.mrf.mxu0
      %446 = vmatprep.mubr.bf16.mxu0 0
      %447 = vmatmul.mubr.bf16.gmra.mxu0 %v325
      %v448 = vpop.f32.mrf.mxu0
      %v449 = vadd.f32 0.0, %v448
      %v450 = vpop.f32.mrf.mxu0
      %v451 = vpop.f32.mrf.mxu0
      %v452 = vadd.f32 0.0, %v451
      %v453 = vpop.f32.mrf.mxu0
      %454 = vdwg.mxu0
      %v471 = vunpack.c.l.b16 %v297
      %v472 = vunpack.c.l.b16 %v298
      %v473 = vunpack.c.l.b16 %v299
      %v474 = vunpack.c.l.b16 %v300
      %v475 = vunpack.c.l.b16 %v301
      %v476 = vunpack.c.l.b16 %v302
      %v477 = vunpack.c.l.b16 %v303
      %v478 = vunpack.c.l.b16 %v304
      %v479 = vunpack.c.l.b16 %v305
      %v480 = vunpack.c.l.b16 %v306
      %v481 = vunpack.c.l.b16 %v307
      %v482 = vunpack.c.l.b16 %v308
      %v483 = vunpack.c.l.b16 %v309
      %v484 = vunpack.c.l.b16 %v310
      %v485 = vunpack.c.l.b16 %v311
      %v486 = vunpack.c.l.b16 %v312
      %v487 = vpack.c.b16 %v472, %v471
      %v488 = vpack.c.b16 %v474, %v473
      %v489 = vpack.c.b16 %v476, %v475
      %v490 = vpack.c.b16 %v478, %v477
      %v491 = vpack.c.b16 %v480, %v479
      %v492 = vpack.c.b16 %v482, %v481
      %v493 = vpack.c.b16 %v484, %v483
      %v494 = vpack.c.b16 %v486, %v485
      %503 = vmatprep.subr.bf16.mxu0 0
      %504 = vmatpush1.bf16.msra.mxu0 %v494
      %505 = vmatprep.subr.bf16.mxu0 0
      %506 = vmatpush1.bf16.msra.mxu0 %v493
      %507 = vmatprep.subr.bf16.mxu0 0
      %508 = vmatpush1.bf16.msra.mxu0 %v492
      %509 = vmatprep.subr.bf16.mxu0 0
      %510 = vmatpush1.bf16.msra.mxu0 %v491
      %511 = vmatprep.subr.bf16.mxu0 0
      %512 = vmatpush1.bf16.msra.mxu0 %v490
      %513 = vmatprep.subr.bf16.mxu0 0
      %514 = vmatpush1.bf16.msra.mxu0 %v489
      %515 = vmatprep.subr.bf16.mxu0 0
      %516 = vmatpush1.bf16.msra.mxu0 %v488
      %517 = vmatprep.subr.bf16.mxu0 0
      %518 = vmatpush1.bf16.msra.mxu0 %v487
      %519 = vmatprep.subr.bf16.mxu0 0
      %520 = vmatpush2.bf16.msra.mxu0 0
      %521 = vmatprep.subr.bf16.mxu0 0
      %522 = vmatpush2.bf16.msra.mxu0 0
      %523 = vmatprep.subr.bf16.mxu0 0
      %524 = vmatpush2.bf16.msra.mxu0 0
      %525 = vmatprep.subr.bf16.mxu0 0
      %526 = vmatpush2.bf16.msra.mxu0 0
      %527 = vmatprep.subr.bf16.mxu0 0
      %528 = vmatpush2.bf16.msra.mxu0 0
      %529 = vmatprep.subr.bf16.mxu0 0
      %530 = vmatpush2.bf16.msra.mxu0 0
      %531 = vmatprep.subr.bf16.mxu0 0
      %532 = vmatpush2.bf16.msra.mxu0 0
      %533 = vmatprep.subr.bf16.mxu0 0
      %534 = vmatpush2.bf16.msra.mxu0 0
      %535 = vmatprep.mubr.bf16.mxu0 0
      %536 = vmatmul.mubr.bf16.gmra.mxu0 %v293
      %v537 = vpop.f32.mrf.mxu0
      %v538 = vadd.f32 %v425, %v537
      %v539 = vpop.f32.mrf.mxu0
      %v540 = vpop.f32.mrf.mxu0
      %v541 = vadd.f32 %v428, %v540
      %v542 = vpop.f32.mrf.mxu0
      %543 = vmatprep.mubr.bf16.mxu0 0
      %544 = vmatmul.mubr.bf16.gmra.mxu0 %v294
      %v545 = vpop.f32.mrf.mxu0
      %v546 = vadd.f32 %v433, %v545
      %v547 = vpop.f32.mrf.mxu0
      %v548 = vpop.f32.mrf.mxu0
      %v549 = vadd.f32 %v436, %v548
      %v550 = vpop.f32.mrf.mxu0
      %551 = vmatprep.mubr.bf16.mxu0 0
      %552 = vmatmul.mubr.bf16.gmra.mxu0 %v295
      %v553 = vpop.f32.mrf.mxu0
      %v554 = vadd.f32 %v441, %v553
      %v555 = vpop.f32.mrf.mxu0
      %v556 = vpop.f32.mrf.mxu0
      %v557 = vadd.f32 %v444, %v556
      %v558 = vpop.f32.mrf.mxu0
      %559 = vmatprep.mubr.bf16.mxu0 0
      %560 = vmatmul.mubr.bf16.gmra.mxu0 %v296
      %v561 = vpop.f32.mrf.mxu0
      %v562 = vadd.f32 %v449, %v561
      %v563 = vpop.f32.mrf.mxu0
      %v564 = vpop.f32.mrf.mxu0
      %v565 = vadd.f32 %v452, %v564
      %v566 = vpop.f32.mrf.mxu0
      %567 = vdwg.mxu0
      %v568 = vld [vmem:[%s277 + $0x1] sm:$0xff]
      %v569 = vld [vmem:[%s277 + $0x11] sm:$0xff]
      %v570 = vld [vmem:[%s277 + $0x21] sm:$0xff]
      %v571 = vld [vmem:[%s277 + $0x31] sm:$0xff]
      %v572 = vld [vmem:[%s277 + $0x41] sm:$0xff]
      %v573 = vld [vmem:[%s277 + $0x51] sm:$0xff]
      %v574 = vld [vmem:[%s277 + $0x61] sm:$0xff]
      %v575 = vld [vmem:[%s277 + $0x71] sm:$0xff]
      %v576 = vpack.c.bf16 %v569, %v568
      %v577 = vpack.c.bf16 %v571, %v570
      %v578 = vpack.c.bf16 %v573, %v572
      %v579 = vpack.c.bf16 %v575, %v574
      %v580 = vld [vmem:[%s1 + $0x80] sm:$0xf]
      %v581 = vld [vmem:[%s1 + $0x84] sm:$0xf]
      %v582 = vld [vmem:[%s1 + $0x88] sm:$0xf]
      %v583 = vld [vmem:[%s1 + $0x8c] sm:$0xf]
      %v584 = vld [vmem:[%s1 + $0x90] sm:$0xf]
      %v585 = vld [vmem:[%s1 + $0x94] sm:$0xf]
      %v586 = vld [vmem:[%s1 + $0x98] sm:$0xf]
      %v587 = vld [vmem:[%s1 + $0x9c] sm:$0xf]
      %v588 = vld [vmem:[%s1 + $0xa0] sm:$0xf]
      %v589 = vld [vmem:[%s1 + $0xa4] sm:$0xf]
      %v590 = vld [vmem:[%s1 + $0xa8] sm:$0xf]
      %v591 = vld [vmem:[%s1 + $0xac] sm:$0xf]
      %v592 = vld [vmem:[%s1 + $0xb0] sm:$0xf]
      %v593 = vld [vmem:[%s1 + $0xb4] sm:$0xf]
      %v594 = vld [vmem:[%s1 + $0xb8] sm:$0xf]
      %v595 = vld [vmem:[%s1 + $0xbc] sm:$0xf]
      %v612 = vunpack.c.l.b16 %v580
      %v613 = vunpack.c.l.b16 %v581
      %v614 = vunpack.c.l.b16 %v582
      %v615 = vunpack.c.l.b16 %v583
      %v616 = vunpack.c.l.b16 %v584
      %v617 = vunpack.c.l.b16 %v585
      %v618 = vunpack.c.l.b16 %v586
      %v619 = vunpack.c.l.b16 %v587
      %v620 = vunpack.c.l.b16 %v588
      %v621 = vunpack.c.l.b16 %v589
      %v622 = vunpack.c.l.b16 %v590
      %v623 = vunpack.c.l.b16 %v591
      %v624 = vunpack.c.l.b16 %v592
      %v625 = vunpack.c.l.b16 %v593
      %v626 = vunpack.c.l.b16 %v594
      %v627 = vunpack.c.l.b16 %v595
      %v628 = vpack.c.b16 %v613, %v612
      %v629 = vpack.c.b16 %v615, %v614
      %v630 = vpack.c.b16 %v617, %v616
      %v631 = vpack.c.b16 %v619, %v618
      %v632 = vpack.c.b16 %v621, %v620
      %v633 = vpack.c.b16 %v623, %v622
      %v634 = vpack.c.b16 %v625, %v624
      %v635 = vpack.c.b16 %v627, %v626
      %644 = vmatprep.subr.bf16.mxu0 0
      %645 = vmatpush1.bf16.msra.mxu0 %v635
      %646 = vmatprep.subr.bf16.mxu0 0
      %647 = vmatpush1.bf16.msra.mxu0 %v634
      %648 = vmatprep.subr.bf16.mxu0 0
      %649 = vmatpush1.bf16.msra.mxu0 %v633
      %650 = vmatprep.subr.bf16.mxu0 0
      %651 = vmatpush1.bf16.msra.mxu0 %v632
      %652 = vmatprep.subr.bf16.mxu0 0
      %653 = vmatpush1.bf16.msra.mxu0 %v631
      %654 = vmatprep.subr.bf16.mxu0 0
      %655 = vmatpush1.bf16.msra.mxu0 %v630
      %656 = vmatprep.subr.bf16.mxu0 0
      %657 = vmatpush1.bf16.msra.mxu0 %v629
      %658 = vmatprep.subr.bf16.mxu0 0
      %659 = vmatpush1.bf16.msra.mxu0 %v628
      %660 = vmatprep.subr.bf16.mxu0 0
      %661 = vmatpush2.bf16.msra.mxu0 0
      %662 = vmatprep.subr.bf16.mxu0 0
      %663 = vmatpush2.bf16.msra.mxu0 0
      %664 = vmatprep.subr.bf16.mxu0 0
      %665 = vmatpush2.bf16.msra.mxu0 0
      %666 = vmatprep.subr.bf16.mxu0 0
      %667 = vmatpush2.bf16.msra.mxu0 0
      %668 = vmatprep.subr.bf16.mxu0 0
      %669 = vmatpush2.bf16.msra.mxu0 0
      %670 = vmatprep.subr.bf16.mxu0 0
      %671 = vmatpush2.bf16.msra.mxu0 0
      %672 = vmatprep.subr.bf16.mxu0 0
      %673 = vmatpush2.bf16.msra.mxu0 0
      %674 = vmatprep.subr.bf16.mxu0 0
      %675 = vmatpush2.bf16.msra.mxu0 0
      %676 = vmatprep.mubr.bf16.mxu0 0
      %677 = vmatmul.mubr.bf16.gmra.mxu0 %v576
      %v678 = vpop.f32.mrf.mxu0
      %v679 = vadd.f32 0.0, %v678
      %v680 = vpop.f32.mrf.mxu0
      %v681 = vpop.f32.mrf.mxu0
      %v682 = vadd.f32 0.0, %v681
      %v683 = vpop.f32.mrf.mxu0
      %684 = vmatprep.mubr.bf16.mxu0 0
      %685 = vmatmul.mubr.bf16.gmra.mxu0 %v577
      %v686 = vpop.f32.mrf.mxu0
      %v687 = vadd.f32 0.0, %v686
      %v688 = vpop.f32.mrf.mxu0
      %v689 = vpop.f32.mrf.mxu0
      %v690 = vadd.f32 0.0, %v689
      %v691 = vpop.f32.mrf.mxu0
      %692 = vmatprep.mubr.bf16.mxu0 0
      %693 = vmatmul.mubr.bf16.gmra.mxu0 %v578
      %v694 = vpop.f32.mrf.mxu0
      %v695 = vadd.f32 0.0, %v694
      %v696 = vpop.f32.mrf.mxu0
      %v697 = vpop.f32.mrf.mxu0
      %v698 = vadd.f32 0.0, %v697
      %v699 = vpop.f32.mrf.mxu0
      %700 = vmatprep.mubr.bf16.mxu0 0
      %701 = vmatmul.mubr.bf16.gmra.mxu0 %v579
      %v702 = vpop.f32.mrf.mxu0
      %v703 = vadd.f32 0.0, %v702
      %v704 = vpop.f32.mrf.mxu0
      %v705 = vpop.f32.mrf.mxu0
      %v706 = vadd.f32 0.0, %v705
      %v707 = vpop.f32.mrf.mxu0
      %708 = vdwg.mxu0
      %v709 = vadd.f32 %v538, %v679
      %v710 = vadd.f32 %v541, %v682
      %v711 = vadd.f32 %v546, %v687
      %v712 = vadd.f32 %v549, %v690
      %v713 = vadd.f32 %v554, %v695
      %v714 = vadd.f32 %v557, %v698
      %v715 = vadd.f32 %v562, %v703
      %v716 = vadd.f32 %v565, %v706
      %s717 = scalar_lea.vmem %s277, 288
      %v718 = vld [vmem:[%s717] sm:$0xff]
      %v719 = vld [vmem:[%s717 + $0x10] sm:$0xff]
      %v720 = vld [vmem:[%s717 + $0x20] sm:$0xff]
      %v721 = vld [vmem:[%s717 + $0x30] sm:$0xff]
      %v722 = vld [vmem:[%s717 + $0x40] sm:$0xff]
      %v723 = vld [vmem:[%s717 + $0x50] sm:$0xff]
      %v724 = vld [vmem:[%s717 + $0x60] sm:$0xff]
      %v725 = vld [vmem:[%s717 + $0x70] sm:$0xff]
      %v726 = vpack.c.bf16 %v719, %v718
      %v727 = vpack.c.bf16 %v721, %v720
      %v728 = vpack.c.bf16 %v723, %v722
      %v729 = vpack.c.bf16 %v725, %v724
      %v730 = vld [vmem:[%s1 + $0xc0] sm:$0xf]
      %v731 = vld [vmem:[%s1 + $0xc4] sm:$0xf]
      %v732 = vld [vmem:[%s1 + $0xc8] sm:$0xf]
      %v733 = vld [vmem:[%s1 + $0xcc] sm:$0xf]
      %v734 = vld [vmem:[%s1 + $0xd0] sm:$0xf]
      %v735 = vld [vmem:[%s1 + $0xd4] sm:$0xf]
      %v736 = vld [vmem:[%s1 + $0xd8] sm:$0xf]
      %v737 = vld [vmem:[%s1 + $0xdc] sm:$0xf]
      %v738 = vld [vmem:[%s1 + $0xe0] sm:$0xf]
      %v739 = vld [vmem:[%s1 + $0xe4] sm:$0xf]
      %v740 = vld [vmem:[%s1 + $0xe8] sm:$0xf]
      %v741 = vld [vmem:[%s1 + $0xec] sm:$0xf]
      %v742 = vld [vmem:[%s1 + $0xf0] sm:$0xf]
      %v743 = vld [vmem:[%s1 + $0xf4] sm:$0xf]
      %v744 = vld [vmem:[%s1 + $0xf8] sm:$0xf]
      %v745 = vld [vmem:[%s1 + $0xfc] sm:$0xf]
      %v762 = vunpack.c.l.b16 %v730
      %v763 = vunpack.c.l.b16 %v731
      %v764 = vunpack.c.l.b16 %v732
      %v765 = vunpack.c.l.b16 %v733
      %v766 = vunpack.c.l.b16 %v734
      %v767 = vunpack.c.l.b16 %v735
      %v768 = vunpack.c.l.b16 %v736
      %v769 = vunpack.c.l.b16 %v737
      %v770 = vunpack.c.l.b16 %v738
      %v771 = vunpack.c.l.b16 %v739
      %v772 = vunpack.c.l.b16 %v740
      %v773 = vunpack.c.l.b16 %v741
      %v774 = vunpack.c.l.b16 %v742
      %v775 = vunpack.c.l.b16 %v743
      %v776 = vunpack.c.l.b16 %v744
      %v777 = vunpack.c.l.b16 %v745
      %v778 = vpack.c.b16 %v763, %v762
      %v779 = vpack.c.b16 %v765, %v764
      %v780 = vpack.c.b16 %v767, %v766
      %v781 = vpack.c.b16 %v769, %v768
      %v782 = vpack.c.b16 %v771, %v770
      %v783 = vpack.c.b16 %v773, %v772
      %v784 = vpack.c.b16 %v775, %v774
      %v785 = vpack.c.b16 %v777, %v776
      %794 = vmatprep.subr.bf16.mxu0 0
      %795 = vmatpush1.bf16.msra.mxu0 %v785
      %796 = vmatprep.subr.bf16.mxu0 0
      %797 = vmatpush1.bf16.msra.mxu0 %v784
      %798 = vmatprep.subr.bf16.mxu0 0
      %799 = vmatpush1.bf16.msra.mxu0 %v783
      %800 = vmatprep.subr.bf16.mxu0 0
      %801 = vmatpush1.bf16.msra.mxu0 %v782
      %802 = vmatprep.subr.bf16.mxu0 0
      %803 = vmatpush1.bf16.msra.mxu0 %v781
      %804 = vmatprep.subr.bf16.mxu0 0
      %805 = vmatpush1.bf16.msra.mxu0 %v780
      %806 = vmatprep.subr.bf16.mxu0 0
      %807 = vmatpush1.bf16.msra.mxu0 %v779
      %808 = vmatprep.subr.bf16.mxu0 0
      %809 = vmatpush1.bf16.msra.mxu0 %v778
      %810 = vmatprep.subr.bf16.mxu0 0
      %811 = vmatpush2.bf16.msra.mxu0 0
      %812 = vmatprep.subr.bf16.mxu0 0
      %813 = vmatpush2.bf16.msra.mxu0 0
      %814 = vmatprep.subr.bf16.mxu0 0
      %815 = vmatpush2.bf16.msra.mxu0 0
      %816 = vmatprep.subr.bf16.mxu0 0
      %817 = vmatpush2.bf16.msra.mxu0 0
      %818 = vmatprep.subr.bf16.mxu0 0
      %819 = vmatpush2.bf16.msra.mxu0 0
      %820 = vmatprep.subr.bf16.mxu0 0
      %821 = vmatpush2.bf16.msra.mxu0 0
      %822 = vmatprep.subr.bf16.mxu0 0
      %823 = vmatpush2.bf16.msra.mxu0 0
      %824 = vmatprep.subr.bf16.mxu0 0
      %825 = vmatpush2.bf16.msra.mxu0 0
      %826 = vmatprep.mubr.bf16.mxu0 0
      %827 = vmatmul.mubr.bf16.gmra.mxu0 %v726
      %v828 = vpop.f32.mrf.mxu0
      %v829 = vadd.f32 0.0, %v828
      %v830 = vpop.f32.mrf.mxu0
      %v831 = vpop.f32.mrf.mxu0
      %v832 = vadd.f32 0.0, %v831
      %v833 = vpop.f32.mrf.mxu0
      %834 = vmatprep.mubr.bf16.mxu0 0
      %835 = vmatmul.mubr.bf16.gmra.mxu0 %v727
      %v836 = vpop.f32.mrf.mxu0
      %v837 = vadd.f32 0.0, %v836
      %v838 = vpop.f32.mrf.mxu0
      %v839 = vpop.f32.mrf.mxu0
      %v840 = vadd.f32 0.0, %v839
      %v841 = vpop.f32.mrf.mxu0
      %842 = vmatprep.mubr.bf16.mxu0 0
      %843 = vmatmul.mubr.bf16.gmra.mxu0 %v728
      %v844 = vpop.f32.mrf.mxu0
      %v845 = vadd.f32 0.0, %v844
      %v846 = vpop.f32.mrf.mxu0
      %v847 = vpop.f32.mrf.mxu0
      %v848 = vadd.f32 0.0, %v847
      %v849 = vpop.f32.mrf.mxu0
      %850 = vmatprep.mubr.bf16.mxu0 0
      %851 = vmatmul.mubr.bf16.gmra.mxu0 %v729
      %v852 = vpop.f32.mrf.mxu0
      %v853 = vadd.f32 0.0, %v852
      %v854 = vpop.f32.mrf.mxu0
      %v855 = vpop.f32.mrf.mxu0
      %v856 = vadd.f32 0.0, %v855
      %v857 = vpop.f32.mrf.mxu0
      %858 = vdwg.mxu0
      %v859 = vadd.f32 %v709, %v829
      %v860 = vadd.f32 %v710, %v832
      %v861 = vadd.f32 %v711, %v837
      %v862 = vadd.f32 %v712, %v840
      %v863 = vadd.f32 %v713, %v845
      %v864 = vadd.f32 %v714, %v848
      %v865 = vadd.f32 %v715, %v853
      %v866 = vadd.f32 %v716, %v856
      %s867 = scalar_lea.vmem %s277, 432
      %v868 = vld [vmem:[%s867] sm:$0xff]
      %v869 = vld [vmem:[%s867 + $0x10] sm:$0xff]
      %v870 = vld [vmem:[%s867 + $0x20] sm:$0xff]
      %v871 = vld [vmem:[%s867 + $0x30] sm:$0xff]
      %v872 = vld [vmem:[%s867 + $0x40] sm:$0xff]
      %v873 = vld [vmem:[%s867 + $0x50] sm:$0xff]
      %v874 = vld [vmem:[%s867 + $0x60] sm:$0xff]
      %v875 = vld [vmem:[%s867 + $0x70] sm:$0xff]
      %v876 = vpack.c.bf16 %v869, %v868
      %v877 = vpack.c.bf16 %v871, %v870
      %v878 = vpack.c.bf16 %v873, %v872
      %v879 = vpack.c.bf16 %v875, %v874
      %v880 = vld [vmem:[%s1 + $0x100] sm:$0xf]
      %v881 = vld [vmem:[%s1 + $0x104] sm:$0xf]
      %v882 = vld [vmem:[%s1 + $0x108] sm:$0xf]
      %v883 = vld [vmem:[%s1 + $0x10c] sm:$0xf]
      %v884 = vld [vmem:[%s1 + $0x110] sm:$0xf]
      %v885 = vld [vmem:[%s1 + $0x114] sm:$0xf]
      %v886 = vld [vmem:[%s1 + $0x118] sm:$0xf]
      %v887 = vld [vmem:[%s1 + $0x11c] sm:$0xf]
      %v888 = vld [vmem:[%s1 + $0x120] sm:$0xf]
      %v889 = vld [vmem:[%s1 + $0x124] sm:$0xf]
      %v890 = vld [vmem:[%s1 + $0x128] sm:$0xf]
      %v891 = vld [vmem:[%s1 + $0x12c] sm:$0xf]
      %v892 = vld [vmem:[%s1 + $0x130] sm:$0xf]
      %v893 = vld [vmem:[%s1 + $0x134] sm:$0xf]
      %v894 = vld [vmem:[%s1 + $0x138] sm:$0xf]
      %v895 = vld [vmem:[%s1 + $0x13c] sm:$0xf]
      %v912 = vunpack.c.l.b16 %v880
      %v913 = vunpack.c.l.b16 %v881
      %v914 = vunpack.c.l.b16 %v882
      %v915 = vunpack.c.l.b16 %v883
      %v916 = vunpack.c.l.b16 %v884
      %v917 = vunpack.c.l.b16 %v885
      %v918 = vunpack.c.l.b16 %v886
      %v919 = vunpack.c.l.b16 %v887
      %v920 = vunpack.c.l.b16 %v888
      %v921 = vunpack.c.l.b16 %v889
      %v922 = vunpack.c.l.b16 %v890
      %v923 = vunpack.c.l.b16 %v891
      %v924 = vunpack.c.l.b16 %v892
      %v925 = vunpack.c.l.b16 %v893
      %v926 = vunpack.c.l.b16 %v894
      %v927 = vunpack.c.l.b16 %v895
      %v928 = vpack.c.b16 %v913, %v912
      %v929 = vpack.c.b16 %v915, %v914
      %v930 = vpack.c.b16 %v917, %v916
      %v931 = vpack.c.b16 %v919, %v918
      %v932 = vpack.c.b16 %v921, %v920
      %v933 = vpack.c.b16 %v923, %v922
      %v934 = vpack.c.b16 %v925, %v924
      %v935 = vpack.c.b16 %v927, %v926
      %944 = vmatprep.subr.bf16.mxu0 0
      %945 = vmatpush1.bf16.msra.mxu0 %v935
      %946 = vmatprep.subr.bf16.mxu0 0
      %947 = vmatpush1.bf16.msra.mxu0 %v934
      %948 = vmatprep.subr.bf16.mxu0 0
      %949 = vmatpush1.bf16.msra.mxu0 %v933
      %950 = vmatprep.subr.bf16.mxu0 0
      %951 = vmatpush1.bf16.msra.mxu0 %v932
      %952 = vmatprep.subr.bf16.mxu0 0
      %953 = vmatpush1.bf16.msra.mxu0 %v931
      %954 = vmatprep.subr.bf16.mxu0 0
      %955 = vmatpush1.bf16.msra.mxu0 %v930
      %956 = vmatprep.subr.bf16.mxu0 0
      %957 = vmatpush1.bf16.msra.mxu0 %v929
      %958 = vmatprep.subr.bf16.mxu0 0
      %959 = vmatpush1.bf16.msra.mxu0 %v928
      %960 = vmatprep.subr.bf16.mxu0 0
      %961 = vmatpush2.bf16.msra.mxu0 0
      %962 = vmatprep.subr.bf16.mxu0 0
      %963 = vmatpush2.bf16.msra.mxu0 0
      %964 = vmatprep.subr.bf16.mxu0 0
      %965 = vmatpush2.bf16.msra.mxu0 0
      %966 = vmatprep.subr.bf16.mxu0 0
      %967 = vmatpush2.bf16.msra.mxu0 0
      %968 = vmatprep.subr.bf16.mxu0 0
      %969 = vmatpush2.bf16.msra.mxu0 0
      %970 = vmatprep.subr.bf16.mxu0 0
      %971 = vmatpush2.bf16.msra.mxu0 0
      %972 = vmatprep.subr.bf16.mxu0 0
      %973 = vmatpush2.bf16.msra.mxu0 0
      %974 = vmatprep.subr.bf16.mxu0 0
      %975 = vmatpush2.bf16.msra.mxu0 0
      %976 = vmatprep.mubr.bf16.mxu0 0
      %977 = vmatmul.mubr.bf16.gmra.mxu0 %v876
      %v978 = vpop.f32.mrf.mxu0
      %v979 = vadd.f32 0.0, %v978
      %v980 = vpop.f32.mrf.mxu0
      %v981 = vpop.f32.mrf.mxu0
      %v982 = vadd.f32 0.0, %v981
      %v983 = vpop.f32.mrf.mxu0
      %984 = vmatprep.mubr.bf16.mxu0 0
      %985 = vmatmul.mubr.bf16.gmra.mxu0 %v877
      %v986 = vpop.f32.mrf.mxu0
      %v987 = vadd.f32 0.0, %v986
      %v988 = vpop.f32.mrf.mxu0
      %v989 = vpop.f32.mrf.mxu0
      %v990 = vadd.f32 0.0, %v989
      %v991 = vpop.f32.mrf.mxu0
      %992 = vmatprep.mubr.bf16.mxu0 0
      %993 = vmatmul.mubr.bf16.gmra.mxu0 %v878
      %v994 = vpop.f32.mrf.mxu0
      %v995 = vadd.f32 0.0, %v994
      %v996 = vpop.f32.mrf.mxu0
      %v997 = vpop.f32.mrf.mxu0
      %v998 = vadd.f32 0.0, %v997
      %v999 = vpop.f32.mrf.mxu0
      %1000 = vmatprep.mubr.bf16.mxu0 0
      %1001 = vmatmul.mubr.bf16.gmra.mxu0 %v879
      %v1002 = vpop.f32.mrf.mxu0
      %v1003 = vadd.f32 0.0, %v1002
      %v1004 = vpop.f32.mrf.mxu0
      %v1005 = vpop.f32.mrf.mxu0
      %v1006 = vadd.f32 0.0, %v1005
      %v1007 = vpop.f32.mrf.mxu0
      %1008 = vdwg.mxu0
      %v1009 = vadd.f32 %v859, %v979
      %v1010 = vadd.f32 %v860, %v982
      %v1011 = vadd.f32 %v861, %v987
      %v1012 = vadd.f32 %v862, %v990
      %v1013 = vadd.f32 %v863, %v995
      %v1014 = vadd.f32 %v864, %v998
      %v1015 = vadd.f32 %v865, %v1003
      %v1016 = vadd.f32 %v866, %v1006
      %v1017 = vld [vmem:[%s717 + $0x1] sm:$0xff]
      %v1018 = vld [vmem:[%s717 + $0x11] sm:$0xff]
      %v1019 = vld [vmem:[%s717 + $0x21] sm:$0xff]
      %v1020 = vld [vmem:[%s717 + $0x31] sm:$0xff]
      %v1021 = vld [vmem:[%s717 + $0x41] sm:$0xff]
      %v1022 = vld [vmem:[%s717 + $0x51] sm:$0xff]
      %v1023 = vld [vmem:[%s717 + $0x61] sm:$0xff]
      %v1024 = vld [vmem:[%s717 + $0x71] sm:$0xff]
      %v1025 = vpack.c.bf16 %v1018, %v1017
      %v1026 = vpack.c.bf16 %v1020, %v1019
      %v1027 = vpack.c.bf16 %v1022, %v1021
      %v1028 = vpack.c.bf16 %v1024, %v1023
      %v1029 = vld [vmem:[%s1 + $0x140] sm:$0xf]
      %v1030 = vld [vmem:[%s1 + $0x144] sm:$0xf]
      %v1031 = vld [vmem:[%s1 + $0x148] sm:$0xf]
      %v1032 = vld [vmem:[%s1 + $0x14c] sm:$0xf]
      %v1033 = vld [vmem:[%s1 + $0x150] sm:$0xf]
      %v1034 = vld [vmem:[%s1 + $0x154] sm:$0xf]
      %v1035 = vld [vmem:[%s1 + $0x158] sm:$0xf]
      %v1036 = vld [vmem:[%s1 + $0x15c] sm:$0xf]
      %v1037 = vld [vmem:[%s1 + $0x160] sm:$0xf]
      %v1038 = vld [vmem:[%s1 + $0x164] sm:$0xf]
      %v1039 = vld [vmem:[%s1 + $0x168] sm:$0xf]
      %v1040 = vld [vmem:[%s1 + $0x16c] sm:$0xf]
      %v1041 = vld [vmem:[%s1 + $0x170] sm:$0xf]
      %v1042 = vld [vmem:[%s1 + $0x174] sm:$0xf]
      %v1043 = vld [vmem:[%s1 + $0x178] sm:$0xf]
      %v1044 = vld [vmem:[%s1 + $0x17c] sm:$0xf]
      %v1061 = vunpack.c.l.b16 %v1029
      %v1062 = vunpack.c.l.b16 %v1030
      %v1063 = vunpack.c.l.b16 %v1031
      %v1064 = vunpack.c.l.b16 %v1032
      %v1065 = vunpack.c.l.b16 %v1033
      %v1066 = vunpack.c.l.b16 %v1034
      %v1067 = vunpack.c.l.b16 %v1035
      %v1068 = vunpack.c.l.b16 %v1036
      %v1069 = vunpack.c.l.b16 %v1037
      %v1070 = vunpack.c.l.b16 %v1038
      %v1071 = vunpack.c.l.b16 %v1039
      %v1072 = vunpack.c.l.b16 %v1040
      %v1073 = vunpack.c.l.b16 %v1041
      %v1074 = vunpack.c.l.b16 %v1042
      %v1075 = vunpack.c.l.b16 %v1043
      %v1076 = vunpack.c.l.b16 %v1044
      %v1077 = vpack.c.b16 %v1062, %v1061
      %v1078 = vpack.c.b16 %v1064, %v1063
      %v1079 = vpack.c.b16 %v1066, %v1065
      %v1080 = vpack.c.b16 %v1068, %v1067
      %v1081 = vpack.c.b16 %v1070, %v1069
      %v1082 = vpack.c.b16 %v1072, %v1071
      %v1083 = vpack.c.b16 %v1074, %v1073
      %v1084 = vpack.c.b16 %v1076, %v1075
      %1093 = vmatprep.subr.bf16.mxu0 0
      %1094 = vmatpush1.bf16.msra.mxu0 %v1084
      %1095 = vmatprep.subr.bf16.mxu0 0
      %1096 = vmatpush1.bf16.msra.mxu0 %v1083
      %1097 = vmatprep.subr.bf16.mxu0 0
      %1098 = vmatpush1.bf16.msra.mxu0 %v1082
      %1099 = vmatprep.subr.bf16.mxu0 0
      %1100 = vmatpush1.bf16.msra.mxu0 %v1081
      %1101 = vmatprep.subr.bf16.mxu0 0
      %1102 = vmatpush1.bf16.msra.mxu0 %v1080
      %1103 = vmatprep.subr.bf16.mxu0 0
      %1104 = vmatpush1.bf16.msra.mxu0 %v1079
      %1105 = vmatprep.subr.bf16.mxu0 0
      %1106 = vmatpush1.bf16.msra.mxu0 %v1078
      %1107 = vmatprep.subr.bf16.mxu0 0
      %1108 = vmatpush1.bf16.msra.mxu0 %v1077
      %1109 = vmatprep.subr.bf16.mxu0 0
      %1110 = vmatpush2.bf16.msra.mxu0 0
      %1111 = vmatprep.subr.bf16.mxu0 0
      %1112 = vmatpush2.bf16.msra.mxu0 0
      %1113 = vmatprep.subr.bf16.mxu0 0
      %1114 = vmatpush2.bf16.msra.mxu0 0
      %1115 = vmatprep.subr.bf16.mxu0 0
      %1116 = vmatpush2.bf16.msra.mxu0 0
      %1117 = vmatprep.subr.bf16.mxu0 0
      %1118 = vmatpush2.bf16.msra.mxu0 0
      %1119 = vmatprep.subr.bf16.mxu0 0
      %1120 = vmatpush2.bf16.msra.mxu0 0
      %1121 = vmatprep.subr.bf16.mxu0 0
      %1122 = vmatpush2.bf16.msra.mxu0 0
      %1123 = vmatprep.subr.bf16.mxu0 0
      %1124 = vmatpush2.bf16.msra.mxu0 0
      %1125 = vmatprep.mubr.bf16.mxu0 0
      %1126 = vmatmul.mubr.bf16.gmra.mxu0 %v1025
      %v1127 = vpop.f32.mrf.mxu0
      %v1128 = vadd.f32 0.0, %v1127
      %v1129 = vpop.f32.mrf.mxu0
      %v1130 = vpop.f32.mrf.mxu0
      %v1131 = vadd.f32 0.0, %v1130
      %v1132 = vpop.f32.mrf.mxu0
      %1133 = vmatprep.mubr.bf16.mxu0 0
      %1134 = vmatmul.mubr.bf16.gmra.mxu0 %v1026
      %v1135 = vpop.f32.mrf.mxu0
      %v1136 = vadd.f32 0.0, %v1135
      %v1137 = vpop.f32.mrf.mxu0
      %v1138 = vpop.f32.mrf.mxu0
      %v1139 = vadd.f32 0.0, %v1138
      %v1140 = vpop.f32.mrf.mxu0
      %1141 = vmatprep.mubr.bf16.mxu0 0
      %1142 = vmatmul.mubr.bf16.gmra.mxu0 %v1027
      %v1143 = vpop.f32.mrf.mxu0
      %v1144 = vadd.f32 0.0, %v1143
      %v1145 = vpop.f32.mrf.mxu0
      %v1146 = vpop.f32.mrf.mxu0
      %v1147 = vadd.f32 0.0, %v1146
      %v1148 = vpop.f32.mrf.mxu0
      %1149 = vmatprep.mubr.bf16.mxu0 0
      %1150 = vmatmul.mubr.bf16.gmra.mxu0 %v1028
      %v1151 = vpop.f32.mrf.mxu0
      %v1152 = vadd.f32 0.0, %v1151
      %v1153 = vpop.f32.mrf.mxu0
      %v1154 = vpop.f32.mrf.mxu0
      %v1155 = vadd.f32 0.0, %v1154
      %v1156 = vpop.f32.mrf.mxu0
      %1157 = vdwg.mxu0
      %v1158 = vadd.f32 %v1009, %v1128
      %v1159 = vadd.f32 %v1010, %v1131
      %v1160 = vadd.f32 %v1011, %v1136
      %v1161 = vadd.f32 %v1012, %v1139
      %v1162 = vadd.f32 %v1013, %v1144
      %v1163 = vadd.f32 %v1014, %v1147
      %v1164 = vadd.f32 %v1015, %v1152
      %v1165 = vadd.f32 %v1016, %v1155
      %s1166 = scalar_lea.vmem %s277, 16
      %v1167 = vld [vmem:[%s1166] sm:$0xff]
      %v1168 = vld [vmem:[%s1166 + $0x10] sm:$0xff]
      %v1169 = vld [vmem:[%s1166 + $0x20] sm:$0xff]
      %v1170 = vld [vmem:[%s1166 + $0x30] sm:$0xff]
      %v1171 = vld [vmem:[%s1166 + $0x40] sm:$0xff]
      %v1172 = vld [vmem:[%s1166 + $0x50] sm:$0xff]
      %v1173 = vld [vmem:[%s1166 + $0x60] sm:$0xff]
      %v1174 = vld [vmem:[%s1166 + $0x70] sm:$0xff]
      %v1175 = vpack.c.bf16 %v1168, %v1167
      %v1176 = vpack.c.bf16 %v1170, %v1169
      %v1177 = vpack.c.bf16 %v1172, %v1171
      %v1178 = vpack.c.bf16 %v1174, %v1173
      %v1179 = vld [vmem:[%s1 + $0x180] sm:$0xf]
      %v1180 = vld [vmem:[%s1 + $0x184] sm:$0xf]
      %v1181 = vld [vmem:[%s1 + $0x188] sm:$0xf]
      %v1182 = vld [vmem:[%s1 + $0x18c] sm:$0xf]
      %v1183 = vld [vmem:[%s1 + $0x190] sm:$0xf]
      %v1184 = vld [vmem:[%s1 + $0x194] sm:$0xf]
      %v1185 = vld [vmem:[%s1 + $0x198] sm:$0xf]
      %v1186 = vld [vmem:[%s1 + $0x19c] sm:$0xf]
      %v1187 = vld [vmem:[%s1 + $0x1a0] sm:$0xf]
      %v1188 = vld [vmem:[%s1 + $0x1a4] sm:$0xf]
      %v1189 = vld [vmem:[%s1 + $0x1a8] sm:$0xf]
      %v1190 = vld [vmem:[%s1 + $0x1ac] sm:$0xf]
      %v1191 = vld [vmem:[%s1 + $0x1b0] sm:$0xf]
      %v1192 = vld [vmem:[%s1 + $0x1b4] sm:$0xf]
      %v1193 = vld [vmem:[%s1 + $0x1b8] sm:$0xf]
      %v1194 = vld [vmem:[%s1 + $0x1bc] sm:$0xf]
      %v1211 = vunpack.c.l.b16 %v1179
      %v1212 = vunpack.c.l.b16 %v1180
      %v1213 = vunpack.c.l.b16 %v1181
      %v1214 = vunpack.c.l.b16 %v1182
      %v1215 = vunpack.c.l.b16 %v1183
      %v1216 = vunpack.c.l.b16 %v1184
      %v1217 = vunpack.c.l.b16 %v1185
      %v1218 = vunpack.c.l.b16 %v1186
      %v1219 = vunpack.c.l.b16 %v1187
      %v1220 = vunpack.c.l.b16 %v1188
      %v1221 = vunpack.c.l.b16 %v1189
      %v1222 = vunpack.c.l.b16 %v1190
      %v1223 = vunpack.c.l.b16 %v1191
      %v1224 = vunpack.c.l.b16 %v1192
      %v1225 = vunpack.c.l.b16 %v1193
      %v1226 = vunpack.c.l.b16 %v1194
      %v1227 = vpack.c.b16 %v1212, %v1211
      %v1228 = vpack.c.b16 %v1214, %v1213
      %v1229 = vpack.c.b16 %v1216, %v1215
      %v1230 = vpack.c.b16 %v1218, %v1217
      %v1231 = vpack.c.b16 %v1220, %v1219
      %v1232 = vpack.c.b16 %v1222, %v1221
      %v1233 = vpack.c.b16 %v1224, %v1223
      %v1234 = vpack.c.b16 %v1226, %v1225
      %1243 = vmatprep.subr.bf16.mxu0 0
      %1244 = vmatpush1.bf16.msra.mxu0 %v1234
      %1245 = vmatprep.subr.bf16.mxu0 0
      %1246 = vmatpush1.bf16.msra.mxu0 %v1233
      %1247 = vmatprep.subr.bf16.mxu0 0
      %1248 = vmatpush1.bf16.msra.mxu0 %v1232
      %1249 = vmatprep.subr.bf16.mxu0 0
      %1250 = vmatpush1.bf16.msra.mxu0 %v1231
      %1251 = vmatprep.subr.bf16.mxu0 0
      %1252 = vmatpush1.bf16.msra.mxu0 %v1230
      %1253 = vmatprep.subr.bf16.mxu0 0
      %1254 = vmatpush1.bf16.msra.mxu0 %v1229
      %1255 = vmatprep.subr.bf16.mxu0 0
      %1256 = vmatpush1.bf16.msra.mxu0 %v1228
      %1257 = vmatprep.subr.bf16.mxu0 0
      %1258 = vmatpush1.bf16.msra.mxu0 %v1227
      %1259 = vmatprep.subr.bf16.mxu0 0
      %1260 = vmatpush2.bf16.msra.mxu0 0
      %1261 = vmatprep.subr.bf16.mxu0 0
      %1262 = vmatpush2.bf16.msra.mxu0 0
      %1263 = vmatprep.subr.bf16.mxu0 0
      %1264 = vmatpush2.bf16.msra.mxu0 0
      %1265 = vmatprep.subr.bf16.mxu0 0
      %1266 = vmatpush2.bf16.msra.mxu0 0
      %1267 = vmatprep.subr.bf16.mxu0 0
      %1268 = vmatpush2.bf16.msra.mxu0 0
      %1269 = vmatprep.subr.bf16.mxu0 0
      %1270 = vmatpush2.bf16.msra.mxu0 0
      %1271 = vmatprep.subr.bf16.mxu0 0
      %1272 = vmatpush2.bf16.msra.mxu0 0
      %1273 = vmatprep.subr.bf16.mxu0 0
      %1274 = vmatpush2.bf16.msra.mxu0 0
      %1275 = vmatprep.mubr.bf16.mxu0 0
      %1276 = vmatmul.mubr.bf16.gmra.mxu0 %v1175
      %v1277 = vpop.f32.mrf.mxu0
      %v1278 = vadd.f32 0.0, %v1277
      %v1279 = vpop.f32.mrf.mxu0
      %v1280 = vpop.f32.mrf.mxu0
      %v1281 = vadd.f32 0.0, %v1280
      %v1282 = vpop.f32.mrf.mxu0
      %1283 = vmatprep.mubr.bf16.mxu0 0
      %1284 = vmatmul.mubr.bf16.gmra.mxu0 %v1176
      %v1285 = vpop.f32.mrf.mxu0
      %v1286 = vadd.f32 0.0, %v1285
      %v1287 = vpop.f32.mrf.mxu0
      %v1288 = vpop.f32.mrf.mxu0
      %v1289 = vadd.f32 0.0, %v1288
      %v1290 = vpop.f32.mrf.mxu0
      %1291 = vmatprep.mubr.bf16.mxu0 0
      %1292 = vmatmul.mubr.bf16.gmra.mxu0 %v1177
      %v1293 = vpop.f32.mrf.mxu0
      %v1294 = vadd.f32 0.0, %v1293
      %v1295 = vpop.f32.mrf.mxu0
      %v1296 = vpop.f32.mrf.mxu0
      %v1297 = vadd.f32 0.0, %v1296
      %v1298 = vpop.f32.mrf.mxu0
      %1299 = vmatprep.mubr.bf16.mxu0 0
      %1300 = vmatmul.mubr.bf16.gmra.mxu0 %v1178
      %v1301 = vpop.f32.mrf.mxu0
      %v1302 = vadd.f32 0.0, %v1301
      %v1303 = vpop.f32.mrf.mxu0
      %v1304 = vpop.f32.mrf.mxu0
      %v1305 = vadd.f32 0.0, %v1304
      %v1306 = vpop.f32.mrf.mxu0
      %1307 = vdwg.mxu0
      %v1308 = vadd.f32 %v1158, %v1278
      %v1309 = vadd.f32 %v1159, %v1281
      %v1310 = vadd.f32 %v1160, %v1286
      %v1311 = vadd.f32 %v1161, %v1289
      %v1312 = vadd.f32 %v1162, %v1294
      %v1313 = vadd.f32 %v1163, %v1297
      %v1314 = vadd.f32 %v1164, %v1302
      %v1315 = vadd.f32 %v1165, %v1305
      %s1316 = scalar_lea.vmem %s277, 160
      %v1317 = vld [vmem:[%s1316] sm:$0xff]
      %v1318 = vld [vmem:[%s1316 + $0x10] sm:$0xff]
      %v1319 = vld [vmem:[%s1316 + $0x20] sm:$0xff]
      %v1320 = vld [vmem:[%s1316 + $0x30] sm:$0xff]
      %v1321 = vld [vmem:[%s1316 + $0x40] sm:$0xff]
      %v1322 = vld [vmem:[%s1316 + $0x50] sm:$0xff]
      %v1323 = vld [vmem:[%s1316 + $0x60] sm:$0xff]
      %v1324 = vld [vmem:[%s1316 + $0x70] sm:$0xff]
      %v1325 = vpack.c.bf16 %v1318, %v1317
      %v1326 = vpack.c.bf16 %v1320, %v1319
      %v1327 = vpack.c.bf16 %v1322, %v1321
      %v1328 = vpack.c.bf16 %v1324, %v1323
      %v1329 = vld [vmem:[%s1 + $0x1c0] sm:$0xf]
      %v1330 = vld [vmem:[%s1 + $0x1c4] sm:$0xf]
      %v1331 = vld [vmem:[%s1 + $0x1c8] sm:$0xf]
      %v1332 = vld [vmem:[%s1 + $0x1cc] sm:$0xf]
      %v1333 = vld [vmem:[%s1 + $0x1d0] sm:$0xf]
      %v1334 = vld [vmem:[%s1 + $0x1d4] sm:$0xf]
      %v1335 = vld [vmem:[%s1 + $0x1d8] sm:$0xf]
      %v1336 = vld [vmem:[%s1 + $0x1dc] sm:$0xf]
      %v1337 = vld [vmem:[%s1 + $0x1e0] sm:$0xf]
      %v1338 = vld [vmem:[%s1 + $0x1e4] sm:$0xf]
      %v1339 = vld [vmem:[%s1 + $0x1e8] sm:$0xf]
      %v1340 = vld [vmem:[%s1 + $0x1ec] sm:$0xf]
      %v1341 = vld [vmem:[%s1 + $0x1f0] sm:$0xf]
      %v1342 = vld [vmem:[%s1 + $0x1f4] sm:$0xf]
      %v1343 = vld [vmem:[%s1 + $0x1f8] sm:$0xf]
      %v1344 = vld [vmem:[%s1 + $0x1fc] sm:$0xf]
      %v1361 = vunpack.c.l.b16 %v1329
      %v1362 = vunpack.c.l.b16 %v1330
      %v1363 = vunpack.c.l.b16 %v1331
      %v1364 = vunpack.c.l.b16 %v1332
      %v1365 = vunpack.c.l.b16 %v1333
      %v1366 = vunpack.c.l.b16 %v1334
      %v1367 = vunpack.c.l.b16 %v1335
      %v1368 = vunpack.c.l.b16 %v1336
      %v1369 = vunpack.c.l.b16 %v1337
      %v1370 = vunpack.c.l.b16 %v1338
      %v1371 = vunpack.c.l.b16 %v1339
      %v1372 = vunpack.c.l.b16 %v1340
      %v1373 = vunpack.c.l.b16 %v1341
      %v1374 = vunpack.c.l.b16 %v1342
      %v1375 = vunpack.c.l.b16 %v1343
      %v1376 = vunpack.c.l.b16 %v1344
      %v1377 = vpack.c.b16 %v1362, %v1361
      %v1378 = vpack.c.b16 %v1364, %v1363
      %v1379 = vpack.c.b16 %v1366, %v1365
      %v1380 = vpack.c.b16 %v1368, %v1367
      %v1381 = vpack.c.b16 %v1370, %v1369
      %v1382 = vpack.c.b16 %v1372, %v1371
      %v1383 = vpack.c.b16 %v1374, %v1373
      %v1384 = vpack.c.b16 %v1376, %v1375
      %1393 = vmatprep.subr.bf16.mxu0 0
      %1394 = vmatpush1.bf16.msra.mxu0 %v1384
      %1395 = vmatprep.subr.bf16.mxu0 0
      %1396 = vmatpush1.bf16.msra.mxu0 %v1383
      %1397 = vmatprep.subr.bf16.mxu0 0
      %1398 = vmatpush1.bf16.msra.mxu0 %v1382
      %1399 = vmatprep.subr.bf16.mxu0 0
      %1400 = vmatpush1.bf16.msra.mxu0 %v1381
      %1401 = vmatprep.subr.bf16.mxu0 0
      %1402 = vmatpush1.bf16.msra.mxu0 %v1380
      %1403 = vmatprep.subr.bf16.mxu0 0
      %1404 = vmatpush1.bf16.msra.mxu0 %v1379
      %1405 = vmatprep.subr.bf16.mxu0 0
      %1406 = vmatpush1.bf16.msra.mxu0 %v1378
      %1407 = vmatprep.subr.bf16.mxu0 0
      %1408 = vmatpush1.bf16.msra.mxu0 %v1377
      %1409 = vmatprep.subr.bf16.mxu0 0
      %1410 = vmatpush2.bf16.msra.mxu0 0
      %1411 = vmatprep.subr.bf16.mxu0 0
      %1412 = vmatpush2.bf16.msra.mxu0 0
      %1413 = vmatprep.subr.bf16.mxu0 0
      %1414 = vmatpush2.bf16.msra.mxu0 0
      %1415 = vmatprep.subr.bf16.mxu0 0
      %1416 = vmatpush2.bf16.msra.mxu0 0
      %1417 = vmatprep.subr.bf16.mxu0 0
      %1418 = vmatpush2.bf16.msra.mxu0 0
      %1419 = vmatprep.subr.bf16.mxu0 0
      %1420 = vmatpush2.bf16.msra.mxu0 0
      %1421 = vmatprep.subr.bf16.mxu0 0
      %1422 = vmatpush2.bf16.msra.mxu0 0
      %1423 = vmatprep.subr.bf16.mxu0 0
      %1424 = vmatpush2.bf16.msra.mxu0 0
      %1425 = vmatprep.mubr.bf16.mxu0 0
      %1426 = vmatmul.mubr.bf16.gmra.mxu0 %v1325
      %v1427 = vpop.f32.mrf.mxu0
      %v1428 = vadd.f32 0.0, %v1427
      %v1429 = vpop.f32.mrf.mxu0
      %v1430 = vpop.f32.mrf.mxu0
      %v1431 = vadd.f32 0.0, %v1430
      %v1432 = vpop.f32.mrf.mxu0
      %1433 = vmatprep.mubr.bf16.mxu0 0
      %1434 = vmatmul.mubr.bf16.gmra.mxu0 %v1326
      %v1435 = vpop.f32.mrf.mxu0
      %v1436 = vadd.f32 0.0, %v1435
      %v1437 = vpop.f32.mrf.mxu0
      %v1438 = vpop.f32.mrf.mxu0
      %v1439 = vadd.f32 0.0, %v1438
      %v1440 = vpop.f32.mrf.mxu0
      %1441 = vmatprep.mubr.bf16.mxu0 0
      %1442 = vmatmul.mubr.bf16.gmra.mxu0 %v1327
      %v1443 = vpop.f32.mrf.mxu0
      %v1444 = vadd.f32 0.0, %v1443
      %v1445 = vpop.f32.mrf.mxu0
      %v1446 = vpop.f32.mrf.mxu0
      %v1447 = vadd.f32 0.0, %v1446
      %v1448 = vpop.f32.mrf.mxu0
      %1449 = vmatprep.mubr.bf16.mxu0 0
      %1450 = vmatmul.mubr.bf16.gmra.mxu0 %v1328
      %v1451 = vpop.f32.mrf.mxu0
      %v1452 = vadd.f32 0.0, %v1451
      %v1453 = vpop.f32.mrf.mxu0
      %v1454 = vpop.f32.mrf.mxu0
      %v1455 = vadd.f32 0.0, %v1454
      %v1456 = vpop.f32.mrf.mxu0
      %1457 = vdwg.mxu0
      %v1458 = vadd.f32 %v1308, %v1428
      %v1459 = vadd.f32 %v1309, %v1431
      %v1460 = vadd.f32 %v1310, %v1436
      %v1461 = vadd.f32 %v1311, %v1439
      %v1462 = vadd.f32 %v1312, %v1444
      %v1463 = vadd.f32 %v1313, %v1447
      %v1464 = vadd.f32 %v1314, %v1452
      %v1465 = vadd.f32 %v1315, %v1455
      %v1466 = vld [vmem:[%s1166 + $0x1] sm:$0xff]
      %v1467 = vld [vmem:[%s1166 + $0x11] sm:$0xff]
      %v1468 = vld [vmem:[%s1166 + $0x21] sm:$0xff]
      %v1469 = vld [vmem:[%s1166 + $0x31] sm:$0xff]
      %v1470 = vld [vmem:[%s1166 + $0x41] sm:$0xff]
      %v1471 = vld [vmem:[%s1166 + $0x51] sm:$0xff]
      %v1472 = vld [vmem:[%s1166 + $0x61] sm:$0xff]
      %v1473 = vld [vmem:[%s1166 + $0x71] sm:$0xff]
      %v1474 = vpack.c.bf16 %v1467, %v1466
      %v1475 = vpack.c.bf16 %v1469, %v1468
      %v1476 = vpack.c.bf16 %v1471, %v1470
      %v1477 = vpack.c.bf16 %v1473, %v1472
      %v1478 = vld [vmem:[%s1 + $0x200] sm:$0xf]
      %v1479 = vld [vmem:[%s1 + $0x204] sm:$0xf]
      %v1480 = vld [vmem:[%s1 + $0x208] sm:$0xf]
      %v1481 = vld [vmem:[%s1 + $0x20c] sm:$0xf]
      %v1482 = vld [vmem:[%s1 + $0x210] sm:$0xf]
      %v1483 = vld [vmem:[%s1 + $0x214] sm:$0xf]
      %v1484 = vld [vmem:[%s1 + $0x218] sm:$0xf]
      %v1485 = vld [vmem:[%s1 + $0x21c] sm:$0xf]
      %v1486 = vld [vmem:[%s1 + $0x220] sm:$0xf]
      %v1487 = vld [vmem:[%s1 + $0x224] sm:$0xf]
      %v1488 = vld [vmem:[%s1 + $0x228] sm:$0xf]
      %v1489 = vld [vmem:[%s1 + $0x22c] sm:$0xf]
      %v1490 = vld [vmem:[%s1 + $0x230] sm:$0xf]
      %v1491 = vld [vmem:[%s1 + $0x234] sm:$0xf]
      %v1492 = vld [vmem:[%s1 + $0x238] sm:$0xf]
      %v1493 = vld [vmem:[%s1 + $0x23c] sm:$0xf]
      %v1510 = vunpack.c.l.b16 %v1478
      %v1511 = vunpack.c.l.b16 %v1479
      %v1512 = vunpack.c.l.b16 %v1480
      %v1513 = vunpack.c.l.b16 %v1481
      %v1514 = vunpack.c.l.b16 %v1482
      %v1515 = vunpack.c.l.b16 %v1483
      %v1516 = vunpack.c.l.b16 %v1484
      %v1517 = vunpack.c.l.b16 %v1485
      %v1518 = vunpack.c.l.b16 %v1486
      %v1519 = vunpack.c.l.b16 %v1487
      %v1520 = vunpack.c.l.b16 %v1488
      %v1521 = vunpack.c.l.b16 %v1489
      %v1522 = vunpack.c.l.b16 %v1490
      %v1523 = vunpack.c.l.b16 %v1491
      %v1524 = vunpack.c.l.b16 %v1492
      %v1525 = vunpack.c.l.b16 %v1493
      %v1526 = vpack.c.b16 %v1511, %v1510
      %v1527 = vpack.c.b16 %v1513, %v1512
      %v1528 = vpack.c.b16 %v1515, %v1514
      %v1529 = vpack.c.b16 %v1517, %v1516
      %v1530 = vpack.c.b16 %v1519, %v1518
      %v1531 = vpack.c.b16 %v1521, %v1520
      %v1532 = vpack.c.b16 %v1523, %v1522
      %v1533 = vpack.c.b16 %v1525, %v1524
      %1542 = vmatprep.subr.bf16.mxu0 0
      %1543 = vmatpush1.bf16.msra.mxu0 %v1533
      %1544 = vmatprep.subr.bf16.mxu0 0
      %1545 = vmatpush1.bf16.msra.mxu0 %v1532
      %1546 = vmatprep.subr.bf16.mxu0 0
      %1547 = vmatpush1.bf16.msra.mxu0 %v1531
      %1548 = vmatprep.subr.bf16.mxu0 0
      %1549 = vmatpush1.bf16.msra.mxu0 %v1530
      %1550 = vmatprep.subr.bf16.mxu0 0
      %1551 = vmatpush1.bf16.msra.mxu0 %v1529
      %1552 = vmatprep.subr.bf16.mxu0 0
      %1553 = vmatpush1.bf16.msra.mxu0 %v1528
      %1554 = vmatprep.subr.bf16.mxu0 0
      %1555 = vmatpush1.bf16.msra.mxu0 %v1527
      %1556 = vmatprep.subr.bf16.mxu0 0
      %1557 = vmatpush1.bf16.msra.mxu0 %v1526
      %1558 = vmatprep.subr.bf16.mxu0 0
      %1559 = vmatpush2.bf16.msra.mxu0 0
      %1560 = vmatprep.subr.bf16.mxu0 0
      %1561 = vmatpush2.bf16.msra.mxu0 0
      %1562 = vmatprep.subr.bf16.mxu0 0
      %1563 = vmatpush2.bf16.msra.mxu0 0
      %1564 = vmatprep.subr.bf16.mxu0 0
      %1565 = vmatpush2.bf16.msra.mxu0 0
      %1566 = vmatprep.subr.bf16.mxu0 0
      %1567 = vmatpush2.bf16.msra.mxu0 0
      %1568 = vmatprep.subr.bf16.mxu0 0
      %1569 = vmatpush2.bf16.msra.mxu0 0
      %1570 = vmatprep.subr.bf16.mxu0 0
      %1571 = vmatpush2.bf16.msra.mxu0 0
      %1572 = vmatprep.subr.bf16.mxu0 0
      %1573 = vmatpush2.bf16.msra.mxu0 0
      %1574 = vmatprep.mubr.bf16.mxu0 0
      %1575 = vmatmul.mubr.bf16.gmra.mxu0 %v1474
      %v1576 = vpop.f32.mrf.mxu0
      %v1577 = vadd.f32 0.0, %v1576
      %v1578 = vpop.f32.mrf.mxu0
      %v1579 = vpop.f32.mrf.mxu0
      %v1580 = vadd.f32 0.0, %v1579
      %v1581 = vpop.f32.mrf.mxu0
      %1582 = vmatprep.mubr.bf16.mxu0 0
      %1583 = vmatmul.mubr.bf16.gmra.mxu0 %v1475
      %v1584 = vpop.f32.mrf.mxu0
      %v1585 = vadd.f32 0.0, %v1584
      %v1586 = vpop.f32.mrf.mxu0
      %v1587 = vpop.f32.mrf.mxu0
      %v1588 = vadd.f32 0.0, %v1587
      %v1589 = vpop.f32.mrf.mxu0
      %1590 = vmatprep.mubr.bf16.mxu0 0
      %1591 = vmatmul.mubr.bf16.gmra.mxu0 %v1476
      %v1592 = vpop.f32.mrf.mxu0
      %v1593 = vadd.f32 0.0, %v1592
      %v1594 = vpop.f32.mrf.mxu0
      %v1595 = vpop.f32.mrf.mxu0
      %v1596 = vadd.f32 0.0, %v1595
      %v1597 = vpop.f32.mrf.mxu0
      %1598 = vmatprep.mubr.bf16.mxu0 0
      %1599 = vmatmul.mubr.bf16.gmra.mxu0 %v1477
      %v1600 = vpop.f32.mrf.mxu0
      %v1601 = vadd.f32 0.0, %v1600
      %v1602 = vpop.f32.mrf.mxu0
      %v1603 = vpop.f32.mrf.mxu0
      %v1604 = vadd.f32 0.0, %v1603
      %v1605 = vpop.f32.mrf.mxu0
      %1606 = vdwg.mxu0
      %v1607 = vadd.f32 %v1458, %v1577
      %v1608 = vadd.f32 %v1459, %v1580
      %v1609 = vadd.f32 %v1460, %v1585
      %v1610 = vadd.f32 %v1461, %v1588
      %v1611 = vadd.f32 %v1462, %v1593
      %v1612 = vadd.f32 %v1463, %v1596
      %v1613 = vadd.f32 %v1464, %v1601
      %v1614 = vadd.f32 %v1465, %v1604
      %v1615 = vld [vmem:[%s2] sm:$0x1]
      %v1617 = vlaneseq
      %v1618 = vshrl.u32 %v1617, 7
      %v1619 = vsub.s32 0, %v1618
      %v1620 = vrot.slane %v1615, %v1619
      %v1622 = vadd.f32 %v1607, %v1620
      %v1623 = vadd.f32 %v1608, %v1620
      %v1624 = vadd.f32 %v1609, %v1620
      %v1625 = vadd.f32 %v1610, %v1620
      %v1626 = vadd.f32 %v1611, %v1620
      %v1627 = vadd.f32 %v1612, %v1620
      %v1628 = vadd.f32 %v1613, %v1620
      %v1629 = vadd.f32 %v1614, %v1620
      %v1630 = vmax.f32 %v1622, 0.0
      %v1631 = vmax.f32 %v1623, 0.0
      %v1632 = vmax.f32 %v1624, 0.0
      %v1633 = vmax.f32 %v1625, 0.0
      %v1634 = vmax.f32 %v1626, 0.0
      %v1635 = vmax.f32 %v1627, 0.0
      %v1636 = vmax.f32 %v1628, 0.0
      %v1637 = vmax.f32 %v1629, 0.0
      %1638 = vst [vmem:[#allocation2] sm:$0xff] 0.0
      %1639 = vst [vmem:[#allocation2 + $0x8] sm:$0x3] 0.0
      %1640 = vst [vmem:[#allocation2 + $0x10] sm:$0xff] 0.0
      %1641 = vst [vmem:[#allocation2 + $0x18] sm:$0x3] 0.0
      %1642 = vst [vmem:[#allocation2 + $0x20] sm:$0xff] 0.0
      %1643 = vst [vmem:[#allocation2 + $0x28] sm:$0x3] 0.0
      %1644 = vst [vmem:[#allocation2 + $0x30] sm:$0xff] 0.0
      %1645 = vst [vmem:[#allocation2 + $0x38] sm:$0x3] 0.0
      %1646 = vst [vmem:[#allocation2 + $0x40] sm:$0xff] 0.0
      %1647 = vst [vmem:[#allocation2 + $0x48] sm:$0x3] 0.0
      %1648 = vst [vmem:[#allocation2 + $0x50] sm:$0xff] 0.0
      %1649 = vst [vmem:[#allocation2 + $0x58] sm:$0x3] 0.0
      %1650 = vst [vmem:[#allocation2 + $0x60] sm:$0xff] 0.0
      %1651 = vst [vmem:[#allocation2 + $0x68] sm:$0x3] 0.0
      %1652 = vst [vmem:[#allocation2 + $0x70] sm:$0xff] 0.0
      %1653 = vst [vmem:[#allocation2 + $0x78] sm:$0x3] 0.0
      %1654 = vst [vmem:[#allocation2 + $0x80] sm:$0xff] 0.0
      %1655 = vst [vmem:[#allocation2 + $0x88] sm:$0x3] 0.0
      %1656 = vst [vmem:[#allocation2 + $0x90] sm:$0xff] 0.0
      %1657 = vst [vmem:[#allocation2 + $0x98] sm:$0x3] 0.0
      %s1658 = scalar_lea.vmem [#allocation2], 16
      %1659 = vst [vmem:[%s1658 + $0x1] sm:$0xff] %v1630
      %1660 = vst [vmem:[%s1658 + $0x11] sm:$0xff] %v1631
      %1661 = vst [vmem:[%s1658 + $0x21] sm:$0xff] %v1632
      %1662 = vst [vmem:[%s1658 + $0x31] sm:$0xff] %v1633
      %1663 = vst [vmem:[%s1658 + $0x41] sm:$0xff] %v1634
      %1664 = vst [vmem:[%s1658 + $0x51] sm:$0xff] %v1635
      %1665 = vst [vmem:[%s1658 + $0x61] sm:$0xff] %v1636
      %1666 = vst [vmem:[%s1658 + $0x71] sm:$0xff] %v1637
      %v1667 = vld [vmem:[#allocation2] sm:$0xff]
      %v1668 = vld [vmem:[#allocation2 + $0x10] sm:$0xff]
      %v1669 = vld [vmem:[#allocation2 + $0x20] sm:$0xff]
      %v1670 = vld [vmem:[#allocation2 + $0x30] sm:$0xff]
      %v1671 = vld [vmem:[#allocation2 + $0x40] sm:$0xff]
      %v1672 = vld [vmem:[#allocation2 + $0x50] sm:$0xff]
      %v1673 = vld [vmem:[#allocation2 + $0x60] sm:$0xff]
      %v1674 = vld [vmem:[#allocation2 + $0x70] sm:$0xff]
      %v1675 = vpack.c.bf16 %v1668, %v1667
      %v1676 = vpack.c.bf16 %v1670, %v1669
      %v1677 = vpack.c.bf16 %v1672, %v1671
      %v1678 = vpack.c.bf16 %v1674, %v1673
      %v1679 = vld [vmem:[%s3] sm:$0xf]
      %v1680 = vld [vmem:[%s3 + $0x4] sm:$0xf]
      %v1681 = vld [vmem:[%s3 + $0x8] sm:$0xf]
      %v1682 = vld [vmem:[%s3 + $0xc] sm:$0xf]
      %v1683 = vld [vmem:[%s3 + $0x10] sm:$0xf]
      %v1684 = vld [vmem:[%s3 + $0x14] sm:$0xf]
      %v1685 = vld [vmem:[%s3 + $0x18] sm:$0xf]
      %v1686 = vld [vmem:[%s3 + $0x1c] sm:$0xf]
      %v1687 = vld [vmem:[%s3 + $0x20] sm:$0xf]
      %v1688 = vld [vmem:[%s3 + $0x24] sm:$0xf]
      %v1689 = vld [vmem:[%s3 + $0x28] sm:$0xf]
      %v1690 = vld [vmem:[%s3 + $0x2c] sm:$0xf]
      %v1691 = vld [vmem:[%s3 + $0x30] sm:$0xf]
      %v1692 = vld [vmem:[%s3 + $0x34] sm:$0xf]
      %v1693 = vld [vmem:[%s3 + $0x38] sm:$0xf]
      %v1694 = vld [vmem:[%s3 + $0x3c] sm:$0xf]
      %v1695 = vld [vmem:[#allocation2 + $0x1] sm:$0xff]
      %v1696 = vld [vmem:[#allocation2 + $0x11] sm:$0xff]
      %v1697 = vld [vmem:[#allocation2 + $0x21] sm:$0xff]
      %v1698 = vld [vmem:[#allocation2 + $0x31] sm:$0xff]
      %v1699 = vld [vmem:[#allocation2 + $0x41] sm:$0xff]
      %v1700 = vld [vmem:[#allocation2 + $0x51] sm:$0xff]
      %v1701 = vld [vmem:[#allocation2 + $0x61] sm:$0xff]
      %v1702 = vld [vmem:[#allocation2 + $0x71] sm:$0xff]
      %v1703 = vpack.c.bf16 %v1696, %v1695
      %v1704 = vpack.c.bf16 %v1698, %v1697
      %v1705 = vpack.c.bf16 %v1700, %v1699
      %v1706 = vpack.c.bf16 %v1702, %v1701
      %v1707 = vld [vmem:[%s3 + $0x40] sm:$0xf]
      %v1708 = vld [vmem:[%s3 + $0x44] sm:$0xf]
      %v1709 = vld [vmem:[%s3 + $0x48] sm:$0xf]
      %v1710 = vld [vmem:[%s3 + $0x4c] sm:$0xf]
      %v1711 = vld [vmem:[%s3 + $0x50] sm:$0xf]
      %v1712 = vld [vmem:[%s3 + $0x54] sm:$0xf]
      %v1713 = vld [vmem:[%s3 + $0x58] sm:$0xf]
      %v1714 = vld [vmem:[%s3 + $0x5c] sm:$0xf]
      %v1715 = vld [vmem:[%s3 + $0x60] sm:$0xf]
      %v1716 = vld [vmem:[%s3 + $0x64] sm:$0xf]
      %v1717 = vld [vmem:[%s3 + $0x68] sm:$0xf]
      %v1718 = vld [vmem:[%s3 + $0x6c] sm:$0xf]
      %v1719 = vld [vmem:[%s3 + $0x70] sm:$0xf]
      %v1720 = vld [vmem:[%s3 + $0x74] sm:$0xf]
      %v1721 = vld [vmem:[%s3 + $0x78] sm:$0xf]
      %v1722 = vld [vmem:[%s3 + $0x7c] sm:$0xf]
      %v1739 = vunpack.c.l.b16 %v1707
      %v1740 = vunpack.c.l.b16 %v1708
      %v1741 = vunpack.c.l.b16 %v1709
      %v1742 = vunpack.c.l.b16 %v1710
      %v1743 = vunpack.c.l.b16 %v1711
      %v1744 = vunpack.c.l.b16 %v1712
      %v1745 = vunpack.c.l.b16 %v1713
      %v1746 = vunpack.c.l.b16 %v1714
      %v1747 = vunpack.c.l.b16 %v1715
      %v1748 = vunpack.c.l.b16 %v1716
      %v1749 = vunpack.c.l.b16 %v1717
      %v1750 = vunpack.c.l.b16 %v1718
      %v1751 = vunpack.c.l.b16 %v1719
      %v1752 = vunpack.c.l.b16 %v1720
      %v1753 = vunpack.c.l.b16 %v1721
      %v1754 = vunpack.c.l.b16 %v1722
      %v1755 = vpack.c.b16 %v1740, %v1739
      %v1756 = vpack.c.b16 %v1742, %v1741
      %v1757 = vpack.c.b16 %v1744, %v1743
      %v1758 = vpack.c.b16 %v1746, %v1745
      %v1759 = vpack.c.b16 %v1748, %v1747
      %v1760 = vpack.c.b16 %v1750, %v1749
      %v1761 = vpack.c.b16 %v1752, %v1751
      %v1762 = vpack.c.b16 %v1754, %v1753
      %1771 = vmatprep.subr.bf16.mxu0 0
      %1772 = vmatpush1.bf16.msra.mxu0 %v1762
      %1773 = vmatprep.subr.bf16.mxu0 0
      %1774 = vmatpush1.bf16.msra.mxu0 %v1761
      %1775 = vmatprep.subr.bf16.mxu0 0
      %1776 = vmatpush1.bf16.msra.mxu0 %v1760
      %1777 = vmatprep.subr.bf16.mxu0 0
      %1778 = vmatpush1.bf16.msra.mxu0 %v1759
      %1779 = vmatprep.subr.bf16.mxu0 0
      %1780 = vmatpush1.bf16.msra.mxu0 %v1758
      %1781 = vmatprep.subr.bf16.mxu0 0
      %1782 = vmatpush1.bf16.msra.mxu0 %v1757
      %1783 = vmatprep.subr.bf16.mxu0 0
      %1784 = vmatpush1.bf16.msra.mxu0 %v1756
      %1785 = vmatprep.subr.bf16.mxu0 0
      %1786 = vmatpush1.bf16.msra.mxu0 %v1755
      %1787 = vmatprep.subr.bf16.mxu0 0
      %1788 = vmatpush2.bf16.msra.mxu0 0
      %1789 = vmatprep.subr.bf16.mxu0 0
      %1790 = vmatpush2.bf16.msra.mxu0 0
      %1791 = vmatprep.subr.bf16.mxu0 0
      %1792 = vmatpush2.bf16.msra.mxu0 0
      %1793 = vmatprep.subr.bf16.mxu0 0
      %1794 = vmatpush2.bf16.msra.mxu0 0
      %1795 = vmatprep.subr.bf16.mxu0 0
      %1796 = vmatpush2.bf16.msra.mxu0 0
      %1797 = vmatprep.subr.bf16.mxu0 0
      %1798 = vmatpush2.bf16.msra.mxu0 0
      %1799 = vmatprep.subr.bf16.mxu0 0
      %1800 = vmatpush2.bf16.msra.mxu0 0
      %1801 = vmatprep.subr.bf16.mxu0 0
      %1802 = vmatpush2.bf16.msra.mxu0 0
      %1803 = vmatprep.mubr.bf16.mxu0 0
      %1804 = vmatmul.mubr.bf16.gmra.mxu0 %v1703
      %v1805 = vpop.f32.mrf.mxu0
      %v1806 = vadd.f32 0.0, %v1805
      %v1807 = vpop.f32.mrf.mxu0
      %v1808 = vpop.f32.mrf.mxu0
      %v1809 = vadd.f32 0.0, %v1808
      %v1810 = vpop.f32.mrf.mxu0
      %1811 = vmatprep.mubr.bf16.mxu0 0
      %1812 = vmatmul.mubr.bf16.gmra.mxu0 %v1704
      %v1813 = vpop.f32.mrf.mxu0
      %v1814 = vadd.f32 0.0, %v1813
      %v1815 = vpop.f32.mrf.mxu0
      %v1816 = vpop.f32.mrf.mxu0
      %v1817 = vadd.f32 0.0, %v1816
      %v1818 = vpop.f32.mrf.mxu0
      %1819 = vmatprep.mubr.bf16.mxu0 0
      %1820 = vmatmul.mubr.bf16.gmra.mxu0 %v1705
      %v1821 = vpop.f32.mrf.mxu0
      %v1822 = vadd.f32 0.0, %v1821
      %v1823 = vpop.f32.mrf.mxu0
      %v1824 = vpop.f32.mrf.mxu0
      %v1825 = vadd.f32 0.0, %v1824
      %v1826 = vpop.f32.mrf.mxu0
      %1827 = vmatprep.mubr.bf16.mxu0 0
      %1828 = vmatmul.mubr.bf16.gmra.mxu0 %v1706
      %v1829 = vpop.f32.mrf.mxu0
      %v1830 = vadd.f32 0.0, %v1829
      %v1831 = vpop.f32.mrf.mxu0
      %v1832 = vpop.f32.mrf.mxu0
      %v1833 = vadd.f32 0.0, %v1832
      %v1834 = vpop.f32.mrf.mxu0
      %1835 = vdwg.mxu0
      %v1852 = vunpack.c.l.b16 %v1679
      %v1853 = vunpack.c.l.b16 %v1680
      %v1854 = vunpack.c.l.b16 %v1681
      %v1855 = vunpack.c.l.b16 %v1682
      %v1856 = vunpack.c.l.b16 %v1683
      %v1857 = vunpack.c.l.b16 %v1684
      %v1858 = vunpack.c.l.b16 %v1685
      %v1859 = vunpack.c.l.b16 %v1686
      %v1860 = vunpack.c.l.b16 %v1687
      %v1861 = vunpack.c.l.b16 %v1688
      %v1862 = vunpack.c.l.b16 %v1689
      %v1863 = vunpack.c.l.b16 %v1690
      %v1864 = vunpack.c.l.b16 %v1691
      %v1865 = vunpack.c.l.b16 %v1692
      %v1866 = vunpack.c.l.b16 %v1693
      %v1867 = vunpack.c.l.b16 %v1694
      %v1868 = vpack.c.b16 %v1853, %v1852
      %v1869 = vpack.c.b16 %v1855, %v1854
      %v1870 = vpack.c.b16 %v1857, %v1856
      %v1871 = vpack.c.b16 %v1859, %v1858
      %v1872 = vpack.c.b16 %v1861, %v1860
      %v1873 = vpack.c.b16 %v1863, %v1862
      %v1874 = vpack.c.b16 %v1865, %v1864
      %v1875 = vpack.c.b16 %v1867, %v1866
      %1884 = vmatprep.subr.bf16.mxu0 0
      %1885 = vmatpush1.bf16.msra.mxu0 %v1875
      %1886 = vmatprep.subr.bf16.mxu0 0
      %1887 = vmatpush1.bf16.msra.mxu0 %v1874
      %1888 = vmatprep.subr.bf16.mxu0 0
      %1889 = vmatpush1.bf16.msra.mxu0 %v1873
      %1890 = vmatprep.subr.bf16.mxu0 0
      %1891 = vmatpush1.bf16.msra.mxu0 %v1872
      %1892 = vmatprep.subr.bf16.mxu0 0
      %1893 = vmatpush1.bf16.msra.mxu0 %v1871
      %1894 = vmatprep.subr.bf16.mxu0 0
      %1895 = vmatpush1.bf16.msra.mxu0 %v1870
      %1896 = vmatprep.subr.bf16.mxu0 0
      %1897 = vmatpush1.bf16.msra.mxu0 %v1869
      %1898 = vmatprep.subr.bf16.mxu0 0
      %1899 = vmatpush1.bf16.msra.mxu0 %v1868
      %1900 = vmatprep.subr.bf16.mxu0 0
      %1901 = vmatpush2.bf16.msra.mxu0 0
      %1902 = vmatprep.subr.bf16.mxu0 0
      %1903 = vmatpush2.bf16.msra.mxu0 0
      %1904 = vmatprep.subr.bf16.mxu0 0
      %1905 = vmatpush2.bf16.msra.mxu0 0
      %1906 = vmatprep.subr.bf16.mxu0 0
      %1907 = vmatpush2.bf16.msra.mxu0 0
      %1908 = vmatprep.subr.bf16.mxu0 0
      %1909 = vmatpush2.bf16.msra.mxu0 0
      %1910 = vmatprep.subr.bf16.mxu0 0
      %1911 = vmatpush2.bf16.msra.mxu0 0
      %1912 = vmatprep.subr.bf16.mxu0 0
      %1913 = vmatpush2.bf16.msra.mxu0 0
      %1914 = vmatprep.subr.bf16.mxu0 0
      %1915 = vmatpush2.bf16.msra.mxu0 0
      %1916 = vmatprep.mubr.bf16.mxu0 0
      %1917 = vmatmul.mubr.bf16.gmra.mxu0 %v1675
      %v1918 = vpop.f32.mrf.mxu0
      %v1919 = vadd.f32 %v1806, %v1918
      %v1920 = vpop.f32.mrf.mxu0
      %v1921 = vpop.f32.mrf.mxu0
      %v1922 = vadd.f32 %v1809, %v1921
      %v1923 = vpop.f32.mrf.mxu0
      %1924 = vmatprep.mubr.bf16.mxu0 0
      %1925 = vmatmul.mubr.bf16.gmra.mxu0 %v1676
      %v1926 = vpop.f32.mrf.mxu0
      %v1927 = vadd.f32 %v1814, %v1926
      %v1928 = vpop.f32.mrf.mxu0
      %v1929 = vpop.f32.mrf.mxu0
      %v1930 = vadd.f32 %v1817, %v1929
      %v1931 = vpop.f32.mrf.mxu0
      %1932 = vmatprep.mubr.bf16.mxu0 0
      %1933 = vmatmul.mubr.bf16.gmra.mxu0 %v1677
      %v1934 = vpop.f32.mrf.mxu0
      %v1935 = vadd.f32 %v1822, %v1934
      %v1936 = vpop.f32.mrf.mxu0
      %v1937 = vpop.f32.mrf.mxu0
      %v1938 = vadd.f32 %v1825, %v1937
      %v1939 = vpop.f32.mrf.mxu0
      %1940 = vmatprep.mubr.bf16.mxu0 0
      %1941 = vmatmul.mubr.bf16.gmra.mxu0 %v1678
      %v1942 = vpop.f32.mrf.mxu0
      %v1943 = vadd.f32 %v1830, %v1942
      %v1944 = vpop.f32.mrf.mxu0
      %v1945 = vpop.f32.mrf.mxu0
      %v1946 = vadd.f32 %v1833, %v1945
      %v1947 = vpop.f32.mrf.mxu0
      %1948 = vdwg.mxu0
      %v1949 = vld [vmem:[#allocation2 + $0x2] sm:$0xff]
      %v1950 = vld [vmem:[#allocation2 + $0x12] sm:$0xff]
      %v1951 = vld [vmem:[#allocation2 + $0x22] sm:$0xff]
      %v1952 = vld [vmem:[#allocation2 + $0x32] sm:$0xff]
      %v1953 = vld [vmem:[#allocation2 + $0x42] sm:$0xff]
      %v1954 = vld [vmem:[#allocation2 + $0x52] sm:$0xff]
      %v1955 = vld [vmem:[#allocation2 + $0x62] sm:$0xff]
      %v1956 = vld [vmem:[#allocation2 + $0x72] sm:$0xff]
      %v1957 = vpack.c.bf16 %v1950, %v1949
      %v1958 = vpack.c.bf16 %v1952, %v1951
      %v1959 = vpack.c.bf16 %v1954, %v1953
      %v1960 = vpack.c.bf16 %v1956, %v1955
      %v1961 = vld [vmem:[%s3 + $0x80] sm:$0xf]
      %v1962 = vld [vmem:[%s3 + $0x84] sm:$0xf]
      %v1963 = vld [vmem:[%s3 + $0x88] sm:$0xf]
      %v1964 = vld [vmem:[%s3 + $0x8c] sm:$0xf]
      %v1965 = vld [vmem:[%s3 + $0x90] sm:$0xf]
      %v1966 = vld [vmem:[%s3 + $0x94] sm:$0xf]
      %v1967 = vld [vmem:[%s3 + $0x98] sm:$0xf]
      %v1968 = vld [vmem:[%s3 + $0x9c] sm:$0xf]
      %v1969 = vld [vmem:[%s3 + $0xa0] sm:$0xf]
      %v1970 = vld [vmem:[%s3 + $0xa4] sm:$0xf]
      %v1971 = vld [vmem:[%s3 + $0xa8] sm:$0xf]
      %v1972 = vld [vmem:[%s3 + $0xac] sm:$0xf]
      %v1973 = vld [vmem:[%s3 + $0xb0] sm:$0xf]
      %v1974 = vld [vmem:[%s3 + $0xb4] sm:$0xf]
      %v1975 = vld [vmem:[%s3 + $0xb8] sm:$0xf]
      %v1976 = vld [vmem:[%s3 + $0xbc] sm:$0xf]
      %v1993 = vunpack.c.l.b16 %v1961
      %v1994 = vunpack.c.l.b16 %v1962
      %v1995 = vunpack.c.l.b16 %v1963
      %v1996 = vunpack.c.l.b16 %v1964
      %v1997 = vunpack.c.l.b16 %v1965
      %v1998 = vunpack.c.l.b16 %v1966
      %v1999 = vunpack.c.l.b16 %v1967
      %v2000 = vunpack.c.l.b16 %v1968
      %v2001 = vunpack.c.l.b16 %v1969
      %v2002 = vunpack.c.l.b16 %v1970
      %v2003 = vunpack.c.l.b16 %v1971
      %v2004 = vunpack.c.l.b16 %v1972
      %v2005 = vunpack.c.l.b16 %v1973
      %v2006 = vunpack.c.l.b16 %v1974
      %v2007 = vunpack.c.l.b16 %v1975
      %v2008 = vunpack.c.l.b16 %v1976
      %v2009 = vpack.c.b16 %v1994, %v1993
      %v2010 = vpack.c.b16 %v1996, %v1995
      %v2011 = vpack.c.b16 %v1998, %v1997
      %v2012 = vpack.c.b16 %v2000, %v1999
      %v2013 = vpack.c.b16 %v2002, %v2001
      %v2014 = vpack.c.b16 %v2004, %v2003
      %v2015 = vpack.c.b16 %v2006, %v2005
      %v2016 = vpack.c.b16 %v2008, %v2007
      %2025 = vmatprep.subr.bf16.mxu0 0
      %2026 = vmatpush1.bf16.msra.mxu0 %v2016
      %2027 = vmatprep.subr.bf16.mxu0 0
      %2028 = vmatpush1.bf16.msra.mxu0 %v2015
      %2029 = vmatprep.subr.bf16.mxu0 0
      %2030 = vmatpush1.bf16.msra.mxu0 %v2014
      %2031 = vmatprep.subr.bf16.mxu0 0
      %2032 = vmatpush1.bf16.msra.mxu0 %v2013
      %2033 = vmatprep.subr.bf16.mxu0 0
      %2034 = vmatpush1.bf16.msra.mxu0 %v2012
      %2035 = vmatprep.subr.bf16.mxu0 0
      %2036 = vmatpush1.bf16.msra.mxu0 %v2011
      %2037 = vmatprep.subr.bf16.mxu0 0
      %2038 = vmatpush1.bf16.msra.mxu0 %v2010
      %2039 = vmatprep.subr.bf16.mxu0 0
      %2040 = vmatpush1.bf16.msra.mxu0 %v2009
      %2041 = vmatprep.subr.bf16.mxu0 0
      %2042 = vmatpush2.bf16.msra.mxu0 0
      %2043 = vmatprep.subr.bf16.mxu0 0
      %2044 = vmatpush2.bf16.msra.mxu0 0
      %2045 = vmatprep.subr.bf16.mxu0 0
      %2046 = vmatpush2.bf16.msra.mxu0 0
      %2047 = vmatprep.subr.bf16.mxu0 0
      %2048 = vmatpush2.bf16.msra.mxu0 0
      %2049 = vmatprep.subr.bf16.mxu0 0
      %2050 = vmatpush2.bf16.msra.mxu0 0
      %2051 = vmatprep.subr.bf16.mxu0 0
      %2052 = vmatpush2.bf16.msra.mxu0 0
      %2053 = vmatprep.subr.bf16.mxu0 0
      %2054 = vmatpush2.bf16.msra.mxu0 0
      %2055 = vmatprep.subr.bf16.mxu0 0
      %2056 = vmatpush2.bf16.msra.mxu0 0
      %2057 = vmatprep.mubr.bf16.mxu0 0
      %2058 = vmatmul.mubr.bf16.gmra.mxu0 %v1957
      %v2059 = vpop.f32.mrf.mxu0
      %v2060 = vadd.f32 0.0, %v2059
      %v2061 = vpop.f32.mrf.mxu0
      %v2062 = vpop.f32.mrf.mxu0
      %v2063 = vadd.f32 0.0, %v2062
      %v2064 = vpop.f32.mrf.mxu0
      %2065 = vmatprep.mubr.bf16.mxu0 0
      %2066 = vmatmul.mubr.bf16.gmra.mxu0 %v1958
      %v2067 = vpop.f32.mrf.mxu0
      %v2068 = vadd.f32 0.0, %v2067
      %v2069 = vpop.f32.mrf.mxu0
      %v2070 = vpop.f32.mrf.mxu0
      %v2071 = vadd.f32 0.0, %v2070
      %v2072 = vpop.f32.mrf.mxu0
      %2073 = vmatprep.mubr.bf16.mxu0 0
      %2074 = vmatmul.mubr.bf16.gmra.mxu0 %v1959
      %v2075 = vpop.f32.mrf.mxu0
      %v2076 = vadd.f32 0.0, %v2075
      %v2077 = vpop.f32.mrf.mxu0
      %v2078 = vpop.f32.mrf.mxu0
      %v2079 = vadd.f32 0.0, %v2078
      %v2080 = vpop.f32.mrf.mxu0
      %2081 = vmatprep.mubr.bf16.mxu0 0
      %2082 = vmatmul.mubr.bf16.gmra.mxu0 %v1960
      %v2083 = vpop.f32.mrf.mxu0
      %v2084 = vadd.f32 0.0, %v2083
      %v2085 = vpop.f32.mrf.mxu0
      %v2086 = vpop.f32.mrf.mxu0
      %v2087 = vadd.f32 0.0, %v2086
      %v2088 = vpop.f32.mrf.mxu0
      %2089 = vdwg.mxu0
      %v2090 = vadd.f32 %v1919, %v2060
      %v2091 = vadd.f32 %v1922, %v2063
      %v2092 = vadd.f32 %v1927, %v2068
      %v2093 = vadd.f32 %v1930, %v2071
      %v2094 = vadd.f32 %v1935, %v2076
      %v2095 = vadd.f32 %v1938, %v2079
      %v2096 = vadd.f32 %v1943, %v2084
      %v2097 = vadd.f32 %v1946, %v2087
      %v2098 = vld [vmem:[%s1658] sm:$0xff]
      %v2099 = vld [vmem:[%s1658 + $0x10] sm:$0xff]
      %v2100 = vld [vmem:[%s1658 + $0x20] sm:$0xff]
      %v2101 = vld [vmem:[%s1658 + $0x30] sm:$0xff]
      %v2102 = vld [vmem:[%s1658 + $0x40] sm:$0xff]
      %v2103 = vld [vmem:[%s1658 + $0x50] sm:$0xff]
      %v2104 = vld [vmem:[%s1658 + $0x60] sm:$0xff]
      %v2105 = vld [vmem:[%s1658 + $0x70] sm:$0xff]
      %v2106 = vpack.c.bf16 %v2099, %v2098
      %v2107 = vpack.c.bf16 %v2101, %v2100
      %v2108 = vpack.c.bf16 %v2103, %v2102
      %v2109 = vpack.c.bf16 %v2105, %v2104
      %v2110 = vld [vmem:[%s3 + $0xc0] sm:$0xf]
      %v2111 = vld [vmem:[%s3 + $0xc4] sm:$0xf]
      %v2112 = vld [vmem:[%s3 + $0xc8] sm:$0xf]
      %v2113 = vld [vmem:[%s3 + $0xcc] sm:$0xf]
      %v2114 = vld [vmem:[%s3 + $0xd0] sm:$0xf]
      %v2115 = vld [vmem:[%s3 + $0xd4] sm:$0xf]
      %v2116 = vld [vmem:[%s3 + $0xd8] sm:$0xf]
      %v2117 = vld [vmem:[%s3 + $0xdc] sm:$0xf]
      %v2118 = vld [vmem:[%s3 + $0xe0] sm:$0xf]
      %v2119 = vld [vmem:[%s3 + $0xe4] sm:$0xf]
      %v2120 = vld [vmem:[%s3 + $0xe8] sm:$0xf]
      %v2121 = vld [vmem:[%s3 + $0xec] sm:$0xf]
      %v2122 = vld [vmem:[%s3 + $0xf0] sm:$0xf]
      %v2123 = vld [vmem:[%s3 + $0xf4] sm:$0xf]
      %v2124 = vld [vmem:[%s3 + $0xf8] sm:$0xf]
      %v2125 = vld [vmem:[%s3 + $0xfc] sm:$0xf]
      %v2142 = vunpack.c.l.b16 %v2110
      %v2143 = vunpack.c.l.b16 %v2111
      %v2144 = vunpack.c.l.b16 %v2112
      %v2145 = vunpack.c.l.b16 %v2113
      %v2146 = vunpack.c.l.b16 %v2114
      %v2147 = vunpack.c.l.b16 %v2115
      %v2148 = vunpack.c.l.b16 %v2116
      %v2149 = vunpack.c.l.b16 %v2117
      %v2150 = vunpack.c.l.b16 %v2118
      %v2151 = vunpack.c.l.b16 %v2119
      %v2152 = vunpack.c.l.b16 %v2120
      %v2153 = vunpack.c.l.b16 %v2121
      %v2154 = vunpack.c.l.b16 %v2122
      %v2155 = vunpack.c.l.b16 %v2123
      %v2156 = vunpack.c.l.b16 %v2124
      %v2157 = vunpack.c.l.b16 %v2125
      %v2158 = vpack.c.b16 %v2143, %v2142
      %v2159 = vpack.c.b16 %v2145, %v2144
      %v2160 = vpack.c.b16 %v2147, %v2146
      %v2161 = vpack.c.b16 %v2149, %v2148
      %v2162 = vpack.c.b16 %v2151, %v2150
      %v2163 = vpack.c.b16 %v2153, %v2152
      %v2164 = vpack.c.b16 %v2155, %v2154
      %v2165 = vpack.c.b16 %v2157, %v2156
      %2174 = vmatprep.subr.bf16.mxu0 0
      %2175 = vmatpush1.bf16.msra.mxu0 %v2165
      %2176 = vmatprep.subr.bf16.mxu0 0
      %2177 = vmatpush1.bf16.msra.mxu0 %v2164
      %2178 = vmatprep.subr.bf16.mxu0 0
      %2179 = vmatpush1.bf16.msra.mxu0 %v2163
      %2180 = vmatprep.subr.bf16.mxu0 0
      %2181 = vmatpush1.bf16.msra.mxu0 %v2162
      %2182 = vmatprep.subr.bf16.mxu0 0
      %2183 = vmatpush1.bf16.msra.mxu0 %v2161
      %2184 = vmatprep.subr.bf16.mxu0 0
      %2185 = vmatpush1.bf16.msra.mxu0 %v2160
      %2186 = vmatprep.subr.bf16.mxu0 0
      %2187 = vmatpush1.bf16.msra.mxu0 %v2159
      %2188 = vmatprep.subr.bf16.mxu0 0
      %2189 = vmatpush1.bf16.msra.mxu0 %v2158
      %2190 = vmatprep.subr.bf16.mxu0 0
      %2191 = vmatpush2.bf16.msra.mxu0 0
      %2192 = vmatprep.subr.bf16.mxu0 0
      %2193 = vmatpush2.bf16.msra.mxu0 0
      %2194 = vmatprep.subr.bf16.mxu0 0
      %2195 = vmatpush2.bf16.msra.mxu0 0
      %2196 = vmatprep.subr.bf16.mxu0 0
      %2197 = vmatpush2.bf16.msra.mxu0 0
      %2198 = vmatprep.subr.bf16.mxu0 0
      %2199 = vmatpush2.bf16.msra.mxu0 0
      %2200 = vmatprep.subr.bf16.mxu0 0
      %2201 = vmatpush2.bf16.msra.mxu0 0
      %2202 = vmatprep.subr.bf16.mxu0 0
      %2203 = vmatpush2.bf16.msra.mxu0 0
      %2204 = vmatprep.subr.bf16.mxu0 0
      %2205 = vmatpush2.bf16.msra.mxu0 0
      %2206 = vmatprep.mubr.bf16.mxu0 0
      %2207 = vmatmul.mubr.bf16.gmra.mxu0 %v2106
      %v2208 = vpop.f32.mrf.mxu0
      %v2209 = vadd.f32 0.0, %v2208
      %v2210 = vpop.f32.mrf.mxu0
      %v2211 = vpop.f32.mrf.mxu0
      %v2212 = vadd.f32 0.0, %v2211
      %v2213 = vpop.f32.mrf.mxu0
      %2214 = vmatprep.mubr.bf16.mxu0 0
      %2215 = vmatmul.mubr.bf16.gmra.mxu0 %v2107
      %v2216 = vpop.f32.mrf.mxu0
      %v2217 = vadd.f32 0.0, %v2216
      %v2218 = vpop.f32.mrf.mxu0
      %v2219 = vpop.f32.mrf.mxu0
      %v2220 = vadd.f32 0.0, %v2219
      %v2221 = vpop.f32.mrf.mxu0
      %2222 = vmatprep.mubr.bf16.mxu0 0
      %2223 = vmatmul.mubr.bf16.gmra.mxu0 %v2108
      %v2224 = vpop.f32.mrf.mxu0
      %v2225 = vadd.f32 0.0, %v2224
      %v2226 = vpop.f32.mrf.mxu0
      %v2227 = vpop.f32.mrf.mxu0
      %v2228 = vadd.f32 0.0, %v2227
      %v2229 = vpop.f32.mrf.mxu0
      %2230 = vmatprep.mubr.bf16.mxu0 0
      %2231 = vmatmul.mubr.bf16.gmra.mxu0 %v2109
      %v2232 = vpop.f32.mrf.mxu0
      %v2233 = vadd.f32 0.0, %v2232
      %v2234 = vpop.f32.mrf.mxu0
      %v2235 = vpop.f32.mrf.mxu0
      %v2236 = vadd.f32 0.0, %v2235
      %v2237 = vpop.f32.mrf.mxu0
      %2238 = vdwg.mxu0
      %v2239 = vadd.f32 %v2090, %v2209
      %v2240 = vadd.f32 %v2091, %v2212
      %v2241 = vadd.f32 %v2092, %v2217
      %v2242 = vadd.f32 %v2093, %v2220
      %v2243 = vadd.f32 %v2094, %v2225
      %v2244 = vadd.f32 %v2095, %v2228
      %v2245 = vadd.f32 %v2096, %v2233
      %v2246 = vadd.f32 %v2097, %v2236
      %v2247 = vld [vmem:[%s1658 + $0x1] sm:$0xff]
      %v2248 = vld [vmem:[%s1658 + $0x11] sm:$0xff]
      %v2249 = vld [vmem:[%s1658 + $0x21] sm:$0xff]
      %v2250 = vld [vmem:[%s1658 + $0x31] sm:$0xff]
      %v2251 = vld [vmem:[%s1658 + $0x41] sm:$0xff]
      %v2252 = vld [vmem:[%s1658 + $0x51] sm:$0xff]
      %v2253 = vld [vmem:[%s1658 + $0x61] sm:$0xff]
      %v2254 = vld [vmem:[%s1658 + $0x71] sm:$0xff]
      %v2255 = vpack.c.bf16 %v2248, %v2247
      %v2256 = vpack.c.bf16 %v2250, %v2249
      %v2257 = vpack.c.bf16 %v2252, %v2251
      %v2258 = vpack.c.bf16 %v2254, %v2253
      %v2259 = vld [vmem:[%s3 + $0x100] sm:$0xf]
      %v2260 = vld [vmem:[%s3 + $0x104] sm:$0xf]
      %v2261 = vld [vmem:[%s3 + $0x108] sm:$0xf]
      %v2262 = vld [vmem:[%s3 + $0x10c] sm:$0xf]
      %v2263 = vld [vmem:[%s3 + $0x110] sm:$0xf]
      %v2264 = vld [vmem:[%s3 + $0x114] sm:$0xf]
      %v2265 = vld [vmem:[%s3 + $0x118] sm:$0xf]
      %v2266 = vld [vmem:[%s3 + $0x11c] sm:$0xf]
      %v2267 = vld [vmem:[%s3 + $0x120] sm:$0xf]
      %v2268 = vld [vmem:[%s3 + $0x124] sm:$0xf]
      %v2269 = vld [vmem:[%s3 + $0x128] sm:$0xf]
      %v2270 = vld [vmem:[%s3 + $0x12c] sm:$0xf]
      %v2271 = vld [vmem:[%s3 + $0x130] sm:$0xf]
      %v2272 = vld [vmem:[%s3 + $0x134] sm:$0xf]
      %v2273 = vld [vmem:[%s3 + $0x138] sm:$0xf]
      %v2274 = vld [vmem:[%s3 + $0x13c] sm:$0xf]
      %v2291 = vunpack.c.l.b16 %v2259
      %v2292 = vunpack.c.l.b16 %v2260
      %v2293 = vunpack.c.l.b16 %v2261
      %v2294 = vunpack.c.l.b16 %v2262
      %v2295 = vunpack.c.l.b16 %v2263
      %v2296 = vunpack.c.l.b16 %v2264
      %v2297 = vunpack.c.l.b16 %v2265
      %v2298 = vunpack.c.l.b16 %v2266
      %v2299 = vunpack.c.l.b16 %v2267
      %v2300 = vunpack.c.l.b16 %v2268
      %v2301 = vunpack.c.l.b16 %v2269
      %v2302 = vunpack.c.l.b16 %v2270
      %v2303 = vunpack.c.l.b16 %v2271
      %v2304 = vunpack.c.l.b16 %v2272
      %v2305 = vunpack.c.l.b16 %v2273
      %v2306 = vunpack.c.l.b16 %v2274
      %v2307 = vpack.c.b16 %v2292, %v2291
      %v2308 = vpack.c.b16 %v2294, %v2293
      %v2309 = vpack.c.b16 %v2296, %v2295
      %v2310 = vpack.c.b16 %v2298, %v2297
      %v2311 = vpack.c.b16 %v2300, %v2299
      %v2312 = vpack.c.b16 %v2302, %v2301
      %v2313 = vpack.c.b16 %v2304, %v2303
      %v2314 = vpack.c.b16 %v2306, %v2305
      %2323 = vmatprep.subr.bf16.mxu0 0
      %2324 = vmatpush1.bf16.msra.mxu0 %v2314
      %2325 = vmatprep.subr.bf16.mxu0 0
      %2326 = vmatpush1.bf16.msra.mxu0 %v2313
      %2327 = vmatprep.subr.bf16.mxu0 0
      %2328 = vmatpush1.bf16.msra.mxu0 %v2312
      %2329 = vmatprep.subr.bf16.mxu0 0
      %2330 = vmatpush1.bf16.msra.mxu0 %v2311
      %2331 = vmatprep.subr.bf16.mxu0 0
      %2332 = vmatpush1.bf16.msra.mxu0 %v2310
      %2333 = vmatprep.subr.bf16.mxu0 0
      %2334 = vmatpush1.bf16.msra.mxu0 %v2309
      %2335 = vmatprep.subr.bf16.mxu0 0
      %2336 = vmatpush1.bf16.msra.mxu0 %v2308
      %2337 = vmatprep.subr.bf16.mxu0 0
      %2338 = vmatpush1.bf16.msra.mxu0 %v2307
      %2339 = vmatprep.subr.bf16.mxu0 0
      %2340 = vmatpush2.bf16.msra.mxu0 0
      %2341 = vmatprep.subr.bf16.mxu0 0
      %2342 = vmatpush2.bf16.msra.mxu0 0
      %2343 = vmatprep.subr.bf16.mxu0 0
      %2344 = vmatpush2.bf16.msra.mxu0 0
      %2345 = vmatprep.subr.bf16.mxu0 0
      %2346 = vmatpush2.bf16.msra.mxu0 0
      %2347 = vmatprep.subr.bf16.mxu0 0
      %2348 = vmatpush2.bf16.msra.mxu0 0
      %2349 = vmatprep.subr.bf16.mxu0 0
      %2350 = vmatpush2.bf16.msra.mxu0 0
      %2351 = vmatprep.subr.bf16.mxu0 0
      %2352 = vmatpush2.bf16.msra.mxu0 0
      %2353 = vmatprep.subr.bf16.mxu0 0
      %2354 = vmatpush2.bf16.msra.mxu0 0
      %2355 = vmatprep.mubr.bf16.mxu0 0
      %2356 = vmatmul.mubr.bf16.gmra.mxu0 %v2255
      %v2357 = vpop.f32.mrf.mxu0
      %v2358 = vadd.f32 0.0, %v2357
      %v2359 = vpop.f32.mrf.mxu0
      %v2360 = vpop.f32.mrf.mxu0
      %v2361 = vadd.f32 0.0, %v2360
      %v2362 = vpop.f32.mrf.mxu0
      %2363 = vmatprep.mubr.bf16.mxu0 0
      %2364 = vmatmul.mubr.bf16.gmra.mxu0 %v2256
      %v2365 = vpop.f32.mrf.mxu0
      %v2366 = vadd.f32 0.0, %v2365
      %v2367 = vpop.f32.mrf.mxu0
      %v2368 = vpop.f32.mrf.mxu0
      %v2369 = vadd.f32 0.0, %v2368
      %v2370 = vpop.f32.mrf.mxu0
      %2371 = vmatprep.mubr.bf16.mxu0 0
      %2372 = vmatmul.mubr.bf16.gmra.mxu0 %v2257
      %v2373 = vpop.f32.mrf.mxu0
      %v2374 = vadd.f32 0.0, %v2373
      %v2375 = vpop.f32.mrf.mxu0
      %v2376 = vpop.f32.mrf.mxu0
      %v2377 = vadd.f32 0.0, %v2376
      %v2378 = vpop.f32.mrf.mxu0
      %2379 = vmatprep.mubr.bf16.mxu0 0
      %2380 = vmatmul.mubr.bf16.gmra.mxu0 %v2258
      %v2381 = vpop.f32.mrf.mxu0
      %v2382 = vadd.f32 0.0, %v2381
      %v2383 = vpop.f32.mrf.mxu0
      %v2384 = vpop.f32.mrf.mxu0
      %v2385 = vadd.f32 0.0, %v2384
      %v2386 = vpop.f32.mrf.mxu0
      %2387 = vdwg.mxu0
      %v2388 = vadd.f32 %v2239, %v2358
      %v2389 = vadd.f32 %v2240, %v2361
      %v2390 = vadd.f32 %v2241, %v2366
      %v2391 = vadd.f32 %v2242, %v2369
      %v2392 = vadd.f32 %v2243, %v2374
      %v2393 = vadd.f32 %v2244, %v2377
      %v2394 = vadd.f32 %v2245, %v2382
      %v2395 = vadd.f32 %v2246, %v2385
      %v2396 = vld [vmem:[%s1658 + $0x2] sm:$0xff]
      %v2397 = vld [vmem:[%s1658 + $0x12] sm:$0xff]
      %v2398 = vld [vmem:[%s1658 + $0x22] sm:$0xff]
      %v2399 = vld [vmem:[%s1658 + $0x32] sm:$0xff]
      %v2400 = vld [vmem:[%s1658 + $0x42] sm:$0xff]
      %v2401 = vld [vmem:[%s1658 + $0x52] sm:$0xff]
      %v2402 = vld [vmem:[%s1658 + $0x62] sm:$0xff]
      %v2403 = vld [vmem:[%s1658 + $0x72] sm:$0xff]
      %v2404 = vpack.c.bf16 %v2397, %v2396
      %v2405 = vpack.c.bf16 %v2399, %v2398
      %v2406 = vpack.c.bf16 %v2401, %v2400
      %v2407 = vpack.c.bf16 %v2403, %v2402
      %v2408 = vld [vmem:[%s3 + $0x140] sm:$0xf]
      %v2409 = vld [vmem:[%s3 + $0x144] sm:$0xf]
      %v2410 = vld [vmem:[%s3 + $0x148] sm:$0xf]
      %v2411 = vld [vmem:[%s3 + $0x14c] sm:$0xf]
      %v2412 = vld [vmem:[%s3 + $0x150] sm:$0xf]
      %v2413 = vld [vmem:[%s3 + $0x154] sm:$0xf]
      %v2414 = vld [vmem:[%s3 + $0x158] sm:$0xf]
      %v2415 = vld [vmem:[%s3 + $0x15c] sm:$0xf]
      %v2416 = vld [vmem:[%s3 + $0x160] sm:$0xf]
      %v2417 = vld [vmem:[%s3 + $0x164] sm:$0xf]
      %v2418 = vld [vmem:[%s3 + $0x168] sm:$0xf]
      %v2419 = vld [vmem:[%s3 + $0x16c] sm:$0xf]
      %v2420 = vld [vmem:[%s3 + $0x170] sm:$0xf]
      %v2421 = vld [vmem:[%s3 + $0x174] sm:$0xf]
      %v2422 = vld [vmem:[%s3 + $0x178] sm:$0xf]
      %v2423 = vld [vmem:[%s3 + $0x17c] sm:$0xf]
      %v2440 = vunpack.c.l.b16 %v2408
      %v2441 = vunpack.c.l.b16 %v2409
      %v2442 = vunpack.c.l.b16 %v2410
      %v2443 = vunpack.c.l.b16 %v2411
      %v2444 = vunpack.c.l.b16 %v2412
      %v2445 = vunpack.c.l.b16 %v2413
      %v2446 = vunpack.c.l.b16 %v2414
      %v2447 = vunpack.c.l.b16 %v2415
      %v2448 = vunpack.c.l.b16 %v2416
      %v2449 = vunpack.c.l.b16 %v2417
      %v2450 = vunpack.c.l.b16 %v2418
      %v2451 = vunpack.c.l.b16 %v2419
      %v2452 = vunpack.c.l.b16 %v2420
      %v2453 = vunpack.c.l.b16 %v2421
      %v2454 = vunpack.c.l.b16 %v2422
      %v2455 = vunpack.c.l.b16 %v2423
      %v2456 = vpack.c.b16 %v2441, %v2440
      %v2457 = vpack.c.b16 %v2443, %v2442
      %v2458 = vpack.c.b16 %v2445, %v2444
      %v2459 = vpack.c.b16 %v2447, %v2446
      %v2460 = vpack.c.b16 %v2449, %v2448
      %v2461 = vpack.c.b16 %v2451, %v2450
      %v2462 = vpack.c.b16 %v2453, %v2452
      %v2463 = vpack.c.b16 %v2455, %v2454
      %2472 = vmatprep.subr.bf16.mxu0 0
      %2473 = vmatpush1.bf16.msra.mxu0 %v2463
      %2474 = vmatprep.subr.bf16.mxu0 0
      %2475 = vmatpush1.bf16.msra.mxu0 %v2462
      %2476 = vmatprep.subr.bf16.mxu0 0
      %2477 = vmatpush1.bf16.msra.mxu0 %v2461
      %2478 = vmatprep.subr.bf16.mxu0 0
      %2479 = vmatpush1.bf16.msra.mxu0 %v2460
      %2480 = vmatprep.subr.bf16.mxu0 0
      %2481 = vmatpush1.bf16.msra.mxu0 %v2459
      %2482 = vmatprep.subr.bf16.mxu0 0
      %2483 = vmatpush1.bf16.msra.mxu0 %v2458
      %2484 = vmatprep.subr.bf16.mxu0 0
      %2485 = vmatpush1.bf16.msra.mxu0 %v2457
      %2486 = vmatprep.subr.bf16.mxu0 0
      %2487 = vmatpush1.bf16.msra.mxu0 %v2456
      %2488 = vmatprep.subr.bf16.mxu0 0
      %2489 = vmatpush2.bf16.msra.mxu0 0
      %2490 = vmatprep.subr.bf16.mxu0 0
      %2491 = vmatpush2.bf16.msra.mxu0 0
      %2492 = vmatprep.subr.bf16.mxu0 0
      %2493 = vmatpush2.bf16.msra.mxu0 0
      %2494 = vmatprep.subr.bf16.mxu0 0
      %2495 = vmatpush2.bf16.msra.mxu0 0
      %2496 = vmatprep.subr.bf16.mxu0 0
      %2497 = vmatpush2.bf16.msra.mxu0 0
      %2498 = vmatprep.subr.bf16.mxu0 0
      %2499 = vmatpush2.bf16.msra.mxu0 0
      %2500 = vmatprep.subr.bf16.mxu0 0
      %2501 = vmatpush2.bf16.msra.mxu0 0
      %2502 = vmatprep.subr.bf16.mxu0 0
      %2503 = vmatpush2.bf16.msra.mxu0 0
      %2504 = vmatprep.mubr.bf16.mxu0 0
      %2505 = vmatmul.mubr.bf16.gmra.mxu0 %v2404
      %v2506 = vpop.f32.mrf.mxu0
      %v2507 = vadd.f32 0.0, %v2506
      %v2508 = vpop.f32.mrf.mxu0
      %v2509 = vpop.f32.mrf.mxu0
      %v2510 = vadd.f32 0.0, %v2509
      %v2511 = vpop.f32.mrf.mxu0
      %2512 = vmatprep.mubr.bf16.mxu0 0
      %2513 = vmatmul.mubr.bf16.gmra.mxu0 %v2405
      %v2514 = vpop.f32.mrf.mxu0
      %v2515 = vadd.f32 0.0, %v2514
      %v2516 = vpop.f32.mrf.mxu0
      %v2517 = vpop.f32.mrf.mxu0
      %v2518 = vadd.f32 0.0, %v2517
      %v2519 = vpop.f32.mrf.mxu0
      %2520 = vmatprep.mubr.bf16.mxu0 0
      %2521 = vmatmul.mubr.bf16.gmra.mxu0 %v2406
      %v2522 = vpop.f32.mrf.mxu0
      %v2523 = vadd.f32 0.0, %v2522
      %v2524 = vpop.f32.mrf.mxu0
      %v2525 = vpop.f32.mrf.mxu0
      %v2526 = vadd.f32 0.0, %v2525
      %v2527 = vpop.f32.mrf.mxu0
      %2528 = vmatprep.mubr.bf16.mxu0 0
      %2529 = vmatmul.mubr.bf16.gmra.mxu0 %v2407
      %v2530 = vpop.f32.mrf.mxu0
      %v2531 = vadd.f32 0.0, %v2530
      %v2532 = vpop.f32.mrf.mxu0
      %v2533 = vpop.f32.mrf.mxu0
      %v2534 = vadd.f32 0.0, %v2533
      %v2535 = vpop.f32.mrf.mxu0
      %2536 = vdwg.mxu0
      %v2537 = vadd.f32 %v2388, %v2507
      %v2538 = vadd.f32 %v2389, %v2510
      %v2539 = vadd.f32 %v2390, %v2515
      %v2540 = vadd.f32 %v2391, %v2518
      %v2541 = vadd.f32 %v2392, %v2523
      %v2542 = vadd.f32 %v2393, %v2526
      %v2543 = vadd.f32 %v2394, %v2531
      %v2544 = vadd.f32 %v2395, %v2534
      %s2545 = scalar_lea.vmem [#allocation2], 32
      %v2546 = vld [vmem:[%s2545] sm:$0xff]
      %v2547 = vld [vmem:[%s2545 + $0x10] sm:$0xff]
      %v2548 = vld [vmem:[%s2545 + $0x20] sm:$0xff]
      %v2549 = vld [vmem:[%s2545 + $0x30] sm:$0xff]
      %v2550 = vld [vmem:[%s2545 + $0x40] sm:$0xff]
      %v2551 = vld [vmem:[%s2545 + $0x50] sm:$0xff]
      %v2552 = vld [vmem:[%s2545 + $0x60] sm:$0xff]
      %v2553 = vld [vmem:[%s2545 + $0x70] sm:$0xff]
      %v2554 = vpack.c.bf16 %v2547, %v2546
      %v2555 = vpack.c.bf16 %v2549, %v2548
      %v2556 = vpack.c.bf16 %v2551, %v2550
      %v2557 = vpack.c.bf16 %v2553, %v2552
      %v2558 = vld [vmem:[%s3 + $0x180] sm:$0xf]
      %v2559 = vld [vmem:[%s3 + $0x184] sm:$0xf]
      %v2560 = vld [vmem:[%s3 + $0x188] sm:$0xf]
      %v2561 = vld [vmem:[%s3 + $0x18c] sm:$0xf]
      %v2562 = vld [vmem:[%s3 + $0x190] sm:$0xf]
      %v2563 = vld [vmem:[%s3 + $0x194] sm:$0xf]
      %v2564 = vld [vmem:[%s3 + $0x198] sm:$0xf]
      %v2565 = vld [vmem:[%s3 + $0x19c] sm:$0xf]
      %v2566 = vld [vmem:[%s3 + $0x1a0] sm:$0xf]
      %v2567 = vld [vmem:[%s3 + $0x1a4] sm:$0xf]
      %v2568 = vld [vmem:[%s3 + $0x1a8] sm:$0xf]
      %v2569 = vld [vmem:[%s3 + $0x1ac] sm:$0xf]
      %v2570 = vld [vmem:[%s3 + $0x1b0] sm:$0xf]
      %v2571 = vld [vmem:[%s3 + $0x1b4] sm:$0xf]
      %v2572 = vld [vmem:[%s3 + $0x1b8] sm:$0xf]
      %v2573 = vld [vmem:[%s3 + $0x1bc] sm:$0xf]
      %v2590 = vunpack.c.l.b16 %v2558
      %v2591 = vunpack.c.l.b16 %v2559
      %v2592 = vunpack.c.l.b16 %v2560
      %v2593 = vunpack.c.l.b16 %v2561
      %v2594 = vunpack.c.l.b16 %v2562
      %v2595 = vunpack.c.l.b16 %v2563
      %v2596 = vunpack.c.l.b16 %v2564
      %v2597 = vunpack.c.l.b16 %v2565
      %v2598 = vunpack.c.l.b16 %v2566
      %v2599 = vunpack.c.l.b16 %v2567
      %v2600 = vunpack.c.l.b16 %v2568
      %v2601 = vunpack.c.l.b16 %v2569
      %v2602 = vunpack.c.l.b16 %v2570
      %v2603 = vunpack.c.l.b16 %v2571
      %v2604 = vunpack.c.l.b16 %v2572
      %v2605 = vunpack.c.l.b16 %v2573
      %v2606 = vpack.c.b16 %v2591, %v2590
      %v2607 = vpack.c.b16 %v2593, %v2592
      %v2608 = vpack.c.b16 %v2595, %v2594
      %v2609 = vpack.c.b16 %v2597, %v2596
      %v2610 = vpack.c.b16 %v2599, %v2598
      %v2611 = vpack.c.b16 %v2601, %v2600
      %v2612 = vpack.c.b16 %v2603, %v2602
      %v2613 = vpack.c.b16 %v2605, %v2604
      %2622 = vmatprep.subr.bf16.mxu0 0
      %2623 = vmatpush1.bf16.msra.mxu0 %v2613
      %2624 = vmatprep.subr.bf16.mxu0 0
      %2625 = vmatpush1.bf16.msra.mxu0 %v2612
      %2626 = vmatprep.subr.bf16.mxu0 0
      %2627 = vmatpush1.bf16.msra.mxu0 %v2611
      %2628 = vmatprep.subr.bf16.mxu0 0
      %2629 = vmatpush1.bf16.msra.mxu0 %v2610
      %2630 = vmatprep.subr.bf16.mxu0 0
      %2631 = vmatpush1.bf16.msra.mxu0 %v2609
      %2632 = vmatprep.subr.bf16.mxu0 0
      %2633 = vmatpush1.bf16.msra.mxu0 %v2608
      %2634 = vmatprep.subr.bf16.mxu0 0
      %2635 = vmatpush1.bf16.msra.mxu0 %v2607
      %2636 = vmatprep.subr.bf16.mxu0 0
      %2637 = vmatpush1.bf16.msra.mxu0 %v2606
      %2638 = vmatprep.subr.bf16.mxu0 0
      %2639 = vmatpush2.bf16.msra.mxu0 0
      %2640 = vmatprep.subr.bf16.mxu0 0
      %2641 = vmatpush2.bf16.msra.mxu0 0
      %2642 = vmatprep.subr.bf16.mxu0 0
      %2643 = vmatpush2.bf16.msra.mxu0 0
      %2644 = vmatprep.subr.bf16.mxu0 0
      %2645 = vmatpush2.bf16.msra.mxu0 0
      %2646 = vmatprep.subr.bf16.mxu0 0
      %2647 = vmatpush2.bf16.msra.mxu0 0
      %2648 = vmatprep.subr.bf16.mxu0 0
      %2649 = vmatpush2.bf16.msra.mxu0 0
      %2650 = vmatprep.subr.bf16.mxu0 0
      %2651 = vmatpush2.bf16.msra.mxu0 0
      %2652 = vmatprep.subr.bf16.mxu0 0
      %2653 = vmatpush2.bf16.msra.mxu0 0
      %2654 = vmatprep.mubr.bf16.mxu0 0
      %2655 = vmatmul.mubr.bf16.gmra.mxu0 %v2554
      %v2656 = vpop.f32.mrf.mxu0
      %v2657 = vadd.f32 0.0, %v2656
      %v2658 = vpop.f32.mrf.mxu0
      %v2659 = vpop.f32.mrf.mxu0
      %v2660 = vadd.f32 0.0, %v2659
      %v2661 = vpop.f32.mrf.mxu0
      %2662 = vmatprep.mubr.bf16.mxu0 0
      %2663 = vmatmul.mubr.bf16.gmra.mxu0 %v2555
      %v2664 = vpop.f32.mrf.mxu0
      %v2665 = vadd.f32 0.0, %v2664
      %v2666 = vpop.f32.mrf.mxu0
      %v2667 = vpop.f32.mrf.mxu0
      %v2668 = vadd.f32 0.0, %v2667
      %v2669 = vpop.f32.mrf.mxu0
      %2670 = vmatprep.mubr.bf16.mxu0 0
      %2671 = vmatmul.mubr.bf16.gmra.mxu0 %v2556
      %v2672 = vpop.f32.mrf.mxu0
      %v2673 = vadd.f32 0.0, %v2672
      %v2674 = vpop.f32.mrf.mxu0
      %v2675 = vpop.f32.mrf.mxu0
      %v2676 = vadd.f32 0.0, %v2675
      %v2677 = vpop.f32.mrf.mxu0
      %2678 = vmatprep.mubr.bf16.mxu0 0
      %2679 = vmatmul.mubr.bf16.gmra.mxu0 %v2557
      %v2680 = vpop.f32.mrf.mxu0
      %v2681 = vadd.f32 0.0, %v2680
      %v2682 = vpop.f32.mrf.mxu0
      %v2683 = vpop.f32.mrf.mxu0
      %v2684 = vadd.f32 0.0, %v2683
      %v2685 = vpop.f32.mrf.mxu0
      %2686 = vdwg.mxu0
      %v2687 = vadd.f32 %v2537, %v2657
      %v2688 = vadd.f32 %v2538, %v2660
      %v2689 = vadd.f32 %v2539, %v2665
      %v2690 = vadd.f32 %v2540, %v2668
      %v2691 = vadd.f32 %v2541, %v2673
      %v2692 = vadd.f32 %v2542, %v2676
      %v2693 = vadd.f32 %v2543, %v2681
      %v2694 = vadd.f32 %v2544, %v2684
      %v2695 = vld [vmem:[%s2545 + $0x1] sm:$0xff]
      %v2696 = vld [vmem:[%s2545 + $0x11] sm:$0xff]
      %v2697 = vld [vmem:[%s2545 + $0x21] sm:$0xff]
      %v2698 = vld [vmem:[%s2545 + $0x31] sm:$0xff]
      %v2699 = vld [vmem:[%s2545 + $0x41] sm:$0xff]
      %v2700 = vld [vmem:[%s2545 + $0x51] sm:$0xff]
      %v2701 = vld [vmem:[%s2545 + $0x61] sm:$0xff]
      %v2702 = vld [vmem:[%s2545 + $0x71] sm:$0xff]
      %v2703 = vpack.c.bf16 %v2696, %v2695
      %v2704 = vpack.c.bf16 %v2698, %v2697
      %v2705 = vpack.c.bf16 %v2700, %v2699
      %v2706 = vpack.c.bf16 %v2702, %v2701
      %v2707 = vld [vmem:[%s3 + $0x1c0] sm:$0xf]
      %v2708 = vld [vmem:[%s3 + $0x1c4] sm:$0xf]
      %v2709 = vld [vmem:[%s3 + $0x1c8] sm:$0xf]
      %v2710 = vld [vmem:[%s3 + $0x1cc] sm:$0xf]
      %v2711 = vld [vmem:[%s3 + $0x1d0] sm:$0xf]
      %v2712 = vld [vmem:[%s3 + $0x1d4] sm:$0xf]
      %v2713 = vld [vmem:[%s3 + $0x1d8] sm:$0xf]
      %v2714 = vld [vmem:[%s3 + $0x1dc] sm:$0xf]
      %v2715 = vld [vmem:[%s3 + $0x1e0] sm:$0xf]
      %v2716 = vld [vmem:[%s3 + $0x1e4] sm:$0xf]
      %v2717 = vld [vmem:[%s3 + $0x1e8] sm:$0xf]
      %v2718 = vld [vmem:[%s3 + $0x1ec] sm:$0xf]
      %v2719 = vld [vmem:[%s3 + $0x1f0] sm:$0xf]
      %v2720 = vld [vmem:[%s3 + $0x1f4] sm:$0xf]
      %v2721 = vld [vmem:[%s3 + $0x1f8] sm:$0xf]
      %v2722 = vld [vmem:[%s3 + $0x1fc] sm:$0xf]
      %v2739 = vunpack.c.l.b16 %v2707
      %v2740 = vunpack.c.l.b16 %v2708
      %v2741 = vunpack.c.l.b16 %v2709
      %v2742 = vunpack.c.l.b16 %v2710
      %v2743 = vunpack.c.l.b16 %v2711
      %v2744 = vunpack.c.l.b16 %v2712
      %v2745 = vunpack.c.l.b16 %v2713
      %v2746 = vunpack.c.l.b16 %v2714
      %v2747 = vunpack.c.l.b16 %v2715
      %v2748 = vunpack.c.l.b16 %v2716
      %v2749 = vunpack.c.l.b16 %v2717
      %v2750 = vunpack.c.l.b16 %v2718
      %v2751 = vunpack.c.l.b16 %v2719
      %v2752 = vunpack.c.l.b16 %v2720
      %v2753 = vunpack.c.l.b16 %v2721
      %v2754 = vunpack.c.l.b16 %v2722
      %v2755 = vpack.c.b16 %v2740, %v2739
      %v2756 = vpack.c.b16 %v2742, %v2741
      %v2757 = vpack.c.b16 %v2744, %v2743
      %v2758 = vpack.c.b16 %v2746, %v2745
      %v2759 = vpack.c.b16 %v2748, %v2747
      %v2760 = vpack.c.b16 %v2750, %v2749
      %v2761 = vpack.c.b16 %v2752, %v2751
      %v2762 = vpack.c.b16 %v2754, %v2753
      %2771 = vmatprep.subr.bf16.mxu0 0
      %2772 = vmatpush1.bf16.msra.mxu0 %v2762
      %2773 = vmatprep.subr.bf16.mxu0 0
      %2774 = vmatpush1.bf16.msra.mxu0 %v2761
      %2775 = vmatprep.subr.bf16.mxu0 0
      %2776 = vmatpush1.bf16.msra.mxu0 %v2760
      %2777 = vmatprep.subr.bf16.mxu0 0
      %2778 = vmatpush1.bf16.msra.mxu0 %v2759
      %2779 = vmatprep.subr.bf16.mxu0 0
      %2780 = vmatpush1.bf16.msra.mxu0 %v2758
      %2781 = vmatprep.subr.bf16.mxu0 0
      %2782 = vmatpush1.bf16.msra.mxu0 %v2757
      %2783 = vmatprep.subr.bf16.mxu0 0
      %2784 = vmatpush1.bf16.msra.mxu0 %v2756
      %2785 = vmatprep.subr.bf16.mxu0 0
      %2786 = vmatpush1.bf16.msra.mxu0 %v2755
      %2787 = vmatprep.subr.bf16.mxu0 0
      %2788 = vmatpush2.bf16.msra.mxu0 0
      %2789 = vmatprep.subr.bf16.mxu0 0
      %2790 = vmatpush2.bf16.msra.mxu0 0
      %2791 = vmatprep.subr.bf16.mxu0 0
      %2792 = vmatpush2.bf16.msra.mxu0 0
      %2793 = vmatprep.subr.bf16.mxu0 0
      %2794 = vmatpush2.bf16.msra.mxu0 0
      %2795 = vmatprep.subr.bf16.mxu0 0
      %2796 = vmatpush2.bf16.msra.mxu0 0
      %2797 = vmatprep.subr.bf16.mxu0 0
      %2798 = vmatpush2.bf16.msra.mxu0 0
      %2799 = vmatprep.subr.bf16.mxu0 0
      %2800 = vmatpush2.bf16.msra.mxu0 0
      %2801 = vmatprep.subr.bf16.mxu0 0
      %2802 = vmatpush2.bf16.msra.mxu0 0
      %2803 = vmatprep.mubr.bf16.mxu0 0
      %2804 = vmatmul.mubr.bf16.gmra.mxu0 %v2703
      %v2805 = vpop.f32.mrf.mxu0
      %v2806 = vadd.f32 0.0, %v2805
      %v2807 = vpop.f32.mrf.mxu0
      %v2808 = vpop.f32.mrf.mxu0
      %v2809 = vadd.f32 0.0, %v2808
      %v2810 = vpop.f32.mrf.mxu0
      %2811 = vmatprep.mubr.bf16.mxu0 0
      %2812 = vmatmul.mubr.bf16.gmra.mxu0 %v2704
      %v2813 = vpop.f32.mrf.mxu0
      %v2814 = vadd.f32 0.0, %v2813
      %v2815 = vpop.f32.mrf.mxu0
      %v2816 = vpop.f32.mrf.mxu0
      %v2817 = vadd.f32 0.0, %v2816
      %v2818 = vpop.f32.mrf.mxu0
      %2819 = vmatprep.mubr.bf16.mxu0 0
      %2820 = vmatmul.mubr.bf16.gmra.mxu0 %v2705
      %v2821 = vpop.f32.mrf.mxu0
      %v2822 = vadd.f32 0.0, %v2821
      %v2823 = vpop.f32.mrf.mxu0
      %v2824 = vpop.f32.mrf.mxu0
      %v2825 = vadd.f32 0.0, %v2824
      %v2826 = vpop.f32.mrf.mxu0
      %2827 = vmatprep.mubr.bf16.mxu0 0
      %2828 = vmatmul.mubr.bf16.gmra.mxu0 %v2706
      %v2829 = vpop.f32.mrf.mxu0
      %v2830 = vadd.f32 0.0, %v2829
      %v2831 = vpop.f32.mrf.mxu0
      %v2832 = vpop.f32.mrf.mxu0
      %v2833 = vadd.f32 0.0, %v2832
      %v2834 = vpop.f32.mrf.mxu0
      %2835 = vdwg.mxu0
      %v2836 = vadd.f32 %v2687, %v2806
      %v2837 = vadd.f32 %v2688, %v2809
      %v2838 = vadd.f32 %v2689, %v2814
      %v2839 = vadd.f32 %v2690, %v2817
      %v2840 = vadd.f32 %v2691, %v2822
      %v2841 = vadd.f32 %v2692, %v2825
      %v2842 = vadd.f32 %v2693, %v2830
      %v2843 = vadd.f32 %v2694, %v2833
      %v2844 = vld [vmem:[%s2545 + $0x2] sm:$0xff]
      %v2845 = vld [vmem:[%s2545 + $0x12] sm:$0xff]
      %v2846 = vld [vmem:[%s2545 + $0x22] sm:$0xff]
      %v2847 = vld [vmem:[%s2545 + $0x32] sm:$0xff]
      %v2848 = vld [vmem:[%s2545 + $0x42] sm:$0xff]
      %v2849 = vld [vmem:[%s2545 + $0x52] sm:$0xff]
      %v2850 = vld [vmem:[%s2545 + $0x62] sm:$0xff]
      %v2851 = vld [vmem:[%s2545 + $0x72] sm:$0xff]
      %v2852 = vpack.c.bf16 %v2845, %v2844
      %v2853 = vpack.c.bf16 %v2847, %v2846
      %v2854 = vpack.c.bf16 %v2849, %v2848
      %v2855 = vpack.c.bf16 %v2851, %v2850
      %v2856 = vld [vmem:[%s3 + $0x200] sm:$0xf]
      %v2857 = vld [vmem:[%s3 + $0x204] sm:$0xf]
      %v2858 = vld [vmem:[%s3 + $0x208] sm:$0xf]
      %v2859 = vld [vmem:[%s3 + $0x20c] sm:$0xf]
      %v2860 = vld [vmem:[%s3 + $0x210] sm:$0xf]
      %v2861 = vld [vmem:[%s3 + $0x214] sm:$0xf]
      %v2862 = vld [vmem:[%s3 + $0x218] sm:$0xf]
      %v2863 = vld [vmem:[%s3 + $0x21c] sm:$0xf]
      %v2864 = vld [vmem:[%s3 + $0x220] sm:$0xf]
      %v2865 = vld [vmem:[%s3 + $0x224] sm:$0xf]
      %v2866 = vld [vmem:[%s3 + $0x228] sm:$0xf]
      %v2867 = vld [vmem:[%s3 + $0x22c] sm:$0xf]
      %v2868 = vld [vmem:[%s3 + $0x230] sm:$0xf]
      %v2869 = vld [vmem:[%s3 + $0x234] sm:$0xf]
      %v2870 = vld [vmem:[%s3 + $0x238] sm:$0xf]
      %v2871 = vld [vmem:[%s3 + $0x23c] sm:$0xf]
      %v2888 = vunpack.c.l.b16 %v2856
      %v2889 = vunpack.c.l.b16 %v2857
      %v2890 = vunpack.c.l.b16 %v2858
      %v2891 = vunpack.c.l.b16 %v2859
      %v2892 = vunpack.c.l.b16 %v2860
      %v2893 = vunpack.c.l.b16 %v2861
      %v2894 = vunpack.c.l.b16 %v2862
      %v2895 = vunpack.c.l.b16 %v2863
      %v2896 = vunpack.c.l.b16 %v2864
      %v2897 = vunpack.c.l.b16 %v2865
      %v2898 = vunpack.c.l.b16 %v2866
      %v2899 = vunpack.c.l.b16 %v2867
      %v2900 = vunpack.c.l.b16 %v2868
      %v2901 = vunpack.c.l.b16 %v2869
      %v2902 = vunpack.c.l.b16 %v2870
      %v2903 = vunpack.c.l.b16 %v2871
      %v2904 = vpack.c.b16 %v2889, %v2888
      %v2905 = vpack.c.b16 %v2891, %v2890
      %v2906 = vpack.c.b16 %v2893, %v2892
      %v2907 = vpack.c.b16 %v2895, %v2894
      %v2908 = vpack.c.b16 %v2897, %v2896
      %v2909 = vpack.c.b16 %v2899, %v2898
      %v2910 = vpack.c.b16 %v2901, %v2900
      %v2911 = vpack.c.b16 %v2903, %v2902
      %2920 = vmatprep.subr.bf16.mxu0 0
      %2921 = vmatpush1.bf16.msra.mxu0 %v2911
      %2922 = vmatprep.subr.bf16.mxu0 0
      %2923 = vmatpush1.bf16.msra.mxu0 %v2910
      %2924 = vmatprep.subr.bf16.mxu0 0
      %2925 = vmatpush1.bf16.msra.mxu0 %v2909
      %2926 = vmatprep.subr.bf16.mxu0 0
      %2927 = vmatpush1.bf16.msra.mxu0 %v2908
      %2928 = vmatprep.subr.bf16.mxu0 0
      %2929 = vmatpush1.bf16.msra.mxu0 %v2907
      %2930 = vmatprep.subr.bf16.mxu0 0
      %2931 = vmatpush1.bf16.msra.mxu0 %v2906
      %2932 = vmatprep.subr.bf16.mxu0 0
      %2933 = vmatpush1.bf16.msra.mxu0 %v2905
      %2934 = vmatprep.subr.bf16.mxu0 0
      %2935 = vmatpush1.bf16.msra.mxu0 %v2904
      %2936 = vmatprep.subr.bf16.mxu0 0
      %2937 = vmatpush2.bf16.msra.mxu0 0
      %2938 = vmatprep.subr.bf16.mxu0 0
      %2939 = vmatpush2.bf16.msra.mxu0 0
      %2940 = vmatprep.subr.bf16.mxu0 0
      %2941 = vmatpush2.bf16.msra.mxu0 0
      %2942 = vmatprep.subr.bf16.mxu0 0
      %2943 = vmatpush2.bf16.msra.mxu0 0
      %2944 = vmatprep.subr.bf16.mxu0 0
      %2945 = vmatpush2.bf16.msra.mxu0 0
      %2946 = vmatprep.subr.bf16.mxu0 0
      %2947 = vmatpush2.bf16.msra.mxu0 0
      %2948 = vmatprep.subr.bf16.mxu0 0
      %2949 = vmatpush2.bf16.msra.mxu0 0
      %2950 = vmatprep.subr.bf16.mxu0 0
      %2951 = vmatpush2.bf16.msra.mxu0 0
      %2952 = vmatprep.mubr.bf16.mxu0 0
      %2953 = vmatmul.mubr.bf16.gmra.mxu0 %v2852
      %v2954 = vpop.f32.mrf.mxu0
      %v2955 = vadd.f32 0.0, %v2954
      %v2956 = vpop.f32.mrf.mxu0
      %v2957 = vpop.f32.mrf.mxu0
      %v2958 = vadd.f32 0.0, %v2957
      %v2959 = vpop.f32.mrf.mxu0
      %2960 = vmatprep.mubr.bf16.mxu0 0
      %2961 = vmatmul.mubr.bf16.gmra.mxu0 %v2853
      %v2962 = vpop.f32.mrf.mxu0
      %v2963 = vadd.f32 0.0, %v2962
      %v2964 = vpop.f32.mrf.mxu0
      %v2965 = vpop.f32.mrf.mxu0
      %v2966 = vadd.f32 0.0, %v2965
      %v2967 = vpop.f32.mrf.mxu0
      %2968 = vmatprep.mubr.bf16.mxu0 0
      %2969 = vmatmul.mubr.bf16.gmra.mxu0 %v2854
      %v2970 = vpop.f32.mrf.mxu0
      %v2971 = vadd.f32 0.0, %v2970
      %v2972 = vpop.f32.mrf.mxu0
      %v2973 = vpop.f32.mrf.mxu0
      %v2974 = vadd.f32 0.0, %v2973
      %v2975 = vpop.f32.mrf.mxu0
      %2976 = vmatprep.mubr.bf16.mxu0 0
      %2977 = vmatmul.mubr.bf16.gmra.mxu0 %v2855
      %v2978 = vpop.f32.mrf.mxu0
      %v2979 = vadd.f32 0.0, %v2978
      %v2980 = vpop.f32.mrf.mxu0
      %v2981 = vpop.f32.mrf.mxu0
      %v2982 = vadd.f32 0.0, %v2981
      %v2983 = vpop.f32.mrf.mxu0
      %2984 = vdwg.mxu0
      %v2985 = vadd.f32 %v2836, %v2955
      %v2986 = vadd.f32 %v2837, %v2958
      %v2987 = vadd.f32 %v2838, %v2963
      %v2988 = vadd.f32 %v2839, %v2966
      %v2989 = vadd.f32 %v2840, %v2971
      %v2990 = vadd.f32 %v2841, %v2974
      %v2991 = vadd.f32 %v2842, %v2979
      %v2992 = vadd.f32 %v2843, %v2982
      %v2993 = vld [vmem:[%s4] sm:$0x1]
      %v2995 = vlaneseq
      %v2996 = vshrl.u32 %v2995, 7
      %v2997 = vsub.s32 0, %v2996
      %v2998 = vrot.slane %v2993, %v2997
      %v3000 = vadd.f32 %v2985, %v2998
      %v3001 = vadd.f32 %v2986, %v2998
      %v3002 = vadd.f32 %v2987, %v2998
      %v3003 = vadd.f32 %v2988, %v2998
      %v3004 = vadd.f32 %v2989, %v2998
      %v3005 = vadd.f32 %v2990, %v2998
      %v3006 = vadd.f32 %v2991, %v2998
      %v3007 = vadd.f32 %v2992, %v2998
      %v3008 = vld [vmem:[%s867] sm:$0xff]
      %v3009 = vld [vmem:[%s867 + $0x10] sm:$0xff]
      %v3010 = vld [vmem:[%s867 + $0x20] sm:$0xff]
      %v3011 = vld [vmem:[%s867 + $0x30] sm:$0xff]
      %v3012 = vld [vmem:[%s867 + $0x40] sm:$0xff]
      %v3013 = vld [vmem:[%s867 + $0x50] sm:$0xff]
      %v3014 = vld [vmem:[%s867 + $0x60] sm:$0xff]
      %v3015 = vld [vmem:[%s867 + $0x70] sm:$0xff]
      %v3016 = vpack.c.bf16 %v3009, %v3008
      %v3017 = vpack.c.bf16 %v3011, %v3010
      %v3018 = vpack.c.bf16 %v3013, %v3012
      %v3019 = vpack.c.bf16 %v3015, %v3014
      %v3020 = vld [vmem:[%s5] sm:$0xf]
      %v3021 = vld [vmem:[%s5 + $0x4] sm:$0xf]
      %v3022 = vld [vmem:[%s5 + $0x8] sm:$0xf]
      %v3023 = vld [vmem:[%s5 + $0xc] sm:$0xf]
      %v3024 = vld [vmem:[%s5 + $0x10] sm:$0xf]
      %v3025 = vld [vmem:[%s5 + $0x14] sm:$0xf]
      %v3026 = vld [vmem:[%s5 + $0x18] sm:$0xf]
      %v3027 = vld [vmem:[%s5 + $0x1c] sm:$0xf]
      %v3028 = vld [vmem:[%s5 + $0x20] sm:$0xf]
      %v3029 = vld [vmem:[%s5 + $0x24] sm:$0xf]
      %v3030 = vld [vmem:[%s5 + $0x28] sm:$0xf]
      %v3031 = vld [vmem:[%s5 + $0x2c] sm:$0xf]
      %v3032 = vld [vmem:[%s5 + $0x30] sm:$0xf]
      %v3033 = vld [vmem:[%s5 + $0x34] sm:$0xf]
      %v3034 = vld [vmem:[%s5 + $0x38] sm:$0xf]
      %v3035 = vld [vmem:[%s5 + $0x3c] sm:$0xf]
      %v3036 = vld [vmem:[%s6] sm:$0x1]
      %v3038 = vlaneseq
      %v3039 = vshrl.u32 %v3038, 7
      %v3040 = vsub.s32 0, %v3039
      %v3041 = vrot.slane %v3036, %v3040
      %v3059 = vunpack.c.l.b16 %v3020
      %v3060 = vunpack.c.l.b16 %v3021
      %v3061 = vunpack.c.l.b16 %v3022
      %v3062 = vunpack.c.l.b16 %v3023
      %v3063 = vunpack.c.l.b16 %v3024
      %v3064 = vunpack.c.l.b16 %v3025
      %v3065 = vunpack.c.l.b16 %v3026
      %v3066 = vunpack.c.l.b16 %v3027
      %v3067 = vunpack.c.l.b16 %v3028
      %v3068 = vunpack.c.l.b16 %v3029
      %v3069 = vunpack.c.l.b16 %v3030
      %v3070 = vunpack.c.l.b16 %v3031
      %v3071 = vunpack.c.l.b16 %v3032
      %v3072 = vunpack.c.l.b16 %v3033
      %v3073 = vunpack.c.l.b16 %v3034
      %v3074 = vunpack.c.l.b16 %v3035
      %v3075 = vpack.c.b16 %v3060, %v3059
      %v3076 = vpack.c.b16 %v3062, %v3061
      %v3077 = vpack.c.b16 %v3064, %v3063
      %v3078 = vpack.c.b16 %v3066, %v3065
      %v3079 = vpack.c.b16 %v3068, %v3067
      %v3080 = vpack.c.b16 %v3070, %v3069
      %v3081 = vpack.c.b16 %v3072, %v3071
      %v3082 = vpack.c.b16 %v3074, %v3073
      %3091 = vmatprep.subr.bf16.mxu0 0
      %3092 = vmatpush1.bf16.msra.mxu0 %v3082
      %3093 = vmatprep.subr.bf16.mxu0 0
      %3094 = vmatpush1.bf16.msra.mxu0 %v3081
      %3095 = vmatprep.subr.bf16.mxu0 0
      %3096 = vmatpush1.bf16.msra.mxu0 %v3080
      %3097 = vmatprep.subr.bf16.mxu0 0
      %3098 = vmatpush1.bf16.msra.mxu0 %v3079
      %3099 = vmatprep.subr.bf16.mxu0 0
      %3100 = vmatpush1.bf16.msra.mxu0 %v3078
      %3101 = vmatprep.subr.bf16.mxu0 0
      %3102 = vmatpush1.bf16.msra.mxu0 %v3077
      %3103 = vmatprep.subr.bf16.mxu0 0
      %3104 = vmatpush1.bf16.msra.mxu0 %v3076
      %3105 = vmatprep.subr.bf16.mxu0 0
      %3106 = vmatpush1.bf16.msra.mxu0 %v3075
      %3107 = vmatprep.subr.bf16.mxu0 0
      %3108 = vmatpush2.bf16.msra.mxu0 0
      %3109 = vmatprep.subr.bf16.mxu0 0
      %3110 = vmatpush2.bf16.msra.mxu0 0
      %3111 = vmatprep.subr.bf16.mxu0 0
      %3112 = vmatpush2.bf16.msra.mxu0 0
      %3113 = vmatprep.subr.bf16.mxu0 0
      %3114 = vmatpush2.bf16.msra.mxu0 0
      %3115 = vmatprep.subr.bf16.mxu0 0
      %3116 = vmatpush2.bf16.msra.mxu0 0
      %3117 = vmatprep.subr.bf16.mxu0 0
      %3118 = vmatpush2.bf16.msra.mxu0 0
      %3119 = vmatprep.subr.bf16.mxu0 0
      %3120 = vmatpush2.bf16.msra.mxu0 0
      %3121 = vmatprep.subr.bf16.mxu0 0
      %3122 = vmatpush2.bf16.msra.mxu0 0
      %3123 = vmatprep.mubr.bf16.mxu0 0
      %3124 = vmatmul.mubr.bf16.gmra.mxu0 %v3016
      %v3125 = vpop.f32.mrf.mxu0
      %v3126 = vadd.f32 %v3041, %v3125
      %v3127 = vpop.f32.mrf.mxu0
      %v3128 = vpop.f32.mrf.mxu0
      %v3129 = vadd.f32 %v3041, %v3128
      %v3130 = vpop.f32.mrf.mxu0
      %3131 = vmatprep.mubr.bf16.mxu0 0
      %3132 = vmatmul.mubr.bf16.gmra.mxu0 %v3017
      %v3133 = vpop.f32.mrf.mxu0
      %v3134 = vadd.f32 %v3041, %v3133
      %v3135 = vpop.f32.mrf.mxu0
      %v3136 = vpop.f32.mrf.mxu0
      %v3137 = vadd.f32 %v3041, %v3136
      %v3138 = vpop.f32.mrf.mxu0
      %3139 = vmatprep.mubr.bf16.mxu0 0
      %3140 = vmatmul.mubr.bf16.gmra.mxu0 %v3018
      %v3141 = vpop.f32.mrf.mxu0
      %v3142 = vadd.f32 %v3041, %v3141
      %v3143 = vpop.f32.mrf.mxu0
      %v3144 = vpop.f32.mrf.mxu0
      %v3145 = vadd.f32 %v3041, %v3144
      %v3146 = vpop.f32.mrf.mxu0
      %3147 = vmatprep.mubr.bf16.mxu0 0
      %3148 = vmatmul.mubr.bf16.gmra.mxu0 %v3019
      %v3149 = vpop.f32.mrf.mxu0
      %v3150 = vadd.f32 %v3041, %v3149
      %v3151 = vpop.f32.mrf.mxu0
      %v3152 = vpop.f32.mrf.mxu0
      %v3153 = vadd.f32 %v3041, %v3152
      %v3154 = vpop.f32.mrf.mxu0
      %3155 = vdwg.mxu0
      %v3156 = vadd.f32 %v3000, %v3126
      %v3157 = vadd.f32 %v3001, %v3129
      %v3158 = vadd.f32 %v3002, %v3134
      %v3159 = vadd.f32 %v3003, %v3137
      %v3160 = vadd.f32 %v3004, %v3142
      %v3161 = vadd.f32 %v3005, %v3145
      %v3162 = vadd.f32 %v3006, %v3150
      %v3163 = vadd.f32 %v3007, %v3153
      %v3164 = vmax.f32 %v3156, 0.0
      %v3165 = vmax.f32 %v3157, 0.0
      %v3166 = vmax.f32 %v3158, 0.0
      %v3167 = vmax.f32 %v3159, 0.0
      %v3168 = vmax.f32 %v3160, 0.0
      %v3169 = vmax.f32 %v3161, 0.0
      %v3170 = vmax.f32 %v3162, 0.0
      %v3171 = vmax.f32 %v3163, 0.0
      %v3172 = vpack.c.bf16 %v3164, %v3164
      %v3173 = vpack.c.bf16 %v3165, %v3165
      %v3174 = vpack.c.bf16 %v3166, %v3166
      %v3175 = vpack.c.bf16 %v3167, %v3167
      %v3176 = vpack.c.bf16 %v3168, %v3168
      %v3177 = vpack.c.bf16 %v3169, %v3169
      %v3178 = vpack.c.bf16 %v3170, %v3170
      %v3179 = vpack.c.bf16 %v3171, %v3171
      %3180 = vst [vmem:[%s283] sm:$0xf] %v3172
      %3181 = vst [vmem:[%s283 + $0x4] sm:$0xf] %v3173
      %3182 = vst [vmem:[%s283 + $0x8] sm:$0xf] %v3174
      %3183 = vst [vmem:[%s283 + $0xc] sm:$0xf] %v3175
      %3184 = vst [vmem:[%s283 + $0x10] sm:$0xf] %v3176
      %3185 = vst [vmem:[%s283 + $0x14] sm:$0xf] %v3177
      %3186 = vst [vmem:[%s283 + $0x18] sm:$0xf] %v3178
      %3187 = vst [vmem:[%s283 + $0x1c] sm:$0xf] %v3179
      %p3188 = scmp.lt.s32.totalorder %s18, 1
      %s3189 = scalar_select %p3188, %s18, 1
      %s3190 = smul.addr %s3189, 8
      %s3191 = smul.addr %s3190, 4
      %s3192 = scalar_lea.vmem %s7, %s3191
      // Predicated region
      $region49: #{resnet_block_forward.2} parent=47 // pred_check
        %p3193 = pneg %p188
      $region50: #{resnet_block_forward.2} parent=47 // pred_check_branch
        %3195 = sbr.rel (%p3193) target = $region52
      $region51: #{resnet_block_forward.2} parent=47 // pred_region
        _
      $region52: #{resnet_block_forward.2} parent=47 // pred_fallthru
        _
    $region48: #{resnet_block_forward.2} parent=5 // pred_fallthru
      _
    %p3196 = scmp.le.s32.totalorder 2, %s13
    // Predicated region
    $region53: #{resnet_block_forward.2} parent=5 // pred_check
      %p3197 = pneg %p3196
    $region54: #{resnet_block_forward.2} parent=5 // pred_check_branch
      %3199 = sbr.rel (%p3197) target = $region56
    $region55: #{resnet_block_forward.2} parent=5 // pred_region
      %s3200 = ssub.s32 %s13, 2
      // Predicated region
      $region57: #{resnet_block_forward.2} parent=55 // pred_check
        %p3201 = pneg %p194
      $region58: #{resnet_block_forward.2} parent=55 // pred_check_branch
        %3203 = sbr.rel (%p3201) target = $region60
      $region59: #{resnet_block_forward.2} parent=55 // pred_region
        %p3204 = scmp.lt.s32.totalorder %s19, 1
        %s3205 = scalar_select %p3204, %s19, 1
        %s3206 = smul.addr %s3205, 8
        %s3207 = smul.addr %s3206, 4
        %s3208 = scalar_lea.vmem %s7, %s3207
      $region60: #{resnet_block_forward.2} parent=55 // pred_fallthru
        _
    $region56: #{resnet_block_forward.2} parent=5 // pred_fallthru
      _
  $region6: #{resnet_block_forward.2} parent=0 // loop_footer
    %s17 = sadd.s32 1, %s13
  $region7: #{resnet_block_forward.2} parent=0 // loop_footer_branch
    %12 = sbr.rel target = $region3
  $region8: #{resnet_block_forward.2} parent=0 // loop_exit
    _

</llo_original>
